<compile_context>
chip_gen: v7x
topology: tpu7x:2x2x1
jax: 0.10.0
libtpu: 0.0.40
codegen_flags: <defaults>
</compile_context>

<pallas_src>
import functools

import jax
import jax.numpy as jnp
from jax.experimental import pallas as pl
from jax.experimental.pallas import tpu as pltpu


BN_EPS = 1e-5


def _round_up(n, m):
    return ((n + m - 1) // m) * m


# ----------------------------- Pallas kernels ------------------------------ #

def conv_bn_prelu_kernel(w_ref, p_ref, gb_ref, alpha_ref, o_ref, *, inv_m):
    """Fused conv-as-GEMM + training-mode BatchNorm + PReLU.

    Layout: channels on sublanes, (batch*spatial) on lanes.
      w_ref:     [Cout, K]      K = Cin*KH*KW, (cin, kh, kw) row order
      p_ref:     [K, Mpad]      im2col patches, zero-padded on lanes
      gb_ref:    [Cout, 2]      col 0 = BN gamma, col 1 = BN beta
      alpha_ref: [1]   (SMEM)   shared PReLU slope
      o_ref:     [Cout, Mpad]

    Padded patch columns yield exactly-zero GEMM columns (no conv bias), so
    dividing the sums by the true M keeps the batch statistics exact.
    """
    y = jnp.dot(w_ref[...], p_ref[...], preferred_element_type=jnp.float32)

    # One-pass batch statistics (two lane reductions over the big tile).
    s1 = jnp.sum(y, axis=1, keepdims=True)
    s2 = jnp.sum(y * y, axis=1, keepdims=True)
    mean = s1 * inv_m
    var = jnp.maximum(s2 * inv_m - mean * mean, 0.0)

    gamma = gb_ref[:, 0:1]
    beta = gb_ref[:, 1:2]
    scale = gamma * jax.lax.rsqrt(var + BN_EPS)
    shift = beta - mean * scale

    yn = y * scale + shift                           # single FMA pass
    alpha = alpha_ref[0]
    o_ref[...] = jnp.where(yn >= 0.0, yn, alpha * yn)     # PReLU


def heads_kernel(x_ref, w_ref, b_ref, o_ref):
    """One output-feature tile of the fused mu/var heads GEMM (bf16 weights)."""
    o_ref[...] = (
        jnp.dot(x_ref[...].astype(jnp.bfloat16), w_ref[...],
                preferred_element_type=jnp.float32)
        + b_ref[...]
    )


# ----------------------------- Pallas wrappers ------------------------------ #

def _whole(shape):
    nd = len(shape)

    def index_map(i):
        return (0,) * nd

    return pl.BlockSpec(shape, index_map)


def conv_bn_prelu(patches, w, gb, alpha, m_true):
    Cout, K = w.shape
    Kp, Mpad = patches.shape
    assert Kp == K
    flops = 2 * Cout * K * Mpad + 10 * Cout * Mpad
    bytes_accessed = 4 * (Cout * K + K * Mpad + 2 * Cout + 1 + Cout * Mpad)
    kernel = functools.partial(conv_bn_prelu_kernel, inv_m=1.0 / float(m_true))
    return pl.pallas_call(
        kernel,
        out_shape=jax.ShapeDtypeStruct((Cout, Mpad), jnp.float32),
        grid=(1,),
        in_specs=[
            _whole((Cout, K)),
            _whole((K, Mpad)),
            _whole((Cout, 2)),
            pl.BlockSpec(memory_space=pltpu.MemorySpace.SMEM),
        ],
        out_specs=_whole((Cout, Mpad)),
        compiler_params=pltpu.CompilerParams(dimension_semantics=("arbitrary",)),
        cost_estimate=pl.CostEstimate(
            flops=flops, transcendentals=Cout, bytes_accessed=bytes_accessed),
    )(w, patches, gb, alpha)


def _pick_tile(n, candidates=(512, 256, 128)):
    for c in candidates:
        if n % c == 0:
            return c
    return n


def linear_heads(feat, w_bf16, b):
    """Both heads in one GEMM, tiled over output features: [B,3136]@[3136,2L]."""
    B, F = feat.shape
    Fw, Nout = w_bf16.shape
    assert Fw == F
    tn = _pick_tile(Nout)
    flops = 2 * B * F * Nout
    bytes_accessed = 4 * B * F + 2 * F * Nout + 4 * Nout + 4 * B * Nout
    return pl.pallas_call(
        heads_kernel,
        out_shape=jax.ShapeDtypeStruct((B, Nout), jnp.float32),
        grid=(Nout // tn,),
        in_specs=[
            pl.BlockSpec((B, F), lambda j: (0, 0)),
            pl.BlockSpec((F, tn), lambda j: (0, j)),
            pl.BlockSpec((1, tn), lambda j: (0, j)),
        ],
        out_specs=pl.BlockSpec((B, tn), lambda j: (0, j)),
        compiler_params=pltpu.CompilerParams(dimension_semantics=("parallel",)),
        cost_estimate=pl.CostEstimate(
            flops=flops, transcendentals=0, bytes_accessed=bytes_accessed),
    )(feat, w_bf16, b)


# ------------------------------- glue (JAX) -------------------------------- #

def im2col_cm(x_cnhw, k, stride, pad, lane_pad=False):
    """Channel-major im2col: [Cin*KH*KW, N*OH*OW] with (cin, kh, kw) row order.

    Works directly on the kernels' native [C, N, H, W] activation layout, so
    no per-layer transposes are needed between conv layers.
    """
    if pad:
        x_cnhw = jnp.pad(x_cnhw, ((0, 0), (0, 0), (pad, pad), (pad, pad)))
    C, N, H, W = x_cnhw.shape
    OH = (H - k) // stride + 1
    OW = (W - k) // stride + 1
    cols = [
        x_cnhw[:, :, i:i + stride * OH:stride, j:j + stride * OW:stride]
        for i in range(k) for j in range(k)
    ]
    patches = jnp.stack(cols, axis=1)                 # [C, k*k, N, OH, OW]
    M = N * OH * OW
    patches = patches.reshape(C * k * k, M)
    if lane_pad and M % 128 != 0:
        patches = jnp.pad(patches, ((0, 0), (0, _round_up(M, 128) - M)))
    return patches, (N, OH, OW)


def encoder_forward(params, x_nchw):
    # Keep activations in the kernels' channel-major [C, N, H, W] layout.
    xc = jnp.transpose(x_nchw, (1, 0, 2, 3))

    # conv1: 7x7, stride 2, pad 1, Cin -> 16
    p1, (N, OH, OW) = im2col_cm(xc, 7, 2, 1)
    y1 = conv_bn_prelu(p1, params["w1"], params["gb1"], params["a1"], N * OH * OW)
    x1 = y1.reshape(16, N, OH, OW)

    # conv2: 7x7, stride 2, pad 1, 16 -> 32
    p2, (N, OH, OW) = im2col_cm(x1, 7, 2, 1)
    y2 = conv_bn_prelu(p2, params["w2"], params["gb2"], params["a2"], N * OH * OW)
    x2 = y2.reshape(32, N, OH, OW)

    # conv3: 7x7, stride 1, pad 0, 32 -> 64  (lane width padded to >=128)
    p3, (N, OH, OW) = im2col_cm(x2, 7, 1, 0, lane_pad=True)
    m3 = N * OH * OW
    y3 = conv_bn_prelu(p3, params["w3"], params["gb3"], params["a3"], m3)

    # PyTorch x.view(B, -1) flattens NCHW in (C, H, W) order; y3 is [64, (n,s)].
    feat = (y3[:, :m3].reshape(64, N, OH * OW)
            .transpose(1, 0, 2).reshape(N, 64 * OH * OW))

    z = linear_heads(feat, params["w_heads"], params["b_heads"])   # [B, 2*latent]
    L = z.shape[1] // 2
    return z[:, :L], z[:, L:]


# ------------------------------ parameters --------------------------------- #

def init_pytorch_params(key, in_channels=1, latent_dim=2048):
    """Parameters in PyTorch layout (as the nn.Module would hold them)."""
    ks = jax.random.split(key, 5)
    f32 = jnp.float32

    def nrm(k, shape, scale=0.05):
        return (scale * jax.random.normal(k, shape)).astype(f32)

    return {
        "conv1_w": nrm(ks[0], (16, in_channels, 7, 7)), "conv1_b": jnp.zeros((16,), f32),
        "bn1_g": jnp.ones((16,), f32), "bn1_b": jnp.zeros((16,), f32),
        "prelu1_a": jnp.full((1,), 0.25, f32),
        "conv2_w": nrm(ks[1], (32, 16, 7, 7)), "conv2_b": jnp.zeros((32,), f32),
        "bn2_g": jnp.ones((32,), f32), "bn2_b": jnp.zeros((32,), f32),
        "prelu2_a": jnp.full((1,), 0.25, f32),
        "conv3_w": nrm(ks[2], (64, 32, 7, 7)), "conv3_b": jnp.zeros((64,), f32),
        "bn3_g": jnp.ones((64,), f32), "bn3_b": jnp.zeros((64,), f32),
        "prelu3_a": jnp.full((1,), 0.25, f32),
        "mu_w": nrm(ks[3], (latent_dim, 3136), 0.02), "mu_b": jnp.zeros((latent_dim,), f32),
        "var_w": nrm(ks[4], (latent_dim, 3136), 0.02), "var_b": jnp.zeros((latent_dim,), f32),
    }


def prepare_params(p):
    """One-time PyTorch-layout -> kernel-layout conversion (outside jit).

    * conv weights [Cout, Cin, KH, KW] -> [Cout, Cin*KH*KW], matching the
      channel-major im2col row order.  Conv biases dropped (cancelled exactly
      by training-mode BN mean subtraction).
    * BN gamma/beta packed into one [Cout, 2] array; PReLU slope stays (1,)
      and is read from SMEM.
    * mu/var weights fused into one [3136, 2*latent] matrix, stored bf16 (the
      heads GEMM is HBM-bandwidth bound on the weight read); bias row f32.
    """
    def conv_w(w):
        return w.reshape(w.shape[0], -1)

    def gb(g, b):
        return jnp.stack([g, b], axis=1)

    return {
        "w1": conv_w(p["conv1_w"]), "gb1": gb(p["bn1_g"], p["bn1_b"]),
        "a1": p["prelu1_a"].reshape(1),
        "w2": conv_w(p["conv2_w"]), "gb2": gb(p["bn2_g"], p["bn2_b"]),
        "a2": p["prelu2_a"].reshape(1),
        "w3": conv_w(p["conv3_w"]), "gb3": gb(p["bn3_g"], p["bn3_b"]),
        "a3": p["prelu3_a"].reshape(1),
        "w_heads": jnp.concatenate([p["mu_w"].T, p["var_w"].T], axis=1)
                      .astype(jnp.bfloat16),
        "b_heads": jnp.concatenate([p["mu_b"], p["var_b"]]).reshape(1, -1),
    }


if __name__ == "__main__":
    key = jax.random.PRNGKey(0)
    k_param, k_x = jax.random.split(key)

    latent_dim = 2048  # module default; exercises the tiled heads GEMM
    torch_params = init_pytorch_params(k_param, in_channels=1, latent_dim=latent_dim)
    params = jax.block_until_ready(prepare_params(torch_params))  # one-time prep

    # Input must be 64x64 so the conv stack yields 64*7*7 = 3136 features.
    x = jax.random.normal(k_x, (2, 1, 64, 64), dtype=jnp.float32)

    fwd = jax.jit(encoder_forward)
    z_mu, z_var = fwd(params, x)
    jax.block_until_ready((z_mu, z_var))

    assert z_mu.shape == (2, latent_dim) and z_var.shape == (2, latent_dim)
    assert jnp.all(jnp.isfinite(z_mu)) and jnp.all(jnp.isfinite(z_var))
    print("KERNEL_OK")
</pallas_src>

<mosaic_0001>
module attributes {stable_mosaic.version = 11 : i64} {
  func.func @conv_bn_prelu_kernel(%arg0: i32, %arg1: memref<16x49xf32, #tpu.memory_space<vmem>>, %arg2: memref<49x1800xf32, #tpu.memory_space<vmem>>, %arg3: memref<16x2xf32, #tpu.memory_space<vmem>>, %arg4: memref<1xf32, #tpu.memory_space<smem>>, %arg5: memref<16x1800xf32, #tpu.memory_space<vmem>>) attributes {dimension_semantics = [#tpu.dimension_semantics<arbitrary>], iteration_bounds = array<i64: 1>, scalar_prefetch = 0 : i64, scratch_operands = 0 : i64, tpu.core_type = #tpu.core_type<tc>, window_params = [{pipeline_mode = #tpu.pipeline_mode<synchronous>, transform_indices = @transform_0, window_bounds = array<i64: 16, 49>}, {pipeline_mode = #tpu.pipeline_mode<synchronous>, transform_indices = @transform_1, window_bounds = array<i64: 49, 1800>}, {pipeline_mode = #tpu.pipeline_mode<synchronous>, transform_indices = @transform_2, window_bounds = array<i64: 16, 2>}, {transform_indices = @transform_3, window_bounds = array<i64: 1>}, {pipeline_mode = #tpu.pipeline_mode<synchronous>, transform_indices = @transform_4, window_bounds = array<i64: 16, 1800>}]} {
    %c0 = arith.constant 0 : index
    %c0_0 = arith.constant 0 : index
    %0 = vector.load %arg1[%c0, %c0_0] : memref<16x49xf32, #tpu.memory_space<vmem>>, vector<16x49xf32>
    %c0_1 = arith.constant 0 : index
    %c0_2 = arith.constant 0 : index
    %1 = vector.load %arg2[%c0_1, %c0_2] : memref<49x1800xf32, #tpu.memory_space<vmem>>, vector<49x1800xf32>
    %cst = arith.constant dense<0.000000e+00> : vector<16x1800xf32>
    %2 = tpu.matmul %0, %1, %cst {dimension_numbers = #tpu.dot_dimension_numbers<[1], [0], [0], [1], [0, 0, 1, 1], [], []>} : vector<16x49xf32>, vector<49x1800xf32>, vector<16x1800xf32> -> vector<16x1800xf32>
    %cst_3 = arith.constant dense<0.000000e+00> : vector<16xf32>
    %3 = vector.multi_reduction <add>, %2, %cst_3 [1] : vector<16x1800xf32> to vector<16xf32>
    %4 = vector.shape_cast %3 : vector<16xf32> to vector<16x1xf32>
    %5 = arith.mulf %2, %2 : vector<16x1800xf32>
    %cst_4 = arith.constant dense<0.000000e+00> : vector<16xf32>
    %6 = vector.multi_reduction <add>, %5, %cst_4 [1] : vector<16x1800xf32> to vector<16xf32>
    %7 = vector.shape_cast %6 : vector<16xf32> to vector<16x1xf32>
    %cst_5 = arith.constant 5.55555569E-4 : f32
    %8 = vector.broadcast %cst_5 : f32 to vector<16x1xf32>
    %9 = arith.mulf %4, %8 : vector<16x1xf32>
    %cst_6 = arith.constant 5.55555569E-4 : f32
    %10 = vector.broadcast %cst_6 : f32 to vector<16x1xf32>
    %11 = arith.mulf %7, %10 : vector<16x1xf32>
    %12 = arith.mulf %9, %9 : vector<16x1xf32>
    %13 = arith.subf %11, %12 : vector<16x1xf32>
    %cst_7 = arith.constant 0.000000e+00 : f32
    %14 = vector.broadcast %cst_7 : f32 to vector<16x1xf32>
    %15 = arith.maximumf %13, %14 : vector<16x1xf32>
    %c0_8 = arith.constant 0 : index
    %c0_9 = arith.constant 0 : index
    %16 = vector.load %arg3[%c0_8, %c0_9] : memref<16x2xf32, #tpu.memory_space<vmem>>, vector<16x1xf32>
    %c0_10 = arith.constant 0 : index
    %c1 = arith.constant 1 : index
    %17 = vector.load %arg3[%c0_10, %c1] : memref<16x2xf32, #tpu.memory_space<vmem>>, vector<16x1xf32>
    %cst_11 = arith.constant 9.99999974E-6 : f32
    %18 = vector.broadcast %cst_11 : f32 to vector<16x1xf32>
    %19 = arith.addf %15, %18 : vector<16x1xf32>
    %20 = math.rsqrt %19 : vector<16x1xf32>
    %21 = arith.mulf %16, %20 : vector<16x1xf32>
    %22 = arith.mulf %9, %21 : vector<16x1xf32>
    %23 = arith.subf %17, %22 : vector<16x1xf32>
    %24 = vector.broadcast %21 : vector<16x1xf32> to vector<16x1800xf32>
    %25 = arith.mulf %2, %24 : vector<16x1800xf32>
    %26 = vector.broadcast %23 : vector<16x1xf32> to vector<16x1800xf32>
    %27 = arith.addf %25, %26 : vector<16x1800xf32>
    %c0_12 = arith.constant 0 : index
    %28 = memref.load %arg4[%c0_12] : memref<1xf32, #tpu.memory_space<smem>>
    %cst_13 = arith.constant 0.000000e+00 : f32
    %29 = vector.broadcast %cst_13 : f32 to vector<16x1800xf32>
    %30 = arith.cmpf oge, %27, %29 : vector<16x1800xf32>
    %31 = vector.broadcast %28 : f32 to vector<16x1800xf32>
    %32 = arith.mulf %31, %27 : vector<16x1800xf32>
    %33 = arith.select %30, %27, %32 : vector<16x1800xi1>, vector<16x1800xf32>
    %c0_14 = arith.constant 0 : index
    %c0_15 = arith.constant 0 : index
    %34 = vector.load %arg5[%c0_14, %c0_15] : memref<16x1800xf32, #tpu.memory_space<vmem>>, vector<16x1800xf32>
    tpu.vector_store %arg5[%c0_14, %c0_15], %33 {strides = array<i32>} : memref<16x1800xf32, #tpu.memory_space<vmem>>, vector<16x1800xf32>,
    return
  }
  func.func @transform_0(%arg0: i32) -> (i32, i32) {
    %c0_i32 = arith.constant 0 : i32
    %c0_i32_0 = arith.constant 0 : i32
    %c0_i32_1 = arith.constant 0 : i32
    return %c0_i32, %c0_i32_0 : i32, i32
  }
  func.func @transform_1(%arg0: i32) -> (i32, i32) {
    %c0_i32 = arith.constant 0 : i32
    %c0_i32_0 = arith.constant 0 : i32
    %c0_i32_1 = arith.constant 0 : i32
    return %c0_i32, %c0_i32_0 : i32, i32
  }
  func.func @transform_2(%arg0: i32) -> (i32, i32) {
    %c0_i32 = arith.constant 0 : i32
    %c0_i32_0 = arith.constant 0 : i32
    %c0_i32_1 = arith.constant 0 : i32
    return %c0_i32, %c0_i32_0 : i32, i32
  }
  func.func @transform_3(%arg0: i32) -> i32 {
    %c0_i32 = arith.constant 0 : i32
    %c0_i32_0 = arith.constant 0 : i32
    return %c0_i32 : i32
  }
  func.func @transform_4(%arg0: i32) -> (i32, i32) {
    %c0_i32 = arith.constant 0 : i32
    %c0_i32_0 = arith.constant 0 : i32
    %c0_i32_1 = arith.constant 0 : i32
    return %c0_i32, %c0_i32_0 : i32, i32
  }
}

module attributes {stable_mosaic.version = 11 : i64} {
  func.func @conv_bn_prelu_kernel(%arg0: i32, %arg1: memref<32x784xf32, #tpu.memory_space<vmem>>, %arg2: memref<784x338xf32, #tpu.memory_space<vmem>>, %arg3: memref<32x2xf32, #tpu.memory_space<vmem>>, %arg4: memref<1xf32, #tpu.memory_space<smem>>, %arg5: memref<32x338xf32, #tpu.memory_space<vmem>>) attributes {dimension_semantics = [#tpu.dimension_semantics<arbitrary>], iteration_bounds = array<i64: 1>, scalar_prefetch = 0 : i64, scratch_operands = 0 : i64, tpu.core_type = #tpu.core_type<tc>, window_params = [{pipeline_mode = #tpu.pipeline_mode<synchronous>, transform_indices = @transform_0, window_bounds = array<i64: 32, 784>}, {pipeline_mode = #tpu.pipeline_mode<synchronous>, transform_indices = @transform_1, window_bounds = array<i64: 784, 338>}, {pipeline_mode = #tpu.pipeline_mode<synchronous>, transform_indices = @transform_2, window_bounds = array<i64: 32, 2>}, {transform_indices = @transform_3, window_bounds = array<i64: 1>}, {pipeline_mode = #tpu.pipeline_mode<synchronous>, transform_indices = @transform_4, window_bounds = array<i64: 32, 338>}]} {
    %c0 = arith.constant 0 : index
    %c0_0 = arith.constant 0 : index
    %0 = vector.load %arg1[%c0, %c0_0] : memref<32x784xf32, #tpu.memory_space<vmem>>, vector<32x784xf32>
    %c0_1 = arith.constant 0 : index
    %c0_2 = arith.constant 0 : index
    %1 = vector.load %arg2[%c0_1, %c0_2] : memref<784x338xf32, #tpu.memory_space<vmem>>, vector<784x338xf32>
    %cst = arith.constant dense<0.000000e+00> : vector<32x338xf32>
    %2 = tpu.matmul %0, %1, %cst {dimension_numbers = #tpu.dot_dimension_numbers<[1], [0], [0], [1], [0, 0, 1, 1], [], []>} : vector<32x784xf32>, vector<784x338xf32>, vector<32x338xf32> -> vector<32x338xf32>
    %cst_3 = arith.constant dense<0.000000e+00> : vector<32xf32>
    %3 = vector.multi_reduction <add>, %2, %cst_3 [1] : vector<32x338xf32> to vector<32xf32>
    %4 = vector.shape_cast %3 : vector<32xf32> to vector<32x1xf32>
    %5 = arith.mulf %2, %2 : vector<32x338xf32>
    %cst_4 = arith.constant dense<0.000000e+00> : vector<32xf32>
    %6 = vector.multi_reduction <add>, %5, %cst_4 [1] : vector<32x338xf32> to vector<32xf32>
    %7 = vector.shape_cast %6 : vector<32xf32> to vector<32x1xf32>
    %cst_5 = arith.constant 2.958580e-03 : f32
    %8 = vector.broadcast %cst_5 : f32 to vector<32x1xf32>
    %9 = arith.mulf %4, %8 : vector<32x1xf32>
    %cst_6 = arith.constant 2.958580e-03 : f32
    %10 = vector.broadcast %cst_6 : f32 to vector<32x1xf32>
    %11 = arith.mulf %7, %10 : vector<32x1xf32>
    %12 = arith.mulf %9, %9 : vector<32x1xf32>
    %13 = arith.subf %11, %12 : vector<32x1xf32>
    %cst_7 = arith.constant 0.000000e+00 : f32
    %14 = vector.broadcast %cst_7 : f32 to vector<32x1xf32>
    %15 = arith.maximumf %13, %14 : vector<32x1xf32>
    %c0_8 = arith.constant 0 : index
    %c0_9 = arith.constant 0 : index
    %16 = vector.load %arg3[%c0_8, %c0_9] : memref<32x2xf32, #tpu.memory_space<vmem>>, vector<32x1xf32>
    %c0_10 = arith.constant 0 : index
    %c1 = arith.constant 1 : index
    %17 = vector.load %arg3[%c0_10, %c1] : memref<32x2xf32, #tpu.memory_space<vmem>>, vector<32x1xf32>
    %cst_11 = arith.constant 9.99999974E-6 : f32
    %18 = vector.broadcast %cst_11 : f32 to vector<32x1xf32>
    %19 = arith.addf %15, %18 : vector<32x1xf32>
    %20 = math.rsqrt %19 : vector<32x1xf32>
    %21 = arith.mulf %16, %20 : vector<32x1xf32>
    %22 = arith.mulf %9, %21 : vector<32x1xf32>
    %23 = arith.subf %17, %22 : vector<32x1xf32>
    %24 = vector.broadcast %21 : vector<32x1xf32> to vector<32x338xf32>
    %25 = arith.mulf %2, %24 : vector<32x338xf32>
    %26 = vector.broadcast %23 : vector<32x1xf32> to vector<32x338xf32>
    %27 = arith.addf %25, %26 : vector<32x338xf32>
    %c0_12 = arith.constant 0 : index
    %28 = memref.load %arg4[%c0_12] : memref<1xf32, #tpu.memory_space<smem>>
    %cst_13 = arith.constant 0.000000e+00 : f32
    %29 = vector.broadcast %cst_13 : f32 to vector<32x338xf32>
    %30 = arith.cmpf oge, %27, %29 : vector<32x338xf32>
    %31 = vector.broadcast %28 : f32 to vector<32x338xf32>
    %32 = arith.mulf %31, %27 : vector<32x338xf32>
    %33 = arith.select %30, %27, %32 : vector<32x338xi1>, vector<32x338xf32>
    %c0_14 = arith.constant 0 : index
    %c0_15 = arith.constant 0 : index
    %34 = vector.load %arg5[%c0_14, %c0_15] : memref<32x338xf32, #tpu.memory_space<vmem>>, vector<32x338xf32>
    tpu.vector_store %arg5[%c0_14, %c0_15], %33 {strides = array<i32>} : memref<32x338xf32, #tpu.memory_space<vmem>>, vector<32x338xf32>,
    return
  }
  func.func @transform_0(%arg0: i32) -> (i32, i32) {
    %c0_i32 = arith.constant 0 : i32
    %c0_i32_0 = arith.constant 0 : i32
    %c0_i32_1 = arith.constant 0 : i32
    return %c0_i32, %c0_i32_0 : i32, i32
  }
  func.func @transform_1(%arg0: i32) -> (i32, i32) {
    %c0_i32 = arith.constant 0 : i32
    %c0_i32_0 = arith.constant 0 : i32
    %c0_i32_1 = arith.constant 0 : i32
    return %c0_i32, %c0_i32_0 : i32, i32
  }
  func.func @transform_2(%arg0: i32) -> (i32, i32) {
    %c0_i32 = arith.constant 0 : i32
    %c0_i32_0 = arith.constant 0 : i32
    %c0_i32_1 = arith.constant 0 : i32
    return %c0_i32, %c0_i32_0 : i32, i32
  }
  func.func @transform_3(%arg0: i32) -> i32 {
    %c0_i32 = arith.constant 0 : i32
    %c0_i32_0 = arith.constant 0 : i32
    return %c0_i32 : i32
  }
  func.func @transform_4(%arg0: i32) -> (i32, i32) {
    %c0_i32 = arith.constant 0 : i32
    %c0_i32_0 = arith.constant 0 : i32
    %c0_i32_1 = arith.constant 0 : i32
    return %c0_i32, %c0_i32_0 : i32, i32
  }
}

module attributes {stable_mosaic.version = 11 : i64} {
  func.func @conv_bn_prelu_kernel(%arg0: i32, %arg1: memref<64x1568xf32, #tpu.memory_space<vmem>>, %arg2: memref<1568x128xf32, #tpu.memory_space<vmem>>, %arg3: memref<64x2xf32, #tpu.memory_space<vmem>>, %arg4: memref<1xf32, #tpu.memory_space<smem>>, %arg5: memref<64x128xf32, #tpu.memory_space<vmem>>) attributes {dimension_semantics = [#tpu.dimension_semantics<arbitrary>], iteration_bounds = array<i64: 1>, scalar_prefetch = 0 : i64, scratch_operands = 0 : i64, tpu.core_type = #tpu.core_type<tc>, window_params = [{pipeline_mode = #tpu.pipeline_mode<synchronous>, transform_indices = @transform_0, window_bounds = array<i64: 64, 1568>}, {pipeline_mode = #tpu.pipeline_mode<synchronous>, transform_indices = @transform_1, window_bounds = array<i64: 1568, 128>}, {pipeline_mode = #tpu.pipeline_mode<synchronous>, transform_indices = @transform_2, window_bounds = array<i64: 64, 2>}, {transform_indices = @transform_3, window_bounds = array<i64: 1>}, {pipeline_mode = #tpu.pipeline_mode<synchronous>, transform_indices = @transform_4, window_bounds = array<i64: 64, 128>}]} {
    %c0 = arith.constant 0 : index
    %c0_0 = arith.constant 0 : index
    %0 = vector.load %arg1[%c0, %c0_0] : memref<64x1568xf32, #tpu.memory_space<vmem>>, vector<64x1568xf32>
    %c0_1 = arith.constant 0 : index
    %c0_2 = arith.constant 0 : index
    %1 = vector.load %arg2[%c0_1, %c0_2] : memref<1568x128xf32, #tpu.memory_space<vmem>>, vector<1568x128xf32>
    %cst = arith.constant dense<0.000000e+00> : vector<64x128xf32>
    %2 = tpu.matmul %0, %1, %cst {dimension_numbers = #tpu.dot_dimension_numbers<[1], [0], [0], [1], [0, 0, 1, 1], [], []>} : vector<64x1568xf32>, vector<1568x128xf32>, vector<64x128xf32> -> vector<64x128xf32>
    %cst_3 = arith.constant dense<0.000000e+00> : vector<64xf32>
    %3 = vector.multi_reduction <add>, %2, %cst_3 [1] : vector<64x128xf32> to vector<64xf32>
    %4 = vector.shape_cast %3 : vector<64xf32> to vector<64x1xf32>
    %5 = arith.mulf %2, %2 : vector<64x128xf32>
    %cst_4 = arith.constant dense<0.000000e+00> : vector<64xf32>
    %6 = vector.multi_reduction <add>, %5, %cst_4 [1] : vector<64x128xf32> to vector<64xf32>
    %7 = vector.shape_cast %6 : vector<64xf32> to vector<64x1xf32>
    %cst_5 = arith.constant 0.0102040814 : f32
    %8 = vector.broadcast %cst_5 : f32 to vector<64x1xf32>
    %9 = arith.mulf %4, %8 : vector<64x1xf32>
    %cst_6 = arith.constant 0.0102040814 : f32
    %10 = vector.broadcast %cst_6 : f32 to vector<64x1xf32>
    %11 = arith.mulf %7, %10 : vector<64x1xf32>
    %12 = arith.mulf %9, %9 : vector<64x1xf32>
    %13 = arith.subf %11, %12 : vector<64x1xf32>
    %cst_7 = arith.constant 0.000000e+00 : f32
    %14 = vector.broadcast %cst_7 : f32 to vector<64x1xf32>
    %15 = arith.maximumf %13, %14 : vector<64x1xf32>
    %c0_8 = arith.constant 0 : index
    %c0_9 = arith.constant 0 : index
    %16 = vector.load %arg3[%c0_8, %c0_9] : memref<64x2xf32, #tpu.memory_space<vmem>>, vector<64x1xf32>
    %c0_10 = arith.constant 0 : index
    %c1 = arith.constant 1 : index
    %17 = vector.load %arg3[%c0_10, %c1] : memref<64x2xf32, #tpu.memory_space<vmem>>, vector<64x1xf32>
    %cst_11 = arith.constant 9.99999974E-6 : f32
    %18 = vector.broadcast %cst_11 : f32 to vector<64x1xf32>
    %19 = arith.addf %15, %18 : vector<64x1xf32>
    %20 = math.rsqrt %19 : vector<64x1xf32>
    %21 = arith.mulf %16, %20 : vector<64x1xf32>
    %22 = arith.mulf %9, %21 : vector<64x1xf32>
    %23 = arith.subf %17, %22 : vector<64x1xf32>
    %24 = vector.broadcast %21 : vector<64x1xf32> to vector<64x128xf32>
    %25 = arith.mulf %2, %24 : vector<64x128xf32>
    %26 = vector.broadcast %23 : vector<64x1xf32> to vector<64x128xf32>
    %27 = arith.addf %25, %26 : vector<64x128xf32>
    %c0_12 = arith.constant 0 : index
    %28 = memref.load %arg4[%c0_12] : memref<1xf32, #tpu.memory_space<smem>>
    %cst_13 = arith.constant 0.000000e+00 : f32
    %29 = vector.broadcast %cst_13 : f32 to vector<64x128xf32>
    %30 = arith.cmpf oge, %27, %29 : vector<64x128xf32>
    %31 = vector.broadcast %28 : f32 to vector<64x128xf32>
    %32 = arith.mulf %31, %27 : vector<64x128xf32>
    %33 = arith.select %30, %27, %32 : vector<64x128xi1>, vector<64x128xf32>
    %c0_14 = arith.constant 0 : index
    %c0_15 = arith.constant 0 : index
    %34 = vector.load %arg5[%c0_14, %c0_15] : memref<64x128xf32, #tpu.memory_space<vmem>>, vector<64x128xf32>
    tpu.vector_store %arg5[%c0_14, %c0_15], %33 {strides = array<i32>} : memref<64x128xf32, #tpu.memory_space<vmem>>, vector<64x128xf32>,
    return
  }
  func.func @transform_0(%arg0: i32) -> (i32, i32) {
    %c0_i32 = arith.constant 0 : i32
    %c0_i32_0 = arith.constant 0 : i32
    %c0_i32_1 = arith.constant 0 : i32
    return %c0_i32, %c0_i32_0 : i32, i32
  }
  func.func @transform_1(%arg0: i32) -> (i32, i32) {
    %c0_i32 = arith.constant 0 : i32
    %c0_i32_0 = arith.constant 0 : i32
    %c0_i32_1 = arith.constant 0 : i32
    return %c0_i32, %c0_i32_0 : i32, i32
  }
  func.func @transform_2(%arg0: i32) -> (i32, i32) {
    %c0_i32 = arith.constant 0 : i32
    %c0_i32_0 = arith.constant 0 : i32
    %c0_i32_1 = arith.constant 0 : i32
    return %c0_i32, %c0_i32_0 : i32, i32
  }
  func.func @transform_3(%arg0: i32) -> i32 {
    %c0_i32 = arith.constant 0 : i32
    %c0_i32_0 = arith.constant 0 : i32
    return %c0_i32 : i32
  }
  func.func @transform_4(%arg0: i32) -> (i32, i32) {
    %c0_i32 = arith.constant 0 : i32
    %c0_i32_0 = arith.constant 0 : i32
    %c0_i32_1 = arith.constant 0 : i32
    return %c0_i32, %c0_i32_0 : i32, i32
  }
}

module attributes {stable_mosaic.version = 11 : i64} {
  func.func @heads_kernel(%arg0: i32, %arg1: memref<2x3136xf32, #tpu.memory_space<vmem>>, %arg2: memref<3136x512xbf16, #tpu.memory_space<vmem>>, %arg3: memref<1x512xf32, #tpu.memory_space<vmem>>, %arg4: memref<2x512xf32, #tpu.memory_space<vmem>>) attributes {dimension_semantics = [#tpu.dimension_semantics<parallel>], iteration_bounds = array<i64: 8>, scalar_prefetch = 0 : i64, scratch_operands = 0 : i64, tpu.core_type = #tpu.core_type<tc>, window_params = [{pipeline_mode = #tpu.pipeline_mode<synchronous>, transform_indices = @transform_0, window_bounds = array<i64: 2, 3136>}, {transform_indices = @transform_1, window_bounds = array<i64: 3136, 512>}, {transform_indices = @transform_2, window_bounds = array<i64: 1, 512>}, {transform_indices = @transform_3, window_bounds = array<i64: 2, 512>}]} {
    %c0 = arith.constant 0 : index
    %c0_0 = arith.constant 0 : index
    %0 = vector.load %arg1[%c0, %c0_0] : memref<2x3136xf32, #tpu.memory_space<vmem>>, vector<2x3136xf32>
    %1 = arith.truncf %0 : vector<2x3136xf32> to vector<2x3136xbf16>
    %c0_1 = arith.constant 0 : index
    %c0_2 = arith.constant 0 : index
    %2 = vector.load %arg2[%c0_1, %c0_2] : memref<3136x512xbf16, #tpu.memory_space<vmem>>, vector<3136x512xbf16>
    %cst = arith.constant dense<0.000000e+00> : vector<2x512xf32>
    %3 = tpu.matmul %1, %2, %cst {dimension_numbers = #tpu.dot_dimension_numbers<[1], [0], [0], [1], [0, 0, 1, 1], [], []>} : vector<2x3136xbf16>, vector<3136x512xbf16>, vector<2x512xf32> -> vector<2x512xf32>
    %c0_3 = arith.constant 0 : index
    %c0_4 = arith.constant 0 : index
    %4 = vector.load %arg3[%c0_3, %c0_4] : memref<1x512xf32, #tpu.memory_space<vmem>>, vector<1x512xf32>
    %5 = vector.broadcast %4 : vector<1x512xf32> to vector<2x512xf32>
    %6 = arith.addf %3, %5 : vector<2x512xf32>
    %c0_5 = arith.constant 0 : index
    %c0_6 = arith.constant 0 : index
    %7 = vector.load %arg4[%c0_5, %c0_6] : memref<2x512xf32, #tpu.memory_space<vmem>>, vector<2x512xf32>
    tpu.vector_store %arg4[%c0_5, %c0_6], %6 {strides = array<i32>} : memref<2x512xf32, #tpu.memory_space<vmem>>, vector<2x512xf32>,
    return
  }
  func.func @transform_0(%arg0: i32) -> (i32, i32) {
    %c0_i32 = arith.constant 0 : i32
    %c0_i32_0 = arith.constant 0 : i32
    %c0_i32_1 = arith.constant 0 : i32
    return %c0_i32, %c0_i32_0 : i32, i32
  }
  func.func @transform_1(%arg0: i32) -> (i32, i32) {
    %c0_i32 = arith.constant 0 : i32
    %c0_i32_0 = arith.constant 0 : i32
    return %c0_i32, %arg0 : i32, i32
  }
  func.func @transform_2(%arg0: i32) -> (i32, i32) {
    %c0_i32 = arith.constant 0 : i32
    %c0_i32_0 = arith.constant 0 : i32
    return %c0_i32, %arg0 : i32, i32
  }
  func.func @transform_3(%arg0: i32) -> (i32, i32) {
    %c0_i32 = arith.constant 0 : i32
    %c0_i32_0 = arith.constant 0 : i32
    return %c0_i32, %arg0 : i32, i32
  }
}

</mosaic_0001>

<llo_original>
// kernel: encoder_forward.4
$region0: #{encoder_forward.4}
  #allocation0 [shape = 'u32[]', space=smem, size = 0x4, offset = 0x4, fixed_abs, tag = 'smem constant byte address 0x4 - core index']
  #allocation1 [shape = 'u32[144,128]{1,0:T(1,128)}', space=vmem, size = 0x12000, scoped, tag = 'internal scratch']
  #allocation2 [shape = 'f32[1]{0:T(128)S(6)}', space=smem, size = 0x200, scoped, tag = 'scoped memory for encoder_forward.4']
  %s0 = inlined_call_operand.vmem [shape: f32[16,49], index: 0, kind: input, shape index: {}]
  %s1 = inlined_call_operand.vmem [shape: f32[49,1800], index: 1, kind: input, shape index: {}]
  %s2 = inlined_call_operand.vmem [shape: f32[16,2], index: 2, kind: input, shape index: {}]
  %s3 = inlined_call_operand.<no memory space> [shape: f32[1], index: 3, kind: input, shape index: {}]
  %s4 = inlined_call_operand.vmem [shape: f32[16,1800], index: 4, kind: output, shape index: {}]
  %s5 = sld [smem:[#allocation0]]
  $region26: #{encoder_forward.4} parent=0
    _
  %s7 = ssub.s32 1, %s5
  %s8 = scalar_select 0, %s7, %s5
  %9 = sst [smem:[#allocation2]] %s3
  // Predicated region
  $region2: #{encoder_forward.4} parent=0 // pred_check
    _
  $region3: #{encoder_forward.4} parent=0 // pred_check_branch
    %11 = sbr.rel (0) target = $region5
  $region4: #{encoder_forward.4} parent=0 // pred_region
    _
  $region5: #{encoder_forward.4} parent=0 // pred_fallthru
    _
  // Predicated region
  $region6: #{encoder_forward.4} parent=0 // pred_check
    _
  $region7: #{encoder_forward.4} parent=0 // pred_check_branch
    %13 = sbr.rel (0) target = $region9
  $region8: #{encoder_forward.4} parent=0 // pred_region
    _
  $region9: #{encoder_forward.4} parent=0 // pred_fallthru
    _
  // Predicated region
  $region10: #{encoder_forward.4} parent=0 // pred_check
    _
  $region11: #{encoder_forward.4} parent=0 // pred_check_branch
    %15 = sbr.rel (0) target = $region13
  $region12: #{encoder_forward.4} parent=0 // pred_region
    _
  $region13: #{encoder_forward.4} parent=0 // pred_fallthru
    _
  // Predicated region
  $region14: #{encoder_forward.4} parent=0 // pred_check
    _
  $region15: #{encoder_forward.4} parent=0 // pred_check_branch
    %17 = sbr.rel (0) target = $region17
  $region16: #{encoder_forward.4} parent=0 // pred_region
    _
  $region17: #{encoder_forward.4} parent=0 // pred_fallthru
    _
  %v18 = vld [vmem:[%s0] sm:$0xff]
  %v19 = vld [vmem:[%s0 + $0x8] sm:$0xff]
  %v20 = vld [vmem:[%s1] sm:$0xff]
  %v21 = vld [vmem:[%s1 + $0x8] sm:$0xff]
  %v22 = vld [vmem:[%s1 + $0x10] sm:$0xff]
  %v23 = vld [vmem:[%s1 + $0x18] sm:$0xff]
  %v24 = vld [vmem:[%s1 + $0x20] sm:$0xff]
  %v25 = vld [vmem:[%s1 + $0x28] sm:$0xff]
  %v26 = vld [vmem:[%s1 + $0x30] sm:$0xff]
  %v27 = vld [vmem:[%s1 + $0x38] sm:$0xff]
  %v28 = vld [vmem:[%s1 + $0x40] sm:$0xff]
  %v29 = vld [vmem:[%s1 + $0x48] sm:$0xff]
  %v30 = vld [vmem:[%s1 + $0x50] sm:$0xff]
  %v31 = vld [vmem:[%s1 + $0x58] sm:$0xff]
  %v32 = vld [vmem:[%s1 + $0x60] sm:$0xff]
  %v33 = vld [vmem:[%s1 + $0x68] sm:$0xff]
  %v34 = vld [vmem:[%s1 + $0x70] sm:$0xff]
  %v35 = vld [vmem:[%s1 + $0x78] sm:$0xff]
  %v36 = vld [vmem:[%s1 + $0x80] sm:$0xff]
  %v37 = vld [vmem:[%s1 + $0x88] sm:$0xff]
  %v38 = vld [vmem:[%s1 + $0x90] sm:$0xff]
  %v39 = vld [vmem:[%s1 + $0x98] sm:$0xff]
  %v40 = vld [vmem:[%s1 + $0xa0] sm:$0xff]
  %v41 = vld [vmem:[%s1 + $0xa8] sm:$0xff]
  %v42 = vld [vmem:[%s1 + $0xb0] sm:$0xff]
  %v43 = vld [vmem:[%s1 + $0xb8] sm:$0xff]
  %v44 = vld [vmem:[%s1 + $0xc0] sm:$0xff]
  %v45 = vld [vmem:[%s1 + $0xc8] sm:$0xff]
  %v46 = vld [vmem:[%s1 + $0xd0] sm:$0xff]
  %v47 = vld [vmem:[%s1 + $0xd8] sm:$0xff]
  %v48 = vld [vmem:[%s1 + $0xe0] sm:$0xff]
  %v49 = vld [vmem:[%s1 + $0xe8] sm:$0xff]
  %v50 = vld [vmem:[%s1 + $0xf0] sm:$0xff]
  %v51 = vld [vmem:[%s1 + $0xf8] sm:$0xff]
  %v52 = vld [vmem:[%s1 + $0x100] sm:$0xff]
  %v53 = vld [vmem:[%s1 + $0x108] sm:$0xff]
  %v54 = vld [vmem:[%s1 + $0x110] sm:$0xff]
  %v55 = vld [vmem:[%s1 + $0x118] sm:$0xff]
  %v56 = vld [vmem:[%s1 + $0x120] sm:$0xff]
  %v57 = vld [vmem:[%s1 + $0x128] sm:$0xff]
  %v58 = vld [vmem:[%s1 + $0x130] sm:$0xff]
  %v59 = vld [vmem:[%s1 + $0x138] sm:$0xff]
  %v60 = vld [vmem:[%s1 + $0x140] sm:$0xff]
  %v61 = vld [vmem:[%s1 + $0x148] sm:$0xff]
  %v62 = vld [vmem:[%s1 + $0x150] sm:$0xff]
  %v63 = vld [vmem:[%s1 + $0x158] sm:$0xff]
  %v64 = vld [vmem:[%s1 + $0x160] sm:$0xff]
  %v65 = vld [vmem:[%s1 + $0x168] sm:$0xff]
  %v66 = vld [vmem:[%s1 + $0x170] sm:$0xff]
  %v67 = vld [vmem:[%s1 + $0x178] sm:$0xff]
  %v68 = vld [vmem:[%s1 + $0x180] sm:$0xff]
  %v69 = vld [vmem:[%s1 + $0x188] sm:$0xff]
  %v70 = vld [vmem:[%s1 + $0x190] sm:$0xff]
  %v71 = vld [vmem:[%s1 + $0x198] sm:$0xff]
  %v72 = vld [vmem:[%s1 + $0x1a0] sm:$0xff]
  %v73 = vld [vmem:[%s1 + $0x1a8] sm:$0xff]
  %v74 = vld [vmem:[%s1 + $0x1b0] sm:$0xff]
  %v75 = vld [vmem:[%s1 + $0x1b8] sm:$0xff]
  %v76 = vld [vmem:[%s1 + $0x1c0] sm:$0xff]
  %v77 = vld [vmem:[%s1 + $0x1c8] sm:$0xff]
  %v78 = vld [vmem:[%s1 + $0x1d0] sm:$0xff]
  %v79 = vld [vmem:[%s1 + $0x1d8] sm:$0xff]
  %v80 = vld [vmem:[%s1 + $0x1e0] sm:$0xff]
  %v81 = vld [vmem:[%s1 + $0x1e8] sm:$0xff]
  %v82 = vld [vmem:[%s1 + $0x1f0] sm:$0xff]
  %v83 = vld [vmem:[%s1 + $0x1f8] sm:$0xff]
  %v84 = vld [vmem:[%s1 + $0x200] sm:$0xff]
  %v85 = vld [vmem:[%s1 + $0x208] sm:$0xff]
  %v86 = vld [vmem:[%s1 + $0x210] sm:$0xff]
  %v87 = vld [vmem:[%s1 + $0x218] sm:$0xff]
  %v88 = vld [vmem:[%s1 + $0x220] sm:$0xff]
  %v89 = vld [vmem:[%s1 + $0x228] sm:$0xff]
  %v90 = vld [vmem:[%s1 + $0x230] sm:$0xff]
  %v91 = vld [vmem:[%s1 + $0x238] sm:$0xff]
  %v92 = vld [vmem:[%s1 + $0x240] sm:$0xff]
  %v93 = vld [vmem:[%s1 + $0x248] sm:$0xff]
  %v94 = vld [vmem:[%s1 + $0x250] sm:$0xff]
  %v95 = vld [vmem:[%s1 + $0x258] sm:$0xff]
  %v96 = vld [vmem:[%s1 + $0x260] sm:$0xff]
  %v97 = vld [vmem:[%s1 + $0x268] sm:$0xff]
  %v98 = vld [vmem:[%s1 + $0x270] sm:$0xff]
  %v99 = vld [vmem:[%s1 + $0x278] sm:$0xff]
  %v100 = vld [vmem:[%s1 + $0x280] sm:$0xff]
  %v101 = vld [vmem:[%s1 + $0x288] sm:$0xff]
  %v102 = vld [vmem:[%s1 + $0x290] sm:$0xff]
  %v103 = vld [vmem:[%s1 + $0x298] sm:$0xff]
  %v104 = vld [vmem:[%s1 + $0x2a0] sm:$0xff]
  %v105 = vld [vmem:[%s1 + $0x2a8] sm:$0xff]
  %v106 = vld [vmem:[%s1 + $0x2b0] sm:$0xff]
  %v107 = vld [vmem:[%s1 + $0x2b8] sm:$0xff]
  %v108 = vld [vmem:[%s1 + $0x2c0] sm:$0xff]
  %v109 = vld [vmem:[%s1 + $0x2c8] sm:$0xff]
  %v110 = vld [vmem:[%s1 + $0x2d0] sm:$0x1]
  %v111 = vld [vmem:[%s1 + $0x2d8] sm:$0x1]
  %v112 = vld [vmem:[%s1 + $0x2e0] sm:$0x1]
  %v113 = vld [vmem:[%s1 + $0x2e8] sm:$0x1]
  %v114 = vld [vmem:[%s1 + $0x2f0] sm:$0x1]
  %v115 = vld [vmem:[%s1 + $0x2f8] sm:$0x1]
  %v116 = vld [vmem:[%s1 + $0x300] sm:$0x1]
  %v117 = vld [vmem:[%s1 + $0x308] sm:$0x1]
  %v118 = vld [vmem:[%s1 + $0x310] sm:$0x1]
  %v119 = vld [vmem:[%s1 + $0x318] sm:$0x1]
  %v120 = vld [vmem:[%s1 + $0x320] sm:$0x1]
  %v121 = vld [vmem:[%s1 + $0x328] sm:$0x1]
  %v122 = vld [vmem:[%s1 + $0x330] sm:$0x1]
  %v123 = vld [vmem:[%s1 + $0x338] sm:$0x1]
  %v124 = vld [vmem:[%s1 + $0x340] sm:$0x1]
  %vm125 = vcmask 400384
  %v127 = vsel %vm125, %v18, 0
  %v130 = vsel %vm125, %v19, 0
  %vm132 = vcmask 1040384
  %v134 = vsel %vm132, %v110, 0
  %v137 = vsel %vm132, %v111, 0
  %v140 = vsel %vm132, %v112, 0
  %v143 = vsel %vm132, %v113, 0
  %v146 = vsel %vm132, %v114, 0
  %v149 = vsel %vm132, %v115, 0
  %v152 = vsel %vm132, %v116, 0
  %v155 = vsel %vm132, %v117, 0
  %v158 = vsel %vm132, %v118, 0
  %v161 = vsel %vm132, %v119, 0
  %v164 = vsel %vm132, %v120, 0
  %v167 = vsel %vm132, %v121, 0
  %v170 = vsel %vm132, %v122, 0
  %v173 = vsel %vm132, %v123, 0
  %v176 = vsel %vm132, %v124, 0
  %178 = vmatprep.subr.mxu0 %v21
  %179 = vmatpush1.msra.mxu0 %v20
  %180 = vmatprep.subr.mxu0 %v36
  %181 = vmatpush1.msra.mxu0 %v35
  %182 = vmatprep.subr.mxu0 %v51
  %183 = vmatpush1.msra.mxu0 %v50
  %184 = vmatprep.subr.mxu0 %v66
  %185 = vmatpush1.msra.mxu0 %v65
  %186 = vmatprep.subr.mxu0 %v81
  %187 = vmatpush1.msra.mxu0 %v80
  %188 = vmatprep.subr.mxu0 %v96
  %189 = vmatpush1.msra.mxu0 %v95
  %190 = vmatprep.subr.mxu0 %v137
  %191 = vmatpush1.msra.mxu0 %v134
  %192 = vmatprep.subr.mxu0 0.0
  %193 = vmatpush1.msra.mxu0 0.0
  %194 = vmatprep.subr.mxu0 0.0
  %195 = vmatpush1.msra.mxu0 0.0
  %196 = vmatprep.subr.mxu0 0.0
  %197 = vmatpush1.msra.mxu0 0.0
  %198 = vmatprep.subr.mxu0 0.0
  %199 = vmatpush1.msra.mxu0 0.0
  %200 = vmatprep.subr.mxu0 0.0
  %201 = vmatpush1.msra.mxu0 0.0
  %202 = vmatprep.subr.mxu0 0.0
  %203 = vmatpush1.msra.mxu0 0.0
  %204 = vmatprep.subr.mxu0 0.0
  %205 = vmatpush1.msra.mxu0 0.0
  %206 = vmatprep.subr.mxu0 0.0
  %207 = vmatpush1.msra.mxu0 0.0
  %208 = vmatprep.subr.mxu0 0.0
  %209 = vmatpush1.msra.mxu0 0.0
  %210 = vmatprep.subr.mxu0 0.0
  %211 = vmatpush1.msra.mxu0 0.0
  %212 = vmatprep.subr.mxu0 0.0
  %213 = vmatpush1.msra.mxu0 0.0
  %214 = vmatprep.subr.mxu0 0.0
  %215 = vmatpush1.msra.mxu0 0.0
  %216 = vmatprep.subr.mxu0 0.0
  %217 = vmatpush1.msra.mxu0 0.0
  %218 = vmatprep.subr.mxu0 0.0
  %219 = vmatpush1.msra.mxu0 0.0
  %220 = vmatprep.subr.mxu0 0.0
  %221 = vmatpush1.msra.mxu0 0.0
  %222 = vmatprep.subr.mxu0 0.0
  %223 = vmatpush1.msra.mxu0 0.0
  %224 = vmatprep.subr.mxu0 0.0
  %225 = vmatpush1.msra.mxu0 0.0
  %226 = vmatprep.subr.mxu0 0.0
  %227 = vmatpush1.msra.mxu0 0.0
  %228 = vmatprep.subr.mxu0 0.0
  %229 = vmatpush1.msra.mxu0 0.0
  %230 = vmatprep.subr.mxu0 0.0
  %231 = vmatpush1.msra.mxu0 0.0
  %232 = vmatprep.subr.mxu0 0.0
  %233 = vmatpush1.msra.mxu0 0.0
  %234 = vmatprep.subr.mxu0 0.0
  %235 = vmatpush1.msra.mxu0 0.0
  %236 = vmatprep.subr.mxu0 0.0
  %237 = vmatpush1.msra.mxu0 0.0
  %238 = vmatprep.subr.mxu0 0.0
  %239 = vmatpush1.msra.mxu0 0.0
  %240 = vmatprep.subr.mxu0 0.0
  %241 = vmatpush1.msra.mxu0 0.0
  %242 = vmatprep.mubr.f32.mxu0 0.0
  %243 = vmatmul.mubr.f32.gmra.mrb[0].mxu0 %v127
  %v244 = vpop.f32.mrb[0].mxu0
  %v245 = vadd.f32 0.0, %v244
  %v246 = vpop.f32.mrb[0].mxu0
  %v247 = vadd.f32 0.0, %v246
  %248 = vmatprep.mubr.f32.mxu0 0.0
  %249 = vmatmul.mubr.f32.gmra.mrb[0].mxu0 %v130
  %v250 = vpop.f32.mrb[0].mxu0
  %v251 = vadd.f32 0.0, %v250
  %v252 = vpop.f32.mrb[0].mxu0
  %v253 = vadd.f32 0.0, %v252
  %254 = vdwg.mxu0
  %255 = vmatprep.subr.mxu0 %v23
  %256 = vmatpush1.msra.mxu0 %v22
  %257 = vmatprep.subr.mxu0 %v38
  %258 = vmatpush1.msra.mxu0 %v37
  %259 = vmatprep.subr.mxu0 %v53
  %260 = vmatpush1.msra.mxu0 %v52
  %261 = vmatprep.subr.mxu0 %v68
  %262 = vmatpush1.msra.mxu0 %v67
  %263 = vmatprep.subr.mxu0 %v83
  %264 = vmatpush1.msra.mxu0 %v82
  %265 = vmatprep.subr.mxu0 %v98
  %266 = vmatpush1.msra.mxu0 %v97
  %267 = vmatprep.subr.mxu0 %v143
  %268 = vmatpush1.msra.mxu0 %v140
  %269 = vmatprep.subr.mxu0 0.0
  %270 = vmatpush1.msra.mxu0 0.0
  %271 = vmatprep.subr.mxu0 0.0
  %272 = vmatpush1.msra.mxu0 0.0
  %273 = vmatprep.subr.mxu0 0.0
  %274 = vmatpush1.msra.mxu0 0.0
  %275 = vmatprep.subr.mxu0 0.0
  %276 = vmatpush1.msra.mxu0 0.0
  %277 = vmatprep.subr.mxu0 0.0
  %278 = vmatpush1.msra.mxu0 0.0
  %279 = vmatprep.subr.mxu0 0.0
  %280 = vmatpush1.msra.mxu0 0.0
  %281 = vmatprep.subr.mxu0 0.0
  %282 = vmatpush1.msra.mxu0 0.0
  %283 = vmatprep.subr.mxu0 0.0
  %284 = vmatpush1.msra.mxu0 0.0
  %285 = vmatprep.subr.mxu0 0.0
  %286 = vmatpush1.msra.mxu0 0.0
  %287 = vmatprep.subr.mxu0 0.0
  %288 = vmatpush1.msra.mxu0 0.0
  %289 = vmatprep.subr.mxu0 0.0
  %290 = vmatpush1.msra.mxu0 0.0
  %291 = vmatprep.subr.mxu0 0.0
  %292 = vmatpush1.msra.mxu0 0.0
  %293 = vmatprep.subr.mxu0 0.0
  %294 = vmatpush1.msra.mxu0 0.0
  %295 = vmatprep.subr.mxu0 0.0
  %296 = vmatpush1.msra.mxu0 0.0
  %297 = vmatprep.subr.mxu0 0.0
  %298 = vmatpush1.msra.mxu0 0.0
  %299 = vmatprep.subr.mxu0 0.0
  %300 = vmatpush1.msra.mxu0 0.0
  %301 = vmatprep.subr.mxu0 0.0
  %302 = vmatpush1.msra.mxu0 0.0
  %303 = vmatprep.subr.mxu0 0.0
  %304 = vmatpush1.msra.mxu0 0.0
  %305 = vmatprep.subr.mxu0 0.0
  %306 = vmatpush1.msra.mxu0 0.0
  %307 = vmatprep.subr.mxu0 0.0
  %308 = vmatpush1.msra.mxu0 0.0
  %309 = vmatprep.subr.mxu0 0.0
  %310 = vmatpush1.msra.mxu0 0.0
  %311 = vmatprep.subr.mxu0 0.0
  %312 = vmatpush1.msra.mxu0 0.0
  %313 = vmatprep.subr.mxu0 0.0
  %314 = vmatpush1.msra.mxu0 0.0
  %315 = vmatprep.subr.mxu0 0.0
  %316 = vmatpush1.msra.mxu0 0.0
  %317 = vmatprep.subr.mxu0 0.0
  %318 = vmatpush1.msra.mxu0 0.0
  %319 = vmatprep.mubr.f32.mxu0 0.0
  %320 = vmatmul.mubr.f32.gmra.mrb[0].mxu0 %v127
  %v321 = vpop.f32.mrb[0].mxu0
  %v322 = vadd.f32 0.0, %v321
  %v323 = vpop.f32.mrb[0].mxu0
  %v324 = vadd.f32 0.0, %v323
  %325 = vmatprep.mubr.f32.mxu0 0.0
  %326 = vmatmul.mubr.f32.gmra.mrb[0].mxu0 %v130
  %v327 = vpop.f32.mrb[0].mxu0
  %v328 = vadd.f32 0.0, %v327
  %v329 = vpop.f32.mrb[0].mxu0
  %v330 = vadd.f32 0.0, %v329
  %331 = vdwg.mxu0
  %332 = vmatprep.subr.mxu0 %v25
  %333 = vmatpush1.msra.mxu0 %v24
  %334 = vmatprep.subr.mxu0 %v40
  %335 = vmatpush1.msra.mxu0 %v39
  %336 = vmatprep.subr.mxu0 %v55
  %337 = vmatpush1.msra.mxu0 %v54
  %338 = vmatprep.subr.mxu0 %v70
  %339 = vmatpush1.msra.mxu0 %v69
  %340 = vmatprep.subr.mxu0 %v85
  %341 = vmatpush1.msra.mxu0 %v84
  %342 = vmatprep.subr.mxu0 %v100
  %343 = vmatpush1.msra.mxu0 %v99
  %344 = vmatprep.subr.mxu0 %v149
  %345 = vmatpush1.msra.mxu0 %v146
  %346 = vmatprep.subr.mxu0 0.0
  %347 = vmatpush1.msra.mxu0 0.0
  %348 = vmatprep.subr.mxu0 0.0
  %349 = vmatpush1.msra.mxu0 0.0
  %350 = vmatprep.subr.mxu0 0.0
  %351 = vmatpush1.msra.mxu0 0.0
  %352 = vmatprep.subr.mxu0 0.0
  %353 = vmatpush1.msra.mxu0 0.0
  %354 = vmatprep.subr.mxu0 0.0
  %355 = vmatpush1.msra.mxu0 0.0
  %356 = vmatprep.subr.mxu0 0.0
  %357 = vmatpush1.msra.mxu0 0.0
  %358 = vmatprep.subr.mxu0 0.0
  %359 = vmatpush1.msra.mxu0 0.0
  %360 = vmatprep.subr.mxu0 0.0
  %361 = vmatpush1.msra.mxu0 0.0
  %362 = vmatprep.subr.mxu0 0.0
  %363 = vmatpush1.msra.mxu0 0.0
  %364 = vmatprep.subr.mxu0 0.0
  %365 = vmatpush1.msra.mxu0 0.0
  %366 = vmatprep.subr.mxu0 0.0
  %367 = vmatpush1.msra.mxu0 0.0
  %368 = vmatprep.subr.mxu0 0.0
  %369 = vmatpush1.msra.mxu0 0.0
  %370 = vmatprep.subr.mxu0 0.0
  %371 = vmatpush1.msra.mxu0 0.0
  %372 = vmatprep.subr.mxu0 0.0
  %373 = vmatpush1.msra.mxu0 0.0
  %374 = vmatprep.subr.mxu0 0.0
  %375 = vmatpush1.msra.mxu0 0.0
  %376 = vmatprep.subr.mxu0 0.0
  %377 = vmatpush1.msra.mxu0 0.0
  %378 = vmatprep.subr.mxu0 0.0
  %379 = vmatpush1.msra.mxu0 0.0
  %380 = vmatprep.subr.mxu0 0.0
  %381 = vmatpush1.msra.mxu0 0.0
  %382 = vmatprep.subr.mxu0 0.0
  %383 = vmatpush1.msra.mxu0 0.0
  %384 = vmatprep.subr.mxu0 0.0
  %385 = vmatpush1.msra.mxu0 0.0
  %386 = vmatprep.subr.mxu0 0.0
  %387 = vmatpush1.msra.mxu0 0.0
  %388 = vmatprep.subr.mxu0 0.0
  %389 = vmatpush1.msra.mxu0 0.0
  %390 = vmatprep.subr.mxu0 0.0
  %391 = vmatpush1.msra.mxu0 0.0
  %392 = vmatprep.subr.mxu0 0.0
  %393 = vmatpush1.msra.mxu0 0.0
  %394 = vmatprep.subr.mxu0 0.0
  %395 = vmatpush1.msra.mxu0 0.0
  %396 = vmatprep.mubr.f32.mxu0 0.0
  %397 = vmatmul.mubr.f32.gmra.mrb[0].mxu0 %v127
  %v398 = vpop.f32.mrb[0].mxu0
  %v399 = vadd.f32 0.0, %v398
  %v400 = vpop.f32.mrb[0].mxu0
  %v401 = vadd.f32 0.0, %v400
  %402 = vmatprep.mubr.f32.mxu0 0.0
  %403 = vmatmul.mubr.f32.gmra.mrb[0].mxu0 %v130
  %v404 = vpop.f32.mrb[0].mxu0
  %v405 = vadd.f32 0.0, %v404
  %v406 = vpop.f32.mrb[0].mxu0
  %v407 = vadd.f32 0.0, %v406
  %408 = vdwg.mxu0
  %409 = vmatprep.subr.mxu0 %v27
  %410 = vmatpush1.msra.mxu0 %v26
  %411 = vmatprep.subr.mxu0 %v42
  %412 = vmatpush1.msra.mxu0 %v41
  %413 = vmatprep.subr.mxu0 %v57
  %414 = vmatpush1.msra.mxu0 %v56
  %415 = vmatprep.subr.mxu0 %v72
  %416 = vmatpush1.msra.mxu0 %v71
  %417 = vmatprep.subr.mxu0 %v87
  %418 = vmatpush1.msra.mxu0 %v86
  %419 = vmatprep.subr.mxu0 %v102
  %420 = vmatpush1.msra.mxu0 %v101
  %421 = vmatprep.subr.mxu0 %v155
  %422 = vmatpush1.msra.mxu0 %v152
  %423 = vmatprep.subr.mxu0 0.0
  %424 = vmatpush1.msra.mxu0 0.0
  %425 = vmatprep.subr.mxu0 0.0
  %426 = vmatpush1.msra.mxu0 0.0
  %427 = vmatprep.subr.mxu0 0.0
  %428 = vmatpush1.msra.mxu0 0.0
  %429 = vmatprep.subr.mxu0 0.0
  %430 = vmatpush1.msra.mxu0 0.0
  %431 = vmatprep.subr.mxu0 0.0
  %432 = vmatpush1.msra.mxu0 0.0
  %433 = vmatprep.subr.mxu0 0.0
  %434 = vmatpush1.msra.mxu0 0.0
  %435 = vmatprep.subr.mxu0 0.0
  %436 = vmatpush1.msra.mxu0 0.0
  %437 = vmatprep.subr.mxu0 0.0
  %438 = vmatpush1.msra.mxu0 0.0
  %439 = vmatprep.subr.mxu0 0.0
  %440 = vmatpush1.msra.mxu0 0.0
  %441 = vmatprep.subr.mxu0 0.0
  %442 = vmatpush1.msra.mxu0 0.0
  %443 = vmatprep.subr.mxu0 0.0
  %444 = vmatpush1.msra.mxu0 0.0
  %445 = vmatprep.subr.mxu0 0.0
  %446 = vmatpush1.msra.mxu0 0.0
  %447 = vmatprep.subr.mxu0 0.0
  %448 = vmatpush1.msra.mxu0 0.0
  %449 = vmatprep.subr.mxu0 0.0
  %450 = vmatpush1.msra.mxu0 0.0
  %451 = vmatprep.subr.mxu0 0.0
  %452 = vmatpush1.msra.mxu0 0.0
  %453 = vmatprep.subr.mxu0 0.0
  %454 = vmatpush1.msra.mxu0 0.0
  %455 = vmatprep.subr.mxu0 0.0
  %456 = vmatpush1.msra.mxu0 0.0
  %457 = vmatprep.subr.mxu0 0.0
  %458 = vmatpush1.msra.mxu0 0.0
  %459 = vmatprep.subr.mxu0 0.0
  %460 = vmatpush1.msra.mxu0 0.0
  %461 = vmatprep.subr.mxu0 0.0
  %462 = vmatpush1.msra.mxu0 0.0
  %463 = vmatprep.subr.mxu0 0.0
  %464 = vmatpush1.msra.mxu0 0.0
  %465 = vmatprep.subr.mxu0 0.0
  %466 = vmatpush1.msra.mxu0 0.0
  %467 = vmatprep.subr.mxu0 0.0
  %468 = vmatpush1.msra.mxu0 0.0
  %469 = vmatprep.subr.mxu0 0.0
  %470 = vmatpush1.msra.mxu0 0.0
  %471 = vmatprep.subr.mxu0 0.0
  %472 = vmatpush1.msra.mxu0 0.0
  %473 = vmatprep.mubr.f32.mxu0 0.0
  %474 = vmatmul.mubr.f32.gmra.mrb[0].mxu0 %v127
  %v475 = vpop.f32.mrb[0].mxu0
  %v476 = vadd.f32 0.0, %v475
  %v477 = vpop.f32.mrb[0].mxu0
  %v478 = vadd.f32 0.0, %v477
  %479 = vmatprep.mubr.f32.mxu0 0.0
  %480 = vmatmul.mubr.f32.gmra.mrb[0].mxu0 %v130
  %v481 = vpop.f32.mrb[0].mxu0
  %v482 = vadd.f32 0.0, %v481
  %v483 = vpop.f32.mrb[0].mxu0
  %v484 = vadd.f32 0.0, %v483
  %485 = vdwg.mxu0
  %486 = vmatprep.subr.mxu0 %v29
  %487 = vmatpush1.msra.mxu0 %v28
  %488 = vmatprep.subr.mxu0 %v44
  %489 = vmatpush1.msra.mxu0 %v43
  %490 = vmatprep.subr.mxu0 %v59
  %491 = vmatpush1.msra.mxu0 %v58
  %492 = vmatprep.subr.mxu0 %v74
  %493 = vmatpush1.msra.mxu0 %v73
  %494 = vmatprep.subr.mxu0 %v89
  %495 = vmatpush1.msra.mxu0 %v88
  %496 = vmatprep.subr.mxu0 %v104
  %497 = vmatpush1.msra.mxu0 %v103
  %498 = vmatprep.subr.mxu0 %v161
  %499 = vmatpush1.msra.mxu0 %v158
  %500 = vmatprep.subr.mxu0 0.0
  %501 = vmatpush1.msra.mxu0 0.0
  %502 = vmatprep.subr.mxu0 0.0
  %503 = vmatpush1.msra.mxu0 0.0
  %504 = vmatprep.subr.mxu0 0.0
  %505 = vmatpush1.msra.mxu0 0.0
  %506 = vmatprep.subr.mxu0 0.0
  %507 = vmatpush1.msra.mxu0 0.0
  %508 = vmatprep.subr.mxu0 0.0
  %509 = vmatpush1.msra.mxu0 0.0
  %510 = vmatprep.subr.mxu0 0.0
  %511 = vmatpush1.msra.mxu0 0.0
  %512 = vmatprep.subr.mxu0 0.0
  %513 = vmatpush1.msra.mxu0 0.0
  %514 = vmatprep.subr.mxu0 0.0
  %515 = vmatpush1.msra.mxu0 0.0
  %516 = vmatprep.subr.mxu0 0.0
  %517 = vmatpush1.msra.mxu0 0.0
  %518 = vmatprep.subr.mxu0 0.0
  %519 = vmatpush1.msra.mxu0 0.0
  %520 = vmatprep.subr.mxu0 0.0
  %521 = vmatpush1.msra.mxu0 0.0
  %522 = vmatprep.subr.mxu0 0.0
  %523 = vmatpush1.msra.mxu0 0.0
  %524 = vmatprep.subr.mxu0 0.0
  %525 = vmatpush1.msra.mxu0 0.0
  %526 = vmatprep.subr.mxu0 0.0
  %527 = vmatpush1.msra.mxu0 0.0
  %528 = vmatprep.subr.mxu0 0.0
  %529 = vmatpush1.msra.mxu0 0.0
  %530 = vmatprep.subr.mxu0 0.0
  %531 = vmatpush1.msra.mxu0 0.0
  %532 = vmatprep.subr.mxu0 0.0
  %533 = vmatpush1.msra.mxu0 0.0
  %534 = vmatprep.subr.mxu0 0.0
  %535 = vmatpush1.msra.mxu0 0.0
  %536 = vmatprep.subr.mxu0 0.0
  %537 = vmatpush1.msra.mxu0 0.0
  %538 = vmatprep.subr.mxu0 0.0
  %539 = vmatpush1.msra.mxu0 0.0
  %540 = vmatprep.subr.mxu0 0.0
  %541 = vmatpush1.msra.mxu0 0.0
  %542 = vmatprep.subr.mxu0 0.0
  %543 = vmatpush1.msra.mxu0 0.0
  %544 = vmatprep.subr.mxu0 0.0
  %545 = vmatpush1.msra.mxu0 0.0
  %546 = vmatprep.subr.mxu0 0.0
  %547 = vmatpush1.msra.mxu0 0.0
  %548 = vmatprep.subr.mxu0 0.0
  %549 = vmatpush1.msra.mxu0 0.0
  %550 = vmatprep.mubr.f32.mxu0 0.0
  %551 = vmatmul.mubr.f32.gmra.mrb[0].mxu0 %v127
  %v552 = vpop.f32.mrb[0].mxu0
  %v553 = vadd.f32 0.0, %v552
  %v554 = vpop.f32.mrb[0].mxu0
  %v555 = vadd.f32 0.0, %v554
  %556 = vmatprep.mubr.f32.mxu0 0.0
  %557 = vmatmul.mubr.f32.gmra.mrb[0].mxu0 %v130
  %v558 = vpop.f32.mrb[0].mxu0
  %v559 = vadd.f32 0.0, %v558
  %v560 = vpop.f32.mrb[0].mxu0
  %v561 = vadd.f32 0.0, %v560
  %562 = vdwg.mxu0
  %563 = vmatprep.subr.mxu0 %v31
  %564 = vmatpush1.msra.mxu0 %v30
  %565 = vmatprep.subr.mxu0 %v46
  %566 = vmatpush1.msra.mxu0 %v45
  %567 = vmatprep.subr.mxu0 %v61
  %568 = vmatpush1.msra.mxu0 %v60
  %569 = vmatprep.subr.mxu0 %v76
  %570 = vmatpush1.msra.mxu0 %v75
  %571 = vmatprep.subr.mxu0 %v91
  %572 = vmatpush1.msra.mxu0 %v90
  %573 = vmatprep.subr.mxu0 %v106
  %574 = vmatpush1.msra.mxu0 %v105
  %575 = vmatprep.subr.mxu0 %v167
  %576 = vmatpush1.msra.mxu0 %v164
  %577 = vmatprep.subr.mxu0 0.0
  %578 = vmatpush1.msra.mxu0 0.0
  %579 = vmatprep.subr.mxu0 0.0
  %580 = vmatpush1.msra.mxu0 0.0
  %581 = vmatprep.subr.mxu0 0.0
  %582 = vmatpush1.msra.mxu0 0.0
  %583 = vmatprep.subr.mxu0 0.0
  %584 = vmatpush1.msra.mxu0 0.0
  %585 = vmatprep.subr.mxu0 0.0
  %586 = vmatpush1.msra.mxu0 0.0
  %587 = vmatprep.subr.mxu0 0.0
  %588 = vmatpush1.msra.mxu0 0.0
  %589 = vmatprep.subr.mxu0 0.0
  %590 = vmatpush1.msra.mxu0 0.0
  %591 = vmatprep.subr.mxu0 0.0
  %592 = vmatpush1.msra.mxu0 0.0
  %593 = vmatprep.subr.mxu0 0.0
  %594 = vmatpush1.msra.mxu0 0.0
  %595 = vmatprep.subr.mxu0 0.0
  %596 = vmatpush1.msra.mxu0 0.0
  %597 = vmatprep.subr.mxu0 0.0
  %598 = vmatpush1.msra.mxu0 0.0
  %599 = vmatprep.subr.mxu0 0.0
  %600 = vmatpush1.msra.mxu0 0.0
  %601 = vmatprep.subr.mxu0 0.0
  %602 = vmatpush1.msra.mxu0 0.0
  %603 = vmatprep.subr.mxu0 0.0
  %604 = vmatpush1.msra.mxu0 0.0
  %605 = vmatprep.subr.mxu0 0.0
  %606 = vmatpush1.msra.mxu0 0.0
  %607 = vmatprep.subr.mxu0 0.0
  %608 = vmatpush1.msra.mxu0 0.0
  %609 = vmatprep.subr.mxu0 0.0
  %610 = vmatpush1.msra.mxu0 0.0
  %611 = vmatprep.subr.mxu0 0.0
  %612 = vmatpush1.msra.mxu0 0.0
  %613 = vmatprep.subr.mxu0 0.0
  %614 = vmatpush1.msra.mxu0 0.0
  %615 = vmatprep.subr.mxu0 0.0
  %616 = vmatpush1.msra.mxu0 0.0
  %617 = vmatprep.subr.mxu0 0.0
  %618 = vmatpush1.msra.mxu0 0.0
  %619 = vmatprep.subr.mxu0 0.0
  %620 = vmatpush1.msra.mxu0 0.0
  %621 = vmatprep.subr.mxu0 0.0
  %622 = vmatpush1.msra.mxu0 0.0
  %623 = vmatprep.subr.mxu0 0.0
  %624 = vmatpush1.msra.mxu0 0.0
  %625 = vmatprep.subr.mxu0 0.0
  %626 = vmatpush1.msra.mxu0 0.0
  %627 = vmatprep.mubr.f32.mxu0 0.0
  %628 = vmatmul.mubr.f32.gmra.mrb[0].mxu0 %v127
  %v629 = vpop.f32.mrb[0].mxu0
  %v630 = vadd.f32 0.0, %v629
  %v631 = vpop.f32.mrb[0].mxu0
  %v632 = vadd.f32 0.0, %v631
  %633 = vmatprep.mubr.f32.mxu0 0.0
  %634 = vmatmul.mubr.f32.gmra.mrb[0].mxu0 %v130
  %v635 = vpop.f32.mrb[0].mxu0
  %v636 = vadd.f32 0.0, %v635
  %v637 = vpop.f32.mrb[0].mxu0
  %v638 = vadd.f32 0.0, %v637
  %639 = vdwg.mxu0
  %640 = vmatprep.subr.mxu0 %v33
  %641 = vmatpush1.msra.mxu0 %v32
  %642 = vmatprep.subr.mxu0 %v48
  %643 = vmatpush1.msra.mxu0 %v47
  %644 = vmatprep.subr.mxu0 %v63
  %645 = vmatpush1.msra.mxu0 %v62
  %646 = vmatprep.subr.mxu0 %v78
  %647 = vmatpush1.msra.mxu0 %v77
  %648 = vmatprep.subr.mxu0 %v93
  %649 = vmatpush1.msra.mxu0 %v92
  %650 = vmatprep.subr.mxu0 %v108
  %651 = vmatpush1.msra.mxu0 %v107
  %652 = vmatprep.subr.mxu0 %v173
  %653 = vmatpush1.msra.mxu0 %v170
  %654 = vmatprep.subr.mxu0 0.0
  %655 = vmatpush1.msra.mxu0 0.0
  %656 = vmatprep.subr.mxu0 0.0
  %657 = vmatpush1.msra.mxu0 0.0
  %658 = vmatprep.subr.mxu0 0.0
  %659 = vmatpush1.msra.mxu0 0.0
  %660 = vmatprep.subr.mxu0 0.0
  %661 = vmatpush1.msra.mxu0 0.0
  %662 = vmatprep.subr.mxu0 0.0
  %663 = vmatpush1.msra.mxu0 0.0
  %664 = vmatprep.subr.mxu0 0.0
  %665 = vmatpush1.msra.mxu0 0.0
  %666 = vmatprep.subr.mxu0 0.0
  %667 = vmatpush1.msra.mxu0 0.0
  %668 = vmatprep.subr.mxu0 0.0
  %669 = vmatpush1.msra.mxu0 0.0
  %670 = vmatprep.subr.mxu0 0.0
  %671 = vmatpush1.msra.mxu0 0.0
  %672 = vmatprep.subr.mxu0 0.0
  %673 = vmatpush1.msra.mxu0 0.0
  %674 = vmatprep.subr.mxu0 0.0
  %675 = vmatpush1.msra.mxu0 0.0
  %676 = vmatprep.subr.mxu0 0.0
  %677 = vmatpush1.msra.mxu0 0.0
  %678 = vmatprep.subr.mxu0 0.0
  %679 = vmatpush1.msra.mxu0 0.0
  %680 = vmatprep.subr.mxu0 0.0
  %681 = vmatpush1.msra.mxu0 0.0
  %682 = vmatprep.subr.mxu0 0.0
  %683 = vmatpush1.msra.mxu0 0.0
  %684 = vmatprep.subr.mxu0 0.0
  %685 = vmatpush1.msra.mxu0 0.0
  %686 = vmatprep.subr.mxu0 0.0
  %687 = vmatpush1.msra.mxu0 0.0
  %688 = vmatprep.subr.mxu0 0.0
  %689 = vmatpush1.msra.mxu0 0.0
  %690 = vmatprep.subr.mxu0 0.0
  %691 = vmatpush1.msra.mxu0 0.0
  %692 = vmatprep.subr.mxu0 0.0
  %693 = vmatpush1.msra.mxu0 0.0
  %694 = vmatprep.subr.mxu0 0.0
  %695 = vmatpush1.msra.mxu0 0.0
  %696 = vmatprep.subr.mxu0 0.0
  %697 = vmatpush1.msra.mxu0 0.0
  %698 = vmatprep.subr.mxu0 0.0
  %699 = vmatpush1.msra.mxu0 0.0
  %700 = vmatprep.subr.mxu0 0.0
  %701 = vmatpush1.msra.mxu0 0.0
  %702 = vmatprep.subr.mxu0 0.0
  %703 = vmatpush1.msra.mxu0 0.0
  %704 = vmatprep.mubr.f32.mxu0 0.0
  %705 = vmatmul.mubr.f32.gmra.mrb[0].mxu0 %v127
  %v706 = vpop.f32.mrb[0].mxu0
  %v707 = vadd.f32 0.0, %v706
  %v708 = vpop.f32.mrb[0].mxu0
  %v709 = vadd.f32 0.0, %v708
  %710 = vmatprep.mubr.f32.mxu0 0.0
  %711 = vmatmul.mubr.f32.gmra.mrb[0].mxu0 %v130
  %v712 = vpop.f32.mrb[0].mxu0
  %v713 = vadd.f32 0.0, %v712
  %v714 = vpop.f32.mrb[0].mxu0
  %v715 = vadd.f32 0.0, %v714
  %716 = vdwg.mxu0
  %717 = vmatprep.subr.mxu0 0.0
  %718 = vmatpush1.msra.mxu0 %v34
  %719 = vmatprep.subr.mxu0 0.0
  %720 = vmatpush1.msra.mxu0 %v49
  %721 = vmatprep.subr.mxu0 0.0
  %722 = vmatpush1.msra.mxu0 %v64
  %723 = vmatprep.subr.mxu0 0.0
  %724 = vmatpush1.msra.mxu0 %v79
  %725 = vmatprep.subr.mxu0 0.0
  %726 = vmatpush1.msra.mxu0 %v94
  %727 = vmatprep.subr.mxu0 0.0
  %728 = vmatpush1.msra.mxu0 %v109
  %729 = vmatprep.subr.mxu0 0.0
  %730 = vmatpush1.msra.mxu0 %v176
  %731 = vmatprep.subr.mxu0 0.0
  %732 = vmatpush1.msra.mxu0 0.0
  %733 = vmatprep.subr.mxu0 0.0
  %734 = vmatpush1.msra.mxu0 0.0
  %735 = vmatprep.subr.mxu0 0.0
  %736 = vmatpush1.msra.mxu0 0.0
  %737 = vmatprep.subr.mxu0 0.0
  %738 = vmatpush1.msra.mxu0 0.0
  %739 = vmatprep.subr.mxu0 0.0
  %740 = vmatpush1.msra.mxu0 0.0
  %741 = vmatprep.subr.mxu0 0.0
  %742 = vmatpush1.msra.mxu0 0.0
  %743 = vmatprep.subr.mxu0 0.0
  %744 = vmatpush1.msra.mxu0 0.0
  %745 = vmatprep.subr.mxu0 0.0
  %746 = vmatpush1.msra.mxu0 0.0
  %747 = vmatprep.subr.mxu0 0.0
  %748 = vmatpush1.msra.mxu0 0.0
  %749 = vmatprep.subr.mxu0 0.0
  %750 = vmatpush1.msra.mxu0 0.0
  %751 = vmatprep.subr.mxu0 0.0
  %752 = vmatpush1.msra.mxu0 0.0
  %753 = vmatprep.subr.mxu0 0.0
  %754 = vmatpush1.msra.mxu0 0.0
  %755 = vmatprep.subr.mxu0 0.0
  %756 = vmatpush1.msra.mxu0 0.0
  %757 = vmatprep.subr.mxu0 0.0
  %758 = vmatpush1.msra.mxu0 0.0
  %759 = vmatprep.subr.mxu0 0.0
  %760 = vmatpush1.msra.mxu0 0.0
  %761 = vmatprep.subr.mxu0 0.0
  %762 = vmatpush1.msra.mxu0 0.0
  %763 = vmatprep.subr.mxu0 0.0
  %764 = vmatpush1.msra.mxu0 0.0
  %765 = vmatprep.subr.mxu0 0.0
  %766 = vmatpush1.msra.mxu0 0.0
  %767 = vmatprep.subr.mxu0 0.0
  %768 = vmatpush1.msra.mxu0 0.0
  %769 = vmatprep.subr.mxu0 0.0
  %770 = vmatpush1.msra.mxu0 0.0
  %771 = vmatprep.subr.mxu0 0.0
  %772 = vmatpush1.msra.mxu0 0.0
  %773 = vmatprep.subr.mxu0 0.0
  %774 = vmatpush1.msra.mxu0 0.0
  %775 = vmatprep.subr.mxu0 0.0
  %776 = vmatpush1.msra.mxu0 0.0
  %777 = vmatprep.subr.mxu0 0.0
  %778 = vmatpush1.msra.mxu0 0.0
  %779 = vmatprep.subr.mxu0 0.0
  %780 = vmatpush1.msra.mxu0 0.0
  %781 = vmatprep.mubr.f32.mxu0 0.0
  %782 = vmatmul.mubr.f32.gmra.mrb[0].mxu0 %v127
  %v783 = vpop.f32.mrb[0].mxu0
  %v784 = vadd.f32 0.0, %v783
  %v785 = vpop.f32.mrb[0].mxu0
  %786 = vmatprep.mubr.f32.mxu0 0.0
  %787 = vmatmul.mubr.f32.gmra.mrb[0].mxu0 %v130
  %v788 = vpop.f32.mrb[0].mxu0
  %v789 = vadd.f32 0.0, %v788
  %v790 = vpop.f32.mrb[0].mxu0
  %791 = vdwg.mxu0
  %v792 = vadd.f32 %v245, %v247
  %v793 = vadd.f32 %v792, %v322
  %v794 = vadd.f32 %v793, %v324
  %v795 = vadd.f32 %v794, %v399
  %v796 = vadd.f32 %v795, %v401
  %v797 = vadd.f32 %v796, %v476
  %v798 = vadd.f32 %v797, %v478
  %v799 = vadd.f32 %v798, %v553
  %v800 = vadd.f32 %v799, %v555
  %v801 = vadd.f32 %v800, %v630
  %v802 = vadd.f32 %v801, %v632
  %v803 = vadd.f32 %v802, %v707
  %v804 = vadd.f32 %v803, %v709
  %vm805 = vcmask 64512
  %v806 = vsel %vm805, %v784, 0.0
  %v807 = vadd.f32 %v804, %v806
  %808 = vadd.xlane.f32.xlu0 %v807
  %v809 = vpop.xlane.xlu0 %808
  %v810 = vadd.f32 %v251, %v253
  %v811 = vadd.f32 %v810, %v328
  %v812 = vadd.f32 %v811, %v330
  %v813 = vadd.f32 %v812, %v405
  %v814 = vadd.f32 %v813, %v407
  %v815 = vadd.f32 %v814, %v482
  %v816 = vadd.f32 %v815, %v484
  %v817 = vadd.f32 %v816, %v559
  %v818 = vadd.f32 %v817, %v561
  %v819 = vadd.f32 %v818, %v636
  %v820 = vadd.f32 %v819, %v638
  %v821 = vadd.f32 %v820, %v713
  %v822 = vadd.f32 %v821, %v715
  %v823 = vsel %vm805, %v789, 0.0
  %v824 = vadd.f32 %v822, %v823
  %825 = vadd.xlane.f32.xlu0 %v824
  %v826 = vpop.xlane.xlu0 %825
  %v827 = vmul.f32 %v245, %v245
  %v828 = vmul.f32 %v247, %v247
  %v829 = vmul.f32 %v322, %v322
  %v830 = vmul.f32 %v324, %v324
  %v831 = vmul.f32 %v399, %v399
  %v832 = vmul.f32 %v401, %v401
  %v833 = vmul.f32 %v476, %v476
  %v834 = vmul.f32 %v478, %v478
  %v835 = vmul.f32 %v553, %v553
  %v836 = vmul.f32 %v555, %v555
  %v837 = vmul.f32 %v630, %v630
  %v838 = vmul.f32 %v632, %v632
  %v839 = vmul.f32 %v707, %v707
  %v840 = vmul.f32 %v709, %v709
  %v841 = vmul.f32 %v784, %v784
  %v842 = vmul.f32 %v251, %v251
  %v843 = vmul.f32 %v253, %v253
  %v844 = vmul.f32 %v328, %v328
  %v845 = vmul.f32 %v330, %v330
  %v846 = vmul.f32 %v405, %v405
  %v847 = vmul.f32 %v407, %v407
  %v848 = vmul.f32 %v482, %v482
  %v849 = vmul.f32 %v484, %v484
  %v850 = vmul.f32 %v559, %v559
  %v851 = vmul.f32 %v561, %v561
  %v852 = vmul.f32 %v636, %v636
  %v853 = vmul.f32 %v638, %v638
  %v854 = vmul.f32 %v713, %v713
  %v855 = vmul.f32 %v715, %v715
  %v856 = vmul.f32 %v789, %v789
  %v857 = vadd.f32 %v827, %v828
  %v858 = vadd.f32 %v857, %v829
  %v859 = vadd.f32 %v858, %v830
  %v860 = vadd.f32 %v859, %v831
  %v861 = vadd.f32 %v860, %v832
  %v862 = vadd.f32 %v861, %v833
  %v863 = vadd.f32 %v862, %v834
  %v864 = vadd.f32 %v863, %v835
  %v865 = vadd.f32 %v864, %v836
  %v866 = vadd.f32 %v865, %v837
  %v867 = vadd.f32 %v866, %v838
  %v868 = vadd.f32 %v867, %v839
  %v869 = vadd.f32 %v868, %v840
  %v870 = vsel %vm805, %v841, 0.0
  %v871 = vadd.f32 %v869, %v870
  %872 = vadd.xlane.f32.xlu0 %v871
  %v873 = vpop.xlane.xlu0 %872
  %v874 = vadd.f32 %v842, %v843
  %v875 = vadd.f32 %v874, %v844
  %v876 = vadd.f32 %v875, %v845
  %v877 = vadd.f32 %v876, %v846
  %v878 = vadd.f32 %v877, %v847
  %v879 = vadd.f32 %v878, %v848
  %v880 = vadd.f32 %v879, %v849
  %v881 = vadd.f32 %v880, %v850
  %v882 = vadd.f32 %v881, %v851
  %v883 = vadd.f32 %v882, %v852
  %v884 = vadd.f32 %v883, %v853
  %v885 = vadd.f32 %v884, %v854
  %v886 = vadd.f32 %v885, %v855
  %v887 = vsel %vm805, %v856, 0.0
  %v888 = vadd.f32 %v886, %v887
  %889 = vadd.xlane.f32.xlu0 %v888
  %v890 = vpop.xlane.xlu0 %889
  %v891 = vmul.f32 %v809, 0.00055555557
  %v892 = vmul.f32 %v826, 0.00055555557
  %v893 = vmul.f32 %v873, 0.00055555557
  %v894 = vmul.f32 %v890, 0.00055555557
  %v895 = vmul.f32 %v891, %v891
  %v896 = vmul.f32 %v892, %v892
  %v897 = vsub.f32 %v893, %v895
  %v898 = vsub.f32 %v894, %v896
  %v899 = vmax.f32 %v897, 0.0
  %v900 = vmax.f32 %v898, 0.0
  %v901 = vld [vmem:[%s2] sm:$0xff]
  %v902 = vld [vmem:[%s2 + $0x8] sm:$0xff]
  %v903 = vadd.f32 %v899, 1e-05
  %v904 = vadd.f32 %v900, 1e-05
  %v905 = vrsqrt.pop %v903
  %v906 = vrsqrt.pop %v904
  %v907 = vmul.f32 %v901, %v905
  %v908 = vmul.f32 %v902, %v906
  %v909 = vmul.f32 %v891, %v907
  %v910 = vmul.f32 %v892, %v908
  %913 = vrot.lane.b32.xlu0 %v909, 1
  %v914 = vpop.permute.xlu0 %913
  %915 = vrot.lane.b32.xlu0 %v910, 1
  %v916 = vpop.permute.xlu0 %915
  %v919 = vsub.f32 %v901, %v914
  %v920 = vsub.f32 %v902, %v916
  %922 = vset.pattern.permute.xlu0 0
  %923 = vperm.xlu0 %922, %v907
  %v924 = vpop.permute.xlu0 %923
  %927 = vset.pattern.permute.xlu0 0
  %928 = vperm.xlu0 %927, %v908
  %v929 = vpop.permute.xlu0 %928
  %v931 = vmul.f32 %v245, %v924
  %v932 = vmul.f32 %v247, %v924
  %v933 = vmul.f32 %v322, %v924
  %v934 = vmul.f32 %v324, %v924
  %v935 = vmul.f32 %v399, %v924
  %v936 = vmul.f32 %v401, %v924
  %v937 = vmul.f32 %v476, %v924
  %v938 = vmul.f32 %v478, %v924
  %v939 = vmul.f32 %v553, %v924
  %v940 = vmul.f32 %v555, %v924
  %v941 = vmul.f32 %v630, %v924
  %v942 = vmul.f32 %v632, %v924
  %v943 = vmul.f32 %v707, %v924
  %v944 = vmul.f32 %v709, %v924
  %v945 = vmul.f32 %v784, %v924
  %v946 = vmul.f32 %v251, %v929
  %v947 = vmul.f32 %v253, %v929
  %v948 = vmul.f32 %v328, %v929
  %v949 = vmul.f32 %v330, %v929
  %v950 = vmul.f32 %v405, %v929
  %v951 = vmul.f32 %v407, %v929
  %v952 = vmul.f32 %v482, %v929
  %v953 = vmul.f32 %v484, %v929
  %v954 = vmul.f32 %v559, %v929
  %v955 = vmul.f32 %v561, %v929
  %v956 = vmul.f32 %v636, %v929
  %v957 = vmul.f32 %v638, %v929
  %v958 = vmul.f32 %v713, %v929
  %v959 = vmul.f32 %v715, %v929
  %v960 = vmul.f32 %v789, %v929
  %962 = vset.pattern.permute.xlu0 1
  %963 = vperm.xlu0 %962, %v919
  %v964 = vpop.permute.xlu0 %963
  %967 = vset.pattern.permute.xlu0 1
  %968 = vperm.xlu0 %967, %v920
  %v969 = vpop.permute.xlu0 %968
  %v971 = vadd.f32 %v931, %v964
  %v972 = vadd.f32 %v932, %v964
  %v973 = vadd.f32 %v933, %v964
  %v974 = vadd.f32 %v934, %v964
  %v975 = vadd.f32 %v935, %v964
  %v976 = vadd.f32 %v936, %v964
  %v977 = vadd.f32 %v937, %v964
  %v978 = vadd.f32 %v938, %v964
  %v979 = vadd.f32 %v939, %v964
  %v980 = vadd.f32 %v940, %v964
  %v981 = vadd.f32 %v941, %v964
  %v982 = vadd.f32 %v942, %v964
  %v983 = vadd.f32 %v943, %v964
  %v984 = vadd.f32 %v944, %v964
  %v985 = vadd.f32 %v945, %v964
  %v986 = vadd.f32 %v946, %v969
  %v987 = vadd.f32 %v947, %v969
  %v988 = vadd.f32 %v948, %v969
  %v989 = vadd.f32 %v949, %v969
  %v990 = vadd.f32 %v950, %v969
  %v991 = vadd.f32 %v951, %v969
  %v992 = vadd.f32 %v952, %v969
  %v993 = vadd.f32 %v953, %v969
  %v994 = vadd.f32 %v954, %v969
  %v995 = vadd.f32 %v955, %v969
  %v996 = vadd.f32 %v956, %v969
  %v997 = vadd.f32 %v957, %v969
  %v998 = vadd.f32 %v958, %v969
  %v999 = vadd.f32 %v959, %v969
  %v1000 = vadd.f32 %v960, %v969
  %s1001 = sld [smem:[#allocation2]]
  %vm1002 = vcmp.ge.f32.partialorder %v971, 0.0
  %vm1003 = vcmp.ge.f32.partialorder %v972, 0.0
  %vm1004 = vcmp.ge.f32.partialorder %v973, 0.0
  %vm1005 = vcmp.ge.f32.partialorder %v974, 0.0
  %vm1006 = vcmp.ge.f32.partialorder %v975, 0.0
  %vm1007 = vcmp.ge.f32.partialorder %v976, 0.0
  %vm1008 = vcmp.ge.f32.partialorder %v977, 0.0
  %vm1009 = vcmp.ge.f32.partialorder %v978, 0.0
  %vm1010 = vcmp.ge.f32.partialorder %v979, 0.0
  %vm1011 = vcmp.ge.f32.partialorder %v980, 0.0
  %vm1012 = vcmp.ge.f32.partialorder %v981, 0.0
  %vm1013 = vcmp.ge.f32.partialorder %v982, 0.0
  %vm1014 = vcmp.ge.f32.partialorder %v983, 0.0
  %vm1015 = vcmp.ge.f32.partialorder %v984, 0.0
  %vm1016 = vcmp.ge.f32.partialorder %v985, 0.0
  %vm1017 = vcmp.ge.f32.partialorder %v986, 0.0
  %vm1018 = vcmp.ge.f32.partialorder %v987, 0.0
  %vm1019 = vcmp.ge.f32.partialorder %v988, 0.0
  %vm1020 = vcmp.ge.f32.partialorder %v989, 0.0
  %vm1021 = vcmp.ge.f32.partialorder %v990, 0.0
  %vm1022 = vcmp.ge.f32.partialorder %v991, 0.0
  %vm1023 = vcmp.ge.f32.partialorder %v992, 0.0
  %vm1024 = vcmp.ge.f32.partialorder %v993, 0.0
  %vm1025 = vcmp.ge.f32.partialorder %v994, 0.0
  %vm1026 = vcmp.ge.f32.partialorder %v995, 0.0
  %vm1027 = vcmp.ge.f32.partialorder %v996, 0.0
  %vm1028 = vcmp.ge.f32.partialorder %v997, 0.0
  %vm1029 = vcmp.ge.f32.partialorder %v998, 0.0
  %vm1030 = vcmp.ge.f32.partialorder %v999, 0.0
  %vm1031 = vcmp.ge.f32.partialorder %v1000, 0.0
  %v1032 = vstv %s1001
  %v1033 = vmul.f32 %v1032, %v971
  %v1034 = vmul.f32 %v1032, %v972
  %v1035 = vmul.f32 %v1032, %v973
  %v1036 = vmul.f32 %v1032, %v974
  %v1037 = vmul.f32 %v1032, %v975
  %v1038 = vmul.f32 %v1032, %v976
  %v1039 = vmul.f32 %v1032, %v977
  %v1040 = vmul.f32 %v1032, %v978
  %v1041 = vmul.f32 %v1032, %v979
  %v1042 = vmul.f32 %v1032, %v980
  %v1043 = vmul.f32 %v1032, %v981
  %v1044 = vmul.f32 %v1032, %v982
  %v1045 = vmul.f32 %v1032, %v983
  %v1046 = vmul.f32 %v1032, %v984
  %v1047 = vmul.f32 %v1032, %v985
  %v1048 = vmul.f32 %v1032, %v986
  %v1049 = vmul.f32 %v1032, %v987
  %v1050 = vmul.f32 %v1032, %v988
  %v1051 = vmul.f32 %v1032, %v989
  %v1052 = vmul.f32 %v1032, %v990
  %v1053 = vmul.f32 %v1032, %v991
  %v1054 = vmul.f32 %v1032, %v992
  %v1055 = vmul.f32 %v1032, %v993
  %v1056 = vmul.f32 %v1032, %v994
  %v1057 = vmul.f32 %v1032, %v995
  %v1058 = vmul.f32 %v1032, %v996
  %v1059 = vmul.f32 %v1032, %v997
  %v1060 = vmul.f32 %v1032, %v998
  %v1061 = vmul.f32 %v1032, %v999
  %v1062 = vmul.f32 %v1032, %v1000
  %v1063 = vsel %vm1002, %v971, %v1033
  %v1064 = vsel %vm1003, %v972, %v1034
  %v1065 = vsel %vm1004, %v973, %v1035
  %v1066 = vsel %vm1005, %v974, %v1036
  %v1067 = vsel %vm1006, %v975, %v1037
  %v1068 = vsel %vm1007, %v976, %v1038
  %v1069 = vsel %vm1008, %v977, %v1039
  %v1070 = vsel %vm1009, %v978, %v1040
  %v1071 = vsel %vm1010, %v979, %v1041
  %v1072 = vsel %vm1011, %v980, %v1042
  %v1073 = vsel %vm1012, %v981, %v1043
  %v1074 = vsel %vm1013, %v982, %v1044
  %v1075 = vsel %vm1014, %v983, %v1045
  %v1076 = vsel %vm1015, %v984, %v1046
  %v1077 = vsel %vm1016, %v985, %v1047
  %v1078 = vsel %vm1017, %v986, %v1048
  %v1079 = vsel %vm1018, %v987, %v1049
  %v1080 = vsel %vm1019, %v988, %v1050
  %v1081 = vsel %vm1020, %v989, %v1051
  %v1082 = vsel %vm1021, %v990, %v1052
  %v1083 = vsel %vm1022, %v991, %v1053
  %v1084 = vsel %vm1023, %v992, %v1054
  %v1085 = vsel %vm1024, %v993, %v1055
  %v1086 = vsel %vm1025, %v994, %v1056
  %v1087 = vsel %vm1026, %v995, %v1057
  %v1088 = vsel %vm1027, %v996, %v1058
  %v1089 = vsel %vm1028, %v997, %v1059
  %v1090 = vsel %vm1029, %v998, %v1060
  %v1091 = vsel %vm1030, %v999, %v1061
  %v1092 = vsel %vm1031, %v1000, %v1062
  %1093 = vst [vmem:[%s4] sm:$0xff] %v1063
  %1094 = vst [vmem:[%s4 + $0x8] sm:$0xff] %v1064
  %1095 = vst [vmem:[%s4 + $0x10] sm:$0xff] %v1065
  %1096 = vst [vmem:[%s4 + $0x18] sm:$0xff] %v1066
  %1097 = vst [vmem:[%s4 + $0x20] sm:$0xff] %v1067
  %1098 = vst [vmem:[%s4 + $0x28] sm:$0xff] %v1068
  %1099 = vst [vmem:[%s4 + $0x30] sm:$0xff] %v1069
  %1100 = vst [vmem:[%s4 + $0x38] sm:$0xff] %v1070
  %1101 = vst [vmem:[%s4 + $0x40] sm:$0xff] %v1071
  %1102 = vst [vmem:[%s4 + $0x48] sm:$0xff] %v1072
  %1103 = vst [vmem:[%s4 + $0x50] sm:$0xff] %v1073
  %1104 = vst [vmem:[%s4 + $0x58] sm:$0xff] %v1074
  %1105 = vst [vmem:[%s4 + $0x60] sm:$0xff] %v1075
  %1106 = vst [vmem:[%s4 + $0x68] sm:$0xff] %v1076
  %1107 = vst.msk [vmem:[%s4 + $0x70] sm:$0xff] %vm805, %v1077
  %1108 = vst [vmem:[%s4 + $0x78] sm:$0xff] %v1078
  %1109 = vst [vmem:[%s4 + $0x80] sm:$0xff] %v1079
  %1110 = vst [vmem:[%s4 + $0x88] sm:$0xff] %v1080
  %1111 = vst [vmem:[%s4 + $0x90] sm:$0xff] %v1081
  %1112 = vst [vmem:[%s4 + $0x98] sm:$0xff] %v1082
  %1113 = vst [vmem:[%s4 + $0xa0] sm:$0xff] %v1083
  %1114 = vst [vmem:[%s4 + $0xa8] sm:$0xff] %v1084
  %1115 = vst [vmem:[%s4 + $0xb0] sm:$0xff] %v1085
  %1116 = vst [vmem:[%s4 + $0xb8] sm:$0xff] %v1086
  %1117 = vst [vmem:[%s4 + $0xc0] sm:$0xff] %v1087
  %1118 = vst [vmem:[%s4 + $0xc8] sm:$0xff] %v1088
  %1119 = vst [vmem:[%s4 + $0xd0] sm:$0xff] %v1089
  %1120 = vst [vmem:[%s4 + $0xd8] sm:$0xff] %v1090
  %1121 = vst [vmem:[%s4 + $0xe0] sm:$0xff] %v1091
  %1122 = vst.msk [vmem:[%s4 + $0xe8] sm:$0xff] %vm805, %v1092
  // Predicated region
  $region18: #{encoder_forward.4} parent=0 // pred_check
    _
  $region19: #{encoder_forward.4} parent=0 // pred_check_branch
    %1124 = sbr.rel (0) target = $region21
  $region20: #{encoder_forward.4} parent=0 // pred_region
    _
  $region21: #{encoder_forward.4} parent=0 // pred_fallthru
    _
  // Predicated region
  $region22: #{encoder_forward.4} parent=0 // pred_check
    _
  $region23: #{encoder_forward.4} parent=0 // pred_check_branch
    %1126 = sbr.rel (0) target = $region25
  $region24: #{encoder_forward.4} parent=0 // pred_region
    _
  $region25: #{encoder_forward.4} parent=0 // pred_fallthru
    _

// kernel: encoder_forward.5
$region0: #{encoder_forward.5}
  #allocation0 [shape = 'u32[]', space=smem, size = 0x4, offset = 0x4, fixed_abs, tag = 'smem constant byte address 0x4 - core index']
  #allocation1 [shape = 'u32[144,128]{1,0:T(1,128)}', space=vmem, size = 0x12000, scoped, tag = 'internal scratch']
  #allocation2 [shape = 'f32[1]{0:T(128)S(6)}', space=smem, size = 0x200, scoped, tag = 'scoped memory for encoder_forward.5']
  %s0 = inlined_call_operand.vmem [shape: f32[32,784], index: 0, kind: input, shape index: {}]
  %s1 = inlined_call_operand.vmem [shape: f32[784,338], index: 1, kind: input, shape index: {}]
  %s2 = inlined_call_operand.vmem [shape: f32[32,2], index: 2, kind: input, shape index: {}]
  %s3 = inlined_call_operand.<no memory space> [shape: f32[1], index: 3, kind: input, shape index: {}]
  %s4 = inlined_call_operand.vmem [shape: f32[32,338], index: 4, kind: output, shape index: {}]
  %s5 = sld [smem:[#allocation0]]
  $region26: #{encoder_forward.5} parent=0
    _
  %s7 = ssub.s32 1, %s5
  %s8 = scalar_select 0, %s7, %s5
  %9 = sst [smem:[#allocation2]] %s3
  // Predicated region
  $region2: #{encoder_forward.5} parent=0 // pred_check
    _
  $region3: #{encoder_forward.5} parent=0 // pred_check_branch
    %11 = sbr.rel (0) target = $region5
  $region4: #{encoder_forward.5} parent=0 // pred_region
    _
  $region5: #{encoder_forward.5} parent=0 // pred_fallthru
    _
  // Predicated region
  $region6: #{encoder_forward.5} parent=0 // pred_check
    _
  $region7: #{encoder_forward.5} parent=0 // pred_check_branch
    %13 = sbr.rel (0) target = $region9
  $region8: #{encoder_forward.5} parent=0 // pred_region
    _
  $region9: #{encoder_forward.5} parent=0 // pred_fallthru
    _
  // Predicated region
  $region10: #{encoder_forward.5} parent=0 // pred_check
    _
  $region11: #{encoder_forward.5} parent=0 // pred_check_branch
    %15 = sbr.rel (0) target = $region13
  $region12: #{encoder_forward.5} parent=0 // pred_region
    _
  $region13: #{encoder_forward.5} parent=0 // pred_fallthru
    _
  // Predicated region
  $region14: #{encoder_forward.5} parent=0 // pred_check
    _
  $region15: #{encoder_forward.5} parent=0 // pred_check_branch
    %17 = sbr.rel (0) target = $region17
  $region16: #{encoder_forward.5} parent=0 // pred_region
    _
  $region17: #{encoder_forward.5} parent=0 // pred_fallthru
    _
  %v18 = vld [vmem:[%s0] sm:$0xff]
  %v19 = vld [vmem:[%s0 + $0x8] sm:$0xff]
  %v20 = vld [vmem:[%s0 + $0x10] sm:$0xff]
  %v21 = vld [vmem:[%s0 + $0x18] sm:$0xff]
  %v22 = vld [vmem:[%s0 + $0x20] sm:$0xff]
  %v23 = vld [vmem:[%s0 + $0x28] sm:$0xff]
  %v24 = vld [vmem:[%s0 + $0x30] sm:$0xff]
  %v25 = vld [vmem:[%s0 + $0x38] sm:$0xff]
  %v26 = vld [vmem:[%s0 + $0x40] sm:$0xff]
  %v27 = vld [vmem:[%s0 + $0x48] sm:$0xff]
  %v28 = vld [vmem:[%s0 + $0x50] sm:$0xff]
  %v29 = vld [vmem:[%s0 + $0x58] sm:$0xff]
  %v30 = vld [vmem:[%s0 + $0x60] sm:$0xff]
  %v31 = vld [vmem:[%s0 + $0x68] sm:$0xff]
  %v32 = vld [vmem:[%s0 + $0x70] sm:$0xff]
  %v33 = vld [vmem:[%s0 + $0x78] sm:$0xff]
  %v34 = vld [vmem:[%s0 + $0x80] sm:$0xff]
  %v35 = vld [vmem:[%s0 + $0x88] sm:$0xff]
  %v36 = vld [vmem:[%s0 + $0x90] sm:$0xff]
  %v37 = vld [vmem:[%s0 + $0x98] sm:$0xff]
  %v38 = vld [vmem:[%s0 + $0xa0] sm:$0xff]
  %v39 = vld [vmem:[%s0 + $0xa8] sm:$0xff]
  %v40 = vld [vmem:[%s0 + $0xb0] sm:$0xff]
  %v41 = vld [vmem:[%s0 + $0xb8] sm:$0xff]
  %v42 = vld [vmem:[%s0 + $0xc0] sm:$0xff]
  %v43 = vld [vmem:[%s0 + $0xc8] sm:$0xff]
  %v44 = vld [vmem:[%s0 + $0xd0] sm:$0xff]
  %v45 = vld [vmem:[%s0 + $0xd8] sm:$0xff]
  %v46 = vld [vmem:[%s1] sm:$0xff]
  %v47 = vld [vmem:[%s1 + $0x8] sm:$0xff]
  %v48 = vld [vmem:[%s1 + $0x10] sm:$0xff]
  %v49 = vld [vmem:[%s1 + $0x18] sm:$0xff]
  %v50 = vld [vmem:[%s1 + $0x20] sm:$0xff]
  %v51 = vld [vmem:[%s1 + $0x28] sm:$0xff]
  %v52 = vld [vmem:[%s1 + $0x30] sm:$0xff]
  %v53 = vld [vmem:[%s1 + $0x38] sm:$0xff]
  %v54 = vld [vmem:[%s1 + $0x40] sm:$0xff]
  %v55 = vld [vmem:[%s1 + $0x48] sm:$0xff]
  %v56 = vld [vmem:[%s1 + $0x50] sm:$0xff]
  %v57 = vld [vmem:[%s1 + $0x58] sm:$0xff]
  %v58 = vld [vmem:[%s1 + $0x60] sm:$0xff]
  %v59 = vld [vmem:[%s1 + $0x68] sm:$0xff]
  %v60 = vld [vmem:[%s1 + $0x70] sm:$0xff]
  %v61 = vld [vmem:[%s1 + $0x78] sm:$0xff]
  %v62 = vld [vmem:[%s1 + $0x80] sm:$0xff]
  %v63 = vld [vmem:[%s1 + $0x88] sm:$0xff]
  %v64 = vld [vmem:[%s1 + $0x90] sm:$0xff]
  %v65 = vld [vmem:[%s1 + $0x98] sm:$0xff]
  %v66 = vld [vmem:[%s1 + $0xa0] sm:$0xff]
  %v67 = vld [vmem:[%s1 + $0xa8] sm:$0xff]
  %v68 = vld [vmem:[%s1 + $0xb0] sm:$0xff]
  %v69 = vld [vmem:[%s1 + $0xb8] sm:$0xff]
  %v70 = vld [vmem:[%s1 + $0xc0] sm:$0xff]
  %v71 = vld [vmem:[%s1 + $0xc8] sm:$0xff]
  %v72 = vld [vmem:[%s1 + $0xd0] sm:$0xff]
  %v73 = vld [vmem:[%s1 + $0xd8] sm:$0xff]
  %v74 = vld [vmem:[%s1 + $0xe0] sm:$0xff]
  %v75 = vld [vmem:[%s1 + $0xe8] sm:$0xff]
  %v76 = vld [vmem:[%s1 + $0xf0] sm:$0xff]
  %v77 = vld [vmem:[%s1 + $0xf8] sm:$0xff]
  %v78 = vld [vmem:[%s1 + $0x100] sm:$0xff]
  %v79 = vld [vmem:[%s1 + $0x108] sm:$0xff]
  %v80 = vld [vmem:[%s1 + $0x110] sm:$0xff]
  %v81 = vld [vmem:[%s1 + $0x118] sm:$0xff]
  %v82 = vld [vmem:[%s1 + $0x120] sm:$0xff]
  %v83 = vld [vmem:[%s1 + $0x128] sm:$0xff]
  %v84 = vld [vmem:[%s1 + $0x130] sm:$0xff]
  %v85 = vld [vmem:[%s1 + $0x138] sm:$0xff]
  %v86 = vld [vmem:[%s1 + $0x140] sm:$0xff]
  %v87 = vld [vmem:[%s1 + $0x148] sm:$0xff]
  %v88 = vld [vmem:[%s1 + $0x150] sm:$0xff]
  %v89 = vld [vmem:[%s1 + $0x158] sm:$0xff]
  %v90 = vld [vmem:[%s1 + $0x160] sm:$0xff]
  %v91 = vld [vmem:[%s1 + $0x168] sm:$0xff]
  %v92 = vld [vmem:[%s1 + $0x170] sm:$0xff]
  %v93 = vld [vmem:[%s1 + $0x178] sm:$0xff]
  %v94 = vld [vmem:[%s1 + $0x180] sm:$0xff]
  %v95 = vld [vmem:[%s1 + $0x188] sm:$0xff]
  %v96 = vld [vmem:[%s1 + $0x190] sm:$0xff]
  %v97 = vld [vmem:[%s1 + $0x198] sm:$0xff]
  %v98 = vld [vmem:[%s1 + $0x1a0] sm:$0xff]
  %v99 = vld [vmem:[%s1 + $0x1a8] sm:$0xff]
  %v100 = vld [vmem:[%s1 + $0x1b0] sm:$0xff]
  %v101 = vld [vmem:[%s1 + $0x1b8] sm:$0xff]
  %v102 = vld [vmem:[%s1 + $0x1c0] sm:$0xff]
  %v103 = vld [vmem:[%s1 + $0x1c8] sm:$0xff]
  %v104 = vld [vmem:[%s1 + $0x1d0] sm:$0xff]
  %v105 = vld [vmem:[%s1 + $0x1d8] sm:$0xff]
  %v106 = vld [vmem:[%s1 + $0x1e0] sm:$0xff]
  %v107 = vld [vmem:[%s1 + $0x1e8] sm:$0xff]
  %v108 = vld [vmem:[%s1 + $0x1f0] sm:$0xff]
  %v109 = vld [vmem:[%s1 + $0x1f8] sm:$0xff]
  %v110 = vld [vmem:[%s1 + $0x200] sm:$0xff]
  %v111 = vld [vmem:[%s1 + $0x208] sm:$0xff]
  %v112 = vld [vmem:[%s1 + $0x210] sm:$0xff]
  %v113 = vld [vmem:[%s1 + $0x218] sm:$0xff]
  %v114 = vld [vmem:[%s1 + $0x220] sm:$0xff]
  %v115 = vld [vmem:[%s1 + $0x228] sm:$0xff]
  %v116 = vld [vmem:[%s1 + $0x230] sm:$0xff]
  %v117 = vld [vmem:[%s1 + $0x238] sm:$0xff]
  %v118 = vld [vmem:[%s1 + $0x240] sm:$0xff]
  %v119 = vld [vmem:[%s1 + $0x248] sm:$0xff]
  %v120 = vld [vmem:[%s1 + $0x250] sm:$0xff]
  %v121 = vld [vmem:[%s1 + $0x258] sm:$0xff]
  %v122 = vld [vmem:[%s1 + $0x260] sm:$0xff]
  %v123 = vld [vmem:[%s1 + $0x268] sm:$0xff]
  %v124 = vld [vmem:[%s1 + $0x270] sm:$0xff]
  %v125 = vld [vmem:[%s1 + $0x278] sm:$0xff]
  %v126 = vld [vmem:[%s1 + $0x280] sm:$0xff]
  %v127 = vld [vmem:[%s1 + $0x288] sm:$0xff]
  %v128 = vld [vmem:[%s1 + $0x290] sm:$0xff]
  %v129 = vld [vmem:[%s1 + $0x298] sm:$0xff]
  %v130 = vld [vmem:[%s1 + $0x2a0] sm:$0xff]
  %v131 = vld [vmem:[%s1 + $0x2a8] sm:$0xff]
  %v132 = vld [vmem:[%s1 + $0x2b0] sm:$0xff]
  %v133 = vld [vmem:[%s1 + $0x2b8] sm:$0xff]
  %v134 = vld [vmem:[%s1 + $0x2c0] sm:$0xff]
  %v135 = vld [vmem:[%s1 + $0x2c8] sm:$0xff]
  %v136 = vld [vmem:[%s1 + $0x2d0] sm:$0xff]
  %v137 = vld [vmem:[%s1 + $0x2d8] sm:$0xff]
  %v138 = vld [vmem:[%s1 + $0x2e0] sm:$0xff]
  %v139 = vld [vmem:[%s1 + $0x2e8] sm:$0xff]
  %v140 = vld [vmem:[%s1 + $0x2f0] sm:$0xff]
  %v141 = vld [vmem:[%s1 + $0x2f8] sm:$0xff]
  %v142 = vld [vmem:[%s1 + $0x300] sm:$0xff]
  %v143 = vld [vmem:[%s1 + $0x308] sm:$0xff]
  %v144 = vld [vmem:[%s1 + $0x310] sm:$0xff]
  %v145 = vld [vmem:[%s1 + $0x318] sm:$0xff]
  %v146 = vld [vmem:[%s1 + $0x320] sm:$0xff]
  %v147 = vld [vmem:[%s1 + $0x328] sm:$0xff]
  %v148 = vld [vmem:[%s1 + $0x330] sm:$0xff]
  %v149 = vld [vmem:[%s1 + $0x338] sm:$0xff]
  %v150 = vld [vmem:[%s1 + $0x340] sm:$0xff]
  %v151 = vld [vmem:[%s1 + $0x348] sm:$0xff]
  %v152 = vld [vmem:[%s1 + $0x350] sm:$0xff]
  %v153 = vld [vmem:[%s1 + $0x358] sm:$0xff]
  %v154 = vld [vmem:[%s1 + $0x360] sm:$0xff]
  %v155 = vld [vmem:[%s1 + $0x368] sm:$0xff]
  %v156 = vld [vmem:[%s1 + $0x370] sm:$0xff]
  %v157 = vld [vmem:[%s1 + $0x378] sm:$0xff]
  %v158 = vld [vmem:[%s1 + $0x380] sm:$0xff]
  %v159 = vld [vmem:[%s1 + $0x388] sm:$0xff]
  %v160 = vld [vmem:[%s1 + $0x390] sm:$0xff]
  %v161 = vld [vmem:[%s1 + $0x398] sm:$0xff]
  %v162 = vld [vmem:[%s1 + $0x3a0] sm:$0xff]
  %v163 = vld [vmem:[%s1 + $0x3a8] sm:$0xff]
  %v164 = vld [vmem:[%s1 + $0x3b0] sm:$0xff]
  %v165 = vld [vmem:[%s1 + $0x3b8] sm:$0xff]
  %v166 = vld [vmem:[%s1 + $0x3c0] sm:$0xff]
  %v167 = vld [vmem:[%s1 + $0x3c8] sm:$0xff]
  %v168 = vld [vmem:[%s1 + $0x3d0] sm:$0xff]
  %v169 = vld [vmem:[%s1 + $0x3d8] sm:$0xff]
  %v170 = vld [vmem:[%s1 + $0x3e0] sm:$0xff]
  %v171 = vld [vmem:[%s1 + $0x3e8] sm:$0xff]
  %v172 = vld [vmem:[%s1 + $0x3f0] sm:$0xff]
  %v173 = vld [vmem:[%s1 + $0x3f8] sm:$0xff]
  %v174 = vld [vmem:[%s1 + $0x400] sm:$0xff]
  %v175 = vld [vmem:[%s1 + $0x408] sm:$0xff]
  %v176 = vld [vmem:[%s1 + $0x410] sm:$0xff]
  %v177 = vld [vmem:[%s1 + $0x418] sm:$0xff]
  %v178 = vld [vmem:[%s1 + $0x420] sm:$0xff]
  %v179 = vld [vmem:[%s1 + $0x428] sm:$0xff]
  %v180 = vld [vmem:[%s1 + $0x430] sm:$0xff]
  %v181 = vld [vmem:[%s1 + $0x438] sm:$0xff]
  %v182 = vld [vmem:[%s1 + $0x440] sm:$0xff]
  %v183 = vld [vmem:[%s1 + $0x448] sm:$0xff]
  %v184 = vld [vmem:[%s1 + $0x450] sm:$0xff]
  %v185 = vld [vmem:[%s1 + $0x458] sm:$0xff]
  %v186 = vld [vmem:[%s1 + $0x460] sm:$0xff]
  %v187 = vld [vmem:[%s1 + $0x468] sm:$0xff]
  %v188 = vld [vmem:[%s1 + $0x470] sm:$0xff]
  %v189 = vld [vmem:[%s1 + $0x478] sm:$0xff]
  %v190 = vld [vmem:[%s1 + $0x480] sm:$0xff]
  %v191 = vld [vmem:[%s1 + $0x488] sm:$0xff]
  %v192 = vld [vmem:[%s1 + $0x490] sm:$0xff]
  %v193 = vld [vmem:[%s1 + $0x498] sm:$0xff]
  %v194 = vld [vmem:[%s1 + $0x4a0] sm:$0xff]
  %v195 = vld [vmem:[%s1 + $0x4a8] sm:$0xff]
  %v196 = vld [vmem:[%s1 + $0x4b0] sm:$0xff]
  %v197 = vld [vmem:[%s1 + $0x4b8] sm:$0xff]
  %v198 = vld [vmem:[%s1 + $0x4c0] sm:$0xff]
  %v199 = vld [vmem:[%s1 + $0x4c8] sm:$0xff]
  %v200 = vld [vmem:[%s1 + $0x4d0] sm:$0xff]
  %v201 = vld [vmem:[%s1 + $0x4d8] sm:$0xff]
  %v202 = vld [vmem:[%s1 + $0x4e0] sm:$0xff]
  %v203 = vld [vmem:[%s1 + $0x4e8] sm:$0xff]
  %v204 = vld [vmem:[%s1 + $0x4f0] sm:$0xff]
  %v205 = vld [vmem:[%s1 + $0x4f8] sm:$0xff]
  %v206 = vld [vmem:[%s1 + $0x500] sm:$0xff]
  %v207 = vld [vmem:[%s1 + $0x508] sm:$0xff]
  %v208 = vld [vmem:[%s1 + $0x510] sm:$0xff]
  %v209 = vld [vmem:[%s1 + $0x518] sm:$0xff]
  %v210 = vld [vmem:[%s1 + $0x520] sm:$0xff]
  %v211 = vld [vmem:[%s1 + $0x528] sm:$0xff]
  %v212 = vld [vmem:[%s1 + $0x530] sm:$0xff]
  %v213 = vld [vmem:[%s1 + $0x538] sm:$0xff]
  %v214 = vld [vmem:[%s1 + $0x540] sm:$0xff]
  %v215 = vld [vmem:[%s1 + $0x548] sm:$0xff]
  %v216 = vld [vmem:[%s1 + $0x550] sm:$0xff]
  %v217 = vld [vmem:[%s1 + $0x558] sm:$0xff]
  %v218 = vld [vmem:[%s1 + $0x560] sm:$0xff]
  %v219 = vld [vmem:[%s1 + $0x568] sm:$0xff]
  %v220 = vld [vmem:[%s1 + $0x570] sm:$0xff]
  %v221 = vld [vmem:[%s1 + $0x578] sm:$0xff]
  %v222 = vld [vmem:[%s1 + $0x580] sm:$0xff]
  %v223 = vld [vmem:[%s1 + $0x588] sm:$0xff]
  %v224 = vld [vmem:[%s1 + $0x590] sm:$0xff]
  %v225 = vld [vmem:[%s1 + $0x598] sm:$0xff]
  %v226 = vld [vmem:[%s1 + $0x5a0] sm:$0xff]
  %v227 = vld [vmem:[%s1 + $0x5a8] sm:$0xff]
  %v228 = vld [vmem:[%s1 + $0x5b0] sm:$0xff]
  %v229 = vld [vmem:[%s1 + $0x5b8] sm:$0xff]
  %v230 = vld [vmem:[%s1 + $0x5c0] sm:$0xff]
  %v231 = vld [vmem:[%s1 + $0x5c8] sm:$0xff]
  %v232 = vld [vmem:[%s1 + $0x5d0] sm:$0xff]
  %v233 = vld [vmem:[%s1 + $0x5d8] sm:$0xff]
  %v234 = vld [vmem:[%s1 + $0x5e0] sm:$0xff]
  %v235 = vld [vmem:[%s1 + $0x5e8] sm:$0xff]
  %v236 = vld [vmem:[%s1 + $0x5f0] sm:$0xff]
  %v237 = vld [vmem:[%s1 + $0x5f8] sm:$0xff]
  %v238 = vld [vmem:[%s1 + $0x600] sm:$0xff]
  %v239 = vld [vmem:[%s1 + $0x608] sm:$0xff]
  %v240 = vld [vmem:[%s1 + $0x610] sm:$0xff]
  %v241 = vld [vmem:[%s1 + $0x618] sm:$0xff]
  %v242 = vld [vmem:[%s1 + $0x620] sm:$0xff]
  %v243 = vld [vmem:[%s1 + $0x628] sm:$0xff]
  %v244 = vld [vmem:[%s1 + $0x630] sm:$0xff]
  %v245 = vld [vmem:[%s1 + $0x638] sm:$0xff]
  %v246 = vld [vmem:[%s1 + $0x640] sm:$0xff]
  %v247 = vld [vmem:[%s1 + $0x648] sm:$0xff]
  %v248 = vld [vmem:[%s1 + $0x650] sm:$0xff]
  %v249 = vld [vmem:[%s1 + $0x658] sm:$0xff]
  %v250 = vld [vmem:[%s1 + $0x660] sm:$0xff]
  %v251 = vld [vmem:[%s1 + $0x668] sm:$0xff]
  %v252 = vld [vmem:[%s1 + $0x670] sm:$0xff]
  %v253 = vld [vmem:[%s1 + $0x678] sm:$0xff]
  %v254 = vld [vmem:[%s1 + $0x680] sm:$0xff]
  %v255 = vld [vmem:[%s1 + $0x688] sm:$0xff]
  %v256 = vld [vmem:[%s1 + $0x690] sm:$0xff]
  %v257 = vld [vmem:[%s1 + $0x698] sm:$0xff]
  %v258 = vld [vmem:[%s1 + $0x6a0] sm:$0xff]
  %v259 = vld [vmem:[%s1 + $0x6a8] sm:$0xff]
  %v260 = vld [vmem:[%s1 + $0x6b0] sm:$0xff]
  %v261 = vld [vmem:[%s1 + $0x6b8] sm:$0xff]
  %v262 = vld [vmem:[%s1 + $0x6c0] sm:$0xff]
  %v263 = vld [vmem:[%s1 + $0x6c8] sm:$0xff]
  %v264 = vld [vmem:[%s1 + $0x6d0] sm:$0xff]
  %v265 = vld [vmem:[%s1 + $0x6d8] sm:$0xff]
  %v266 = vld [vmem:[%s1 + $0x6e0] sm:$0xff]
  %v267 = vld [vmem:[%s1 + $0x6e8] sm:$0xff]
  %v268 = vld [vmem:[%s1 + $0x6f0] sm:$0xff]
  %v269 = vld [vmem:[%s1 + $0x6f8] sm:$0xff]
  %v270 = vld [vmem:[%s1 + $0x700] sm:$0xff]
  %v271 = vld [vmem:[%s1 + $0x708] sm:$0xff]
  %v272 = vld [vmem:[%s1 + $0x710] sm:$0xff]
  %v273 = vld [vmem:[%s1 + $0x718] sm:$0xff]
  %v274 = vld [vmem:[%s1 + $0x720] sm:$0xff]
  %v275 = vld [vmem:[%s1 + $0x728] sm:$0xff]
  %v276 = vld [vmem:[%s1 + $0x730] sm:$0xff]
  %v277 = vld [vmem:[%s1 + $0x738] sm:$0xff]
  %v278 = vld [vmem:[%s1 + $0x740] sm:$0xff]
  %v279 = vld [vmem:[%s1 + $0x748] sm:$0xff]
  %v280 = vld [vmem:[%s1 + $0x750] sm:$0xff]
  %v281 = vld [vmem:[%s1 + $0x758] sm:$0xff]
  %v282 = vld [vmem:[%s1 + $0x760] sm:$0xff]
  %v283 = vld [vmem:[%s1 + $0x768] sm:$0xff]
  %v284 = vld [vmem:[%s1 + $0x770] sm:$0xff]
  %v285 = vld [vmem:[%s1 + $0x778] sm:$0xff]
  %v286 = vld [vmem:[%s1 + $0x780] sm:$0xff]
  %v287 = vld [vmem:[%s1 + $0x788] sm:$0xff]
  %v288 = vld [vmem:[%s1 + $0x790] sm:$0xff]
  %v289 = vld [vmem:[%s1 + $0x798] sm:$0xff]
  %v290 = vld [vmem:[%s1 + $0x7a0] sm:$0xff]
  %v291 = vld [vmem:[%s1 + $0x7a8] sm:$0xff]
  %v292 = vld [vmem:[%s1 + $0x7b0] sm:$0xff]
  %v293 = vld [vmem:[%s1 + $0x7b8] sm:$0xff]
  %v294 = vld [vmem:[%s1 + $0x7c0] sm:$0xff]
  %v295 = vld [vmem:[%s1 + $0x7c8] sm:$0xff]
  %v296 = vld [vmem:[%s1 + $0x7d0] sm:$0xff]
  %v297 = vld [vmem:[%s1 + $0x7d8] sm:$0xff]
  %v298 = vld [vmem:[%s1 + $0x7e0] sm:$0xff]
  %v299 = vld [vmem:[%s1 + $0x7e8] sm:$0xff]
  %v300 = vld [vmem:[%s1 + $0x7f0] sm:$0xff]
  %v301 = vld [vmem:[%s1 + $0x7f8] sm:$0xff]
  %v302 = vld [vmem:[%s1 + $0x800] sm:$0xff]
  %v303 = vld [vmem:[%s1 + $0x808] sm:$0xff]
  %v304 = vld [vmem:[%s1 + $0x810] sm:$0xff]
  %v305 = vld [vmem:[%s1 + $0x818] sm:$0xff]
  %v306 = vld [vmem:[%s1 + $0x820] sm:$0xff]
  %v307 = vld [vmem:[%s1 + $0x828] sm:$0xff]
  %v308 = vld [vmem:[%s1 + $0x830] sm:$0xff]
  %v309 = vld [vmem:[%s1 + $0x838] sm:$0xff]
  %v310 = vld [vmem:[%s1 + $0x840] sm:$0xff]
  %v311 = vld [vmem:[%s1 + $0x848] sm:$0xff]
  %v312 = vld [vmem:[%s1 + $0x850] sm:$0xff]
  %v313 = vld [vmem:[%s1 + $0x858] sm:$0xff]
  %v314 = vld [vmem:[%s1 + $0x860] sm:$0xff]
  %v315 = vld [vmem:[%s1 + $0x868] sm:$0xff]
  %v316 = vld [vmem:[%s1 + $0x870] sm:$0xff]
  %v317 = vld [vmem:[%s1 + $0x878] sm:$0xff]
  %v318 = vld [vmem:[%s1 + $0x880] sm:$0xff]
  %v319 = vld [vmem:[%s1 + $0x888] sm:$0xff]
  %v320 = vld [vmem:[%s1 + $0x890] sm:$0xff]
  %v321 = vld [vmem:[%s1 + $0x898] sm:$0xff]
  %v322 = vld [vmem:[%s1 + $0x8a0] sm:$0xff]
  %v323 = vld [vmem:[%s1 + $0x8a8] sm:$0xff]
  %v324 = vld [vmem:[%s1 + $0x8b0] sm:$0xff]
  %v325 = vld [vmem:[%s1 + $0x8b8] sm:$0xff]
  %v326 = vld [vmem:[%s1 + $0x8c0] sm:$0xff]
  %v327 = vld [vmem:[%s1 + $0x8c8] sm:$0xff]
  %v328 = vld [vmem:[%s1 + $0x8d0] sm:$0xff]
  %v329 = vld [vmem:[%s1 + $0x8d8] sm:$0xff]
  %v330 = vld [vmem:[%s1 + $0x8e0] sm:$0xff]
  %v331 = vld [vmem:[%s1 + $0x8e8] sm:$0xff]
  %v332 = vld [vmem:[%s1 + $0x8f0] sm:$0xff]
  %v333 = vld [vmem:[%s1 + $0x8f8] sm:$0xff]
  %v334 = vld [vmem:[%s1 + $0x900] sm:$0xff]
  %v335 = vld [vmem:[%s1 + $0x908] sm:$0xff]
  %v336 = vld [vmem:[%s1 + $0x910] sm:$0xff]
  %v337 = vld [vmem:[%s1 + $0x918] sm:$0xff]
  %v338 = vld [vmem:[%s1 + $0x920] sm:$0xff]
  %v339 = vld [vmem:[%s1 + $0x928] sm:$0xff]
  %vm340 = vcmask 130048
  %v342 = vsel %vm340, %v24, 0
  %v345 = vsel %vm340, %v31, 0
  %v348 = vsel %vm340, %v38, 0
  %v351 = vsel %vm340, %v45, 0
  %353 = vmatprep.subr.mxu0 %v47
  %354 = vmatpush1.msra.mxu0 %v46
  %355 = vmatprep.subr.mxu0 %v50
  %356 = vmatpush1.msra.mxu0 %v49
  %357 = vmatprep.subr.mxu0 %v53
  %358 = vmatpush1.msra.mxu0 %v52
  %359 = vmatprep.subr.mxu0 %v56
  %360 = vmatpush1.msra.mxu0 %v55
  %361 = vmatprep.subr.mxu0 %v59
  %362 = vmatpush1.msra.mxu0 %v58
  %363 = vmatprep.subr.mxu0 %v62
  %364 = vmatpush1.msra.mxu0 %v61
  %365 = vmatprep.subr.mxu0 %v65
  %366 = vmatpush1.msra.mxu0 %v64
  %367 = vmatprep.subr.mxu0 %v68
  %368 = vmatpush1.msra.mxu0 %v67
  %369 = vmatprep.subr.mxu0 %v71
  %370 = vmatpush1.msra.mxu0 %v70
  %371 = vmatprep.subr.mxu0 %v74
  %372 = vmatpush1.msra.mxu0 %v73
  %373 = vmatprep.subr.mxu0 %v77
  %374 = vmatpush1.msra.mxu0 %v76
  %375 = vmatprep.subr.mxu0 %v80
  %376 = vmatpush1.msra.mxu0 %v79
  %377 = vmatprep.subr.mxu0 %v83
  %378 = vmatpush1.msra.mxu0 %v82
  %379 = vmatprep.subr.mxu0 %v86
  %380 = vmatpush1.msra.mxu0 %v85
  %381 = vmatprep.subr.mxu0 %v89
  %382 = vmatpush1.msra.mxu0 %v88
  %383 = vmatprep.subr.mxu0 %v92
  %384 = vmatpush1.msra.mxu0 %v91
  %385 = vmatprep.subr.mxu0 %v95
  %386 = vmatpush1.msra.mxu0 %v94
  %387 = vmatprep.subr.mxu0 %v98
  %388 = vmatpush1.msra.mxu0 %v97
  %389 = vmatprep.subr.mxu0 %v101
  %390 = vmatpush1.msra.mxu0 %v100
  %391 = vmatprep.subr.mxu0 %v104
  %392 = vmatpush1.msra.mxu0 %v103
  %393 = vmatprep.subr.mxu0 %v107
  %394 = vmatpush1.msra.mxu0 %v106
  %395 = vmatprep.subr.mxu0 %v110
  %396 = vmatpush1.msra.mxu0 %v109
  %397 = vmatprep.subr.mxu0 %v113
  %398 = vmatpush1.msra.mxu0 %v112
  %399 = vmatprep.subr.mxu0 %v116
  %400 = vmatpush1.msra.mxu0 %v115
  %401 = vmatprep.subr.mxu0 %v119
  %402 = vmatpush1.msra.mxu0 %v118
  %403 = vmatprep.subr.mxu0 %v122
  %404 = vmatpush1.msra.mxu0 %v121
  %405 = vmatprep.subr.mxu0 %v125
  %406 = vmatpush1.msra.mxu0 %v124
  %407 = vmatprep.subr.mxu0 %v128
  %408 = vmatpush1.msra.mxu0 %v127
  %409 = vmatprep.subr.mxu0 %v131
  %410 = vmatpush1.msra.mxu0 %v130
  %411 = vmatprep.subr.mxu0 %v134
  %412 = vmatpush1.msra.mxu0 %v133
  %413 = vmatprep.subr.mxu0 %v137
  %414 = vmatpush1.msra.mxu0 %v136
  %415 = vmatprep.subr.mxu0 %v140
  %416 = vmatpush1.msra.mxu0 %v139
  %417 = vmatprep.mubr.f32.mxu0 %v19
  %418 = vmatmul.mubr.f32.gmra.mrb[0].mxu0 %v18
  %v419 = vpop.f32.mrb[0].mxu0
  %v420 = vadd.f32 0.0, %v419
  %v421 = vpop.f32.mrb[0].mxu0
  %v422 = vadd.f32 0.0, %v421
  %423 = vmatprep.mubr.f32.mxu0 %v26
  %424 = vmatmul.mubr.f32.gmra.mrb[0].mxu0 %v25
  %v425 = vpop.f32.mrb[0].mxu0
  %v426 = vadd.f32 0.0, %v425
  %v427 = vpop.f32.mrb[0].mxu0
  %v428 = vadd.f32 0.0, %v427
  %429 = vmatprep.mubr.f32.mxu0 %v33
  %430 = vmatmul.mubr.f32.gmra.mrb[0].mxu0 %v32
  %v431 = vpop.f32.mrb[0].mxu0
  %v432 = vadd.f32 0.0, %v431
  %v433 = vpop.f32.mrb[0].mxu0
  %v434 = vadd.f32 0.0, %v433
  %435 = vmatprep.mubr.f32.mxu0 %v40
  %436 = vmatmul.mubr.f32.gmra.mrb[0].mxu0 %v39
  %v437 = vpop.f32.mrb[0].mxu0
  %v438 = vadd.f32 0.0, %v437
  %v439 = vpop.f32.mrb[0].mxu0
  %v440 = vadd.f32 0.0, %v439
  %441 = vdwg.mxu0
  %442 = vmatprep.subr.mxu0 %v143
  %443 = vmatpush1.msra.mxu0 %v142
  %444 = vmatprep.subr.mxu0 %v146
  %445 = vmatpush1.msra.mxu0 %v145
  %446 = vmatprep.subr.mxu0 %v149
  %447 = vmatpush1.msra.mxu0 %v148
  %448 = vmatprep.subr.mxu0 %v152
  %449 = vmatpush1.msra.mxu0 %v151
  %450 = vmatprep.subr.mxu0 %v155
  %451 = vmatpush1.msra.mxu0 %v154
  %452 = vmatprep.subr.mxu0 %v158
  %453 = vmatpush1.msra.mxu0 %v157
  %454 = vmatprep.subr.mxu0 %v161
  %455 = vmatpush1.msra.mxu0 %v160
  %456 = vmatprep.subr.mxu0 %v164
  %457 = vmatpush1.msra.mxu0 %v163
  %458 = vmatprep.subr.mxu0 %v167
  %459 = vmatpush1.msra.mxu0 %v166
  %460 = vmatprep.subr.mxu0 %v170
  %461 = vmatpush1.msra.mxu0 %v169
  %462 = vmatprep.subr.mxu0 %v173
  %463 = vmatpush1.msra.mxu0 %v172
  %464 = vmatprep.subr.mxu0 %v176
  %465 = vmatpush1.msra.mxu0 %v175
  %466 = vmatprep.subr.mxu0 %v179
  %467 = vmatpush1.msra.mxu0 %v178
  %468 = vmatprep.subr.mxu0 %v182
  %469 = vmatpush1.msra.mxu0 %v181
  %470 = vmatprep.subr.mxu0 %v185
  %471 = vmatpush1.msra.mxu0 %v184
  %472 = vmatprep.subr.mxu0 %v188
  %473 = vmatpush1.msra.mxu0 %v187
  %474 = vmatprep.subr.mxu0 %v191
  %475 = vmatpush1.msra.mxu0 %v190
  %476 = vmatprep.subr.mxu0 %v194
  %477 = vmatpush1.msra.mxu0 %v193
  %478 = vmatprep.subr.mxu0 %v197
  %479 = vmatpush1.msra.mxu0 %v196
  %480 = vmatprep.subr.mxu0 %v200
  %481 = vmatpush1.msra.mxu0 %v199
  %482 = vmatprep.subr.mxu0 %v203
  %483 = vmatpush1.msra.mxu0 %v202
  %484 = vmatprep.subr.mxu0 %v206
  %485 = vmatpush1.msra.mxu0 %v205
  %486 = vmatprep.subr.mxu0 %v209
  %487 = vmatpush1.msra.mxu0 %v208
  %488 = vmatprep.subr.mxu0 %v212
  %489 = vmatpush1.msra.mxu0 %v211
  %490 = vmatprep.subr.mxu0 %v215
  %491 = vmatpush1.msra.mxu0 %v214
  %492 = vmatprep.subr.mxu0 %v218
  %493 = vmatpush1.msra.mxu0 %v217
  %494 = vmatprep.subr.mxu0 %v221
  %495 = vmatpush1.msra.mxu0 %v220
  %496 = vmatprep.subr.mxu0 %v224
  %497 = vmatpush1.msra.mxu0 %v223
  %498 = vmatprep.subr.mxu0 %v227
  %499 = vmatpush1.msra.mxu0 %v226
  %500 = vmatprep.subr.mxu0 %v230
  %501 = vmatpush1.msra.mxu0 %v229
  %502 = vmatprep.subr.mxu0 %v233
  %503 = vmatpush1.msra.mxu0 %v232
  %504 = vmatprep.subr.mxu0 %v236
  %505 = vmatpush1.msra.mxu0 %v235
  %506 = vmatprep.mubr.f32.mxu0 %v21
  %507 = vmatmul.mubr.f32.gmra.mrb[0].mxu0 %v20
  %v508 = vpop.f32.mrb[0].mxu0
  %v509 = vadd.f32 %v420, %v508
  %v510 = vpop.f32.mrb[0].mxu0
  %v511 = vadd.f32 %v422, %v510
  %512 = vmatprep.mubr.f32.mxu0 %v28
  %513 = vmatmul.mubr.f32.gmra.mrb[0].mxu0 %v27
  %v514 = vpop.f32.mrb[0].mxu0
  %v515 = vadd.f32 %v426, %v514
  %v516 = vpop.f32.mrb[0].mxu0
  %v517 = vadd.f32 %v428, %v516
  %518 = vmatprep.mubr.f32.mxu0 %v35
  %519 = vmatmul.mubr.f32.gmra.mrb[0].mxu0 %v34
  %v520 = vpop.f32.mrb[0].mxu0
  %v521 = vadd.f32 %v432, %v520
  %v522 = vpop.f32.mrb[0].mxu0
  %v523 = vadd.f32 %v434, %v522
  %524 = vmatprep.mubr.f32.mxu0 %v42
  %525 = vmatmul.mubr.f32.gmra.mrb[0].mxu0 %v41
  %v526 = vpop.f32.mrb[0].mxu0
  %v527 = vadd.f32 %v438, %v526
  %v528 = vpop.f32.mrb[0].mxu0
  %v529 = vadd.f32 %v440, %v528
  %530 = vdwg.mxu0
  %531 = vmatprep.subr.mxu0 %v239
  %532 = vmatpush1.msra.mxu0 %v238
  %533 = vmatprep.subr.mxu0 %v242
  %534 = vmatpush1.msra.mxu0 %v241
  %535 = vmatprep.subr.mxu0 %v245
  %536 = vmatpush1.msra.mxu0 %v244
  %537 = vmatprep.subr.mxu0 %v248
  %538 = vmatpush1.msra.mxu0 %v247
  %539 = vmatprep.subr.mxu0 %v251
  %540 = vmatpush1.msra.mxu0 %v250
  %541 = vmatprep.subr.mxu0 %v254
  %542 = vmatpush1.msra.mxu0 %v253
  %543 = vmatprep.subr.mxu0 %v257
  %544 = vmatpush1.msra.mxu0 %v256
  %545 = vmatprep.subr.mxu0 %v260
  %546 = vmatpush1.msra.mxu0 %v259
  %547 = vmatprep.subr.mxu0 %v263
  %548 = vmatpush1.msra.mxu0 %v262
  %549 = vmatprep.subr.mxu0 %v266
  %550 = vmatpush1.msra.mxu0 %v265
  %551 = vmatprep.subr.mxu0 %v269
  %552 = vmatpush1.msra.mxu0 %v268
  %553 = vmatprep.subr.mxu0 %v272
  %554 = vmatpush1.msra.mxu0 %v271
  %555 = vmatprep.subr.mxu0 %v275
  %556 = vmatpush1.msra.mxu0 %v274
  %557 = vmatprep.subr.mxu0 %v278
  %558 = vmatpush1.msra.mxu0 %v277
  %559 = vmatprep.subr.mxu0 %v281
  %560 = vmatpush1.msra.mxu0 %v280
  %561 = vmatprep.subr.mxu0 %v284
  %562 = vmatpush1.msra.mxu0 %v283
  %563 = vmatprep.subr.mxu0 %v287
  %564 = vmatpush1.msra.mxu0 %v286
  %565 = vmatprep.subr.mxu0 %v290
  %566 = vmatpush1.msra.mxu0 %v289
  %567 = vmatprep.subr.mxu0 %v293
  %568 = vmatpush1.msra.mxu0 %v292
  %569 = vmatprep.subr.mxu0 %v296
  %570 = vmatpush1.msra.mxu0 %v295
  %571 = vmatprep.subr.mxu0 %v299
  %572 = vmatpush1.msra.mxu0 %v298
  %573 = vmatprep.subr.mxu0 %v302
  %574 = vmatpush1.msra.mxu0 %v301
  %575 = vmatprep.subr.mxu0 %v305
  %576 = vmatpush1.msra.mxu0 %v304
  %577 = vmatprep.subr.mxu0 %v308
  %578 = vmatpush1.msra.mxu0 %v307
  %579 = vmatprep.subr.mxu0 %v311
  %580 = vmatpush1.msra.mxu0 %v310
  %581 = vmatprep.subr.mxu0 %v314
  %582 = vmatpush1.msra.mxu0 %v313
  %583 = vmatprep.subr.mxu0 %v317
  %584 = vmatpush1.msra.mxu0 %v316
  %585 = vmatprep.subr.mxu0 %v320
  %586 = vmatpush1.msra.mxu0 %v319
  %587 = vmatprep.subr.mxu0 %v323
  %588 = vmatpush1.msra.mxu0 %v322
  %589 = vmatprep.subr.mxu0 %v326
  %590 = vmatpush1.msra.mxu0 %v325
  %591 = vmatprep.subr.mxu0 %v329
  %592 = vmatpush1.msra.mxu0 %v328
  %593 = vmatprep.subr.mxu0 %v332
  %594 = vmatpush1.msra.mxu0 %v331
  %595 = vmatprep.mubr.f32.mxu0 %v23
  %596 = vmatmul.mubr.f32.gmra.mrb[0].mxu0 %v22
  %v597 = vpop.f32.mrb[0].mxu0
  %v598 = vadd.f32 %v509, %v597
  %v599 = vpop.f32.mrb[0].mxu0
  %v600 = vadd.f32 %v511, %v599
  %601 = vmatprep.mubr.f32.mxu0 %v30
  %602 = vmatmul.mubr.f32.gmra.mrb[0].mxu0 %v29
  %v603 = vpop.f32.mrb[0].mxu0
  %v604 = vadd.f32 %v515, %v603
  %v605 = vpop.f32.mrb[0].mxu0
  %v606 = vadd.f32 %v517, %v605
  %607 = vmatprep.mubr.f32.mxu0 %v37
  %608 = vmatmul.mubr.f32.gmra.mrb[0].mxu0 %v36
  %v609 = vpop.f32.mrb[0].mxu0
  %v610 = vadd.f32 %v521, %v609
  %v611 = vpop.f32.mrb[0].mxu0
  %v612 = vadd.f32 %v523, %v611
  %613 = vmatprep.mubr.f32.mxu0 %v44
  %614 = vmatmul.mubr.f32.gmra.mrb[0].mxu0 %v43
  %v615 = vpop.f32.mrb[0].mxu0
  %v616 = vadd.f32 %v527, %v615
  %v617 = vpop.f32.mrb[0].mxu0
  %v618 = vadd.f32 %v529, %v617
  %619 = vdwg.mxu0
  %620 = vmatprep.subr.mxu0 %v335
  %621 = vmatpush1.msra.mxu0 %v334
  %622 = vmatprep.subr.mxu0 %v338
  %623 = vmatpush1.msra.mxu0 %v337
  %624 = vmatprep.subr.mxu0 0.0
  %625 = vmatpush1.msra.mxu0 0.0
  %626 = vmatprep.subr.mxu0 0.0
  %627 = vmatpush1.msra.mxu0 0.0
  %628 = vmatprep.subr.mxu0 0.0
  %629 = vmatpush1.msra.mxu0 0.0
  %630 = vmatprep.subr.mxu0 0.0
  %631 = vmatpush1.msra.mxu0 0.0
  %632 = vmatprep.subr.mxu0 0.0
  %633 = vmatpush1.msra.mxu0 0.0
  %634 = vmatprep.subr.mxu0 0.0
  %635 = vmatpush1.msra.mxu0 0.0
  %636 = vmatprep.subr.mxu0 0.0
  %637 = vmatpush1.msra.mxu0 0.0
  %638 = vmatprep.subr.mxu0 0.0
  %639 = vmatpush1.msra.mxu0 0.0
  %640 = vmatprep.subr.mxu0 0.0
  %641 = vmatpush1.msra.mxu0 0.0
  %642 = vmatprep.subr.mxu0 0.0
  %643 = vmatpush1.msra.mxu0 0.0
  %644 = vmatprep.subr.mxu0 0.0
  %645 = vmatpush1.msra.mxu0 0.0
  %646 = vmatprep.subr.mxu0 0.0
  %647 = vmatpush1.msra.mxu0 0.0
  %648 = vmatprep.subr.mxu0 0.0
  %649 = vmatpush1.msra.mxu0 0.0
  %650 = vmatprep.subr.mxu0 0.0
  %651 = vmatpush1.msra.mxu0 0.0
  %652 = vmatprep.subr.mxu0 0.0
  %653 = vmatpush1.msra.mxu0 0.0
  %654 = vmatprep.subr.mxu0 0.0
  %655 = vmatpush1.msra.mxu0 0.0
  %656 = vmatprep.subr.mxu0 0.0
  %657 = vmatpush1.msra.mxu0 0.0
  %658 = vmatprep.subr.mxu0 0.0
  %659 = vmatpush1.msra.mxu0 0.0
  %660 = vmatprep.subr.mxu0 0.0
  %661 = vmatpush1.msra.mxu0 0.0
  %662 = vmatprep.subr.mxu0 0.0
  %663 = vmatpush1.msra.mxu0 0.0
  %664 = vmatprep.subr.mxu0 0.0
  %665 = vmatpush1.msra.mxu0 0.0
  %666 = vmatprep.subr.mxu0 0.0
  %667 = vmatpush1.msra.mxu0 0.0
  %668 = vmatprep.subr.mxu0 0.0
  %669 = vmatpush1.msra.mxu0 0.0
  %670 = vmatprep.subr.mxu0 0.0
  %671 = vmatpush1.msra.mxu0 0.0
  %672 = vmatprep.subr.mxu0 0.0
  %673 = vmatpush1.msra.mxu0 0.0
  %674 = vmatprep.subr.mxu0 0.0
  %675 = vmatpush1.msra.mxu0 0.0
  %676 = vmatprep.subr.mxu0 0.0
  %677 = vmatpush1.msra.mxu0 0.0
  %678 = vmatprep.subr.mxu0 0.0
  %679 = vmatpush1.msra.mxu0 0.0
  %680 = vmatprep.subr.mxu0 0.0
  %681 = vmatpush1.msra.mxu0 0.0
  %682 = vmatprep.subr.mxu0 0.0
  %683 = vmatpush1.msra.mxu0 0.0
  %684 = vmatprep.mubr.f32.mxu0 0.0
  %685 = vmatmul.mubr.f32.gmra.mrb[0].mxu0 %v342
  %v686 = vpop.f32.mrb[0].mxu0
  %v687 = vadd.f32 %v598, %v686
  %v688 = vpop.f32.mrb[0].mxu0
  %v689 = vadd.f32 %v600, %v688
  %690 = vmatprep.mubr.f32.mxu0 0.0
  %691 = vmatmul.mubr.f32.gmra.mrb[0].mxu0 %v345
  %v692 = vpop.f32.mrb[0].mxu0
  %v693 = vadd.f32 %v604, %v692
  %v694 = vpop.f32.mrb[0].mxu0
  %v695 = vadd.f32 %v606, %v694
  %696 = vmatprep.mubr.f32.mxu0 0.0
  %697 = vmatmul.mubr.f32.gmra.mrb[0].mxu0 %v348
  %v698 = vpop.f32.mrb[0].mxu0
  %v699 = vadd.f32 %v610, %v698
  %v700 = vpop.f32.mrb[0].mxu0
  %v701 = vadd.f32 %v612, %v700
  %702 = vmatprep.mubr.f32.mxu0 0.0
  %703 = vmatmul.mubr.f32.gmra.mrb[0].mxu0 %v351
  %v704 = vpop.f32.mrb[0].mxu0
  %v705 = vadd.f32 %v616, %v704
  %v706 = vpop.f32.mrb[0].mxu0
  %v707 = vadd.f32 %v618, %v706
  %708 = vdwg.mxu0
  %709 = vmatprep.subr.mxu0 0.0
  %710 = vmatpush1.msra.mxu0 %v48
  %711 = vmatprep.subr.mxu0 0.0
  %712 = vmatpush1.msra.mxu0 %v51
  %713 = vmatprep.subr.mxu0 0.0
  %714 = vmatpush1.msra.mxu0 %v54
  %715 = vmatprep.subr.mxu0 0.0
  %716 = vmatpush1.msra.mxu0 %v57
  %717 = vmatprep.subr.mxu0 0.0
  %718 = vmatpush1.msra.mxu0 %v60
  %719 = vmatprep.subr.mxu0 0.0
  %720 = vmatpush1.msra.mxu0 %v63
  %721 = vmatprep.subr.mxu0 0.0
  %722 = vmatpush1.msra.mxu0 %v66
  %723 = vmatprep.subr.mxu0 0.0
  %724 = vmatpush1.msra.mxu0 %v69
  %725 = vmatprep.subr.mxu0 0.0
  %726 = vmatpush1.msra.mxu0 %v72
  %727 = vmatprep.subr.mxu0 0.0
  %728 = vmatpush1.msra.mxu0 %v75
  %729 = vmatprep.subr.mxu0 0.0
  %730 = vmatpush1.msra.mxu0 %v78
  %731 = vmatprep.subr.mxu0 0.0
  %732 = vmatpush1.msra.mxu0 %v81
  %733 = vmatprep.subr.mxu0 0.0
  %734 = vmatpush1.msra.mxu0 %v84
  %735 = vmatprep.subr.mxu0 0.0
  %736 = vmatpush1.msra.mxu0 %v87
  %737 = vmatprep.subr.mxu0 0.0
  %738 = vmatpush1.msra.mxu0 %v90
  %739 = vmatprep.subr.mxu0 0.0
  %740 = vmatpush1.msra.mxu0 %v93
  %741 = vmatprep.subr.mxu0 0.0
  %742 = vmatpush1.msra.mxu0 %v96
  %743 = vmatprep.subr.mxu0 0.0
  %744 = vmatpush1.msra.mxu0 %v99
  %745 = vmatprep.subr.mxu0 0.0
  %746 = vmatpush1.msra.mxu0 %v102
  %747 = vmatprep.subr.mxu0 0.0
  %748 = vmatpush1.msra.mxu0 %v105
  %749 = vmatprep.subr.mxu0 0.0
  %750 = vmatpush1.msra.mxu0 %v108
  %751 = vmatprep.subr.mxu0 0.0
  %752 = vmatpush1.msra.mxu0 %v111
  %753 = vmatprep.subr.mxu0 0.0
  %754 = vmatpush1.msra.mxu0 %v114
  %755 = vmatprep.subr.mxu0 0.0
  %756 = vmatpush1.msra.mxu0 %v117
  %757 = vmatprep.subr.mxu0 0.0
  %758 = vmatpush1.msra.mxu0 %v120
  %759 = vmatprep.subr.mxu0 0.0
  %760 = vmatpush1.msra.mxu0 %v123
  %761 = vmatprep.subr.mxu0 0.0
  %762 = vmatpush1.msra.mxu0 %v126
  %763 = vmatprep.subr.mxu0 0.0
  %764 = vmatpush1.msra.mxu0 %v129
  %765 = vmatprep.subr.mxu0 0.0
  %766 = vmatpush1.msra.mxu0 %v132
  %767 = vmatprep.subr.mxu0 0.0
  %768 = vmatpush1.msra.mxu0 %v135
  %769 = vmatprep.subr.mxu0 0.0
  %770 = vmatpush1.msra.mxu0 %v138
  %771 = vmatprep.subr.mxu0 0.0
  %772 = vmatpush1.msra.mxu0 %v141
  %773 = vmatprep.mubr.f32.mxu0 %v19
  %774 = vmatmul.mubr.f32.gmra.mrb[0].mxu0 %v18
  %v775 = vpop.f32.mrb[0].mxu0
  %v776 = vadd.f32 0.0, %v775
  %v777 = vpop.f32.mrb[0].mxu0
  %778 = vmatprep.mubr.f32.mxu0 %v26
  %779 = vmatmul.mubr.f32.gmra.mrb[0].mxu0 %v25
  %v780 = vpop.f32.mrb[0].mxu0
  %v781 = vadd.f32 0.0, %v780
  %v782 = vpop.f32.mrb[0].mxu0
  %783 = vmatprep.mubr.f32.mxu0 %v33
  %784 = vmatmul.mubr.f32.gmra.mrb[0].mxu0 %v32
  %v785 = vpop.f32.mrb[0].mxu0
  %v786 = vadd.f32 0.0, %v785
  %v787 = vpop.f32.mrb[0].mxu0
  %788 = vmatprep.mubr.f32.mxu0 %v40
  %789 = vmatmul.mubr.f32.gmra.mrb[0].mxu0 %v39
  %v790 = vpop.f32.mrb[0].mxu0
  %v791 = vadd.f32 0.0, %v790
  %v792 = vpop.f32.mrb[0].mxu0
  %793 = vdwg.mxu0
  %794 = vmatprep.subr.mxu0 0.0
  %795 = vmatpush1.msra.mxu0 %v144
  %796 = vmatprep.subr.mxu0 0.0
  %797 = vmatpush1.msra.mxu0 %v147
  %798 = vmatprep.subr.mxu0 0.0
  %799 = vmatpush1.msra.mxu0 %v150
  %800 = vmatprep.subr.mxu0 0.0
  %801 = vmatpush1.msra.mxu0 %v153
  %802 = vmatprep.subr.mxu0 0.0
  %803 = vmatpush1.msra.mxu0 %v156
  %804 = vmatprep.subr.mxu0 0.0
  %805 = vmatpush1.msra.mxu0 %v159
  %806 = vmatprep.subr.mxu0 0.0
  %807 = vmatpush1.msra.mxu0 %v162
  %808 = vmatprep.subr.mxu0 0.0
  %809 = vmatpush1.msra.mxu0 %v165
  %810 = vmatprep.subr.mxu0 0.0
  %811 = vmatpush1.msra.mxu0 %v168
  %812 = vmatprep.subr.mxu0 0.0
  %813 = vmatpush1.msra.mxu0 %v171
  %814 = vmatprep.subr.mxu0 0.0
  %815 = vmatpush1.msra.mxu0 %v174
  %816 = vmatprep.subr.mxu0 0.0
  %817 = vmatpush1.msra.mxu0 %v177
  %818 = vmatprep.subr.mxu0 0.0
  %819 = vmatpush1.msra.mxu0 %v180
  %820 = vmatprep.subr.mxu0 0.0
  %821 = vmatpush1.msra.mxu0 %v183
  %822 = vmatprep.subr.mxu0 0.0
  %823 = vmatpush1.msra.mxu0 %v186
  %824 = vmatprep.subr.mxu0 0.0
  %825 = vmatpush1.msra.mxu0 %v189
  %826 = vmatprep.subr.mxu0 0.0
  %827 = vmatpush1.msra.mxu0 %v192
  %828 = vmatprep.subr.mxu0 0.0
  %829 = vmatpush1.msra.mxu0 %v195
  %830 = vmatprep.subr.mxu0 0.0
  %831 = vmatpush1.msra.mxu0 %v198
  %832 = vmatprep.subr.mxu0 0.0
  %833 = vmatpush1.msra.mxu0 %v201
  %834 = vmatprep.subr.mxu0 0.0
  %835 = vmatpush1.msra.mxu0 %v204
  %836 = vmatprep.subr.mxu0 0.0
  %837 = vmatpush1.msra.mxu0 %v207
  %838 = vmatprep.subr.mxu0 0.0
  %839 = vmatpush1.msra.mxu0 %v210
  %840 = vmatprep.subr.mxu0 0.0
  %841 = vmatpush1.msra.mxu0 %v213
  %842 = vmatprep.subr.mxu0 0.0
  %843 = vmatpush1.msra.mxu0 %v216
  %844 = vmatprep.subr.mxu0 0.0
  %845 = vmatpush1.msra.mxu0 %v219
  %846 = vmatprep.subr.mxu0 0.0
  %847 = vmatpush1.msra.mxu0 %v222
  %848 = vmatprep.subr.mxu0 0.0
  %849 = vmatpush1.msra.mxu0 %v225
  %850 = vmatprep.subr.mxu0 0.0
  %851 = vmatpush1.msra.mxu0 %v228
  %852 = vmatprep.subr.mxu0 0.0
  %853 = vmatpush1.msra.mxu0 %v231
  %854 = vmatprep.subr.mxu0 0.0
  %855 = vmatpush1.msra.mxu0 %v234
  %856 = vmatprep.subr.mxu0 0.0
  %857 = vmatpush1.msra.mxu0 %v237
  %858 = vmatprep.mubr.f32.mxu0 %v21
  %859 = vmatmul.mubr.f32.gmra.mrb[0].mxu0 %v20
  %v860 = vpop.f32.mrb[0].mxu0
  %v861 = vadd.f32 %v776, %v860
  %v862 = vpop.f32.mrb[0].mxu0
  %863 = vmatprep.mubr.f32.mxu0 %v28
  %864 = vmatmul.mubr.f32.gmra.mrb[0].mxu0 %v27
  %v865 = vpop.f32.mrb[0].mxu0
  %v866 = vadd.f32 %v781, %v865
  %v867 = vpop.f32.mrb[0].mxu0
  %868 = vmatprep.mubr.f32.mxu0 %v35
  %869 = vmatmul.mubr.f32.gmra.mrb[0].mxu0 %v34
  %v870 = vpop.f32.mrb[0].mxu0
  %v871 = vadd.f32 %v786, %v870
  %v872 = vpop.f32.mrb[0].mxu0
  %873 = vmatprep.mubr.f32.mxu0 %v42
  %874 = vmatmul.mubr.f32.gmra.mrb[0].mxu0 %v41
  %v875 = vpop.f32.mrb[0].mxu0
  %v876 = vadd.f32 %v791, %v875
  %v877 = vpop.f32.mrb[0].mxu0
  %878 = vdwg.mxu0
  %879 = vmatprep.subr.mxu0 0.0
  %880 = vmatpush1.msra.mxu0 %v240
  %881 = vmatprep.subr.mxu0 0.0
  %882 = vmatpush1.msra.mxu0 %v243
  %883 = vmatprep.subr.mxu0 0.0
  %884 = vmatpush1.msra.mxu0 %v246
  %885 = vmatprep.subr.mxu0 0.0
  %886 = vmatpush1.msra.mxu0 %v249
  %887 = vmatprep.subr.mxu0 0.0
  %888 = vmatpush1.msra.mxu0 %v252
  %889 = vmatprep.subr.mxu0 0.0
  %890 = vmatpush1.msra.mxu0 %v255
  %891 = vmatprep.subr.mxu0 0.0
  %892 = vmatpush1.msra.mxu0 %v258
  %893 = vmatprep.subr.mxu0 0.0
  %894 = vmatpush1.msra.mxu0 %v261
  %895 = vmatprep.subr.mxu0 0.0
  %896 = vmatpush1.msra.mxu0 %v264
  %897 = vmatprep.subr.mxu0 0.0
  %898 = vmatpush1.msra.mxu0 %v267
  %899 = vmatprep.subr.mxu0 0.0
  %900 = vmatpush1.msra.mxu0 %v270
  %901 = vmatprep.subr.mxu0 0.0
  %902 = vmatpush1.msra.mxu0 %v273
  %903 = vmatprep.subr.mxu0 0.0
  %904 = vmatpush1.msra.mxu0 %v276
  %905 = vmatprep.subr.mxu0 0.0
  %906 = vmatpush1.msra.mxu0 %v279
  %907 = vmatprep.subr.mxu0 0.0
  %908 = vmatpush1.msra.mxu0 %v282
  %909 = vmatprep.subr.mxu0 0.0
  %910 = vmatpush1.msra.mxu0 %v285
  %911 = vmatprep.subr.mxu0 0.0
  %912 = vmatpush1.msra.mxu0 %v288
  %913 = vmatprep.subr.mxu0 0.0
  %914 = vmatpush1.msra.mxu0 %v291
  %915 = vmatprep.subr.mxu0 0.0
  %916 = vmatpush1.msra.mxu0 %v294
  %917 = vmatprep.subr.mxu0 0.0
  %918 = vmatpush1.msra.mxu0 %v297
  %919 = vmatprep.subr.mxu0 0.0
  %920 = vmatpush1.msra.mxu0 %v300
  %921 = vmatprep.subr.mxu0 0.0
  %922 = vmatpush1.msra.mxu0 %v303
  %923 = vmatprep.subr.mxu0 0.0
  %924 = vmatpush1.msra.mxu0 %v306
  %925 = vmatprep.subr.mxu0 0.0
  %926 = vmatpush1.msra.mxu0 %v309
  %927 = vmatprep.subr.mxu0 0.0
  %928 = vmatpush1.msra.mxu0 %v312
  %929 = vmatprep.subr.mxu0 0.0
  %930 = vmatpush1.msra.mxu0 %v315
  %931 = vmatprep.subr.mxu0 0.0
  %932 = vmatpush1.msra.mxu0 %v318
  %933 = vmatprep.subr.mxu0 0.0
  %934 = vmatpush1.msra.mxu0 %v321
  %935 = vmatprep.subr.mxu0 0.0
  %936 = vmatpush1.msra.mxu0 %v324
  %937 = vmatprep.subr.mxu0 0.0
  %938 = vmatpush1.msra.mxu0 %v327
  %939 = vmatprep.subr.mxu0 0.0
  %940 = vmatpush1.msra.mxu0 %v330
  %941 = vmatprep.subr.mxu0 0.0
  %942 = vmatpush1.msra.mxu0 %v333
  %943 = vmatprep.mubr.f32.mxu0 %v23
  %944 = vmatmul.mubr.f32.gmra.mrb[0].mxu0 %v22
  %v945 = vpop.f32.mrb[0].mxu0
  %v946 = vadd.f32 %v861, %v945
  %v947 = vpop.f32.mrb[0].mxu0
  %948 = vmatprep.mubr.f32.mxu0 %v30
  %949 = vmatmul.mubr.f32.gmra.mrb[0].mxu0 %v29
  %v950 = vpop.f32.mrb[0].mxu0
  %v951 = vadd.f32 %v866, %v950
  %v952 = vpop.f32.mrb[0].mxu0
  %953 = vmatprep.mubr.f32.mxu0 %v37
  %954 = vmatmul.mubr.f32.gmra.mrb[0].mxu0 %v36
  %v955 = vpop.f32.mrb[0].mxu0
  %v956 = vadd.f32 %v871, %v955
  %v957 = vpop.f32.mrb[0].mxu0
  %958 = vmatprep.mubr.f32.mxu0 %v44
  %959 = vmatmul.mubr.f32.gmra.mrb[0].mxu0 %v43
  %v960 = vpop.f32.mrb[0].mxu0
  %v961 = vadd.f32 %v876, %v960
  %v962 = vpop.f32.mrb[0].mxu0
  %963 = vdwg.mxu0
  %964 = vmatprep.subr.mxu0 0.0
  %965 = vmatpush1.msra.mxu0 %v336
  %966 = vmatprep.subr.mxu0 0.0
  %967 = vmatpush1.msra.mxu0 %v339
  %968 = vmatprep.subr.mxu0 0.0
  %969 = vmatpush1.msra.mxu0 0.0
  %970 = vmatprep.subr.mxu0 0.0
  %971 = vmatpush1.msra.mxu0 0.0
  %972 = vmatprep.subr.mxu0 0.0
  %973 = vmatpush1.msra.mxu0 0.0
  %974 = vmatprep.subr.mxu0 0.0
  %975 = vmatpush1.msra.mxu0 0.0
  %976 = vmatprep.subr.mxu0 0.0
  %977 = vmatpush1.msra.mxu0 0.0
  %978 = vmatprep.subr.mxu0 0.0
  %979 = vmatpush1.msra.mxu0 0.0
  %980 = vmatprep.subr.mxu0 0.0
  %981 = vmatpush1.msra.mxu0 0.0
  %982 = vmatprep.subr.mxu0 0.0
  %983 = vmatpush1.msra.mxu0 0.0
  %984 = vmatprep.subr.mxu0 0.0
  %985 = vmatpush1.msra.mxu0 0.0
  %986 = vmatprep.subr.mxu0 0.0
  %987 = vmatpush1.msra.mxu0 0.0
  %988 = vmatprep.subr.mxu0 0.0
  %989 = vmatpush1.msra.mxu0 0.0
  %990 = vmatprep.subr.mxu0 0.0
  %991 = vmatpush1.msra.mxu0 0.0
  %992 = vmatprep.subr.mxu0 0.0
  %993 = vmatpush1.msra.mxu0 0.0
  %994 = vmatprep.subr.mxu0 0.0
  %995 = vmatpush1.msra.mxu0 0.0
  %996 = vmatprep.subr.mxu0 0.0
  %997 = vmatpush1.msra.mxu0 0.0
  %998 = vmatprep.subr.mxu0 0.0
  %999 = vmatpush1.msra.mxu0 0.0
  %1000 = vmatprep.subr.mxu0 0.0
  %1001 = vmatpush1.msra.mxu0 0.0
  %1002 = vmatprep.subr.mxu0 0.0
  %1003 = vmatpush1.msra.mxu0 0.0
  %1004 = vmatprep.subr.mxu0 0.0
  %1005 = vmatpush1.msra.mxu0 0.0
  %1006 = vmatprep.subr.mxu0 0.0
  %1007 = vmatpush1.msra.mxu0 0.0
  %1008 = vmatprep.subr.mxu0 0.0
  %1009 = vmatpush1.msra.mxu0 0.0
  %1010 = vmatprep.subr.mxu0 0.0
  %1011 = vmatpush1.msra.mxu0 0.0
  %1012 = vmatprep.subr.mxu0 0.0
  %1013 = vmatpush1.msra.mxu0 0.0
  %1014 = vmatprep.subr.mxu0 0.0
  %1015 = vmatpush1.msra.mxu0 0.0
  %1016 = vmatprep.subr.mxu0 0.0
  %1017 = vmatpush1.msra.mxu0 0.0
  %1018 = vmatprep.subr.mxu0 0.0
  %1019 = vmatpush1.msra.mxu0 0.0
  %1020 = vmatprep.subr.mxu0 0.0
  %1021 = vmatpush1.msra.mxu0 0.0
  %1022 = vmatprep.subr.mxu0 0.0
  %1023 = vmatpush1.msra.mxu0 0.0
  %1024 = vmatprep.subr.mxu0 0.0
  %1025 = vmatpush1.msra.mxu0 0.0
  %1026 = vmatprep.subr.mxu0 0.0
  %1027 = vmatpush1.msra.mxu0 0.0
  %1028 = vmatprep.mubr.f32.mxu0 0.0
  %1029 = vmatmul.mubr.f32.gmra.mrb[0].mxu0 %v342
  %v1030 = vpop.f32.mrb[0].mxu0
  %v1031 = vadd.f32 %v946, %v1030
  %v1032 = vpop.f32.mrb[0].mxu0
  %1033 = vmatprep.mubr.f32.mxu0 0.0
  %1034 = vmatmul.mubr.f32.gmra.mrb[0].mxu0 %v345
  %v1035 = vpop.f32.mrb[0].mxu0
  %v1036 = vadd.f32 %v951, %v1035
  %v1037 = vpop.f32.mrb[0].mxu0
  %1038 = vmatprep.mubr.f32.mxu0 0.0
  %1039 = vmatmul.mubr.f32.gmra.mrb[0].mxu0 %v348
  %v1040 = vpop.f32.mrb[0].mxu0
  %v1041 = vadd.f32 %v956, %v1040
  %v1042 = vpop.f32.mrb[0].mxu0
  %1043 = vmatprep.mubr.f32.mxu0 0.0
  %1044 = vmatmul.mubr.f32.gmra.mrb[0].mxu0 %v351
  %v1045 = vpop.f32.mrb[0].mxu0
  %v1046 = vadd.f32 %v961, %v1045
  %v1047 = vpop.f32.mrb[0].mxu0
  %1048 = vdwg.mxu0
  %v1049 = vadd.f32 %v687, %v689
  %vm1050 = vcmask 670720
  %v1051 = vsel %vm1050, %v1031, 0.0
  %v1052 = vadd.f32 %v1049, %v1051
  %1053 = vadd.xlane.f32.xlu0 %v1052
  %v1054 = vpop.xlane.xlu0 %1053
  %v1055 = vadd.f32 %v693, %v695
  %v1056 = vsel %vm1050, %v1036, 0.0
  %v1057 = vadd.f32 %v1055, %v1056
  %1058 = vadd.xlane.f32.xlu0 %v1057
  %v1059 = vpop.xlane.xlu0 %1058
  %v1060 = vadd.f32 %v699, %v701
  %v1061 = vsel %vm1050, %v1041, 0.0
  %v1062 = vadd.f32 %v1060, %v1061
  %1063 = vadd.xlane.f32.xlu0 %v1062
  %v1064 = vpop.xlane.xlu0 %1063
  %v1065 = vadd.f32 %v705, %v707
  %v1066 = vsel %vm1050, %v1046, 0.0
  %v1067 = vadd.f32 %v1065, %v1066
  %1068 = vadd.xlane.f32.xlu0 %v1067
  %v1069 = vpop.xlane.xlu0 %1068
  %v1070 = vmul.f32 %v687, %v687
  %v1071 = vmul.f32 %v689, %v689
  %v1072 = vmul.f32 %v1031, %v1031
  %v1073 = vmul.f32 %v693, %v693
  %v1074 = vmul.f32 %v695, %v695
  %v1075 = vmul.f32 %v1036, %v1036
  %v1076 = vmul.f32 %v699, %v699
  %v1077 = vmul.f32 %v701, %v701
  %v1078 = vmul.f32 %v1041, %v1041
  %v1079 = vmul.f32 %v705, %v705
  %v1080 = vmul.f32 %v707, %v707
  %v1081 = vmul.f32 %v1046, %v1046
  %v1082 = vadd.f32 %v1070, %v1071
  %v1083 = vsel %vm1050, %v1072, 0.0
  %v1084 = vadd.f32 %v1082, %v1083
  %1085 = vadd.xlane.f32.xlu0 %v1084
  %v1086 = vpop.xlane.xlu0 %1085
  %v1087 = vadd.f32 %v1073, %v1074
  %v1088 = vsel %vm1050, %v1075, 0.0
  %v1089 = vadd.f32 %v1087, %v1088
  %1090 = vadd.xlane.f32.xlu0 %v1089
  %v1091 = vpop.xlane.xlu0 %1090
  %v1092 = vadd.f32 %v1076, %v1077
  %v1093 = vsel %vm1050, %v1078, 0.0
  %v1094 = vadd.f32 %v1092, %v1093
  %1095 = vadd.xlane.f32.xlu0 %v1094
  %v1096 = vpop.xlane.xlu0 %1095
  %v1097 = vadd.f32 %v1079, %v1080
  %v1098 = vsel %vm1050, %v1081, 0.0
  %v1099 = vadd.f32 %v1097, %v1098
  %1100 = vadd.xlane.f32.xlu0 %v1099
  %v1101 = vpop.xlane.xlu0 %1100
  %v1102 = vmul.f32 %v1054, 0.00295858
  %v1103 = vmul.f32 %v1059, 0.00295858
  %v1104 = vmul.f32 %v1064, 0.00295858
  %v1105 = vmul.f32 %v1069, 0.00295858
  %v1106 = vmul.f32 %v1086, 0.00295858
  %v1107 = vmul.f32 %v1091, 0.00295858
  %v1108 = vmul.f32 %v1096, 0.00295858
  %v1109 = vmul.f32 %v1101, 0.00295858
  %v1110 = vmul.f32 %v1102, %v1102
  %v1111 = vmul.f32 %v1103, %v1103
  %v1112 = vmul.f32 %v1104, %v1104
  %v1113 = vmul.f32 %v1105, %v1105
  %v1114 = vsub.f32 %v1106, %v1110
  %v1115 = vsub.f32 %v1107, %v1111
  %v1116 = vsub.f32 %v1108, %v1112
  %v1117 = vsub.f32 %v1109, %v1113
  %v1118 = vmax.f32 %v1114, 0.0
  %v1119 = vmax.f32 %v1115, 0.0
  %v1120 = vmax.f32 %v1116, 0.0
  %v1121 = vmax.f32 %v1117, 0.0
  %v1122 = vld [vmem:[%s2] sm:$0xff]
  %v1123 = vld [vmem:[%s2 + $0x8] sm:$0xff]
  %v1124 = vld [vmem:[%s2 + $0x10] sm:$0xff]
  %v1125 = vld [vmem:[%s2 + $0x18] sm:$0xff]
  %v1126 = vadd.f32 %v1118, 1e-05
  %v1127 = vadd.f32 %v1119, 1e-05
  %v1128 = vadd.f32 %v1120, 1e-05
  %v1129 = vadd.f32 %v1121, 1e-05
  %v1130 = vrsqrt.pop %v1126
  %v1131 = vrsqrt.pop %v1127
  %v1132 = vrsqrt.pop %v1128
  %v1133 = vrsqrt.pop %v1129
  %v1134 = vmul.f32 %v1122, %v1130
  %v1135 = vmul.f32 %v1123, %v1131
  %v1136 = vmul.f32 %v1124, %v1132
  %v1137 = vmul.f32 %v1125, %v1133
  %v1138 = vmul.f32 %v1102, %v1134
  %v1139 = vmul.f32 %v1103, %v1135
  %v1140 = vmul.f32 %v1104, %v1136
  %v1141 = vmul.f32 %v1105, %v1137
  %1146 = vrot.lane.b32.xlu0 %v1138, 1
  %v1147 = vpop.permute.xlu0 %1146
  %1148 = vrot.lane.b32.xlu0 %v1139, 1
  %v1149 = vpop.permute.xlu0 %1148
  %1150 = vrot.lane.b32.xlu0 %v1140, 1
  %v1151 = vpop.permute.xlu0 %1150
  %1152 = vrot.lane.b32.xlu0 %v1141, 1
  %v1153 = vpop.permute.xlu0 %1152
  %v1158 = vsub.f32 %v1122, %v1147
  %v1159 = vsub.f32 %v1123, %v1149
  %v1160 = vsub.f32 %v1124, %v1151
  %v1161 = vsub.f32 %v1125, %v1153
  %1163 = vset.pattern.permute.xlu0 0
  %1164 = vperm.xlu0 %1163, %v1134
  %v1165 = vpop.permute.xlu0 %1164
  %1168 = vset.pattern.permute.xlu0 0
  %1169 = vperm.xlu0 %1168, %v1135
  %v1170 = vpop.permute.xlu0 %1169
  %1173 = vset.pattern.permute.xlu0 0
  %1174 = vperm.xlu0 %1173, %v1136
  %v1175 = vpop.permute.xlu0 %1174
  %1178 = vset.pattern.permute.xlu0 0
  %1179 = vperm.xlu0 %1178, %v1137
  %v1180 = vpop.permute.xlu0 %1179
  %v1182 = vmul.f32 %v687, %v1165
  %v1183 = vmul.f32 %v689, %v1165
  %v1184 = vmul.f32 %v1031, %v1165
  %v1185 = vmul.f32 %v693, %v1170
  %v1186 = vmul.f32 %v695, %v1170
  %v1187 = vmul.f32 %v1036, %v1170
  %v1188 = vmul.f32 %v699, %v1175
  %v1189 = vmul.f32 %v701, %v1175
  %v1190 = vmul.f32 %v1041, %v1175
  %v1191 = vmul.f32 %v705, %v1180
  %v1192 = vmul.f32 %v707, %v1180
  %v1193 = vmul.f32 %v1046, %v1180
  %1195 = vset.pattern.permute.xlu0 1
  %1196 = vperm.xlu0 %1195, %v1158
  %v1197 = vpop.permute.xlu0 %1196
  %1200 = vset.pattern.permute.xlu0 1
  %1201 = vperm.xlu0 %1200, %v1159
  %v1202 = vpop.permute.xlu0 %1201
  %1205 = vset.pattern.permute.xlu0 1
  %1206 = vperm.xlu0 %1205, %v1160
  %v1207 = vpop.permute.xlu0 %1206
  %1210 = vset.pattern.permute.xlu0 1
  %1211 = vperm.xlu0 %1210, %v1161
  %v1212 = vpop.permute.xlu0 %1211
  %v1214 = vadd.f32 %v1182, %v1197
  %v1215 = vadd.f32 %v1183, %v1197
  %v1216 = vadd.f32 %v1184, %v1197
  %v1217 = vadd.f32 %v1185, %v1202
  %v1218 = vadd.f32 %v1186, %v1202
  %v1219 = vadd.f32 %v1187, %v1202
  %v1220 = vadd.f32 %v1188, %v1207
  %v1221 = vadd.f32 %v1189, %v1207
  %v1222 = vadd.f32 %v1190, %v1207
  %v1223 = vadd.f32 %v1191, %v1212
  %v1224 = vadd.f32 %v1192, %v1212
  %v1225 = vadd.f32 %v1193, %v1212
  %s1226 = sld [smem:[#allocation2]]
  %vm1227 = vcmp.ge.f32.partialorder %v1214, 0.0
  %vm1228 = vcmp.ge.f32.partialorder %v1215, 0.0
  %vm1229 = vcmp.ge.f32.partialorder %v1216, 0.0
  %vm1230 = vcmp.ge.f32.partialorder %v1217, 0.0
  %vm1231 = vcmp.ge.f32.partialorder %v1218, 0.0
  %vm1232 = vcmp.ge.f32.partialorder %v1219, 0.0
  %vm1233 = vcmp.ge.f32.partialorder %v1220, 0.0
  %vm1234 = vcmp.ge.f32.partialorder %v1221, 0.0
  %vm1235 = vcmp.ge.f32.partialorder %v1222, 0.0
  %vm1236 = vcmp.ge.f32.partialorder %v1223, 0.0
  %vm1237 = vcmp.ge.f32.partialorder %v1224, 0.0
  %vm1238 = vcmp.ge.f32.partialorder %v1225, 0.0
  %v1239 = vstv %s1226
  %v1240 = vmul.f32 %v1239, %v1214
  %v1241 = vmul.f32 %v1239, %v1215
  %v1242 = vmul.f32 %v1239, %v1216
  %v1243 = vmul.f32 %v1239, %v1217
  %v1244 = vmul.f32 %v1239, %v1218
  %v1245 = vmul.f32 %v1239, %v1219
  %v1246 = vmul.f32 %v1239, %v1220
  %v1247 = vmul.f32 %v1239, %v1221
  %v1248 = vmul.f32 %v1239, %v1222
  %v1249 = vmul.f32 %v1239, %v1223
  %v1250 = vmul.f32 %v1239, %v1224
  %v1251 = vmul.f32 %v1239, %v1225
  %v1252 = vsel %vm1227, %v1214, %v1240
  %v1253 = vsel %vm1228, %v1215, %v1241
  %v1254 = vsel %vm1229, %v1216, %v1242
  %v1255 = vsel %vm1230, %v1217, %v1243
  %v1256 = vsel %vm1231, %v1218, %v1244
  %v1257 = vsel %vm1232, %v1219, %v1245
  %v1258 = vsel %vm1233, %v1220, %v1246
  %v1259 = vsel %vm1234, %v1221, %v1247
  %v1260 = vsel %vm1235, %v1222, %v1248
  %v1261 = vsel %vm1236, %v1223, %v1249
  %v1262 = vsel %vm1237, %v1224, %v1250
  %v1263 = vsel %vm1238, %v1225, %v1251
  %1264 = vst [vmem:[%s4] sm:$0xff] %v1252
  %1265 = vst [vmem:[%s4 + $0x8] sm:$0xff] %v1253
  %1266 = vst.msk [vmem:[%s4 + $0x10] sm:$0xff] %vm1050, %v1254
  %1267 = vst [vmem:[%s4 + $0x18] sm:$0xff] %v1255
  %1268 = vst [vmem:[%s4 + $0x20] sm:$0xff] %v1256
  %1269 = vst.msk [vmem:[%s4 + $0x28] sm:$0xff] %vm1050, %v1257
  %1270 = vst [vmem:[%s4 + $0x30] sm:$0xff] %v1258
  %1271 = vst [vmem:[%s4 + $0x38] sm:$0xff] %v1259
  %1272 = vst.msk [vmem:[%s4 + $0x40] sm:$0xff] %vm1050, %v1260
  %1273 = vst [vmem:[%s4 + $0x48] sm:$0xff] %v1261
  %1274 = vst [vmem:[%s4 + $0x50] sm:$0xff] %v1262
  %1275 = vst.msk [vmem:[%s4 + $0x58] sm:$0xff] %vm1050, %v1263
  // Predicated region
  $region18: #{encoder_forward.5} parent=0 // pred_check
    _
  $region19: #{encoder_forward.5} parent=0 // pred_check_branch
    %1277 = sbr.rel (0) target = $region21
  $region20: #{encoder_forward.5} parent=0 // pred_region
    _
  $region21: #{encoder_forward.5} parent=0 // pred_fallthru
    _
  // Predicated region
  $region22: #{encoder_forward.5} parent=0 // pred_check
    _
  $region23: #{encoder_forward.5} parent=0 // pred_check_branch
    %1279 = sbr.rel (0) target = $region25
  $region24: #{encoder_forward.5} parent=0 // pred_region
    _
  $region25: #{encoder_forward.5} parent=0 // pred_fallthru
    _

// kernel: encoder_forward.6
$region0: #{encoder_forward.6}
  #allocation0 [shape = 'u32[]', space=smem, size = 0x4, offset = 0x4, fixed_abs, tag = 'smem constant byte address 0x4 - core index']
  #allocation1 [shape = 'u32[144,128]{1,0:T(1,128)}', space=vmem, size = 0x12000, scoped, tag = 'internal scratch']
  #allocation2 [shape = 'f32[1]{0:T(128)S(6)}', space=smem, size = 0x200, scoped, tag = 'scoped memory for encoder_forward.6']
  %s0 = inlined_call_operand.vmem [shape: f32[64,1568], index: 0, kind: input, shape index: {}]
  %s1 = inlined_call_operand.vmem [shape: f32[1568,128], index: 1, kind: input, shape index: {}]
  %s2 = inlined_call_operand.vmem [shape: f32[64,2], index: 2, kind: input, shape index: {}]
  %s3 = inlined_call_operand.<no memory space> [shape: f32[1], index: 3, kind: input, shape index: {}]
  %s4 = inlined_call_operand.vmem [shape: f32[64,128], index: 4, kind: output, shape index: {}]
  %s5 = sld [smem:[#allocation0]]
  $region26: #{encoder_forward.6} parent=0
    _
  %s7 = ssub.s32 1, %s5
  %s8 = scalar_select 0, %s7, %s5
  %9 = sst [smem:[#allocation2]] %s3
  // Predicated region
  $region2: #{encoder_forward.6} parent=0 // pred_check
    _
  $region3: #{encoder_forward.6} parent=0 // pred_check_branch
    %11 = sbr.rel (0) target = $region5
  $region4: #{encoder_forward.6} parent=0 // pred_region
    _
  $region5: #{encoder_forward.6} parent=0 // pred_fallthru
    _
  // Predicated region
  $region6: #{encoder_forward.6} parent=0 // pred_check
    _
  $region7: #{encoder_forward.6} parent=0 // pred_check_branch
    %13 = sbr.rel (0) target = $region9
  $region8: #{encoder_forward.6} parent=0 // pred_region
    _
  $region9: #{encoder_forward.6} parent=0 // pred_fallthru
    _
  // Predicated region
  $region10: #{encoder_forward.6} parent=0 // pred_check
    _
  $region11: #{encoder_forward.6} parent=0 // pred_check_branch
    %15 = sbr.rel (0) target = $region13
  $region12: #{encoder_forward.6} parent=0 // pred_region
    _
  $region13: #{encoder_forward.6} parent=0 // pred_fallthru
    _
  // Predicated region
  $region14: #{encoder_forward.6} parent=0 // pred_check
    _
  $region15: #{encoder_forward.6} parent=0 // pred_check_branch
    %17 = sbr.rel (0) target = $region17
  $region16: #{encoder_forward.6} parent=0 // pred_region
    _
  $region17: #{encoder_forward.6} parent=0 // pred_fallthru
    _
  %v18 = vld [vmem:[%s0] sm:$0xff]
  %v19 = vld [vmem:[%s0 + $0x8] sm:$0xff]
  %v20 = vld [vmem:[%s0 + $0x10] sm:$0xff]
  %v21 = vld [vmem:[%s0 + $0x18] sm:$0xff]
  %v22 = vld [vmem:[%s0 + $0x20] sm:$0xff]
  %v23 = vld [vmem:[%s0 + $0x28] sm:$0xff]
  %v24 = vld [vmem:[%s0 + $0x30] sm:$0xff]
  %v25 = vld [vmem:[%s0 + $0x38] sm:$0xff]
  %v26 = vld [vmem:[%s0 + $0x40] sm:$0xff]
  %v27 = vld [vmem:[%s0 + $0x48] sm:$0xff]
  %v28 = vld [vmem:[%s0 + $0x50] sm:$0xff]
  %v29 = vld [vmem:[%s0 + $0x58] sm:$0xff]
  %v30 = vld [vmem:[%s0 + $0x60] sm:$0xff]
  %v31 = vld [vmem:[%s0 + $0x68] sm:$0xff]
  %v32 = vld [vmem:[%s0 + $0x70] sm:$0xff]
  %v33 = vld [vmem:[%s0 + $0x78] sm:$0xff]
  %v34 = vld [vmem:[%s0 + $0x80] sm:$0xff]
  %v35 = vld [vmem:[%s0 + $0x88] sm:$0xff]
  %v36 = vld [vmem:[%s0 + $0x90] sm:$0xff]
  %v37 = vld [vmem:[%s0 + $0x98] sm:$0xff]
  %v38 = vld [vmem:[%s0 + $0xa0] sm:$0xff]
  %v39 = vld [vmem:[%s0 + $0xa8] sm:$0xff]
  %v40 = vld [vmem:[%s0 + $0xb0] sm:$0xff]
  %v41 = vld [vmem:[%s0 + $0xb8] sm:$0xff]
  %v42 = vld [vmem:[%s0 + $0xc0] sm:$0xff]
  %v43 = vld [vmem:[%s0 + $0xc8] sm:$0xff]
  %v44 = vld [vmem:[%s0 + $0xd0] sm:$0xff]
  %v45 = vld [vmem:[%s0 + $0xd8] sm:$0xff]
  %v46 = vld [vmem:[%s0 + $0xe0] sm:$0xff]
  %v47 = vld [vmem:[%s0 + $0xe8] sm:$0xff]
  %v48 = vld [vmem:[%s0 + $0xf0] sm:$0xff]
  %v49 = vld [vmem:[%s0 + $0xf8] sm:$0xff]
  %v50 = vld [vmem:[%s0 + $0x100] sm:$0xff]
  %v51 = vld [vmem:[%s0 + $0x108] sm:$0xff]
  %v52 = vld [vmem:[%s0 + $0x110] sm:$0xff]
  %v53 = vld [vmem:[%s0 + $0x118] sm:$0xff]
  %v54 = vld [vmem:[%s0 + $0x120] sm:$0xff]
  %v55 = vld [vmem:[%s0 + $0x128] sm:$0xff]
  %v56 = vld [vmem:[%s0 + $0x130] sm:$0xff]
  %v57 = vld [vmem:[%s0 + $0x138] sm:$0xff]
  %v58 = vld [vmem:[%s0 + $0x140] sm:$0xff]
  %v59 = vld [vmem:[%s0 + $0x148] sm:$0xff]
  %v60 = vld [vmem:[%s0 + $0x150] sm:$0xff]
  %v61 = vld [vmem:[%s0 + $0x158] sm:$0xff]
  %v62 = vld [vmem:[%s0 + $0x160] sm:$0xff]
  %v63 = vld [vmem:[%s0 + $0x168] sm:$0xff]
  %v64 = vld [vmem:[%s0 + $0x170] sm:$0xff]
  %v65 = vld [vmem:[%s0 + $0x178] sm:$0xff]
  %v66 = vld [vmem:[%s0 + $0x180] sm:$0xff]
  %v67 = vld [vmem:[%s0 + $0x188] sm:$0xff]
  %v68 = vld [vmem:[%s0 + $0x190] sm:$0xff]
  %v69 = vld [vmem:[%s0 + $0x198] sm:$0xff]
  %v70 = vld [vmem:[%s0 + $0x1a0] sm:$0xff]
  %v71 = vld [vmem:[%s0 + $0x1a8] sm:$0xff]
  %v72 = vld [vmem:[%s0 + $0x1b0] sm:$0xff]
  %v73 = vld [vmem:[%s0 + $0x1b8] sm:$0xff]
  %v74 = vld [vmem:[%s0 + $0x1c0] sm:$0xff]
  %v75 = vld [vmem:[%s0 + $0x1c8] sm:$0xff]
  %v76 = vld [vmem:[%s0 + $0x1d0] sm:$0xff]
  %v77 = vld [vmem:[%s0 + $0x1d8] sm:$0xff]
  %v78 = vld [vmem:[%s0 + $0x1e0] sm:$0xff]
  %v79 = vld [vmem:[%s0 + $0x1e8] sm:$0xff]
  %v80 = vld [vmem:[%s0 + $0x1f0] sm:$0xff]
  %v81 = vld [vmem:[%s0 + $0x1f8] sm:$0xff]
  %v82 = vld [vmem:[%s0 + $0x200] sm:$0xff]
  %v83 = vld [vmem:[%s0 + $0x208] sm:$0xff]
  %v84 = vld [vmem:[%s0 + $0x210] sm:$0xff]
  %v85 = vld [vmem:[%s0 + $0x218] sm:$0xff]
  %v86 = vld [vmem:[%s0 + $0x220] sm:$0xff]
  %v87 = vld [vmem:[%s0 + $0x228] sm:$0xff]
  %v88 = vld [vmem:[%s0 + $0x230] sm:$0xff]
  %v89 = vld [vmem:[%s0 + $0x238] sm:$0xff]
  %v90 = vld [vmem:[%s0 + $0x240] sm:$0xff]
  %v91 = vld [vmem:[%s0 + $0x248] sm:$0xff]
  %v92 = vld [vmem:[%s0 + $0x250] sm:$0xff]
  %v93 = vld [vmem:[%s0 + $0x258] sm:$0xff]
  %v94 = vld [vmem:[%s0 + $0x260] sm:$0xff]
  %v95 = vld [vmem:[%s0 + $0x268] sm:$0xff]
  %v96 = vld [vmem:[%s0 + $0x270] sm:$0xff]
  %v97 = vld [vmem:[%s0 + $0x278] sm:$0xff]
  %v98 = vld [vmem:[%s0 + $0x280] sm:$0xff]
  %v99 = vld [vmem:[%s0 + $0x288] sm:$0xff]
  %v100 = vld [vmem:[%s0 + $0x290] sm:$0xff]
  %v101 = vld [vmem:[%s0 + $0x298] sm:$0xff]
  %v102 = vld [vmem:[%s0 + $0x2a0] sm:$0xff]
  %v103 = vld [vmem:[%s0 + $0x2a8] sm:$0xff]
  %v104 = vld [vmem:[%s0 + $0x2b0] sm:$0xff]
  %v105 = vld [vmem:[%s0 + $0x2b8] sm:$0xff]
  %v106 = vld [vmem:[%s0 + $0x2c0] sm:$0xff]
  %v107 = vld [vmem:[%s0 + $0x2c8] sm:$0xff]
  %v108 = vld [vmem:[%s0 + $0x2d0] sm:$0xff]
  %v109 = vld [vmem:[%s0 + $0x2d8] sm:$0xff]
  %v110 = vld [vmem:[%s0 + $0x2e0] sm:$0xff]
  %v111 = vld [vmem:[%s0 + $0x2e8] sm:$0xff]
  %v112 = vld [vmem:[%s0 + $0x2f0] sm:$0xff]
  %v113 = vld [vmem:[%s0 + $0x2f8] sm:$0xff]
  %v114 = vld [vmem:[%s0 + $0x300] sm:$0xff]
  %v115 = vld [vmem:[%s0 + $0x308] sm:$0xff]
  %v116 = vld [vmem:[%s0 + $0x310] sm:$0xff]
  %v117 = vld [vmem:[%s0 + $0x318] sm:$0xff]
  %v118 = vld [vmem:[%s0 + $0x320] sm:$0xff]
  %v119 = vld [vmem:[%s0 + $0x328] sm:$0xff]
  %v120 = vld [vmem:[%s0 + $0x330] sm:$0xff]
  %v121 = vld [vmem:[%s0 + $0x338] sm:$0xff]
  %v122 = vld [vmem:[%s1] sm:$0xff]
  %v123 = vld [vmem:[%s1 + $0x8] sm:$0xff]
  %v124 = vld [vmem:[%s1 + $0x10] sm:$0xff]
  %v125 = vld [vmem:[%s1 + $0x18] sm:$0xff]
  %v126 = vld [vmem:[%s1 + $0x20] sm:$0xff]
  %v127 = vld [vmem:[%s1 + $0x28] sm:$0xff]
  %v128 = vld [vmem:[%s1 + $0x30] sm:$0xff]
  %v129 = vld [vmem:[%s1 + $0x38] sm:$0xff]
  %v130 = vld [vmem:[%s1 + $0x40] sm:$0xff]
  %v131 = vld [vmem:[%s1 + $0x48] sm:$0xff]
  %v132 = vld [vmem:[%s1 + $0x50] sm:$0xff]
  %v133 = vld [vmem:[%s1 + $0x58] sm:$0xff]
  %v134 = vld [vmem:[%s1 + $0x60] sm:$0xff]
  %v135 = vld [vmem:[%s1 + $0x68] sm:$0xff]
  %v136 = vld [vmem:[%s1 + $0x70] sm:$0xff]
  %v137 = vld [vmem:[%s1 + $0x78] sm:$0xff]
  %v138 = vld [vmem:[%s1 + $0x80] sm:$0xff]
  %v139 = vld [vmem:[%s1 + $0x88] sm:$0xff]
  %v140 = vld [vmem:[%s1 + $0x90] sm:$0xff]
  %v141 = vld [vmem:[%s1 + $0x98] sm:$0xff]
  %v142 = vld [vmem:[%s1 + $0xa0] sm:$0xff]
  %v143 = vld [vmem:[%s1 + $0xa8] sm:$0xff]
  %v144 = vld [vmem:[%s1 + $0xb0] sm:$0xff]
  %v145 = vld [vmem:[%s1 + $0xb8] sm:$0xff]
  %v146 = vld [vmem:[%s1 + $0xc0] sm:$0xff]
  %v147 = vld [vmem:[%s1 + $0xc8] sm:$0xff]
  %v148 = vld [vmem:[%s1 + $0xd0] sm:$0xff]
  %v149 = vld [vmem:[%s1 + $0xd8] sm:$0xff]
  %v150 = vld [vmem:[%s1 + $0xe0] sm:$0xff]
  %v151 = vld [vmem:[%s1 + $0xe8] sm:$0xff]
  %v152 = vld [vmem:[%s1 + $0xf0] sm:$0xff]
  %v153 = vld [vmem:[%s1 + $0xf8] sm:$0xff]
  %v154 = vld [vmem:[%s1 + $0x100] sm:$0xff]
  %v155 = vld [vmem:[%s1 + $0x108] sm:$0xff]
  %v156 = vld [vmem:[%s1 + $0x110] sm:$0xff]
  %v157 = vld [vmem:[%s1 + $0x118] sm:$0xff]
  %v158 = vld [vmem:[%s1 + $0x120] sm:$0xff]
  %v159 = vld [vmem:[%s1 + $0x128] sm:$0xff]
  %v160 = vld [vmem:[%s1 + $0x130] sm:$0xff]
  %v161 = vld [vmem:[%s1 + $0x138] sm:$0xff]
  %v162 = vld [vmem:[%s1 + $0x140] sm:$0xff]
  %v163 = vld [vmem:[%s1 + $0x148] sm:$0xff]
  %v164 = vld [vmem:[%s1 + $0x150] sm:$0xff]
  %v165 = vld [vmem:[%s1 + $0x158] sm:$0xff]
  %v166 = vld [vmem:[%s1 + $0x160] sm:$0xff]
  %v167 = vld [vmem:[%s1 + $0x168] sm:$0xff]
  %v168 = vld [vmem:[%s1 + $0x170] sm:$0xff]
  %v169 = vld [vmem:[%s1 + $0x178] sm:$0xff]
  %v170 = vld [vmem:[%s1 + $0x180] sm:$0xff]
  %v171 = vld [vmem:[%s1 + $0x188] sm:$0xff]
  %v172 = vld [vmem:[%s1 + $0x190] sm:$0xff]
  %v173 = vld [vmem:[%s1 + $0x198] sm:$0xff]
  %v174 = vld [vmem:[%s1 + $0x1a0] sm:$0xff]
  %v175 = vld [vmem:[%s1 + $0x1a8] sm:$0xff]
  %v176 = vld [vmem:[%s1 + $0x1b0] sm:$0xff]
  %v177 = vld [vmem:[%s1 + $0x1b8] sm:$0xff]
  %v178 = vld [vmem:[%s1 + $0x1c0] sm:$0xff]
  %v179 = vld [vmem:[%s1 + $0x1c8] sm:$0xff]
  %v180 = vld [vmem:[%s1 + $0x1d0] sm:$0xff]
  %v181 = vld [vmem:[%s1 + $0x1d8] sm:$0xff]
  %v182 = vld [vmem:[%s1 + $0x1e0] sm:$0xff]
  %v183 = vld [vmem:[%s1 + $0x1e8] sm:$0xff]
  %v184 = vld [vmem:[%s1 + $0x1f0] sm:$0xff]
  %v185 = vld [vmem:[%s1 + $0x1f8] sm:$0xff]
  %v186 = vld [vmem:[%s1 + $0x200] sm:$0xff]
  %v187 = vld [vmem:[%s1 + $0x208] sm:$0xff]
  %v188 = vld [vmem:[%s1 + $0x210] sm:$0xff]
  %v189 = vld [vmem:[%s1 + $0x218] sm:$0xff]
  %v190 = vld [vmem:[%s1 + $0x220] sm:$0xff]
  %v191 = vld [vmem:[%s1 + $0x228] sm:$0xff]
  %v192 = vld [vmem:[%s1 + $0x230] sm:$0xff]
  %v193 = vld [vmem:[%s1 + $0x238] sm:$0xff]
  %v194 = vld [vmem:[%s1 + $0x240] sm:$0xff]
  %v195 = vld [vmem:[%s1 + $0x248] sm:$0xff]
  %v196 = vld [vmem:[%s1 + $0x250] sm:$0xff]
  %v197 = vld [vmem:[%s1 + $0x258] sm:$0xff]
  %v198 = vld [vmem:[%s1 + $0x260] sm:$0xff]
  %v199 = vld [vmem:[%s1 + $0x268] sm:$0xff]
  %v200 = vld [vmem:[%s1 + $0x270] sm:$0xff]
  %v201 = vld [vmem:[%s1 + $0x278] sm:$0xff]
  %v202 = vld [vmem:[%s1 + $0x280] sm:$0xff]
  %v203 = vld [vmem:[%s1 + $0x288] sm:$0xff]
  %v204 = vld [vmem:[%s1 + $0x290] sm:$0xff]
  %v205 = vld [vmem:[%s1 + $0x298] sm:$0xff]
  %v206 = vld [vmem:[%s1 + $0x2a0] sm:$0xff]
  %v207 = vld [vmem:[%s1 + $0x2a8] sm:$0xff]
  %v208 = vld [vmem:[%s1 + $0x2b0] sm:$0xff]
  %v209 = vld [vmem:[%s1 + $0x2b8] sm:$0xff]
  %v210 = vld [vmem:[%s1 + $0x2c0] sm:$0xff]
  %v211 = vld [vmem:[%s1 + $0x2c8] sm:$0xff]
  %v212 = vld [vmem:[%s1 + $0x2d0] sm:$0xff]
  %v213 = vld [vmem:[%s1 + $0x2d8] sm:$0xff]
  %v214 = vld [vmem:[%s1 + $0x2e0] sm:$0xff]
  %v215 = vld [vmem:[%s1 + $0x2e8] sm:$0xff]
  %v216 = vld [vmem:[%s1 + $0x2f0] sm:$0xff]
  %v217 = vld [vmem:[%s1 + $0x2f8] sm:$0xff]
  %v218 = vld [vmem:[%s1 + $0x300] sm:$0xff]
  %v219 = vld [vmem:[%s1 + $0x308] sm:$0xff]
  %v220 = vld [vmem:[%s1 + $0x310] sm:$0xff]
  %v221 = vld [vmem:[%s1 + $0x318] sm:$0xff]
  %v222 = vld [vmem:[%s1 + $0x320] sm:$0xff]
  %v223 = vld [vmem:[%s1 + $0x328] sm:$0xff]
  %v224 = vld [vmem:[%s1 + $0x330] sm:$0xff]
  %v225 = vld [vmem:[%s1 + $0x338] sm:$0xff]
  %v226 = vld [vmem:[%s1 + $0x340] sm:$0xff]
  %v227 = vld [vmem:[%s1 + $0x348] sm:$0xff]
  %v228 = vld [vmem:[%s1 + $0x350] sm:$0xff]
  %v229 = vld [vmem:[%s1 + $0x358] sm:$0xff]
  %v230 = vld [vmem:[%s1 + $0x360] sm:$0xff]
  %v231 = vld [vmem:[%s1 + $0x368] sm:$0xff]
  %v232 = vld [vmem:[%s1 + $0x370] sm:$0xff]
  %v233 = vld [vmem:[%s1 + $0x378] sm:$0xff]
  %v234 = vld [vmem:[%s1 + $0x380] sm:$0xff]
  %v235 = vld [vmem:[%s1 + $0x388] sm:$0xff]
  %v236 = vld [vmem:[%s1 + $0x390] sm:$0xff]
  %v237 = vld [vmem:[%s1 + $0x398] sm:$0xff]
  %v238 = vld [vmem:[%s1 + $0x3a0] sm:$0xff]
  %v239 = vld [vmem:[%s1 + $0x3a8] sm:$0xff]
  %v240 = vld [vmem:[%s1 + $0x3b0] sm:$0xff]
  %v241 = vld [vmem:[%s1 + $0x3b8] sm:$0xff]
  %v242 = vld [vmem:[%s1 + $0x3c0] sm:$0xff]
  %v243 = vld [vmem:[%s1 + $0x3c8] sm:$0xff]
  %v244 = vld [vmem:[%s1 + $0x3d0] sm:$0xff]
  %v245 = vld [vmem:[%s1 + $0x3d8] sm:$0xff]
  %v246 = vld [vmem:[%s1 + $0x3e0] sm:$0xff]
  %v247 = vld [vmem:[%s1 + $0x3e8] sm:$0xff]
  %v248 = vld [vmem:[%s1 + $0x3f0] sm:$0xff]
  %v249 = vld [vmem:[%s1 + $0x3f8] sm:$0xff]
  %v250 = vld [vmem:[%s1 + $0x400] sm:$0xff]
  %v251 = vld [vmem:[%s1 + $0x408] sm:$0xff]
  %v252 = vld [vmem:[%s1 + $0x410] sm:$0xff]
  %v253 = vld [vmem:[%s1 + $0x418] sm:$0xff]
  %v254 = vld [vmem:[%s1 + $0x420] sm:$0xff]
  %v255 = vld [vmem:[%s1 + $0x428] sm:$0xff]
  %v256 = vld [vmem:[%s1 + $0x430] sm:$0xff]
  %v257 = vld [vmem:[%s1 + $0x438] sm:$0xff]
  %v258 = vld [vmem:[%s1 + $0x440] sm:$0xff]
  %v259 = vld [vmem:[%s1 + $0x448] sm:$0xff]
  %v260 = vld [vmem:[%s1 + $0x450] sm:$0xff]
  %v261 = vld [vmem:[%s1 + $0x458] sm:$0xff]
  %v262 = vld [vmem:[%s1 + $0x460] sm:$0xff]
  %v263 = vld [vmem:[%s1 + $0x468] sm:$0xff]
  %v264 = vld [vmem:[%s1 + $0x470] sm:$0xff]
  %v265 = vld [vmem:[%s1 + $0x478] sm:$0xff]
  %v266 = vld [vmem:[%s1 + $0x480] sm:$0xff]
  %v267 = vld [vmem:[%s1 + $0x488] sm:$0xff]
  %v268 = vld [vmem:[%s1 + $0x490] sm:$0xff]
  %v269 = vld [vmem:[%s1 + $0x498] sm:$0xff]
  %v270 = vld [vmem:[%s1 + $0x4a0] sm:$0xff]
  %v271 = vld [vmem:[%s1 + $0x4a8] sm:$0xff]
  %v272 = vld [vmem:[%s1 + $0x4b0] sm:$0xff]
  %v273 = vld [vmem:[%s1 + $0x4b8] sm:$0xff]
  %v274 = vld [vmem:[%s1 + $0x4c0] sm:$0xff]
  %v275 = vld [vmem:[%s1 + $0x4c8] sm:$0xff]
  %v276 = vld [vmem:[%s1 + $0x4d0] sm:$0xff]
  %v277 = vld [vmem:[%s1 + $0x4d8] sm:$0xff]
  %v278 = vld [vmem:[%s1 + $0x4e0] sm:$0xff]
  %v279 = vld [vmem:[%s1 + $0x4e8] sm:$0xff]
  %v280 = vld [vmem:[%s1 + $0x4f0] sm:$0xff]
  %v281 = vld [vmem:[%s1 + $0x4f8] sm:$0xff]
  %v282 = vld [vmem:[%s1 + $0x500] sm:$0xff]
  %v283 = vld [vmem:[%s1 + $0x508] sm:$0xff]
  %v284 = vld [vmem:[%s1 + $0x510] sm:$0xff]
  %v285 = vld [vmem:[%s1 + $0x518] sm:$0xff]
  %v286 = vld [vmem:[%s1 + $0x520] sm:$0xff]
  %v287 = vld [vmem:[%s1 + $0x528] sm:$0xff]
  %v288 = vld [vmem:[%s1 + $0x530] sm:$0xff]
  %v289 = vld [vmem:[%s1 + $0x538] sm:$0xff]
  %v290 = vld [vmem:[%s1 + $0x540] sm:$0xff]
  %v291 = vld [vmem:[%s1 + $0x548] sm:$0xff]
  %v292 = vld [vmem:[%s1 + $0x550] sm:$0xff]
  %v293 = vld [vmem:[%s1 + $0x558] sm:$0xff]
  %v294 = vld [vmem:[%s1 + $0x560] sm:$0xff]
  %v295 = vld [vmem:[%s1 + $0x568] sm:$0xff]
  %v296 = vld [vmem:[%s1 + $0x570] sm:$0xff]
  %v297 = vld [vmem:[%s1 + $0x578] sm:$0xff]
  %v298 = vld [vmem:[%s1 + $0x580] sm:$0xff]
  %v299 = vld [vmem:[%s1 + $0x588] sm:$0xff]
  %v300 = vld [vmem:[%s1 + $0x590] sm:$0xff]
  %v301 = vld [vmem:[%s1 + $0x598] sm:$0xff]
  %v302 = vld [vmem:[%s1 + $0x5a0] sm:$0xff]
  %v303 = vld [vmem:[%s1 + $0x5a8] sm:$0xff]
  %v304 = vld [vmem:[%s1 + $0x5b0] sm:$0xff]
  %v305 = vld [vmem:[%s1 + $0x5b8] sm:$0xff]
  %v306 = vld [vmem:[%s1 + $0x5c0] sm:$0xff]
  %v307 = vld [vmem:[%s1 + $0x5c8] sm:$0xff]
  %v308 = vld [vmem:[%s1 + $0x5d0] sm:$0xff]
  %v309 = vld [vmem:[%s1 + $0x5d8] sm:$0xff]
  %v310 = vld [vmem:[%s1 + $0x5e0] sm:$0xff]
  %v311 = vld [vmem:[%s1 + $0x5e8] sm:$0xff]
  %v312 = vld [vmem:[%s1 + $0x5f0] sm:$0xff]
  %v313 = vld [vmem:[%s1 + $0x5f8] sm:$0xff]
  %v314 = vld [vmem:[%s1 + $0x600] sm:$0xff]
  %v315 = vld [vmem:[%s1 + $0x608] sm:$0xff]
  %v316 = vld [vmem:[%s1 + $0x610] sm:$0xff]
  %v317 = vld [vmem:[%s1 + $0x618] sm:$0xff]
  %vm318 = vcmask 261120
  %v320 = vsel %vm318, %v30, 0
  %v323 = vsel %vm318, %v43, 0
  %v326 = vsel %vm318, %v56, 0
  %v329 = vsel %vm318, %v69, 0
  %v332 = vsel %vm318, %v82, 0
  %v335 = vsel %vm318, %v95, 0
  %v338 = vsel %vm318, %v108, 0
  %v341 = vsel %vm318, %v121, 0
  %343 = vmatprep.subr.mxu0 0.0
  %344 = vmatpush1.msra.mxu0 %v122
  %345 = vmatprep.subr.mxu0 0.0
  %346 = vmatpush1.msra.mxu0 %v123
  %347 = vmatprep.subr.mxu0 0.0
  %348 = vmatpush1.msra.mxu0 %v124
  %349 = vmatprep.subr.mxu0 0.0
  %350 = vmatpush1.msra.mxu0 %v125
  %351 = vmatprep.subr.mxu0 0.0
  %352 = vmatpush1.msra.mxu0 %v126
  %353 = vmatprep.subr.mxu0 0.0
  %354 = vmatpush1.msra.mxu0 %v127
  %355 = vmatprep.subr.mxu0 0.0
  %356 = vmatpush1.msra.mxu0 %v128
  %357 = vmatprep.subr.mxu0 0.0
  %358 = vmatpush1.msra.mxu0 %v129
  %359 = vmatprep.subr.mxu0 0.0
  %360 = vmatpush1.msra.mxu0 %v130
  %361 = vmatprep.subr.mxu0 0.0
  %362 = vmatpush1.msra.mxu0 %v131
  %363 = vmatprep.subr.mxu0 0.0
  %364 = vmatpush1.msra.mxu0 %v132
  %365 = vmatprep.subr.mxu0 0.0
  %366 = vmatpush1.msra.mxu0 %v133
  %367 = vmatprep.subr.mxu0 0.0
  %368 = vmatpush1.msra.mxu0 %v134
  %369 = vmatprep.subr.mxu0 0.0
  %370 = vmatpush1.msra.mxu0 %v135
  %371 = vmatprep.subr.mxu0 0.0
  %372 = vmatpush1.msra.mxu0 %v136
  %373 = vmatprep.subr.mxu0 0.0
  %374 = vmatpush1.msra.mxu0 %v137
  %375 = vmatprep.subr.mxu0 0.0
  %376 = vmatpush1.msra.mxu0 %v138
  %377 = vmatprep.subr.mxu0 0.0
  %378 = vmatpush1.msra.mxu0 %v139
  %379 = vmatprep.subr.mxu0 0.0
  %380 = vmatpush1.msra.mxu0 %v140
  %381 = vmatprep.subr.mxu0 0.0
  %382 = vmatpush1.msra.mxu0 %v141
  %383 = vmatprep.subr.mxu0 0.0
  %384 = vmatpush1.msra.mxu0 %v142
  %385 = vmatprep.subr.mxu0 0.0
  %386 = vmatpush1.msra.mxu0 %v143
  %387 = vmatprep.subr.mxu0 0.0
  %388 = vmatpush1.msra.mxu0 %v144
  %389 = vmatprep.subr.mxu0 0.0
  %390 = vmatpush1.msra.mxu0 %v145
  %391 = vmatprep.subr.mxu0 0.0
  %392 = vmatpush1.msra.mxu0 %v146
  %393 = vmatprep.subr.mxu0 0.0
  %394 = vmatpush1.msra.mxu0 %v147
  %395 = vmatprep.subr.mxu0 0.0
  %396 = vmatpush1.msra.mxu0 %v148
  %397 = vmatprep.subr.mxu0 0.0
  %398 = vmatpush1.msra.mxu0 %v149
  %399 = vmatprep.subr.mxu0 0.0
  %400 = vmatpush1.msra.mxu0 %v150
  %401 = vmatprep.subr.mxu0 0.0
  %402 = vmatpush1.msra.mxu0 %v151
  %403 = vmatprep.subr.mxu0 0.0
  %404 = vmatpush1.msra.mxu0 %v152
  %405 = vmatprep.subr.mxu0 0.0
  %406 = vmatpush1.msra.mxu0 %v153
  %407 = vmatprep.mubr.f32.mxu0 %v19
  %408 = vmatmul.mubr.f32.gmra.mrb[0].mxu0 %v18
  %v409 = vpop.f32.mrb[0].mxu0
  %v410 = vadd.f32 0.0, %v409
  %v411 = vpop.f32.mrb[0].mxu0
  %412 = vmatprep.mubr.f32.mxu0 %v32
  %413 = vmatmul.mubr.f32.gmra.mrb[0].mxu0 %v31
  %v414 = vpop.f32.mrb[0].mxu0
  %v415 = vadd.f32 0.0, %v414
  %v416 = vpop.f32.mrb[0].mxu0
  %417 = vmatprep.mubr.f32.mxu0 %v45
  %418 = vmatmul.mubr.f32.gmra.mrb[0].mxu0 %v44
  %v419 = vpop.f32.mrb[0].mxu0
  %v420 = vadd.f32 0.0, %v419
  %v421 = vpop.f32.mrb[0].mxu0
  %422 = vmatprep.mubr.f32.mxu0 %v58
  %423 = vmatmul.mubr.f32.gmra.mrb[0].mxu0 %v57
  %v424 = vpop.f32.mrb[0].mxu0
  %v425 = vadd.f32 0.0, %v424
  %v426 = vpop.f32.mrb[0].mxu0
  %427 = vmatprep.mubr.f32.mxu0 %v71
  %428 = vmatmul.mubr.f32.gmra.mrb[0].mxu0 %v70
  %v429 = vpop.f32.mrb[0].mxu0
  %v430 = vadd.f32 0.0, %v429
  %v431 = vpop.f32.mrb[0].mxu0
  %432 = vmatprep.mubr.f32.mxu0 %v84
  %433 = vmatmul.mubr.f32.gmra.mrb[0].mxu0 %v83
  %v434 = vpop.f32.mrb[0].mxu0
  %v435 = vadd.f32 0.0, %v434
  %v436 = vpop.f32.mrb[0].mxu0
  %437 = vmatprep.mubr.f32.mxu0 %v97
  %438 = vmatmul.mubr.f32.gmra.mrb[0].mxu0 %v96
  %v439 = vpop.f32.mrb[0].mxu0
  %v440 = vadd.f32 0.0, %v439
  %v441 = vpop.f32.mrb[0].mxu0
  %442 = vmatprep.mubr.f32.mxu0 %v110
  %443 = vmatmul.mubr.f32.gmra.mrb[0].mxu0 %v109
  %v444 = vpop.f32.mrb[0].mxu0
  %v445 = vadd.f32 0.0, %v444
  %v446 = vpop.f32.mrb[0].mxu0
  %447 = vdwg.mxu0
  %448 = vmatprep.subr.mxu0 0.0
  %449 = vmatpush1.msra.mxu0 %v154
  %450 = vmatprep.subr.mxu0 0.0
  %451 = vmatpush1.msra.mxu0 %v155
  %452 = vmatprep.subr.mxu0 0.0
  %453 = vmatpush1.msra.mxu0 %v156
  %454 = vmatprep.subr.mxu0 0.0
  %455 = vmatpush1.msra.mxu0 %v157
  %456 = vmatprep.subr.mxu0 0.0
  %457 = vmatpush1.msra.mxu0 %v158
  %458 = vmatprep.subr.mxu0 0.0
  %459 = vmatpush1.msra.mxu0 %v159
  %460 = vmatprep.subr.mxu0 0.0
  %461 = vmatpush1.msra.mxu0 %v160
  %462 = vmatprep.subr.mxu0 0.0
  %463 = vmatpush1.msra.mxu0 %v161
  %464 = vmatprep.subr.mxu0 0.0
  %465 = vmatpush1.msra.mxu0 %v162
  %466 = vmatprep.subr.mxu0 0.0
  %467 = vmatpush1.msra.mxu0 %v163
  %468 = vmatprep.subr.mxu0 0.0
  %469 = vmatpush1.msra.mxu0 %v164
  %470 = vmatprep.subr.mxu0 0.0
  %471 = vmatpush1.msra.mxu0 %v165
  %472 = vmatprep.subr.mxu0 0.0
  %473 = vmatpush1.msra.mxu0 %v166
  %474 = vmatprep.subr.mxu0 0.0
  %475 = vmatpush1.msra.mxu0 %v167
  %476 = vmatprep.subr.mxu0 0.0
  %477 = vmatpush1.msra.mxu0 %v168
  %478 = vmatprep.subr.mxu0 0.0
  %479 = vmatpush1.msra.mxu0 %v169
  %480 = vmatprep.subr.mxu0 0.0
  %481 = vmatpush1.msra.mxu0 %v170
  %482 = vmatprep.subr.mxu0 0.0
  %483 = vmatpush1.msra.mxu0 %v171
  %484 = vmatprep.subr.mxu0 0.0
  %485 = vmatpush1.msra.mxu0 %v172
  %486 = vmatprep.subr.mxu0 0.0
  %487 = vmatpush1.msra.mxu0 %v173
  %488 = vmatprep.subr.mxu0 0.0
  %489 = vmatpush1.msra.mxu0 %v174
  %490 = vmatprep.subr.mxu0 0.0
  %491 = vmatpush1.msra.mxu0 %v175
  %492 = vmatprep.subr.mxu0 0.0
  %493 = vmatpush1.msra.mxu0 %v176
  %494 = vmatprep.subr.mxu0 0.0
  %495 = vmatpush1.msra.mxu0 %v177
  %496 = vmatprep.subr.mxu0 0.0
  %497 = vmatpush1.msra.mxu0 %v178
  %498 = vmatprep.subr.mxu0 0.0
  %499 = vmatpush1.msra.mxu0 %v179
  %500 = vmatprep.subr.mxu0 0.0
  %501 = vmatpush1.msra.mxu0 %v180
  %502 = vmatprep.subr.mxu0 0.0
  %503 = vmatpush1.msra.mxu0 %v181
  %504 = vmatprep.subr.mxu0 0.0
  %505 = vmatpush1.msra.mxu0 %v182
  %506 = vmatprep.subr.mxu0 0.0
  %507 = vmatpush1.msra.mxu0 %v183
  %508 = vmatprep.subr.mxu0 0.0
  %509 = vmatpush1.msra.mxu0 %v184
  %510 = vmatprep.subr.mxu0 0.0
  %511 = vmatpush1.msra.mxu0 %v185
  %512 = vmatprep.mubr.f32.mxu0 %v21
  %513 = vmatmul.mubr.f32.gmra.mrb[0].mxu0 %v20
  %v514 = vpop.f32.mrb[0].mxu0
  %v515 = vadd.f32 %v410, %v514
  %v516 = vpop.f32.mrb[0].mxu0
  %517 = vmatprep.mubr.f32.mxu0 %v34
  %518 = vmatmul.mubr.f32.gmra.mrb[0].mxu0 %v33
  %v519 = vpop.f32.mrb[0].mxu0
  %v520 = vadd.f32 %v415, %v519
  %v521 = vpop.f32.mrb[0].mxu0
  %522 = vmatprep.mubr.f32.mxu0 %v47
  %523 = vmatmul.mubr.f32.gmra.mrb[0].mxu0 %v46
  %v524 = vpop.f32.mrb[0].mxu0
  %v525 = vadd.f32 %v420, %v524
  %v526 = vpop.f32.mrb[0].mxu0
  %527 = vmatprep.mubr.f32.mxu0 %v60
  %528 = vmatmul.mubr.f32.gmra.mrb[0].mxu0 %v59
  %v529 = vpop.f32.mrb[0].mxu0
  %v530 = vadd.f32 %v425, %v529
  %v531 = vpop.f32.mrb[0].mxu0
  %532 = vmatprep.mubr.f32.mxu0 %v73
  %533 = vmatmul.mubr.f32.gmra.mrb[0].mxu0 %v72
  %v534 = vpop.f32.mrb[0].mxu0
  %v535 = vadd.f32 %v430, %v534
  %v536 = vpop.f32.mrb[0].mxu0
  %537 = vmatprep.mubr.f32.mxu0 %v86
  %538 = vmatmul.mubr.f32.gmra.mrb[0].mxu0 %v85
  %v539 = vpop.f32.mrb[0].mxu0
  %v540 = vadd.f32 %v435, %v539
  %v541 = vpop.f32.mrb[0].mxu0
  %542 = vmatprep.mubr.f32.mxu0 %v99
  %543 = vmatmul.mubr.f32.gmra.mrb[0].mxu0 %v98
  %v544 = vpop.f32.mrb[0].mxu0
  %v545 = vadd.f32 %v440, %v544
  %v546 = vpop.f32.mrb[0].mxu0
  %547 = vmatprep.mubr.f32.mxu0 %v112
  %548 = vmatmul.mubr.f32.gmra.mrb[0].mxu0 %v111
  %v549 = vpop.f32.mrb[0].mxu0
  %v550 = vadd.f32 %v445, %v549
  %v551 = vpop.f32.mrb[0].mxu0
  %552 = vdwg.mxu0
  %553 = vmatprep.subr.mxu0 0.0
  %554 = vmatpush1.msra.mxu0 %v186
  %555 = vmatprep.subr.mxu0 0.0
  %556 = vmatpush1.msra.mxu0 %v187
  %557 = vmatprep.subr.mxu0 0.0
  %558 = vmatpush1.msra.mxu0 %v188
  %559 = vmatprep.subr.mxu0 0.0
  %560 = vmatpush1.msra.mxu0 %v189
  %561 = vmatprep.subr.mxu0 0.0
  %562 = vmatpush1.msra.mxu0 %v190
  %563 = vmatprep.subr.mxu0 0.0
  %564 = vmatpush1.msra.mxu0 %v191
  %565 = vmatprep.subr.mxu0 0.0
  %566 = vmatpush1.msra.mxu0 %v192
  %567 = vmatprep.subr.mxu0 0.0
  %568 = vmatpush1.msra.mxu0 %v193
  %569 = vmatprep.subr.mxu0 0.0
  %570 = vmatpush1.msra.mxu0 %v194
  %571 = vmatprep.subr.mxu0 0.0
  %572 = vmatpush1.msra.mxu0 %v195
  %573 = vmatprep.subr.mxu0 0.0
  %574 = vmatpush1.msra.mxu0 %v196
  %575 = vmatprep.subr.mxu0 0.0
  %576 = vmatpush1.msra.mxu0 %v197
  %577 = vmatprep.subr.mxu0 0.0
  %578 = vmatpush1.msra.mxu0 %v198
  %579 = vmatprep.subr.mxu0 0.0
  %580 = vmatpush1.msra.mxu0 %v199
  %581 = vmatprep.subr.mxu0 0.0
  %582 = vmatpush1.msra.mxu0 %v200
  %583 = vmatprep.subr.mxu0 0.0
  %584 = vmatpush1.msra.mxu0 %v201
  %585 = vmatprep.subr.mxu0 0.0
  %586 = vmatpush1.msra.mxu0 %v202
  %587 = vmatprep.subr.mxu0 0.0
  %588 = vmatpush1.msra.mxu0 %v203
  %589 = vmatprep.subr.mxu0 0.0
  %590 = vmatpush1.msra.mxu0 %v204
  %591 = vmatprep.subr.mxu0 0.0
  %592 = vmatpush1.msra.mxu0 %v205
  %593 = vmatprep.subr.mxu0 0.0
  %594 = vmatpush1.msra.mxu0 %v206
  %595 = vmatprep.subr.mxu0 0.0
  %596 = vmatpush1.msra.mxu0 %v207
  %597 = vmatprep.subr.mxu0 0.0
  %598 = vmatpush1.msra.mxu0 %v208
  %599 = vmatprep.subr.mxu0 0.0
  %600 = vmatpush1.msra.mxu0 %v209
  %601 = vmatprep.subr.mxu0 0.0
  %602 = vmatpush1.msra.mxu0 %v210
  %603 = vmatprep.subr.mxu0 0.0
  %604 = vmatpush1.msra.mxu0 %v211
  %605 = vmatprep.subr.mxu0 0.0
  %606 = vmatpush1.msra.mxu0 %v212
  %607 = vmatprep.subr.mxu0 0.0
  %608 = vmatpush1.msra.mxu0 %v213
  %609 = vmatprep.subr.mxu0 0.0
  %610 = vmatpush1.msra.mxu0 %v214
  %611 = vmatprep.subr.mxu0 0.0
  %612 = vmatpush1.msra.mxu0 %v215
  %613 = vmatprep.subr.mxu0 0.0
  %614 = vmatpush1.msra.mxu0 %v216
  %615 = vmatprep.subr.mxu0 0.0
  %616 = vmatpush1.msra.mxu0 %v217
  %617 = vmatprep.mubr.f32.mxu0 %v23
  %618 = vmatmul.mubr.f32.gmra.mrb[0].mxu0 %v22
  %v619 = vpop.f32.mrb[0].mxu0
  %v620 = vadd.f32 %v515, %v619
  %v621 = vpop.f32.mrb[0].mxu0
  %622 = vmatprep.mubr.f32.mxu0 %v36
  %623 = vmatmul.mubr.f32.gmra.mrb[0].mxu0 %v35
  %v624 = vpop.f32.mrb[0].mxu0
  %v625 = vadd.f32 %v520, %v624
  %v626 = vpop.f32.mrb[0].mxu0
  %627 = vmatprep.mubr.f32.mxu0 %v49
  %628 = vmatmul.mubr.f32.gmra.mrb[0].mxu0 %v48
  %v629 = vpop.f32.mrb[0].mxu0
  %v630 = vadd.f32 %v525, %v629
  %v631 = vpop.f32.mrb[0].mxu0
  %632 = vmatprep.mubr.f32.mxu0 %v62
  %633 = vmatmul.mubr.f32.gmra.mrb[0].mxu0 %v61
  %v634 = vpop.f32.mrb[0].mxu0
  %v635 = vadd.f32 %v530, %v634
  %v636 = vpop.f32.mrb[0].mxu0
  %637 = vmatprep.mubr.f32.mxu0 %v75
  %638 = vmatmul.mubr.f32.gmra.mrb[0].mxu0 %v74
  %v639 = vpop.f32.mrb[0].mxu0
  %v640 = vadd.f32 %v535, %v639
  %v641 = vpop.f32.mrb[0].mxu0
  %642 = vmatprep.mubr.f32.mxu0 %v88
  %643 = vmatmul.mubr.f32.gmra.mrb[0].mxu0 %v87
  %v644 = vpop.f32.mrb[0].mxu0
  %v645 = vadd.f32 %v540, %v644
  %v646 = vpop.f32.mrb[0].mxu0
  %647 = vmatprep.mubr.f32.mxu0 %v101
  %648 = vmatmul.mubr.f32.gmra.mrb[0].mxu0 %v100
  %v649 = vpop.f32.mrb[0].mxu0
  %v650 = vadd.f32 %v545, %v649
  %v651 = vpop.f32.mrb[0].mxu0
  %652 = vmatprep.mubr.f32.mxu0 %v114
  %653 = vmatmul.mubr.f32.gmra.mrb[0].mxu0 %v113
  %v654 = vpop.f32.mrb[0].mxu0
  %v655 = vadd.f32 %v550, %v654
  %v656 = vpop.f32.mrb[0].mxu0
  %657 = vdwg.mxu0
  %658 = vmatprep.subr.mxu0 0.0
  %659 = vmatpush1.msra.mxu0 %v218
  %660 = vmatprep.subr.mxu0 0.0
  %661 = vmatpush1.msra.mxu0 %v219
  %662 = vmatprep.subr.mxu0 0.0
  %663 = vmatpush1.msra.mxu0 %v220
  %664 = vmatprep.subr.mxu0 0.0
  %665 = vmatpush1.msra.mxu0 %v221
  %666 = vmatprep.subr.mxu0 0.0
  %667 = vmatpush1.msra.mxu0 %v222
  %668 = vmatprep.subr.mxu0 0.0
  %669 = vmatpush1.msra.mxu0 %v223
  %670 = vmatprep.subr.mxu0 0.0
  %671 = vmatpush1.msra.mxu0 %v224
  %672 = vmatprep.subr.mxu0 0.0
  %673 = vmatpush1.msra.mxu0 %v225
  %674 = vmatprep.subr.mxu0 0.0
  %675 = vmatpush1.msra.mxu0 %v226
  %676 = vmatprep.subr.mxu0 0.0
  %677 = vmatpush1.msra.mxu0 %v227
  %678 = vmatprep.subr.mxu0 0.0
  %679 = vmatpush1.msra.mxu0 %v228
  %680 = vmatprep.subr.mxu0 0.0
  %681 = vmatpush1.msra.mxu0 %v229
  %682 = vmatprep.subr.mxu0 0.0
  %683 = vmatpush1.msra.mxu0 %v230
  %684 = vmatprep.subr.mxu0 0.0
  %685 = vmatpush1.msra.mxu0 %v231
  %686 = vmatprep.subr.mxu0 0.0
  %687 = vmatpush1.msra.mxu0 %v232
  %688 = vmatprep.subr.mxu0 0.0
  %689 = vmatpush1.msra.mxu0 %v233
  %690 = vmatprep.subr.mxu0 0.0
  %691 = vmatpush1.msra.mxu0 %v234
  %692 = vmatprep.subr.mxu0 0.0
  %693 = vmatpush1.msra.mxu0 %v235
  %694 = vmatprep.subr.mxu0 0.0
  %695 = vmatpush1.msra.mxu0 %v236
  %696 = vmatprep.subr.mxu0 0.0
  %697 = vmatpush1.msra.mxu0 %v237
  %698 = vmatprep.subr.mxu0 0.0
  %699 = vmatpush1.msra.mxu0 %v238
  %700 = vmatprep.subr.mxu0 0.0
  %701 = vmatpush1.msra.mxu0 %v239
  %702 = vmatprep.subr.mxu0 0.0
  %703 = vmatpush1.msra.mxu0 %v240
  %704 = vmatprep.subr.mxu0 0.0
  %705 = vmatpush1.msra.mxu0 %v241
  %706 = vmatprep.subr.mxu0 0.0
  %707 = vmatpush1.msra.mxu0 %v242
  %708 = vmatprep.subr.mxu0 0.0
  %709 = vmatpush1.msra.mxu0 %v243
  %710 = vmatprep.subr.mxu0 0.0
  %711 = vmatpush1.msra.mxu0 %v244
  %712 = vmatprep.subr.mxu0 0.0
  %713 = vmatpush1.msra.mxu0 %v245
  %714 = vmatprep.subr.mxu0 0.0
  %715 = vmatpush1.msra.mxu0 %v246
  %716 = vmatprep.subr.mxu0 0.0
  %717 = vmatpush1.msra.mxu0 %v247
  %718 = vmatprep.subr.mxu0 0.0
  %719 = vmatpush1.msra.mxu0 %v248
  %720 = vmatprep.subr.mxu0 0.0
  %721 = vmatpush1.msra.mxu0 %v249
  %722 = vmatprep.mubr.f32.mxu0 %v25
  %723 = vmatmul.mubr.f32.gmra.mrb[0].mxu0 %v24
  %v724 = vpop.f32.mrb[0].mxu0
  %v725 = vadd.f32 %v620, %v724
  %v726 = vpop.f32.mrb[0].mxu0
  %727 = vmatprep.mubr.f32.mxu0 %v38
  %728 = vmatmul.mubr.f32.gmra.mrb[0].mxu0 %v37
  %v729 = vpop.f32.mrb[0].mxu0
  %v730 = vadd.f32 %v625, %v729
  %v731 = vpop.f32.mrb[0].mxu0
  %732 = vmatprep.mubr.f32.mxu0 %v51
  %733 = vmatmul.mubr.f32.gmra.mrb[0].mxu0 %v50
  %v734 = vpop.f32.mrb[0].mxu0
  %v735 = vadd.f32 %v630, %v734
  %v736 = vpop.f32.mrb[0].mxu0
  %737 = vmatprep.mubr.f32.mxu0 %v64
  %738 = vmatmul.mubr.f32.gmra.mrb[0].mxu0 %v63
  %v739 = vpop.f32.mrb[0].mxu0
  %v740 = vadd.f32 %v635, %v739
  %v741 = vpop.f32.mrb[0].mxu0
  %742 = vmatprep.mubr.f32.mxu0 %v77
  %743 = vmatmul.mubr.f32.gmra.mrb[0].mxu0 %v76
  %v744 = vpop.f32.mrb[0].mxu0
  %v745 = vadd.f32 %v640, %v744
  %v746 = vpop.f32.mrb[0].mxu0
  %747 = vmatprep.mubr.f32.mxu0 %v90
  %748 = vmatmul.mubr.f32.gmra.mrb[0].mxu0 %v89
  %v749 = vpop.f32.mrb[0].mxu0
  %v750 = vadd.f32 %v645, %v749
  %v751 = vpop.f32.mrb[0].mxu0
  %752 = vmatprep.mubr.f32.mxu0 %v103
  %753 = vmatmul.mubr.f32.gmra.mrb[0].mxu0 %v102
  %v754 = vpop.f32.mrb[0].mxu0
  %v755 = vadd.f32 %v650, %v754
  %v756 = vpop.f32.mrb[0].mxu0
  %757 = vmatprep.mubr.f32.mxu0 %v116
  %758 = vmatmul.mubr.f32.gmra.mrb[0].mxu0 %v115
  %v759 = vpop.f32.mrb[0].mxu0
  %v760 = vadd.f32 %v655, %v759
  %v761 = vpop.f32.mrb[0].mxu0
  %762 = vdwg.mxu0
  %763 = vmatprep.subr.mxu0 0.0
  %764 = vmatpush1.msra.mxu0 %v250
  %765 = vmatprep.subr.mxu0 0.0
  %766 = vmatpush1.msra.mxu0 %v251
  %767 = vmatprep.subr.mxu0 0.0
  %768 = vmatpush1.msra.mxu0 %v252
  %769 = vmatprep.subr.mxu0 0.0
  %770 = vmatpush1.msra.mxu0 %v253
  %771 = vmatprep.subr.mxu0 0.0
  %772 = vmatpush1.msra.mxu0 %v254
  %773 = vmatprep.subr.mxu0 0.0
  %774 = vmatpush1.msra.mxu0 %v255
  %775 = vmatprep.subr.mxu0 0.0
  %776 = vmatpush1.msra.mxu0 %v256
  %777 = vmatprep.subr.mxu0 0.0
  %778 = vmatpush1.msra.mxu0 %v257
  %779 = vmatprep.subr.mxu0 0.0
  %780 = vmatpush1.msra.mxu0 %v258
  %781 = vmatprep.subr.mxu0 0.0
  %782 = vmatpush1.msra.mxu0 %v259
  %783 = vmatprep.subr.mxu0 0.0
  %784 = vmatpush1.msra.mxu0 %v260
  %785 = vmatprep.subr.mxu0 0.0
  %786 = vmatpush1.msra.mxu0 %v261
  %787 = vmatprep.subr.mxu0 0.0
  %788 = vmatpush1.msra.mxu0 %v262
  %789 = vmatprep.subr.mxu0 0.0
  %790 = vmatpush1.msra.mxu0 %v263
  %791 = vmatprep.subr.mxu0 0.0
  %792 = vmatpush1.msra.mxu0 %v264
  %793 = vmatprep.subr.mxu0 0.0
  %794 = vmatpush1.msra.mxu0 %v265
  %795 = vmatprep.subr.mxu0 0.0
  %796 = vmatpush1.msra.mxu0 %v266
  %797 = vmatprep.subr.mxu0 0.0
  %798 = vmatpush1.msra.mxu0 %v267
  %799 = vmatprep.subr.mxu0 0.0
  %800 = vmatpush1.msra.mxu0 %v268
  %801 = vmatprep.subr.mxu0 0.0
  %802 = vmatpush1.msra.mxu0 %v269
  %803 = vmatprep.subr.mxu0 0.0
  %804 = vmatpush1.msra.mxu0 %v270
  %805 = vmatprep.subr.mxu0 0.0
  %806 = vmatpush1.msra.mxu0 %v271
  %807 = vmatprep.subr.mxu0 0.0
  %808 = vmatpush1.msra.mxu0 %v272
  %809 = vmatprep.subr.mxu0 0.0
  %810 = vmatpush1.msra.mxu0 %v273
  %811 = vmatprep.subr.mxu0 0.0
  %812 = vmatpush1.msra.mxu0 %v274
  %813 = vmatprep.subr.mxu0 0.0
  %814 = vmatpush1.msra.mxu0 %v275
  %815 = vmatprep.subr.mxu0 0.0
  %816 = vmatpush1.msra.mxu0 %v276
  %817 = vmatprep.subr.mxu0 0.0
  %818 = vmatpush1.msra.mxu0 %v277
  %819 = vmatprep.subr.mxu0 0.0
  %820 = vmatpush1.msra.mxu0 %v278
  %821 = vmatprep.subr.mxu0 0.0
  %822 = vmatpush1.msra.mxu0 %v279
  %823 = vmatprep.subr.mxu0 0.0
  %824 = vmatpush1.msra.mxu0 %v280
  %825 = vmatprep.subr.mxu0 0.0
  %826 = vmatpush1.msra.mxu0 %v281
  %827 = vmatprep.mubr.f32.mxu0 %v27
  %828 = vmatmul.mubr.f32.gmra.mrb[0].mxu0 %v26
  %v829 = vpop.f32.mrb[0].mxu0
  %v830 = vadd.f32 %v725, %v829
  %v831 = vpop.f32.mrb[0].mxu0
  %832 = vmatprep.mubr.f32.mxu0 %v40
  %833 = vmatmul.mubr.f32.gmra.mrb[0].mxu0 %v39
  %v834 = vpop.f32.mrb[0].mxu0
  %v835 = vadd.f32 %v730, %v834
  %v836 = vpop.f32.mrb[0].mxu0
  %837 = vmatprep.mubr.f32.mxu0 %v53
  %838 = vmatmul.mubr.f32.gmra.mrb[0].mxu0 %v52
  %v839 = vpop.f32.mrb[0].mxu0
  %v840 = vadd.f32 %v735, %v839
  %v841 = vpop.f32.mrb[0].mxu0
  %842 = vmatprep.mubr.f32.mxu0 %v66
  %843 = vmatmul.mubr.f32.gmra.mrb[0].mxu0 %v65
  %v844 = vpop.f32.mrb[0].mxu0
  %v845 = vadd.f32 %v740, %v844
  %v846 = vpop.f32.mrb[0].mxu0
  %847 = vmatprep.mubr.f32.mxu0 %v79
  %848 = vmatmul.mubr.f32.gmra.mrb[0].mxu0 %v78
  %v849 = vpop.f32.mrb[0].mxu0
  %v850 = vadd.f32 %v745, %v849
  %v851 = vpop.f32.mrb[0].mxu0
  %852 = vmatprep.mubr.f32.mxu0 %v92
  %853 = vmatmul.mubr.f32.gmra.mrb[0].mxu0 %v91
  %v854 = vpop.f32.mrb[0].mxu0
  %v855 = vadd.f32 %v750, %v854
  %v856 = vpop.f32.mrb[0].mxu0
  %857 = vmatprep.mubr.f32.mxu0 %v105
  %858 = vmatmul.mubr.f32.gmra.mrb[0].mxu0 %v104
  %v859 = vpop.f32.mrb[0].mxu0
  %v860 = vadd.f32 %v755, %v859
  %v861 = vpop.f32.mrb[0].mxu0
  %862 = vmatprep.mubr.f32.mxu0 %v118
  %863 = vmatmul.mubr.f32.gmra.mrb[0].mxu0 %v117
  %v864 = vpop.f32.mrb[0].mxu0
  %v865 = vadd.f32 %v760, %v864
  %v866 = vpop.f32.mrb[0].mxu0
  %867 = vdwg.mxu0
  %868 = vmatprep.subr.mxu0 0.0
  %869 = vmatpush1.msra.mxu0 %v282
  %870 = vmatprep.subr.mxu0 0.0
  %871 = vmatpush1.msra.mxu0 %v283
  %872 = vmatprep.subr.mxu0 0.0
  %873 = vmatpush1.msra.mxu0 %v284
  %874 = vmatprep.subr.mxu0 0.0
  %875 = vmatpush1.msra.mxu0 %v285
  %876 = vmatprep.subr.mxu0 0.0
  %877 = vmatpush1.msra.mxu0 %v286
  %878 = vmatprep.subr.mxu0 0.0
  %879 = vmatpush1.msra.mxu0 %v287
  %880 = vmatprep.subr.mxu0 0.0
  %881 = vmatpush1.msra.mxu0 %v288
  %882 = vmatprep.subr.mxu0 0.0
  %883 = vmatpush1.msra.mxu0 %v289
  %884 = vmatprep.subr.mxu0 0.0
  %885 = vmatpush1.msra.mxu0 %v290
  %886 = vmatprep.subr.mxu0 0.0
  %887 = vmatpush1.msra.mxu0 %v291
  %888 = vmatprep.subr.mxu0 0.0
  %889 = vmatpush1.msra.mxu0 %v292
  %890 = vmatprep.subr.mxu0 0.0
  %891 = vmatpush1.msra.mxu0 %v293
  %892 = vmatprep.subr.mxu0 0.0
  %893 = vmatpush1.msra.mxu0 %v294
  %894 = vmatprep.subr.mxu0 0.0
  %895 = vmatpush1.msra.mxu0 %v295
  %896 = vmatprep.subr.mxu0 0.0
  %897 = vmatpush1.msra.mxu0 %v296
  %898 = vmatprep.subr.mxu0 0.0
  %899 = vmatpush1.msra.mxu0 %v297
  %900 = vmatprep.subr.mxu0 0.0
  %901 = vmatpush1.msra.mxu0 %v298
  %902 = vmatprep.subr.mxu0 0.0
  %903 = vmatpush1.msra.mxu0 %v299
  %904 = vmatprep.subr.mxu0 0.0
  %905 = vmatpush1.msra.mxu0 %v300
  %906 = vmatprep.subr.mxu0 0.0
  %907 = vmatpush1.msra.mxu0 %v301
  %908 = vmatprep.subr.mxu0 0.0
  %909 = vmatpush1.msra.mxu0 %v302
  %910 = vmatprep.subr.mxu0 0.0
  %911 = vmatpush1.msra.mxu0 %v303
  %912 = vmatprep.subr.mxu0 0.0
  %913 = vmatpush1.msra.mxu0 %v304
  %914 = vmatprep.subr.mxu0 0.0
  %915 = vmatpush1.msra.mxu0 %v305
  %916 = vmatprep.subr.mxu0 0.0
  %917 = vmatpush1.msra.mxu0 %v306
  %918 = vmatprep.subr.mxu0 0.0
  %919 = vmatpush1.msra.mxu0 %v307
  %920 = vmatprep.subr.mxu0 0.0
  %921 = vmatpush1.msra.mxu0 %v308
  %922 = vmatprep.subr.mxu0 0.0
  %923 = vmatpush1.msra.mxu0 %v309
  %924 = vmatprep.subr.mxu0 0.0
  %925 = vmatpush1.msra.mxu0 %v310
  %926 = vmatprep.subr.mxu0 0.0
  %927 = vmatpush1.msra.mxu0 %v311
  %928 = vmatprep.subr.mxu0 0.0
  %929 = vmatpush1.msra.mxu0 %v312
  %930 = vmatprep.subr.mxu0 0.0
  %931 = vmatpush1.msra.mxu0 %v313
  %932 = vmatprep.mubr.f32.mxu0 %v29
  %933 = vmatmul.mubr.f32.gmra.mrb[0].mxu0 %v28
  %v934 = vpop.f32.mrb[0].mxu0
  %v935 = vadd.f32 %v830, %v934
  %v936 = vpop.f32.mrb[0].mxu0
  %937 = vmatprep.mubr.f32.mxu0 %v42
  %938 = vmatmul.mubr.f32.gmra.mrb[0].mxu0 %v41
  %v939 = vpop.f32.mrb[0].mxu0
  %v940 = vadd.f32 %v835, %v939
  %v941 = vpop.f32.mrb[0].mxu0
  %942 = vmatprep.mubr.f32.mxu0 %v55
  %943 = vmatmul.mubr.f32.gmra.mrb[0].mxu0 %v54
  %v944 = vpop.f32.mrb[0].mxu0
  %v945 = vadd.f32 %v840, %v944
  %v946 = vpop.f32.mrb[0].mxu0
  %947 = vmatprep.mubr.f32.mxu0 %v68
  %948 = vmatmul.mubr.f32.gmra.mrb[0].mxu0 %v67
  %v949 = vpop.f32.mrb[0].mxu0
  %v950 = vadd.f32 %v845, %v949
  %v951 = vpop.f32.mrb[0].mxu0
  %952 = vmatprep.mubr.f32.mxu0 %v81
  %953 = vmatmul.mubr.f32.gmra.mrb[0].mxu0 %v80
  %v954 = vpop.f32.mrb[0].mxu0
  %v955 = vadd.f32 %v850, %v954
  %v956 = vpop.f32.mrb[0].mxu0
  %957 = vmatprep.mubr.f32.mxu0 %v94
  %958 = vmatmul.mubr.f32.gmra.mrb[0].mxu0 %v93
  %v959 = vpop.f32.mrb[0].mxu0
  %v960 = vadd.f32 %v855, %v959
  %v961 = vpop.f32.mrb[0].mxu0
  %962 = vmatprep.mubr.f32.mxu0 %v107
  %963 = vmatmul.mubr.f32.gmra.mrb[0].mxu0 %v106
  %v964 = vpop.f32.mrb[0].mxu0
  %v965 = vadd.f32 %v860, %v964
  %v966 = vpop.f32.mrb[0].mxu0
  %967 = vmatprep.mubr.f32.mxu0 %v120
  %968 = vmatmul.mubr.f32.gmra.mrb[0].mxu0 %v119
  %v969 = vpop.f32.mrb[0].mxu0
  %v970 = vadd.f32 %v865, %v969
  %v971 = vpop.f32.mrb[0].mxu0
  %972 = vdwg.mxu0
  %973 = vmatprep.subr.mxu0 0.0
  %974 = vmatpush1.msra.mxu0 %v314
  %975 = vmatprep.subr.mxu0 0.0
  %976 = vmatpush1.msra.mxu0 %v315
  %977 = vmatprep.subr.mxu0 0.0
  %978 = vmatpush1.msra.mxu0 %v316
  %979 = vmatprep.subr.mxu0 0.0
  %980 = vmatpush1.msra.mxu0 %v317
  %981 = vmatprep.subr.mxu0 0.0
  %982 = vmatpush1.msra.mxu0 0.0
  %983 = vmatprep.subr.mxu0 0.0
  %984 = vmatpush1.msra.mxu0 0.0
  %985 = vmatprep.subr.mxu0 0.0
  %986 = vmatpush1.msra.mxu0 0.0
  %987 = vmatprep.subr.mxu0 0.0
  %988 = vmatpush1.msra.mxu0 0.0
  %989 = vmatprep.subr.mxu0 0.0
  %990 = vmatpush1.msra.mxu0 0.0
  %991 = vmatprep.subr.mxu0 0.0
  %992 = vmatpush1.msra.mxu0 0.0
  %993 = vmatprep.subr.mxu0 0.0
  %994 = vmatpush1.msra.mxu0 0.0
  %995 = vmatprep.subr.mxu0 0.0
  %996 = vmatpush1.msra.mxu0 0.0
  %997 = vmatprep.subr.mxu0 0.0
  %998 = vmatpush1.msra.mxu0 0.0
  %999 = vmatprep.subr.mxu0 0.0
  %1000 = vmatpush1.msra.mxu0 0.0
  %1001 = vmatprep.subr.mxu0 0.0
  %1002 = vmatpush1.msra.mxu0 0.0
  %1003 = vmatprep.subr.mxu0 0.0
  %1004 = vmatpush1.msra.mxu0 0.0
  %1005 = vmatprep.subr.mxu0 0.0
  %1006 = vmatpush1.msra.mxu0 0.0
  %1007 = vmatprep.subr.mxu0 0.0
  %1008 = vmatpush1.msra.mxu0 0.0
  %1009 = vmatprep.subr.mxu0 0.0
  %1010 = vmatpush1.msra.mxu0 0.0
  %1011 = vmatprep.subr.mxu0 0.0
  %1012 = vmatpush1.msra.mxu0 0.0
  %1013 = vmatprep.subr.mxu0 0.0
  %1014 = vmatpush1.msra.mxu0 0.0
  %1015 = vmatprep.subr.mxu0 0.0
  %1016 = vmatpush1.msra.mxu0 0.0
  %1017 = vmatprep.subr.mxu0 0.0
  %1018 = vmatpush1.msra.mxu0 0.0
  %1019 = vmatprep.subr.mxu0 0.0
  %1020 = vmatpush1.msra.mxu0 0.0
  %1021 = vmatprep.subr.mxu0 0.0
  %1022 = vmatpush1.msra.mxu0 0.0
  %1023 = vmatprep.subr.mxu0 0.0
  %1024 = vmatpush1.msra.mxu0 0.0
  %1025 = vmatprep.subr.mxu0 0.0
  %1026 = vmatpush1.msra.mxu0 0.0
  %1027 = vmatprep.subr.mxu0 0.0
  %1028 = vmatpush1.msra.mxu0 0.0
  %1029 = vmatprep.subr.mxu0 0.0
  %1030 = vmatpush1.msra.mxu0 0.0
  %1031 = vmatprep.subr.mxu0 0.0
  %1032 = vmatpush1.msra.mxu0 0.0
  %1033 = vmatprep.subr.mxu0 0.0
  %1034 = vmatpush1.msra.mxu0 0.0
  %1035 = vmatprep.subr.mxu0 0.0
  %1036 = vmatpush1.msra.mxu0 0.0
  %1037 = vmatprep.mubr.f32.mxu0 0.0
  %1038 = vmatmul.mubr.f32.gmra.mrb[0].mxu0 %v320
  %v1039 = vpop.f32.mrb[0].mxu0
  %v1040 = vadd.f32 %v935, %v1039
  %v1041 = vpop.f32.mrb[0].mxu0
  %1042 = vmatprep.mubr.f32.mxu0 0.0
  %1043 = vmatmul.mubr.f32.gmra.mrb[0].mxu0 %v323
  %v1044 = vpop.f32.mrb[0].mxu0
  %v1045 = vadd.f32 %v940, %v1044
  %v1046 = vpop.f32.mrb[0].mxu0
  %1047 = vmatprep.mubr.f32.mxu0 0.0
  %1048 = vmatmul.mubr.f32.gmra.mrb[0].mxu0 %v326
  %v1049 = vpop.f32.mrb[0].mxu0
  %v1050 = vadd.f32 %v945, %v1049
  %v1051 = vpop.f32.mrb[0].mxu0
  %1052 = vmatprep.mubr.f32.mxu0 0.0
  %1053 = vmatmul.mubr.f32.gmra.mrb[0].mxu0 %v329
  %v1054 = vpop.f32.mrb[0].mxu0
  %v1055 = vadd.f32 %v950, %v1054
  %v1056 = vpop.f32.mrb[0].mxu0
  %1057 = vmatprep.mubr.f32.mxu0 0.0
  %1058 = vmatmul.mubr.f32.gmra.mrb[0].mxu0 %v332
  %v1059 = vpop.f32.mrb[0].mxu0
  %v1060 = vadd.f32 %v955, %v1059
  %v1061 = vpop.f32.mrb[0].mxu0
  %1062 = vmatprep.mubr.f32.mxu0 0.0
  %1063 = vmatmul.mubr.f32.gmra.mrb[0].mxu0 %v335
  %v1064 = vpop.f32.mrb[0].mxu0
  %v1065 = vadd.f32 %v960, %v1064
  %v1066 = vpop.f32.mrb[0].mxu0
  %1067 = vmatprep.mubr.f32.mxu0 0.0
  %1068 = vmatmul.mubr.f32.gmra.mrb[0].mxu0 %v338
  %v1069 = vpop.f32.mrb[0].mxu0
  %v1070 = vadd.f32 %v965, %v1069
  %v1071 = vpop.f32.mrb[0].mxu0
  %1072 = vmatprep.mubr.f32.mxu0 0.0
  %1073 = vmatmul.mubr.f32.gmra.mrb[0].mxu0 %v341
  %v1074 = vpop.f32.mrb[0].mxu0
  %v1075 = vadd.f32 %v970, %v1074
  %v1076 = vpop.f32.mrb[0].mxu0
  %1077 = vdwg.mxu0
  %1078 = vadd.xlane.f32.xlu0 %v1040
  %v1079 = vpop.xlane.xlu0 %1078
  %1080 = vadd.xlane.f32.xlu0 %v1045
  %v1081 = vpop.xlane.xlu0 %1080
  %1082 = vadd.xlane.f32.xlu0 %v1050
  %v1083 = vpop.xlane.xlu0 %1082
  %1084 = vadd.xlane.f32.xlu0 %v1055
  %v1085 = vpop.xlane.xlu0 %1084
  %1086 = vadd.xlane.f32.xlu0 %v1060
  %v1087 = vpop.xlane.xlu0 %1086
  %1088 = vadd.xlane.f32.xlu0 %v1065
  %v1089 = vpop.xlane.xlu0 %1088
  %1090 = vadd.xlane.f32.xlu0 %v1070
  %v1091 = vpop.xlane.xlu0 %1090
  %1092 = vadd.xlane.f32.xlu0 %v1075
  %v1093 = vpop.xlane.xlu0 %1092
  %v1094 = vmul.f32 %v1040, %v1040
  %v1095 = vmul.f32 %v1045, %v1045
  %v1096 = vmul.f32 %v1050, %v1050
  %v1097 = vmul.f32 %v1055, %v1055
  %v1098 = vmul.f32 %v1060, %v1060
  %v1099 = vmul.f32 %v1065, %v1065
  %v1100 = vmul.f32 %v1070, %v1070
  %v1101 = vmul.f32 %v1075, %v1075
  %1102 = vadd.xlane.f32.xlu0 %v1094
  %v1103 = vpop.xlane.xlu0 %1102
  %1104 = vadd.xlane.f32.xlu0 %v1095
  %v1105 = vpop.xlane.xlu0 %1104
  %1106 = vadd.xlane.f32.xlu0 %v1096
  %v1107 = vpop.xlane.xlu0 %1106
  %1108 = vadd.xlane.f32.xlu0 %v1097
  %v1109 = vpop.xlane.xlu0 %1108
  %1110 = vadd.xlane.f32.xlu0 %v1098
  %v1111 = vpop.xlane.xlu0 %1110
  %1112 = vadd.xlane.f32.xlu0 %v1099
  %v1113 = vpop.xlane.xlu0 %1112
  %1114 = vadd.xlane.f32.xlu0 %v1100
  %v1115 = vpop.xlane.xlu0 %1114
  %1116 = vadd.xlane.f32.xlu0 %v1101
  %v1117 = vpop.xlane.xlu0 %1116
  %v1118 = vmul.f32 %v1079, 0.010204081
  %v1119 = vmul.f32 %v1081, 0.010204081
  %v1120 = vmul.f32 %v1083, 0.010204081
  %v1121 = vmul.f32 %v1085, 0.010204081
  %v1122 = vmul.f32 %v1087, 0.010204081
  %v1123 = vmul.f32 %v1089, 0.010204081
  %v1124 = vmul.f32 %v1091, 0.010204081
  %v1125 = vmul.f32 %v1093, 0.010204081
  %v1126 = vmul.f32 %v1103, 0.010204081
  %v1127 = vmul.f32 %v1105, 0.010204081
  %v1128 = vmul.f32 %v1107, 0.010204081
  %v1129 = vmul.f32 %v1109, 0.010204081
  %v1130 = vmul.f32 %v1111, 0.010204081
  %v1131 = vmul.f32 %v1113, 0.010204081
  %v1132 = vmul.f32 %v1115, 0.010204081
  %v1133 = vmul.f32 %v1117, 0.010204081
  %v1134 = vmul.f32 %v1118, %v1118
  %v1135 = vmul.f32 %v1119, %v1119
  %v1136 = vmul.f32 %v1120, %v1120
  %v1137 = vmul.f32 %v1121, %v1121
  %v1138 = vmul.f32 %v1122, %v1122
  %v1139 = vmul.f32 %v1123, %v1123
  %v1140 = vmul.f32 %v1124, %v1124
  %v1141 = vmul.f32 %v1125, %v1125
  %v1142 = vsub.f32 %v1126, %v1134
  %v1143 = vsub.f32 %v1127, %v1135
  %v1144 = vsub.f32 %v1128, %v1136
  %v1145 = vsub.f32 %v1129, %v1137
  %v1146 = vsub.f32 %v1130, %v1138
  %v1147 = vsub.f32 %v1131, %v1139
  %v1148 = vsub.f32 %v1132, %v1140
  %v1149 = vsub.f32 %v1133, %v1141
  %v1150 = vmax.f32 %v1142, 0.0
  %v1151 = vmax.f32 %v1143, 0.0
  %v1152 = vmax.f32 %v1144, 0.0
  %v1153 = vmax.f32 %v1145, 0.0
  %v1154 = vmax.f32 %v1146, 0.0
  %v1155 = vmax.f32 %v1147, 0.0
  %v1156 = vmax.f32 %v1148, 0.0
  %v1157 = vmax.f32 %v1149, 0.0
  %v1158 = vld [vmem:[%s2] sm:$0xff]
  %v1159 = vld [vmem:[%s2 + $0x8] sm:$0xff]
  %v1160 = vld [vmem:[%s2 + $0x10] sm:$0xff]
  %v1161 = vld [vmem:[%s2 + $0x18] sm:$0xff]
  %v1162 = vld [vmem:[%s2 + $0x20] sm:$0xff]
  %v1163 = vld [vmem:[%s2 + $0x28] sm:$0xff]
  %v1164 = vld [vmem:[%s2 + $0x30] sm:$0xff]
  %v1165 = vld [vmem:[%s2 + $0x38] sm:$0xff]
  %v1166 = vadd.f32 %v1150, 1e-05
  %v1167 = vadd.f32 %v1151, 1e-05
  %v1168 = vadd.f32 %v1152, 1e-05
  %v1169 = vadd.f32 %v1153, 1e-05
  %v1170 = vadd.f32 %v1154, 1e-05
  %v1171 = vadd.f32 %v1155, 1e-05
  %v1172 = vadd.f32 %v1156, 1e-05
  %v1173 = vadd.f32 %v1157, 1e-05
  %v1174 = vrsqrt.pop %v1166
  %v1175 = vrsqrt.pop %v1167
  %v1176 = vrsqrt.pop %v1168
  %v1177 = vrsqrt.pop %v1169
  %v1178 = vrsqrt.pop %v1170
  %v1179 = vrsqrt.pop %v1171
  %v1180 = vrsqrt.pop %v1172
  %v1181 = vrsqrt.pop %v1173
  %v1182 = vmul.f32 %v1158, %v1174
  %v1183 = vmul.f32 %v1159, %v1175
  %v1184 = vmul.f32 %v1160, %v1176
  %v1185 = vmul.f32 %v1161, %v1177
  %v1186 = vmul.f32 %v1162, %v1178
  %v1187 = vmul.f32 %v1163, %v1179
  %v1188 = vmul.f32 %v1164, %v1180
  %v1189 = vmul.f32 %v1165, %v1181
  %v1190 = vmul.f32 %v1118, %v1182
  %v1191 = vmul.f32 %v1119, %v1183
  %v1192 = vmul.f32 %v1120, %v1184
  %v1193 = vmul.f32 %v1121, %v1185
  %v1194 = vmul.f32 %v1122, %v1186
  %v1195 = vmul.f32 %v1123, %v1187
  %v1196 = vmul.f32 %v1124, %v1188
  %v1197 = vmul.f32 %v1125, %v1189
  %1206 = vrot.lane.b32.xlu0 %v1190, 1
  %v1207 = vpop.permute.xlu0 %1206
  %1208 = vrot.lane.b32.xlu0 %v1191, 1
  %v1209 = vpop.permute.xlu0 %1208
  %1210 = vrot.lane.b32.xlu0 %v1192, 1
  %v1211 = vpop.permute.xlu0 %1210
  %1212 = vrot.lane.b32.xlu0 %v1193, 1
  %v1213 = vpop.permute.xlu0 %1212
  %1214 = vrot.lane.b32.xlu0 %v1194, 1
  %v1215 = vpop.permute.xlu0 %1214
  %1216 = vrot.lane.b32.xlu0 %v1195, 1
  %v1217 = vpop.permute.xlu0 %1216
  %1218 = vrot.lane.b32.xlu0 %v1196, 1
  %v1219 = vpop.permute.xlu0 %1218
  %1220 = vrot.lane.b32.xlu0 %v1197, 1
  %v1221 = vpop.permute.xlu0 %1220
  %v1230 = vsub.f32 %v1158, %v1207
  %v1231 = vsub.f32 %v1159, %v1209
  %v1232 = vsub.f32 %v1160, %v1211
  %v1233 = vsub.f32 %v1161, %v1213
  %v1234 = vsub.f32 %v1162, %v1215
  %v1235 = vsub.f32 %v1163, %v1217
  %v1236 = vsub.f32 %v1164, %v1219
  %v1237 = vsub.f32 %v1165, %v1221
  %1239 = vset.pattern.permute.xlu0 0
  %1240 = vperm.xlu0 %1239, %v1182
  %v1241 = vpop.permute.xlu0 %1240
  %1244 = vset.pattern.permute.xlu0 0
  %1245 = vperm.xlu0 %1244, %v1183
  %v1246 = vpop.permute.xlu0 %1245
  %1249 = vset.pattern.permute.xlu0 0
  %1250 = vperm.xlu0 %1249, %v1184
  %v1251 = vpop.permute.xlu0 %1250
  %1254 = vset.pattern.permute.xlu0 0
  %1255 = vperm.xlu0 %1254, %v1185
  %v1256 = vpop.permute.xlu0 %1255
  %1259 = vset.pattern.permute.xlu0 0
  %1260 = vperm.xlu0 %1259, %v1186
  %v1261 = vpop.permute.xlu0 %1260
  %1264 = vset.pattern.permute.xlu0 0
  %1265 = vperm.xlu0 %1264, %v1187
  %v1266 = vpop.permute.xlu0 %1265
  %1269 = vset.pattern.permute.xlu0 0
  %1270 = vperm.xlu0 %1269, %v1188
  %v1271 = vpop.permute.xlu0 %1270
  %1274 = vset.pattern.permute.xlu0 0
  %1275 = vperm.xlu0 %1274, %v1189
  %v1276 = vpop.permute.xlu0 %1275
  %v1278 = vmul.f32 %v1040, %v1241
  %v1279 = vmul.f32 %v1045, %v1246
  %v1280 = vmul.f32 %v1050, %v1251
  %v1281 = vmul.f32 %v1055, %v1256
  %v1282 = vmul.f32 %v1060, %v1261
  %v1283 = vmul.f32 %v1065, %v1266
  %v1284 = vmul.f32 %v1070, %v1271
  %v1285 = vmul.f32 %v1075, %v1276
  %1287 = vset.pattern.permute.xlu0 1
  %1288 = vperm.xlu0 %1287, %v1230
  %v1289 = vpop.permute.xlu0 %1288
  %1292 = vset.pattern.permute.xlu0 1
  %1293 = vperm.xlu0 %1292, %v1231
  %v1294 = vpop.permute.xlu0 %1293
  %1297 = vset.pattern.permute.xlu0 1
  %1298 = vperm.xlu0 %1297, %v1232
  %v1299 = vpop.permute.xlu0 %1298
  %1302 = vset.pattern.permute.xlu0 1
  %1303 = vperm.xlu0 %1302, %v1233
  %v1304 = vpop.permute.xlu0 %1303
  %1307 = vset.pattern.permute.xlu0 1
  %1308 = vperm.xlu0 %1307, %v1234
  %v1309 = vpop.permute.xlu0 %1308
  %1312 = vset.pattern.permute.xlu0 1
  %1313 = vperm.xlu0 %1312, %v1235
  %v1314 = vpop.permute.xlu0 %1313
  %1317 = vset.pattern.permute.xlu0 1
  %1318 = vperm.xlu0 %1317, %v1236
  %v1319 = vpop.permute.xlu0 %1318
  %1322 = vset.pattern.permute.xlu0 1
  %1323 = vperm.xlu0 %1322, %v1237
  %v1324 = vpop.permute.xlu0 %1323
  %v1326 = vadd.f32 %v1278, %v1289
  %v1327 = vadd.f32 %v1279, %v1294
  %v1328 = vadd.f32 %v1280, %v1299
  %v1329 = vadd.f32 %v1281, %v1304
  %v1330 = vadd.f32 %v1282, %v1309
  %v1331 = vadd.f32 %v1283, %v1314
  %v1332 = vadd.f32 %v1284, %v1319
  %v1333 = vadd.f32 %v1285, %v1324
  %s1334 = sld [smem:[#allocation2]]
  %vm1335 = vcmp.ge.f32.partialorder %v1326, 0.0
  %vm1336 = vcmp.ge.f32.partialorder %v1327, 0.0
  %vm1337 = vcmp.ge.f32.partialorder %v1328, 0.0
  %vm1338 = vcmp.ge.f32.partialorder %v1329, 0.0
  %vm1339 = vcmp.ge.f32.partialorder %v1330, 0.0
  %vm1340 = vcmp.ge.f32.partialorder %v1331, 0.0
  %vm1341 = vcmp.ge.f32.partialorder %v1332, 0.0
  %vm1342 = vcmp.ge.f32.partialorder %v1333, 0.0
  %v1343 = vstv %s1334
  %v1344 = vmul.f32 %v1343, %v1326
  %v1345 = vmul.f32 %v1343, %v1327
  %v1346 = vmul.f32 %v1343, %v1328
  %v1347 = vmul.f32 %v1343, %v1329
  %v1348 = vmul.f32 %v1343, %v1330
  %v1349 = vmul.f32 %v1343, %v1331
  %v1350 = vmul.f32 %v1343, %v1332
  %v1351 = vmul.f32 %v1343, %v1333
  %v1352 = vsel %vm1335, %v1326, %v1344
  %v1353 = vsel %vm1336, %v1327, %v1345
  %v1354 = vsel %vm1337, %v1328, %v1346
  %v1355 = vsel %vm1338, %v1329, %v1347
  %v1356 = vsel %vm1339, %v1330, %v1348
  %v1357 = vsel %vm1340, %v1331, %v1349
  %v1358 = vsel %vm1341, %v1332, %v1350
  %v1359 = vsel %vm1342, %v1333, %v1351
  %1360 = vst [vmem:[%s4] sm:$0xff] %v1352
  %1361 = vst [vmem:[%s4 + $0x8] sm:$0xff] %v1353
  %1362 = vst [vmem:[%s4 + $0x10] sm:$0xff] %v1354
  %1363 = vst [vmem:[%s4 + $0x18] sm:$0xff] %v1355
  %1364 = vst [vmem:[%s4 + $0x20] sm:$0xff] %v1356
  %1365 = vst [vmem:[%s4 + $0x28] sm:$0xff] %v1357
  %1366 = vst [vmem:[%s4 + $0x30] sm:$0xff] %v1358
  %1367 = vst [vmem:[%s4 + $0x38] sm:$0xff] %v1359
  // Predicated region
  $region18: #{encoder_forward.6} parent=0 // pred_check
    _
  $region19: #{encoder_forward.6} parent=0 // pred_check_branch
    %1369 = sbr.rel (0) target = $region21
  $region20: #{encoder_forward.6} parent=0 // pred_region
    _
  $region21: #{encoder_forward.6} parent=0 // pred_fallthru
    _
  // Predicated region
  $region22: #{encoder_forward.6} parent=0 // pred_check
    _
  $region23: #{encoder_forward.6} parent=0 // pred_check_branch
    %1371 = sbr.rel (0) target = $region25
  $region24: #{encoder_forward.6} parent=0 // pred_region
    _
  $region25: #{encoder_forward.6} parent=0 // pred_fallthru
    _

// kernel: encoder_forward.7
$region0: #{encoder_forward.7}
  #allocation0 [shape = 'u32[]', space=smem, size = 0x4, offset = 0x4, fixed_abs, tag = 'smem constant byte address 0x4 - core index']
  #allocation1 [shape = 'u32[144,128]{1,0:T(1,128)}', space=vmem, size = 0x12000, scoped, tag = 'internal scratch']
  %s0 = inlined_call_operand.vmem [shape: f32[2,3136], index: 0, kind: input, shape index: {}]
  %s1 = inlined_call_operand.vmem [shape: bf16[3136,4096], index: 1, kind: input, shape index: {}]
  %s2 = inlined_call_operand.vmem [shape: f32[1,4096], index: 2, kind: input, shape index: {}]
  %s3 = inlined_call_operand.vmem [shape: f32[2,4096], index: 3, kind: output, shape index: {}]
  %s4 = sld [smem:[#allocation0]]
  $region68: #{encoder_forward.7} parent=0
    _
  %s6 = ssub.s32 1, %s4
  %s7 = scalar_select 0, %s6, %s4
  $region1: #{encoder_forward.7} parent=0
    #allocation2 [shape = 'u8[6422528]{0}', space=vmem, size = 0x620000, scoped, tag = 'input window, operand 1']
    loop: start=0, step=1, limit=10
    $region2: #{encoder_forward.7} parent=1 // loop_pre_header
      _
    $region3: #{encoder_forward.7} parent=1 // loop_header
      %s9 = sphi 0, %s13
      %p10 = scmp.ge.s32.totalorder %s9, 10
      %s17 = sphi 0, %s17
      %s19 = sphi 0, %s17
      %s20 = sphi 0, %s19
      %s34 = sphi 0, %s20
      %s40 = sphi 0, %s42
      %s43 = sphi 0, %s40
      %s44 = sphi 0, %s43
      %s60 = sphi 0, %s44
      %s66 = sphi 0, %s68
      %s69 = sphi 0, %s66
      %s70 = sphi 0, %s69
      %s86 = sphi 0, %s70
      %s92 = sphi 0, %s94
      %s95 = sphi 0, %s92
      %s96 = sphi 0, %s95
      %s112 = sphi 0, %s96
    $region4: #{encoder_forward.7} parent=1 // loop_header_branch
      %12 = sbr.rel (%p10) target = $region8
    $region5: #{encoder_forward.7} parent=1 // loop_body
      %s14 = ssub.s32 %s9, 1
      %s15 = ssub.s32 %s9, 2
      %s16 = sadd.s32 %s9, 1
      %s18 = sadd.s32 %s17, 1
      %p21 = scmp.eq.s32.totalorder %s9, 7
      %p22 = scmp.ne.s32.totalorder %s17, %s19
      %p23 = scmp.eq.s32.totalorder %s9, 0
      %p24 = por %p22, %p23
      %p25 = scmp.ne.s32.totalorder %s17, %s19
      %p26 = scmp.eq.s32.totalorder %s14, 7
      %p27 = por %p25, %p26
      %p28 = scmp.ne.s32.totalorder %s19, %s20
      %p29 = scmp.eq.s32.totalorder %s14, 0
      %p30 = por %p28, %p29
      %p31 = scmp.ne.s32.totalorder %s19, %s20
      %p32 = scmp.eq.s32.totalorder %s15, 7
      %p33 = por %p31, %p32
      %p35 = scmp.ne.s32.totalorder %s20, %s34
      %p36 = scmp.eq.s32.totalorder %s15, 0
      %p37 = por %p35, %p36
      %s38 = ssub.s32 %s9, %s16
      %p39 = scmp.eq.s32.totalorder %s38, 0
      %s41 = sadd.s32 %s40, 1
      %s42 = scalar_select %p39, %s40, %s41
      %p45 = pneg %p39
      %p46 = scmp.eq.s32.totalorder %s9, 7
      %p47 = por %p45, %p46
      %p48 = scmp.ne.s32.totalorder %s40, %s43
      %p49 = scmp.eq.s32.totalorder %s9, 0
      %p50 = por %p48, %p49
      %p51 = scmp.ne.s32.totalorder %s40, %s43
      %p52 = scmp.eq.s32.totalorder %s14, 7
      %p53 = por %p51, %p52
      %p54 = scmp.ne.s32.totalorder %s43, %s44
      %p55 = scmp.eq.s32.totalorder %s14, 0
      %p56 = por %p54, %p55
      %p57 = scmp.ne.s32.totalorder %s43, %s44
      %p58 = scmp.eq.s32.totalorder %s15, 7
      %p59 = por %p57, %p58
      %p61 = scmp.ne.s32.totalorder %s44, %s60
      %p62 = scmp.eq.s32.totalorder %s15, 0
      %p63 = por %p61, %p62
      %s64 = ssub.s32 %s9, %s16
      %p65 = scmp.eq.s32.totalorder %s64, 0
      %s67 = sadd.s32 %s66, 1
      %s68 = scalar_select %p65, %s66, %s67
      %p71 = pneg %p65
      %p72 = scmp.eq.s32.totalorder %s9, 7
      %p73 = por %p71, %p72
      %p74 = scmp.ne.s32.totalorder %s66, %s69
      %p75 = scmp.eq.s32.totalorder %s9, 0
      %p76 = por %p74, %p75
      %p77 = scmp.ne.s32.totalorder %s66, %s69
      %p78 = scmp.eq.s32.totalorder %s14, 7
      %p79 = por %p77, %p78
      %p80 = scmp.ne.s32.totalorder %s69, %s70
      %p81 = scmp.eq.s32.totalorder %s14, 0
      %p82 = por %p80, %p81
      %p83 = scmp.ne.s32.totalorder %s69, %s70
      %p84 = scmp.eq.s32.totalorder %s15, 7
      %p85 = por %p83, %p84
      %p87 = scmp.ne.s32.totalorder %s70, %s86
      %p88 = scmp.eq.s32.totalorder %s15, 0
      %p89 = por %p87, %p88
      %s90 = ssub.s32 %s9, %s16
      %p91 = scmp.eq.s32.totalorder %s90, 0
      %s93 = sadd.s32 %s92, 1
      %s94 = scalar_select %p91, %s92, %s93
      %p97 = pneg %p91
      %p98 = scmp.eq.s32.totalorder %s9, 7
      %p99 = por %p97, %p98
      %p100 = scmp.ne.s32.totalorder %s92, %s95
      %p101 = scmp.eq.s32.totalorder %s9, 0
      %p102 = por %p100, %p101
      %p103 = scmp.ne.s32.totalorder %s92, %s95
      %p104 = scmp.eq.s32.totalorder %s14, 7
      %p105 = por %p103, %p104
      %p106 = scmp.ne.s32.totalorder %s95, %s96
      %p107 = scmp.eq.s32.totalorder %s14, 0
      %p108 = por %p106, %p107
      %p109 = scmp.ne.s32.totalorder %s95, %s96
      %p110 = scmp.eq.s32.totalorder %s15, 7
      %p111 = por %p109, %p110
      %p113 = scmp.ne.s32.totalorder %s96, %s112
      %p114 = scmp.eq.s32.totalorder %s15, 0
      %p115 = por %p113, %p114
      %p116 = scmp.le.s32.totalorder 1, %s9
      %p117 = scmp.lt.s32.totalorder %s9, 9
      %p118 = pnand %p116, %p117
      %p119 = pneg %p118
      // Predicated region
      $region9: #{encoder_forward.7} parent=5 // pred_check
        _
      $region10: #{encoder_forward.7} parent=5 // pred_check_branch
        %121 = sbr.rel (%p118) target = $region12
      $region11: #{encoder_forward.7} parent=5 // pred_region
        %s122 = ssub.s32 %s9, 1
        // Predicated region
        $region13: #{encoder_forward.7} parent=11 // pred_check
          %p123 = pneg %p30
        $region14: #{encoder_forward.7} parent=11 // pred_check_branch
          %125 = sbr.rel (%p123) target = $region16
        $region15: #{encoder_forward.7} parent=11 // pred_region
          _
        $region16: #{encoder_forward.7} parent=11 // pred_fallthru
          _
      $region12: #{encoder_forward.7} parent=5 // pred_fallthru
        _
      %p126 = scmp.lt.s32.totalorder %s9, 8
      // Predicated region
      $region17: #{encoder_forward.7} parent=5 // pred_check
        %p127 = pneg %p126
      $region18: #{encoder_forward.7} parent=5 // pred_check_branch
        %129 = sbr.rel (%p127) target = $region20
      $region19: #{encoder_forward.7} parent=5 // pred_region
        // Predicated region
        $region21: #{encoder_forward.7} parent=19 // pred_check
          %p130 = pneg %p50
        $region22: #{encoder_forward.7} parent=19 // pred_check_branch
          %132 = sbr.rel (%p130) target = $region24
        $region23: #{encoder_forward.7} parent=19 // pred_region
          %s133 = sand.u32 %s40, 1
          %s134 = sand.u32 %s40, 1
          %s135 = smul.addr %s134, 6272
          %s136 = scalar_lea.vmem [#allocation2], %s135
          %s137 = smul.u32 4, %s9
          %s138 = smul.addr %s137, 4
          %s139 = scalar_lea.vmem %s1, %s138
          // Predicated region
          $region25: #{encoder_forward.7} parent=23 // pred_check
            _
          $region26: #{encoder_forward.7} parent=23 // pred_check_branch
            %141 = sbr.rel (0) target = $region28
          $region27: #{encoder_forward.7} parent=23 // pred_region
            // Predicated region
            $region29: #{encoder_forward.7} parent=27 // pred_check
              _
            $region30: #{encoder_forward.7} parent=27 // pred_check_branch
              %143 = sbr.rel (0) target = $region32
            $region31: #{encoder_forward.7} parent=27 // pred_region
              loop: start=0, step=1, limit=1
              $region33: #{encoder_forward.7} parent=31 // loop_pre_header
                _
              $region34: #{encoder_forward.7} parent=31 // loop_header
                %s145 = sphi 0, %s149
                %p146 = scmp.ge.s32.totalorder %s145, 1
                %s150 = sphi %s139, %s139
                %s151 = sphi %s136, %s136
              $region35: #{encoder_forward.7} parent=31 // loop_header_branch
                %148 = sbr.rel (%p146) target = $region39
              $region36: #{encoder_forward.7} parent=31 // loop_body
                %v152 = vld [vmem:[%s150] sm:$0xff]
                %153 = vst [vmem:[%s151] sm:$0xff] %v152
                %v154 = vld [vmem:[%s150 + $0x8] sm:$0xff]
                %155 = vst [vmem:[%s151 + $0x8] sm:$0xff] %v154
                %v156 = vld [vmem:[%s150 + $0x80] sm:$0xff]
                %157 = vst [vmem:[%s151 + $0x10] sm:$0xff] %v156
                %v158 = vld [vmem:[%s150 + $0x88] sm:$0xff]
                %159 = vst [vmem:[%s151 + $0x18] sm:$0xff] %v158
                %v160 = vld [vmem:[%s150 + $0x100] sm:$0xff]
                %161 = vst [vmem:[%s151 + $0x20] sm:$0xff] %v160
                %v162 = vld [vmem:[%s150 + $0x108] sm:$0xff]
                %163 = vst [vmem:[%s151 + $0x28] sm:$0xff] %v162
                %v164 = vld [vmem:[%s150 + $0x180] sm:$0xff]
                %165 = vst [vmem:[%s151 + $0x30] sm:$0xff] %v164
                %v166 = vld [vmem:[%s150 + $0x188] sm:$0xff]
                %167 = vst [vmem:[%s151 + $0x38] sm:$0xff] %v166
                %v168 = vld [vmem:[%s150 + $0x200] sm:$0xff]
                %169 = vst [vmem:[%s151 + $0x40] sm:$0xff] %v168
                %v170 = vld [vmem:[%s150 + $0x208] sm:$0xff]
                %171 = vst [vmem:[%s151 + $0x48] sm:$0xff] %v170
                %v172 = vld [vmem:[%s150 + $0x280] sm:$0xff]
                %173 = vst [vmem:[%s151 + $0x50] sm:$0xff] %v172
                %v174 = vld [vmem:[%s150 + $0x288] sm:$0xff]
                %175 = vst [vmem:[%s151 + $0x58] sm:$0xff] %v174
                %v176 = vld [vmem:[%s150 + $0x300] sm:$0xff]
                %177 = vst [vmem:[%s151 + $0x60] sm:$0xff] %v176
                %v178 = vld [vmem:[%s150 + $0x308] sm:$0xff]
                %179 = vst [vmem:[%s151 + $0x68] sm:$0xff] %v178
                %v180 = vld [vmem:[%s150 + $0x380] sm:$0xff]
                %181 = vst [vmem:[%s151 + $0x70] sm:$0xff] %v180
                %v182 = vld [vmem:[%s150 + $0x388] sm:$0xff]
                %183 = vst [vmem:[%s151 + $0x78] sm:$0xff] %v182
                %v184 = vld [vmem:[%s150 + $0x400] sm:$0xff]
                %185 = vst [vmem:[%s151 + $0x80] sm:$0xff] %v184
                %v186 = vld [vmem:[%s150 + $0x408] sm:$0xff]
                %187 = vst [vmem:[%s151 + $0x88] sm:$0xff] %v186
                %v188 = vld [vmem:[%s150 + $0x480] sm:$0xff]
                %189 = vst [vmem:[%s151 + $0x90] sm:$0xff] %v188
                %v190 = vld [vmem:[%s150 + $0x488] sm:$0xff]
                %191 = vst [vmem:[%s151 + $0x98] sm:$0xff] %v190
                %v192 = vld [vmem:[%s150 + $0x500] sm:$0xff]
                %193 = vst [vmem:[%s151 + $0xa0] sm:$0xff] %v192
                %v194 = vld [vmem:[%s150 + $0x508] sm:$0xff]
                %195 = vst [vmem:[%s151 + $0xa8] sm:$0xff] %v194
                %v196 = vld [vmem:[%s150 + $0x580] sm:$0xff]
                %197 = vst [vmem:[%s151 + $0xb0] sm:$0xff] %v196
                %v198 = vld [vmem:[%s150 + $0x588] sm:$0xff]
                %199 = vst [vmem:[%s151 + $0xb8] sm:$0xff] %v198
                %v200 = vld [vmem:[%s150 + $0x600] sm:$0xff]
                %201 = vst [vmem:[%s151 + $0xc0] sm:$0xff] %v200
                %v202 = vld [vmem:[%s150 + $0x608] sm:$0xff]
                %203 = vst [vmem:[%s151 + $0xc8] sm:$0xff] %v202
                %v204 = vld [vmem:[%s150 + $0x680] sm:$0xff]
                %205 = vst [vmem:[%s151 + $0xd0] sm:$0xff] %v204
                %v206 = vld [vmem:[%s150 + $0x688] sm:$0xff]
                %207 = vst [vmem:[%s151 + $0xd8] sm:$0xff] %v206
                %v208 = vld [vmem:[%s150 + $0x700] sm:$0xff]
                %209 = vst [vmem:[%s151 + $0xe0] sm:$0xff] %v208
                %v210 = vld [vmem:[%s150 + $0x708] sm:$0xff]
                %211 = vst [vmem:[%s151 + $0xe8] sm:$0xff] %v210
                %v212 = vld [vmem:[%s150 + $0x780] sm:$0xff]
                %213 = vst [vmem:[%s151 + $0xf0] sm:$0xff] %v212
                %v214 = vld [vmem:[%s150 + $0x788] sm:$0xff]
                %215 = vst [vmem:[%s151 + $0xf8] sm:$0xff] %v214
                %v216 = vld [vmem:[%s150 + $0x800] sm:$0xff]
                %217 = vst [vmem:[%s151 + $0x100] sm:$0xff] %v216
                %v218 = vld [vmem:[%s150 + $0x808] sm:$0xff]
                %219 = vst [vmem:[%s151 + $0x108] sm:$0xff] %v218
                %v220 = vld [vmem:[%s150 + $0x880] sm:$0xff]
                %221 = vst [vmem:[%s151 + $0x110] sm:$0xff] %v220
                %v222 = vld [vmem:[%s150 + $0x888] sm:$0xff]
                %223 = vst [vmem:[%s151 + $0x118] sm:$0xff] %v222
                %v224 = vld [vmem:[%s150 + $0x900] sm:$0xff]
                %225 = vst [vmem:[%s151 + $0x120] sm:$0xff] %v224
                %v226 = vld [vmem:[%s150 + $0x908] sm:$0xff]
                %227 = vst [vmem:[%s151 + $0x128] sm:$0xff] %v226
                %v228 = vld [vmem:[%s150 + $0x980] sm:$0xff]
                %229 = vst [vmem:[%s151 + $0x130] sm:$0xff] %v228
                %v230 = vld [vmem:[%s150 + $0x988] sm:$0xff]
                %231 = vst [vmem:[%s151 + $0x138] sm:$0xff] %v230
                %v232 = vld [vmem:[%s150 + $0xa00] sm:$0xff]
                %233 = vst [vmem:[%s151 + $0x140] sm:$0xff] %v232
                %v234 = vld [vmem:[%s150 + $0xa08] sm:$0xff]
                %235 = vst [vmem:[%s151 + $0x148] sm:$0xff] %v234
                %v236 = vld [vmem:[%s150 + $0xa80] sm:$0xff]
                %237 = vst [vmem:[%s151 + $0x150] sm:$0xff] %v236
                %v238 = vld [vmem:[%s150 + $0xa88] sm:$0xff]
                %239 = vst [vmem:[%s151 + $0x158] sm:$0xff] %v238
                %v240 = vld [vmem:[%s150 + $0xb00] sm:$0xff]
                %241 = vst [vmem:[%s151 + $0x160] sm:$0xff] %v240
                %v242 = vld [vmem:[%s150 + $0xb08] sm:$0xff]
                %243 = vst [vmem:[%s151 + $0x168] sm:$0xff] %v242
                %v244 = vld [vmem:[%s150 + $0xb80] sm:$0xff]
                %245 = vst [vmem:[%s151 + $0x170] sm:$0xff] %v244
                %v246 = vld [vmem:[%s150 + $0xb88] sm:$0xff]
                %247 = vst [vmem:[%s151 + $0x178] sm:$0xff] %v246
                %v248 = vld [vmem:[%s150 + $0xc00] sm:$0xff]
                %249 = vst [vmem:[%s151 + $0x180] sm:$0xff] %v248
                %v250 = vld [vmem:[%s150 + $0xc08] sm:$0xff]
                %251 = vst [vmem:[%s151 + $0x188] sm:$0xff] %v250
                %v252 = vld [vmem:[%s150 + $0xc80] sm:$0xff]
                %253 = vst [vmem:[%s151 + $0x190] sm:$0xff] %v252
                %v254 = vld [vmem:[%s150 + $0xc88] sm:$0xff]
                %255 = vst [vmem:[%s151 + $0x198] sm:$0xff] %v254
                %v256 = vld [vmem:[%s150 + $0xd00] sm:$0xff]
                %257 = vst [vmem:[%s151 + $0x1a0] sm:$0xff] %v256
                %v258 = vld [vmem:[%s150 + $0xd08] sm:$0xff]
                %259 = vst [vmem:[%s151 + $0x1a8] sm:$0xff] %v258
                %v260 = vld [vmem:[%s150 + $0xd80] sm:$0xff]
                %261 = vst [vmem:[%s151 + $0x1b0] sm:$0xff] %v260
                %v262 = vld [vmem:[%s150 + $0xd88] sm:$0xff]
                %263 = vst [vmem:[%s151 + $0x1b8] sm:$0xff] %v262
                %v264 = vld [vmem:[%s150 + $0xe00] sm:$0xff]
                %265 = vst [vmem:[%s151 + $0x1c0] sm:$0xff] %v264
                %v266 = vld [vmem:[%s150 + $0xe08] sm:$0xff]
                %267 = vst [vmem:[%s151 + $0x1c8] sm:$0xff] %v266
                %v268 = vld [vmem:[%s150 + $0xe80] sm:$0xff]
                %269 = vst [vmem:[%s151 + $0x1d0] sm:$0xff] %v268
                %v270 = vld [vmem:[%s150 + $0xe88] sm:$0xff]
                %271 = vst [vmem:[%s151 + $0x1d8] sm:$0xff] %v270
                %v272 = vld [vmem:[%s150 + $0xf00] sm:$0xff]
                %273 = vst [vmem:[%s151 + $0x1e0] sm:$0xff] %v272
                %v274 = vld [vmem:[%s150 + $0xf08] sm:$0xff]
                %275 = vst [vmem:[%s151 + $0x1e8] sm:$0xff] %v274
                %v276 = vld [vmem:[%s150 + $0xf80] sm:$0xff]
                %277 = vst [vmem:[%s151 + $0x1f0] sm:$0xff] %v276
                %v278 = vld [vmem:[%s150 + $0xf88] sm:$0xff]
                %279 = vst [vmem:[%s151 + $0x1f8] sm:$0xff] %v278
                %v280 = vld [vmem:[%s150 + $0x1000] sm:$0xff]
                %281 = vst [vmem:[%s151 + $0x200] sm:$0xff] %v280
                %v282 = vld [vmem:[%s150 + $0x1008] sm:$0xff]
                %283 = vst [vmem:[%s151 + $0x208] sm:$0xff] %v282
                %v284 = vld [vmem:[%s150 + $0x1080] sm:$0xff]
                %285 = vst [vmem:[%s151 + $0x210] sm:$0xff] %v284
                %v286 = vld [vmem:[%s150 + $0x1088] sm:$0xff]
                %287 = vst [vmem:[%s151 + $0x218] sm:$0xff] %v286
                %v288 = vld [vmem:[%s150 + $0x1100] sm:$0xff]
                %289 = vst [vmem:[%s151 + $0x220] sm:$0xff] %v288
                %v290 = vld [vmem:[%s150 + $0x1108] sm:$0xff]
                %291 = vst [vmem:[%s151 + $0x228] sm:$0xff] %v290
                %v292 = vld [vmem:[%s150 + $0x1180] sm:$0xff]
                %293 = vst [vmem:[%s151 + $0x230] sm:$0xff] %v292
                %v294 = vld [vmem:[%s150 + $0x1188] sm:$0xff]
                %295 = vst [vmem:[%s151 + $0x238] sm:$0xff] %v294
                %v296 = vld [vmem:[%s150 + $0x1200] sm:$0xff]
                %297 = vst [vmem:[%s151 + $0x240] sm:$0xff] %v296
                %v298 = vld [vmem:[%s150 + $0x1208] sm:$0xff]
                %299 = vst [vmem:[%s151 + $0x248] sm:$0xff] %v298
                %v300 = vld [vmem:[%s150 + $0x1280] sm:$0xff]
                %301 = vst [vmem:[%s151 + $0x250] sm:$0xff] %v300
                %v302 = vld [vmem:[%s150 + $0x1288] sm:$0xff]
                %303 = vst [vmem:[%s151 + $0x258] sm:$0xff] %v302
                %v304 = vld [vmem:[%s150 + $0x1300] sm:$0xff]
                %305 = vst [vmem:[%s151 + $0x260] sm:$0xff] %v304
                %v306 = vld [vmem:[%s150 + $0x1308] sm:$0xff]
                %307 = vst [vmem:[%s151 + $0x268] sm:$0xff] %v306
                %v308 = vld [vmem:[%s150 + $0x1380] sm:$0xff]
                %309 = vst [vmem:[%s151 + $0x270] sm:$0xff] %v308
                %v310 = vld [vmem:[%s150 + $0x1388] sm:$0xff]
                %311 = vst [vmem:[%s151 + $0x278] sm:$0xff] %v310
                %v312 = vld [vmem:[%s150 + $0x1400] sm:$0xff]
                %313 = vst [vmem:[%s151 + $0x280] sm:$0xff] %v312
                %v314 = vld [vmem:[%s150 + $0x1408] sm:$0xff]
                %315 = vst [vmem:[%s151 + $0x288] sm:$0xff] %v314
                %v316 = vld [vmem:[%s150 + $0x1480] sm:$0xff]
                %317 = vst [vmem:[%s151 + $0x290] sm:$0xff] %v316
                %v318 = vld [vmem:[%s150 + $0x1488] sm:$0xff]
                %319 = vst [vmem:[%s151 + $0x298] sm:$0xff] %v318
                %v320 = vld [vmem:[%s150 + $0x1500] sm:$0xff]
                %321 = vst [vmem:[%s151 + $0x2a0] sm:$0xff] %v320
                %v322 = vld [vmem:[%s150 + $0x1508] sm:$0xff]
                %323 = vst [vmem:[%s151 + $0x2a8] sm:$0xff] %v322
                %v324 = vld [vmem:[%s150 + $0x1580] sm:$0xff]
                %325 = vst [vmem:[%s151 + $0x2b0] sm:$0xff] %v324
                %v326 = vld [vmem:[%s150 + $0x1588] sm:$0xff]
                %327 = vst [vmem:[%s151 + $0x2b8] sm:$0xff] %v326
                %v328 = vld [vmem:[%s150 + $0x1600] sm:$0xff]
                %329 = vst [vmem:[%s151 + $0x2c0] sm:$0xff] %v328
                %v330 = vld [vmem:[%s150 + $0x1608] sm:$0xff]
                %331 = vst [vmem:[%s151 + $0x2c8] sm:$0xff] %v330
                %v332 = vld [vmem:[%s150 + $0x1680] sm:$0xff]
                %333 = vst [vmem:[%s151 + $0x2d0] sm:$0xff] %v332
                %v334 = vld [vmem:[%s150 + $0x1688] sm:$0xff]
                %335 = vst [vmem:[%s151 + $0x2d8] sm:$0xff] %v334
                %v336 = vld [vmem:[%s150 + $0x1700] sm:$0xff]
                %337 = vst [vmem:[%s151 + $0x2e0] sm:$0xff] %v336
                %v338 = vld [vmem:[%s150 + $0x1708] sm:$0xff]
                %339 = vst [vmem:[%s151 + $0x2e8] sm:$0xff] %v338
                %v340 = vld [vmem:[%s150 + $0x1780] sm:$0xff]
                %341 = vst [vmem:[%s151 + $0x2f0] sm:$0xff] %v340
                %v342 = vld [vmem:[%s150 + $0x1788] sm:$0xff]
                %343 = vst [vmem:[%s151 + $0x2f8] sm:$0xff] %v342
                %v344 = vld [vmem:[%s150 + $0x1800] sm:$0xff]
                %345 = vst [vmem:[%s151 + $0x300] sm:$0xff] %v344
                %v346 = vld [vmem:[%s150 + $0x1808] sm:$0xff]
                %347 = vst [vmem:[%s151 + $0x308] sm:$0xff] %v346
                %v348 = vld [vmem:[%s150 + $0x1880] sm:$0xff]
                %349 = vst [vmem:[%s151 + $0x310] sm:$0xff] %v348
                %v350 = vld [vmem:[%s150 + $0x1888] sm:$0xff]
                %351 = vst [vmem:[%s151 + $0x318] sm:$0xff] %v350
                %v352 = vld [vmem:[%s150 + $0x1900] sm:$0xff]
                %353 = vst [vmem:[%s151 + $0x320] sm:$0xff] %v352
                %v354 = vld [vmem:[%s150 + $0x1908] sm:$0xff]
                %355 = vst [vmem:[%s151 + $0x328] sm:$0xff] %v354
                %v356 = vld [vmem:[%s150 + $0x1980] sm:$0xff]
                %357 = vst [vmem:[%s151 + $0x330] sm:$0xff] %v356
                %v358 = vld [vmem:[%s150 + $0x1988] sm:$0xff]
                %359 = vst [vmem:[%s151 + $0x338] sm:$0xff] %v358
                %v360 = vld [vmem:[%s150 + $0x1a00] sm:$0xff]
                %361 = vst [vmem:[%s151 + $0x340] sm:$0xff] %v360
                %v362 = vld [vmem:[%s150 + $0x1a08] sm:$0xff]
                %363 = vst [vmem:[%s151 + $0x348] sm:$0xff] %v362
                %v364 = vld [vmem:[%s150 + $0x1a80] sm:$0xff]
                %365 = vst [vmem:[%s151 + $0x350] sm:$0xff] %v364
                %v366 = vld [vmem:[%s150 + $0x1a88] sm:$0xff]
                %367 = vst [vmem:[%s151 + $0x358] sm:$0xff] %v366
                %v368 = vld [vmem:[%s150 + $0x1b00] sm:$0xff]
                %369 = vst [vmem:[%s151 + $0x360] sm:$0xff] %v368
                %v370 = vld [vmem:[%s150 + $0x1b08] sm:$0xff]
                %371 = vst [vmem:[%s151 + $0x368] sm:$0xff] %v370
                %v372 = vld [vmem:[%s150 + $0x1b80] sm:$0xff]
                %373 = vst [vmem:[%s151 + $0x370] sm:$0xff] %v372
                %v374 = vld [vmem:[%s150 + $0x1b88] sm:$0xff]
                %375 = vst [vmem:[%s151 + $0x378] sm:$0xff] %v374
                %v376 = vld [vmem:[%s150 + $0x1c00] sm:$0xff]
                %377 = vst [vmem:[%s151 + $0x380] sm:$0xff] %v376
                %v378 = vld [vmem:[%s150 + $0x1c08] sm:$0xff]
                %379 = vst [vmem:[%s151 + $0x388] sm:$0xff] %v378
                %v380 = vld [vmem:[%s150 + $0x1c80] sm:$0xff]
                %381 = vst [vmem:[%s151 + $0x390] sm:$0xff] %v380
                %v382 = vld [vmem:[%s150 + $0x1c88] sm:$0xff]
                %383 = vst [vmem:[%s151 + $0x398] sm:$0xff] %v382
                %v384 = vld [vmem:[%s150 + $0x1d00] sm:$0xff]
                %385 = vst [vmem:[%s151 + $0x3a0] sm:$0xff] %v384
                %v386 = vld [vmem:[%s150 + $0x1d08] sm:$0xff]
                %387 = vst [vmem:[%s151 + $0x3a8] sm:$0xff] %v386
                %v388 = vld [vmem:[%s150 + $0x1d80] sm:$0xff]
                %389 = vst [vmem:[%s151 + $0x3b0] sm:$0xff] %v388
                %v390 = vld [vmem:[%s150 + $0x1d88] sm:$0xff]
                %391 = vst [vmem:[%s151 + $0x3b8] sm:$0xff] %v390
                %v392 = vld [vmem:[%s150 + $0x1e00] sm:$0xff]
                %393 = vst [vmem:[%s151 + $0x3c0] sm:$0xff] %v392
                %v394 = vld [vmem:[%s150 + $0x1e08] sm:$0xff]
                %395 = vst [vmem:[%s151 + $0x3c8] sm:$0xff] %v394
                %v396 = vld [vmem:[%s150 + $0x1e80] sm:$0xff]
                %397 = vst [vmem:[%s151 + $0x3d0] sm:$0xff] %v396
                %v398 = vld [vmem:[%s150 + $0x1e88] sm:$0xff]
                %399 = vst [vmem:[%s151 + $0x3d8] sm:$0xff] %v398
                %v400 = vld [vmem:[%s150 + $0x1f00] sm:$0xff]
                %401 = vst [vmem:[%s151 + $0x3e0] sm:$0xff] %v400
                %v402 = vld [vmem:[%s150 + $0x1f08] sm:$0xff]
                %403 = vst [vmem:[%s151 + $0x3e8] sm:$0xff] %v402
                %v404 = vld [vmem:[%s150 + $0x1f80] sm:$0xff]
                %405 = vst [vmem:[%s151 + $0x3f0] sm:$0xff] %v404
                %v406 = vld [vmem:[%s150 + $0x1f88] sm:$0xff]
                %407 = vst [vmem:[%s151 + $0x3f8] sm:$0xff] %v406
                %v408 = vld [vmem:[%s150 + $0x2000] sm:$0xff]
                %409 = vst [vmem:[%s151 + $0x400] sm:$0xff] %v408
                %v410 = vld [vmem:[%s150 + $0x2008] sm:$0xff]
                %411 = vst [vmem:[%s151 + $0x408] sm:$0xff] %v410
                %v412 = vld [vmem:[%s150 + $0x2080] sm:$0xff]
                %413 = vst [vmem:[%s151 + $0x410] sm:$0xff] %v412
                %v414 = vld [vmem:[%s150 + $0x2088] sm:$0xff]
                %415 = vst [vmem:[%s151 + $0x418] sm:$0xff] %v414
                %v416 = vld [vmem:[%s150 + $0x2100] sm:$0xff]
                %417 = vst [vmem:[%s151 + $0x420] sm:$0xff] %v416
                %v418 = vld [vmem:[%s150 + $0x2108] sm:$0xff]
                %419 = vst [vmem:[%s151 + $0x428] sm:$0xff] %v418
                %v420 = vld [vmem:[%s150 + $0x2180] sm:$0xff]
                %421 = vst [vmem:[%s151 + $0x430] sm:$0xff] %v420
                %v422 = vld [vmem:[%s150 + $0x2188] sm:$0xff]
                %423 = vst [vmem:[%s151 + $0x438] sm:$0xff] %v422
                %v424 = vld [vmem:[%s150 + $0x2200] sm:$0xff]
                %425 = vst [vmem:[%s151 + $0x440] sm:$0xff] %v424
                %v426 = vld [vmem:[%s150 + $0x2208] sm:$0xff]
                %427 = vst [vmem:[%s151 + $0x448] sm:$0xff] %v426
                %v428 = vld [vmem:[%s150 + $0x2280] sm:$0xff]
                %429 = vst [vmem:[%s151 + $0x450] sm:$0xff] %v428
                %v430 = vld [vmem:[%s150 + $0x2288] sm:$0xff]
                %431 = vst [vmem:[%s151 + $0x458] sm:$0xff] %v430
                %v432 = vld [vmem:[%s150 + $0x2300] sm:$0xff]
                %433 = vst [vmem:[%s151 + $0x460] sm:$0xff] %v432
                %v434 = vld [vmem:[%s150 + $0x2308] sm:$0xff]
                %435 = vst [vmem:[%s151 + $0x468] sm:$0xff] %v434
                %v436 = vld [vmem:[%s150 + $0x2380] sm:$0xff]
                %437 = vst [vmem:[%s151 + $0x470] sm:$0xff] %v436
                %v438 = vld [vmem:[%s150 + $0x2388] sm:$0xff]
                %439 = vst [vmem:[%s151 + $0x478] sm:$0xff] %v438
                %v440 = vld [vmem:[%s150 + $0x2400] sm:$0xff]
                %441 = vst [vmem:[%s151 + $0x480] sm:$0xff] %v440
                %v442 = vld [vmem:[%s150 + $0x2408] sm:$0xff]
                %443 = vst [vmem:[%s151 + $0x488] sm:$0xff] %v442
                %v444 = vld [vmem:[%s150 + $0x2480] sm:$0xff]
                %445 = vst [vmem:[%s151 + $0x490] sm:$0xff] %v444
                %v446 = vld [vmem:[%s150 + $0x2488] sm:$0xff]
                %447 = vst [vmem:[%s151 + $0x498] sm:$0xff] %v446
                %v448 = vld [vmem:[%s150 + $0x2500] sm:$0xff]
                %449 = vst [vmem:[%s151 + $0x4a0] sm:$0xff] %v448
                %v450 = vld [vmem:[%s150 + $0x2508] sm:$0xff]
                %451 = vst [vmem:[%s151 + $0x4a8] sm:$0xff] %v450
                %v452 = vld [vmem:[%s150 + $0x2580] sm:$0xff]
                %453 = vst [vmem:[%s151 + $0x4b0] sm:$0xff] %v452
                %v454 = vld [vmem:[%s150 + $0x2588] sm:$0xff]
                %455 = vst [vmem:[%s151 + $0x4b8] sm:$0xff] %v454
                %v456 = vld [vmem:[%s150 + $0x2600] sm:$0xff]
                %457 = vst [vmem:[%s151 + $0x4c0] sm:$0xff] %v456
                %v458 = vld [vmem:[%s150 + $0x2608] sm:$0xff]
                %459 = vst [vmem:[%s151 + $0x4c8] sm:$0xff] %v458
                %v460 = vld [vmem:[%s150 + $0x2680] sm:$0xff]
                %461 = vst [vmem:[%s151 + $0x4d0] sm:$0xff] %v460
                %v462 = vld [vmem:[%s150 + $0x2688] sm:$0xff]
                %463 = vst [vmem:[%s151 + $0x4d8] sm:$0xff] %v462
                %v464 = vld [vmem:[%s150 + $0x2700] sm:$0xff]
                %465 = vst [vmem:[%s151 + $0x4e0] sm:$0xff] %v464
                %v466 = vld [vmem:[%s150 + $0x2708] sm:$0xff]
                %467 = vst [vmem:[%s151 + $0x4e8] sm:$0xff] %v466
                %v468 = vld [vmem:[%s150 + $0x2780] sm:$0xff]
                %469 = vst [vmem:[%s151 + $0x4f0] sm:$0xff] %v468
                %v470 = vld [vmem:[%s150 + $0x2788] sm:$0xff]
                %471 = vst [vmem:[%s151 + $0x4f8] sm:$0xff] %v470
                %v472 = vld [vmem:[%s150 + $0x2800] sm:$0xff]
                %473 = vst [vmem:[%s151 + $0x500] sm:$0xff] %v472
                %v474 = vld [vmem:[%s150 + $0x2808] sm:$0xff]
                %475 = vst [vmem:[%s151 + $0x508] sm:$0xff] %v474
                %v476 = vld [vmem:[%s150 + $0x2880] sm:$0xff]
                %477 = vst [vmem:[%s151 + $0x510] sm:$0xff] %v476
                %v478 = vld [vmem:[%s150 + $0x2888] sm:$0xff]
                %479 = vst [vmem:[%s151 + $0x518] sm:$0xff] %v478
                %v480 = vld [vmem:[%s150 + $0x2900] sm:$0xff]
                %481 = vst [vmem:[%s151 + $0x520] sm:$0xff] %v480
                %v482 = vld [vmem:[%s150 + $0x2908] sm:$0xff]
                %483 = vst [vmem:[%s151 + $0x528] sm:$0xff] %v482
                %v484 = vld [vmem:[%s150 + $0x2980] sm:$0xff]
                %485 = vst [vmem:[%s151 + $0x530] sm:$0xff] %v484
                %v486 = vld [vmem:[%s150 + $0x2988] sm:$0xff]
                %487 = vst [vmem:[%s151 + $0x538] sm:$0xff] %v486
                %v488 = vld [vmem:[%s150 + $0x2a00] sm:$0xff]
                %489 = vst [vmem:[%s151 + $0x540] sm:$0xff] %v488
                %v490 = vld [vmem:[%s150 + $0x2a08] sm:$0xff]
                %491 = vst [vmem:[%s151 + $0x548] sm:$0xff] %v490
                %v492 = vld [vmem:[%s150 + $0x2a80] sm:$0xff]
                %493 = vst [vmem:[%s151 + $0x550] sm:$0xff] %v492
                %v494 = vld [vmem:[%s150 + $0x2a88] sm:$0xff]
                %495 = vst [vmem:[%s151 + $0x558] sm:$0xff] %v494
                %v496 = vld [vmem:[%s150 + $0x2b00] sm:$0xff]
                %497 = vst [vmem:[%s151 + $0x560] sm:$0xff] %v496
                %v498 = vld [vmem:[%s150 + $0x2b08] sm:$0xff]
                %499 = vst [vmem:[%s151 + $0x568] sm:$0xff] %v498
                %v500 = vld [vmem:[%s150 + $0x2b80] sm:$0xff]
                %501 = vst [vmem:[%s151 + $0x570] sm:$0xff] %v500
                %v502 = vld [vmem:[%s150 + $0x2b88] sm:$0xff]
                %503 = vst [vmem:[%s151 + $0x578] sm:$0xff] %v502
                %v504 = vld [vmem:[%s150 + $0x2c00] sm:$0xff]
                %505 = vst [vmem:[%s151 + $0x580] sm:$0xff] %v504
                %v506 = vld [vmem:[%s150 + $0x2c08] sm:$0xff]
                %507 = vst [vmem:[%s151 + $0x588] sm:$0xff] %v506
                %v508 = vld [vmem:[%s150 + $0x2c80] sm:$0xff]
                %509 = vst [vmem:[%s151 + $0x590] sm:$0xff] %v508
                %v510 = vld [vmem:[%s150 + $0x2c88] sm:$0xff]
                %511 = vst [vmem:[%s151 + $0x598] sm:$0xff] %v510
                %v512 = vld [vmem:[%s150 + $0x2d00] sm:$0xff]
                %513 = vst [vmem:[%s151 + $0x5a0] sm:$0xff] %v512
                %v514 = vld [vmem:[%s150 + $0x2d08] sm:$0xff]
                %515 = vst [vmem:[%s151 + $0x5a8] sm:$0xff] %v514
                %v516 = vld [vmem:[%s150 + $0x2d80] sm:$0xff]
                %517 = vst [vmem:[%s151 + $0x5b0] sm:$0xff] %v516
                %v518 = vld [vmem:[%s150 + $0x2d88] sm:$0xff]
                %519 = vst [vmem:[%s151 + $0x5b8] sm:$0xff] %v518
                %v520 = vld [vmem:[%s150 + $0x2e00] sm:$0xff]
                %521 = vst [vmem:[%s151 + $0x5c0] sm:$0xff] %v520
                %v522 = vld [vmem:[%s150 + $0x2e08] sm:$0xff]
                %523 = vst [vmem:[%s151 + $0x5c8] sm:$0xff] %v522
                %v524 = vld [vmem:[%s150 + $0x2e80] sm:$0xff]
                %525 = vst [vmem:[%s151 + $0x5d0] sm:$0xff] %v524
                %v526 = vld [vmem:[%s150 + $0x2e88] sm:$0xff]
                %527 = vst [vmem:[%s151 + $0x5d8] sm:$0xff] %v526
                %v528 = vld [vmem:[%s150 + $0x2f00] sm:$0xff]
                %529 = vst [vmem:[%s151 + $0x5e0] sm:$0xff] %v528
                %v530 = vld [vmem:[%s150 + $0x2f08] sm:$0xff]
                %531 = vst [vmem:[%s151 + $0x5e8] sm:$0xff] %v530
                %v532 = vld [vmem:[%s150 + $0x2f80] sm:$0xff]
                %533 = vst [vmem:[%s151 + $0x5f0] sm:$0xff] %v532
                %v534 = vld [vmem:[%s150 + $0x2f88] sm:$0xff]
                %535 = vst [vmem:[%s151 + $0x5f8] sm:$0xff] %v534
                %v536 = vld [vmem:[%s150 + $0x3000] sm:$0xff]
                %537 = vst [vmem:[%s151 + $0x600] sm:$0xff] %v536
                %v538 = vld [vmem:[%s150 + $0x3008] sm:$0xff]
                %539 = vst [vmem:[%s151 + $0x608] sm:$0xff] %v538
                %v540 = vld [vmem:[%s150 + $0x3080] sm:$0xff]
                %541 = vst [vmem:[%s151 + $0x610] sm:$0xff] %v540
                %v542 = vld [vmem:[%s150 + $0x3088] sm:$0xff]
                %543 = vst [vmem:[%s151 + $0x618] sm:$0xff] %v542
                %v544 = vld [vmem:[%s150 + $0x3100] sm:$0xff]
                %545 = vst [vmem:[%s151 + $0x620] sm:$0xff] %v544
                %v546 = vld [vmem:[%s150 + $0x3108] sm:$0xff]
                %547 = vst [vmem:[%s151 + $0x628] sm:$0xff] %v546
                %v548 = vld [vmem:[%s150 + $0x3180] sm:$0xff]
                %549 = vst [vmem:[%s151 + $0x630] sm:$0xff] %v548
                %v550 = vld [vmem:[%s150 + $0x3188] sm:$0xff]
                %551 = vst [vmem:[%s151 + $0x638] sm:$0xff] %v550
                %v552 = vld [vmem:[%s150 + $0x3200] sm:$0xff]
                %553 = vst [vmem:[%s151 + $0x640] sm:$0xff] %v552
                %v554 = vld [vmem:[%s150 + $0x3208] sm:$0xff]
                %555 = vst [vmem:[%s151 + $0x648] sm:$0xff] %v554
                %v556 = vld [vmem:[%s150 + $0x3280] sm:$0xff]
                %557 = vst [vmem:[%s151 + $0x650] sm:$0xff] %v556
                %v558 = vld [vmem:[%s150 + $0x3288] sm:$0xff]
                %559 = vst [vmem:[%s151 + $0x658] sm:$0xff] %v558
                %v560 = vld [vmem:[%s150 + $0x3300] sm:$0xff]
                %561 = vst [vmem:[%s151 + $0x660] sm:$0xff] %v560
                %v562 = vld [vmem:[%s150 + $0x3308] sm:$0xff]
                %563 = vst [vmem:[%s151 + $0x668] sm:$0xff] %v562
                %v564 = vld [vmem:[%s150 + $0x3380] sm:$0xff]
                %565 = vst [vmem:[%s151 + $0x670] sm:$0xff] %v564
                %v566 = vld [vmem:[%s150 + $0x3388] sm:$0xff]
                %567 = vst [vmem:[%s151 + $0x678] sm:$0xff] %v566
                %v568 = vld [vmem:[%s150 + $0x3400] sm:$0xff]
                %569 = vst [vmem:[%s151 + $0x680] sm:$0xff] %v568
                %v570 = vld [vmem:[%s150 + $0x3408] sm:$0xff]
                %571 = vst [vmem:[%s151 + $0x688] sm:$0xff] %v570
                %v572 = vld [vmem:[%s150 + $0x3480] sm:$0xff]
                %573 = vst [vmem:[%s151 + $0x690] sm:$0xff] %v572
                %v574 = vld [vmem:[%s150 + $0x3488] sm:$0xff]
                %575 = vst [vmem:[%s151 + $0x698] sm:$0xff] %v574
                %v576 = vld [vmem:[%s150 + $0x3500] sm:$0xff]
                %577 = vst [vmem:[%s151 + $0x6a0] sm:$0xff] %v576
                %v578 = vld [vmem:[%s150 + $0x3508] sm:$0xff]
                %579 = vst [vmem:[%s151 + $0x6a8] sm:$0xff] %v578
                %v580 = vld [vmem:[%s150 + $0x3580] sm:$0xff]
                %581 = vst [vmem:[%s151 + $0x6b0] sm:$0xff] %v580
                %v582 = vld [vmem:[%s150 + $0x3588] sm:$0xff]
                %583 = vst [vmem:[%s151 + $0x6b8] sm:$0xff] %v582
                %v584 = vld [vmem:[%s150 + $0x3600] sm:$0xff]
                %585 = vst [vmem:[%s151 + $0x6c0] sm:$0xff] %v584
                %v586 = vld [vmem:[%s150 + $0x3608] sm:$0xff]
                %587 = vst [vmem:[%s151 + $0x6c8] sm:$0xff] %v586
                %v588 = vld [vmem:[%s150 + $0x3680] sm:$0xff]
                %589 = vst [vmem:[%s151 + $0x6d0] sm:$0xff] %v588
                %v590 = vld [vmem:[%s150 + $0x3688] sm:$0xff]
                %591 = vst [vmem:[%s151 + $0x6d8] sm:$0xff] %v590
                %v592 = vld [vmem:[%s150 + $0x3700] sm:$0xff]
                %593 = vst [vmem:[%s151 + $0x6e0] sm:$0xff] %v592
                %v594 = vld [vmem:[%s150 + $0x3708] sm:$0xff]
                %595 = vst [vmem:[%s151 + $0x6e8] sm:$0xff] %v594
                %v596 = vld [vmem:[%s150 + $0x3780] sm:$0xff]
                %597 = vst [vmem:[%s151 + $0x6f0] sm:$0xff] %v596
                %v598 = vld [vmem:[%s150 + $0x3788] sm:$0xff]
                %599 = vst [vmem:[%s151 + $0x6f8] sm:$0xff] %v598
                %v600 = vld [vmem:[%s150 + $0x3800] sm:$0xff]
                %601 = vst [vmem:[%s151 + $0x700] sm:$0xff] %v600
                %v602 = vld [vmem:[%s150 + $0x3808] sm:$0xff]
                %603 = vst [vmem:[%s151 + $0x708] sm:$0xff] %v602
                %v604 = vld [vmem:[%s150 + $0x3880] sm:$0xff]
                %605 = vst [vmem:[%s151 + $0x710] sm:$0xff] %v604
                %v606 = vld [vmem:[%s150 + $0x3888] sm:$0xff]
                %607 = vst [vmem:[%s151 + $0x718] sm:$0xff] %v606
                %v608 = vld [vmem:[%s150 + $0x3900] sm:$0xff]
                %609 = vst [vmem:[%s151 + $0x720] sm:$0xff] %v608
                %v610 = vld [vmem:[%s150 + $0x3908] sm:$0xff]
                %611 = vst [vmem:[%s151 + $0x728] sm:$0xff] %v610
                %v612 = vld [vmem:[%s150 + $0x3980] sm:$0xff]
                %613 = vst [vmem:[%s151 + $0x730] sm:$0xff] %v612
                %v614 = vld [vmem:[%s150 + $0x3988] sm:$0xff]
                %615 = vst [vmem:[%s151 + $0x738] sm:$0xff] %v614
                %v616 = vld [vmem:[%s150 + $0x3a00] sm:$0xff]
                %617 = vst [vmem:[%s151 + $0x740] sm:$0xff] %v616
                %v618 = vld [vmem:[%s150 + $0x3a08] sm:$0xff]
                %619 = vst [vmem:[%s151 + $0x748] sm:$0xff] %v618
                %v620 = vld [vmem:[%s150 + $0x3a80] sm:$0xff]
                %621 = vst [vmem:[%s151 + $0x750] sm:$0xff] %v620
                %v622 = vld [vmem:[%s150 + $0x3a88] sm:$0xff]
                %623 = vst [vmem:[%s151 + $0x758] sm:$0xff] %v622
                %v624 = vld [vmem:[%s150 + $0x3b00] sm:$0xff]
                %625 = vst [vmem:[%s151 + $0x760] sm:$0xff] %v624
                %v626 = vld [vmem:[%s150 + $0x3b08] sm:$0xff]
                %627 = vst [vmem:[%s151 + $0x768] sm:$0xff] %v626
                %v628 = vld [vmem:[%s150 + $0x3b80] sm:$0xff]
                %629 = vst [vmem:[%s151 + $0x770] sm:$0xff] %v628
                %v630 = vld [vmem:[%s150 + $0x3b88] sm:$0xff]
                %631 = vst [vmem:[%s151 + $0x778] sm:$0xff] %v630
                %v632 = vld [vmem:[%s150 + $0x3c00] sm:$0xff]
                %633 = vst [vmem:[%s151 + $0x780] sm:$0xff] %v632
                %v634 = vld [vmem:[%s150 + $0x3c08] sm:$0xff]
                %635 = vst [vmem:[%s151 + $0x788] sm:$0xff] %v634
                %v636 = vld [vmem:[%s150 + $0x3c80] sm:$0xff]
                %637 = vst [vmem:[%s151 + $0x790] sm:$0xff] %v636
                %v638 = vld [vmem:[%s150 + $0x3c88] sm:$0xff]
                %639 = vst [vmem:[%s151 + $0x798] sm:$0xff] %v638
                %v640 = vld [vmem:[%s150 + $0x3d00] sm:$0xff]
                %641 = vst [vmem:[%s151 + $0x7a0] sm:$0xff] %v640
                %v642 = vld [vmem:[%s150 + $0x3d08] sm:$0xff]
                %643 = vst [vmem:[%s151 + $0x7a8] sm:$0xff] %v642
                %v644 = vld [vmem:[%s150 + $0x3d80] sm:$0xff]
                %645 = vst [vmem:[%s151 + $0x7b0] sm:$0xff] %v644
                %v646 = vld [vmem:[%s150 + $0x3d88] sm:$0xff]
                %647 = vst [vmem:[%s151 + $0x7b8] sm:$0xff] %v646
                %v648 = vld [vmem:[%s150 + $0x3e00] sm:$0xff]
                %649 = vst [vmem:[%s151 + $0x7c0] sm:$0xff] %v648
                %v650 = vld [vmem:[%s150 + $0x3e08] sm:$0xff]
                %651 = vst [vmem:[%s151 + $0x7c8] sm:$0xff] %v650
                %v652 = vld [vmem:[%s150 + $0x3e80] sm:$0xff]
                %653 = vst [vmem:[%s151 + $0x7d0] sm:$0xff] %v652
                %v654 = vld [vmem:[%s150 + $0x3e88] sm:$0xff]
                %655 = vst [vmem:[%s151 + $0x7d8] sm:$0xff] %v654
                %v656 = vld [vmem:[%s150 + $0x3f00] sm:$0xff]
                %657 = vst [vmem:[%s151 + $0x7e0] sm:$0xff] %v656
                %v658 = vld [vmem:[%s150 + $0x3f08] sm:$0xff]
                %659 = vst [vmem:[%s151 + $0x7e8] sm:$0xff] %v658
                %v660 = vld [vmem:[%s150 + $0x3f80] sm:$0xff]
                %661 = vst [vmem:[%s151 + $0x7f0] sm:$0xff] %v660
                %v662 = vld [vmem:[%s150 + $0x3f88] sm:$0xff]
                %663 = vst [vmem:[%s151 + $0x7f8] sm:$0xff] %v662
                %v664 = vld [vmem:[%s150 + $0x4000] sm:$0xff]
                %665 = vst [vmem:[%s151 + $0x800] sm:$0xff] %v664
                %v666 = vld [vmem:[%s150 + $0x4008] sm:$0xff]
                %667 = vst [vmem:[%s151 + $0x808] sm:$0xff] %v666
                %v668 = vld [vmem:[%s150 + $0x4080] sm:$0xff]
                %669 = vst [vmem:[%s151 + $0x810] sm:$0xff] %v668
                %v670 = vld [vmem:[%s150 + $0x4088] sm:$0xff]
                %671 = vst [vmem:[%s151 + $0x818] sm:$0xff] %v670
                %v672 = vld [vmem:[%s150 + $0x4100] sm:$0xff]
                %673 = vst [vmem:[%s151 + $0x820] sm:$0xff] %v672
                %v674 = vld [vmem:[%s150 + $0x4108] sm:$0xff]
                %675 = vst [vmem:[%s151 + $0x828] sm:$0xff] %v674
                %v676 = vld [vmem:[%s150 + $0x4180] sm:$0xff]
                %677 = vst [vmem:[%s151 + $0x830] sm:$0xff] %v676
                %v678 = vld [vmem:[%s150 + $0x4188] sm:$0xff]
                %679 = vst [vmem:[%s151 + $0x838] sm:$0xff] %v678
                %v680 = vld [vmem:[%s150 + $0x4200] sm:$0xff]
                %681 = vst [vmem:[%s151 + $0x840] sm:$0xff] %v680
                %v682 = vld [vmem:[%s150 + $0x4208] sm:$0xff]
                %683 = vst [vmem:[%s151 + $0x848] sm:$0xff] %v682
                %v684 = vld [vmem:[%s150 + $0x4280] sm:$0xff]
                %685 = vst [vmem:[%s151 + $0x850] sm:$0xff] %v684
                %v686 = vld [vmem:[%s150 + $0x4288] sm:$0xff]
                %687 = vst [vmem:[%s151 + $0x858] sm:$0xff] %v686
                %v688 = vld [vmem:[%s150 + $0x4300] sm:$0xff]
                %689 = vst [vmem:[%s151 + $0x860] sm:$0xff] %v688
                %v690 = vld [vmem:[%s150 + $0x4308] sm:$0xff]
                %691 = vst [vmem:[%s151 + $0x868] sm:$0xff] %v690
                %v692 = vld [vmem:[%s150 + $0x4380] sm:$0xff]
                %693 = vst [vmem:[%s151 + $0x870] sm:$0xff] %v692
                %v694 = vld [vmem:[%s150 + $0x4388] sm:$0xff]
                %695 = vst [vmem:[%s151 + $0x878] sm:$0xff] %v694
                %v696 = vld [vmem:[%s150 + $0x4400] sm:$0xff]
                %697 = vst [vmem:[%s151 + $0x880] sm:$0xff] %v696
                %v698 = vld [vmem:[%s150 + $0x4408] sm:$0xff]
                %699 = vst [vmem:[%s151 + $0x888] sm:$0xff] %v698
                %v700 = vld [vmem:[%s150 + $0x4480] sm:$0xff]
                %701 = vst [vmem:[%s151 + $0x890] sm:$0xff] %v700
                %v702 = vld [vmem:[%s150 + $0x4488] sm:$0xff]
                %703 = vst [vmem:[%s151 + $0x898] sm:$0xff] %v702
                %v704 = vld [vmem:[%s150 + $0x4500] sm:$0xff]
                %705 = vst [vmem:[%s151 + $0x8a0] sm:$0xff] %v704
                %v706 = vld [vmem:[%s150 + $0x4508] sm:$0xff]
                %707 = vst [vmem:[%s151 + $0x8a8] sm:$0xff] %v706
                %v708 = vld [vmem:[%s150 + $0x4580] sm:$0xff]
                %709 = vst [vmem:[%s151 + $0x8b0] sm:$0xff] %v708
                %v710 = vld [vmem:[%s150 + $0x4588] sm:$0xff]
                %711 = vst [vmem:[%s151 + $0x8b8] sm:$0xff] %v710
                %v712 = vld [vmem:[%s150 + $0x4600] sm:$0xff]
                %713 = vst [vmem:[%s151 + $0x8c0] sm:$0xff] %v712
                %v714 = vld [vmem:[%s150 + $0x4608] sm:$0xff]
                %715 = vst [vmem:[%s151 + $0x8c8] sm:$0xff] %v714
                %v716 = vld [vmem:[%s150 + $0x4680] sm:$0xff]
                %717 = vst [vmem:[%s151 + $0x8d0] sm:$0xff] %v716
                %v718 = vld [vmem:[%s150 + $0x4688] sm:$0xff]
                %719 = vst [vmem:[%s151 + $0x8d8] sm:$0xff] %v718
                %v720 = vld [vmem:[%s150 + $0x4700] sm:$0xff]
                %721 = vst [vmem:[%s151 + $0x8e0] sm:$0xff] %v720
                %v722 = vld [vmem:[%s150 + $0x4708] sm:$0xff]
                %723 = vst [vmem:[%s151 + $0x8e8] sm:$0xff] %v722
                %v724 = vld [vmem:[%s150 + $0x4780] sm:$0xff]
                %725 = vst [vmem:[%s151 + $0x8f0] sm:$0xff] %v724
                %v726 = vld [vmem:[%s150 + $0x4788] sm:$0xff]
                %727 = vst [vmem:[%s151 + $0x8f8] sm:$0xff] %v726
                %v728 = vld [vmem:[%s150 + $0x4800] sm:$0xff]
                %729 = vst [vmem:[%s151 + $0x900] sm:$0xff] %v728
                %v730 = vld [vmem:[%s150 + $0x4808] sm:$0xff]
                %731 = vst [vmem:[%s151 + $0x908] sm:$0xff] %v730
                %v732 = vld [vmem:[%s150 + $0x4880] sm:$0xff]
                %733 = vst [vmem:[%s151 + $0x910] sm:$0xff] %v732
                %v734 = vld [vmem:[%s150 + $0x4888] sm:$0xff]
                %735 = vst [vmem:[%s151 + $0x918] sm:$0xff] %v734
                %v736 = vld [vmem:[%s150 + $0x4900] sm:$0xff]
                %737 = vst [vmem:[%s151 + $0x920] sm:$0xff] %v736
                %v738 = vld [vmem:[%s150 + $0x4908] sm:$0xff]
                %739 = vst [vmem:[%s151 + $0x928] sm:$0xff] %v738
                %v740 = vld [vmem:[%s150 + $0x4980] sm:$0xff]
                %741 = vst [vmem:[%s151 + $0x930] sm:$0xff] %v740
                %v742 = vld [vmem:[%s150 + $0x4988] sm:$0xff]
                %743 = vst [vmem:[%s151 + $0x938] sm:$0xff] %v742
                %v744 = vld [vmem:[%s150 + $0x4a00] sm:$0xff]
                %745 = vst [vmem:[%s151 + $0x940] sm:$0xff] %v744
                %v746 = vld [vmem:[%s150 + $0x4a08] sm:$0xff]
                %747 = vst [vmem:[%s151 + $0x948] sm:$0xff] %v746
                %v748 = vld [vmem:[%s150 + $0x4a80] sm:$0xff]
                %749 = vst [vmem:[%s151 + $0x950] sm:$0xff] %v748
                %v750 = vld [vmem:[%s150 + $0x4a88] sm:$0xff]
                %751 = vst [vmem:[%s151 + $0x958] sm:$0xff] %v750
                %v752 = vld [vmem:[%s150 + $0x4b00] sm:$0xff]
                %753 = vst [vmem:[%s151 + $0x960] sm:$0xff] %v752
                %v754 = vld [vmem:[%s150 + $0x4b08] sm:$0xff]
                %755 = vst [vmem:[%s151 + $0x968] sm:$0xff] %v754
                %v756 = vld [vmem:[%s150 + $0x4b80] sm:$0xff]
                %757 = vst [vmem:[%s151 + $0x970] sm:$0xff] %v756
                %v758 = vld [vmem:[%s150 + $0x4b88] sm:$0xff]
                %759 = vst [vmem:[%s151 + $0x978] sm:$0xff] %v758
                %v760 = vld [vmem:[%s150 + $0x4c00] sm:$0xff]
                %761 = vst [vmem:[%s151 + $0x980] sm:$0xff] %v760
                %v762 = vld [vmem:[%s150 + $0x4c08] sm:$0xff]
                %763 = vst [vmem:[%s151 + $0x988] sm:$0xff] %v762
                %v764 = vld [vmem:[%s150 + $0x4c80] sm:$0xff]
                %765 = vst [vmem:[%s151 + $0x990] sm:$0xff] %v764
                %v766 = vld [vmem:[%s150 + $0x4c88] sm:$0xff]
                %767 = vst [vmem:[%s151 + $0x998] sm:$0xff] %v766
                %v768 = vld [vmem:[%s150 + $0x4d00] sm:$0xff]
                %769 = vst [vmem:[%s151 + $0x9a0] sm:$0xff] %v768
                %v770 = vld [vmem:[%s150 + $0x4d08] sm:$0xff]
                %771 = vst [vmem:[%s151 + $0x9a8] sm:$0xff] %v770
                %v772 = vld [vmem:[%s150 + $0x4d80] sm:$0xff]
                %773 = vst [vmem:[%s151 + $0x9b0] sm:$0xff] %v772
                %v774 = vld [vmem:[%s150 + $0x4d88] sm:$0xff]
                %775 = vst [vmem:[%s151 + $0x9b8] sm:$0xff] %v774
                %v776 = vld [vmem:[%s150 + $0x4e00] sm:$0xff]
                %777 = vst [vmem:[%s151 + $0x9c0] sm:$0xff] %v776
                %v778 = vld [vmem:[%s150 + $0x4e08] sm:$0xff]
                %779 = vst [vmem:[%s151 + $0x9c8] sm:$0xff] %v778
                %v780 = vld [vmem:[%s150 + $0x4e80] sm:$0xff]
                %781 = vst [vmem:[%s151 + $0x9d0] sm:$0xff] %v780
                %v782 = vld [vmem:[%s150 + $0x4e88] sm:$0xff]
                %783 = vst [vmem:[%s151 + $0x9d8] sm:$0xff] %v782
                %v784 = vld [vmem:[%s150 + $0x4f00] sm:$0xff]
                %785 = vst [vmem:[%s151 + $0x9e0] sm:$0xff] %v784
                %v786 = vld [vmem:[%s150 + $0x4f08] sm:$0xff]
                %787 = vst [vmem:[%s151 + $0x9e8] sm:$0xff] %v786
                %v788 = vld [vmem:[%s150 + $0x4f80] sm:$0xff]
                %789 = vst [vmem:[%s151 + $0x9f0] sm:$0xff] %v788
                %v790 = vld [vmem:[%s150 + $0x4f88] sm:$0xff]
                %791 = vst [vmem:[%s151 + $0x9f8] sm:$0xff] %v790
                %v792 = vld [vmem:[%s150 + $0x5000] sm:$0xff]
                %793 = vst [vmem:[%s151 + $0xa00] sm:$0xff] %v792
                %v794 = vld [vmem:[%s150 + $0x5008] sm:$0xff]
                %795 = vst [vmem:[%s151 + $0xa08] sm:$0xff] %v794
                %v796 = vld [vmem:[%s150 + $0x5080] sm:$0xff]
                %797 = vst [vmem:[%s151 + $0xa10] sm:$0xff] %v796
                %v798 = vld [vmem:[%s150 + $0x5088] sm:$0xff]
                %799 = vst [vmem:[%s151 + $0xa18] sm:$0xff] %v798
                %v800 = vld [vmem:[%s150 + $0x5100] sm:$0xff]
                %801 = vst [vmem:[%s151 + $0xa20] sm:$0xff] %v800
                %v802 = vld [vmem:[%s150 + $0x5108] sm:$0xff]
                %803 = vst [vmem:[%s151 + $0xa28] sm:$0xff] %v802
                %v804 = vld [vmem:[%s150 + $0x5180] sm:$0xff]
                %805 = vst [vmem:[%s151 + $0xa30] sm:$0xff] %v804
                %v806 = vld [vmem:[%s150 + $0x5188] sm:$0xff]
                %807 = vst [vmem:[%s151 + $0xa38] sm:$0xff] %v806
                %v808 = vld [vmem:[%s150 + $0x5200] sm:$0xff]
                %809 = vst [vmem:[%s151 + $0xa40] sm:$0xff] %v808
                %v810 = vld [vmem:[%s150 + $0x5208] sm:$0xff]
                %811 = vst [vmem:[%s151 + $0xa48] sm:$0xff] %v810
                %v812 = vld [vmem:[%s150 + $0x5280] sm:$0xff]
                %813 = vst [vmem:[%s151 + $0xa50] sm:$0xff] %v812
                %v814 = vld [vmem:[%s150 + $0x5288] sm:$0xff]
                %815 = vst [vmem:[%s151 + $0xa58] sm:$0xff] %v814
                %v816 = vld [vmem:[%s150 + $0x5300] sm:$0xff]
                %817 = vst [vmem:[%s151 + $0xa60] sm:$0xff] %v816
                %v818 = vld [vmem:[%s150 + $0x5308] sm:$0xff]
                %819 = vst [vmem:[%s151 + $0xa68] sm:$0xff] %v818
                %v820 = vld [vmem:[%s150 + $0x5380] sm:$0xff]
                %821 = vst [vmem:[%s151 + $0xa70] sm:$0xff] %v820
                %v822 = vld [vmem:[%s150 + $0x5388] sm:$0xff]
                %823 = vst [vmem:[%s151 + $0xa78] sm:$0xff] %v822
                %v824 = vld [vmem:[%s150 + $0x5400] sm:$0xff]
                %825 = vst [vmem:[%s151 + $0xa80] sm:$0xff] %v824
                %v826 = vld [vmem:[%s150 + $0x5408] sm:$0xff]
                %827 = vst [vmem:[%s151 + $0xa88] sm:$0xff] %v826
                %v828 = vld [vmem:[%s150 + $0x5480] sm:$0xff]
                %829 = vst [vmem:[%s151 + $0xa90] sm:$0xff] %v828
                %v830 = vld [vmem:[%s150 + $0x5488] sm:$0xff]
                %831 = vst [vmem:[%s151 + $0xa98] sm:$0xff] %v830
                %v832 = vld [vmem:[%s150 + $0x5500] sm:$0xff]
                %833 = vst [vmem:[%s151 + $0xaa0] sm:$0xff] %v832
                %v834 = vld [vmem:[%s150 + $0x5508] sm:$0xff]
                %835 = vst [vmem:[%s151 + $0xaa8] sm:$0xff] %v834
                %v836 = vld [vmem:[%s150 + $0x5580] sm:$0xff]
                %837 = vst [vmem:[%s151 + $0xab0] sm:$0xff] %v836
                %v838 = vld [vmem:[%s150 + $0x5588] sm:$0xff]
                %839 = vst [vmem:[%s151 + $0xab8] sm:$0xff] %v838
                %v840 = vld [vmem:[%s150 + $0x5600] sm:$0xff]
                %841 = vst [vmem:[%s151 + $0xac0] sm:$0xff] %v840
                %v842 = vld [vmem:[%s150 + $0x5608] sm:$0xff]
                %843 = vst [vmem:[%s151 + $0xac8] sm:$0xff] %v842
                %v844 = vld [vmem:[%s150 + $0x5680] sm:$0xff]
                %845 = vst [vmem:[%s151 + $0xad0] sm:$0xff] %v844
                %v846 = vld [vmem:[%s150 + $0x5688] sm:$0xff]
                %847 = vst [vmem:[%s151 + $0xad8] sm:$0xff] %v846
                %v848 = vld [vmem:[%s150 + $0x5700] sm:$0xff]
                %849 = vst [vmem:[%s151 + $0xae0] sm:$0xff] %v848
                %v850 = vld [vmem:[%s150 + $0x5708] sm:$0xff]
                %851 = vst [vmem:[%s151 + $0xae8] sm:$0xff] %v850
                %v852 = vld [vmem:[%s150 + $0x5780] sm:$0xff]
                %853 = vst [vmem:[%s151 + $0xaf0] sm:$0xff] %v852
                %v854 = vld [vmem:[%s150 + $0x5788] sm:$0xff]
                %855 = vst [vmem:[%s151 + $0xaf8] sm:$0xff] %v854
                %v856 = vld [vmem:[%s150 + $0x5800] sm:$0xff]
                %857 = vst [vmem:[%s151 + $0xb00] sm:$0xff] %v856
                %v858 = vld [vmem:[%s150 + $0x5808] sm:$0xff]
                %859 = vst [vmem:[%s151 + $0xb08] sm:$0xff] %v858
                %v860 = vld [vmem:[%s150 + $0x5880] sm:$0xff]
                %861 = vst [vmem:[%s151 + $0xb10] sm:$0xff] %v860
                %v862 = vld [vmem:[%s150 + $0x5888] sm:$0xff]
                %863 = vst [vmem:[%s151 + $0xb18] sm:$0xff] %v862
                %v864 = vld [vmem:[%s150 + $0x5900] sm:$0xff]
                %865 = vst [vmem:[%s151 + $0xb20] sm:$0xff] %v864
                %v866 = vld [vmem:[%s150 + $0x5908] sm:$0xff]
                %867 = vst [vmem:[%s151 + $0xb28] sm:$0xff] %v866
                %v868 = vld [vmem:[%s150 + $0x5980] sm:$0xff]
                %869 = vst [vmem:[%s151 + $0xb30] sm:$0xff] %v868
                %v870 = vld [vmem:[%s150 + $0x5988] sm:$0xff]
                %871 = vst [vmem:[%s151 + $0xb38] sm:$0xff] %v870
                %v872 = vld [vmem:[%s150 + $0x5a00] sm:$0xff]
                %873 = vst [vmem:[%s151 + $0xb40] sm:$0xff] %v872
                %v874 = vld [vmem:[%s150 + $0x5a08] sm:$0xff]
                %875 = vst [vmem:[%s151 + $0xb48] sm:$0xff] %v874
                %v876 = vld [vmem:[%s150 + $0x5a80] sm:$0xff]
                %877 = vst [vmem:[%s151 + $0xb50] sm:$0xff] %v876
                %v878 = vld [vmem:[%s150 + $0x5a88] sm:$0xff]
                %879 = vst [vmem:[%s151 + $0xb58] sm:$0xff] %v878
                %v880 = vld [vmem:[%s150 + $0x5b00] sm:$0xff]
                %881 = vst [vmem:[%s151 + $0xb60] sm:$0xff] %v880
                %v882 = vld [vmem:[%s150 + $0x5b08] sm:$0xff]
                %883 = vst [vmem:[%s151 + $0xb68] sm:$0xff] %v882
                %v884 = vld [vmem:[%s150 + $0x5b80] sm:$0xff]
                %885 = vst [vmem:[%s151 + $0xb70] sm:$0xff] %v884
                %v886 = vld [vmem:[%s150 + $0x5b88] sm:$0xff]
                %887 = vst [vmem:[%s151 + $0xb78] sm:$0xff] %v886
                %v888 = vld [vmem:[%s150 + $0x5c00] sm:$0xff]
                %889 = vst [vmem:[%s151 + $0xb80] sm:$0xff] %v888
                %v890 = vld [vmem:[%s150 + $0x5c08] sm:$0xff]
                %891 = vst [vmem:[%s151 + $0xb88] sm:$0xff] %v890
                %v892 = vld [vmem:[%s150 + $0x5c80] sm:$0xff]
                %893 = vst [vmem:[%s151 + $0xb90] sm:$0xff] %v892
                %v894 = vld [vmem:[%s150 + $0x5c88] sm:$0xff]
                %895 = vst [vmem:[%s151 + $0xb98] sm:$0xff] %v894
                %v896 = vld [vmem:[%s150 + $0x5d00] sm:$0xff]
                %897 = vst [vmem:[%s151 + $0xba0] sm:$0xff] %v896
                %v898 = vld [vmem:[%s150 + $0x5d08] sm:$0xff]
                %899 = vst [vmem:[%s151 + $0xba8] sm:$0xff] %v898
                %v900 = vld [vmem:[%s150 + $0x5d80] sm:$0xff]
                %901 = vst [vmem:[%s151 + $0xbb0] sm:$0xff] %v900
                %v902 = vld [vmem:[%s150 + $0x5d88] sm:$0xff]
                %903 = vst [vmem:[%s151 + $0xbb8] sm:$0xff] %v902
                %v904 = vld [vmem:[%s150 + $0x5e00] sm:$0xff]
                %905 = vst [vmem:[%s151 + $0xbc0] sm:$0xff] %v904
                %v906 = vld [vmem:[%s150 + $0x5e08] sm:$0xff]
                %907 = vst [vmem:[%s151 + $0xbc8] sm:$0xff] %v906
                %v908 = vld [vmem:[%s150 + $0x5e80] sm:$0xff]
                %909 = vst [vmem:[%s151 + $0xbd0] sm:$0xff] %v908
                %v910 = vld [vmem:[%s150 + $0x5e88] sm:$0xff]
                %911 = vst [vmem:[%s151 + $0xbd8] sm:$0xff] %v910
                %v912 = vld [vmem:[%s150 + $0x5f00] sm:$0xff]
                %913 = vst [vmem:[%s151 + $0xbe0] sm:$0xff] %v912
                %v914 = vld [vmem:[%s150 + $0x5f08] sm:$0xff]
                %915 = vst [vmem:[%s151 + $0xbe8] sm:$0xff] %v914
                %v916 = vld [vmem:[%s150 + $0x5f80] sm:$0xff]
                %917 = vst [vmem:[%s151 + $0xbf0] sm:$0xff] %v916
                %v918 = vld [vmem:[%s150 + $0x5f88] sm:$0xff]
                %919 = vst [vmem:[%s151 + $0xbf8] sm:$0xff] %v918
                %v920 = vld [vmem:[%s150 + $0x6000] sm:$0xff]
                %921 = vst [vmem:[%s151 + $0xc00] sm:$0xff] %v920
                %v922 = vld [vmem:[%s150 + $0x6008] sm:$0xff]
                %923 = vst [vmem:[%s151 + $0xc08] sm:$0xff] %v922
                %v924 = vld [vmem:[%s150 + $0x6080] sm:$0xff]
                %925 = vst [vmem:[%s151 + $0xc10] sm:$0xff] %v924
                %v926 = vld [vmem:[%s150 + $0x6088] sm:$0xff]
                %927 = vst [vmem:[%s151 + $0xc18] sm:$0xff] %v926
                %v928 = vld [vmem:[%s150 + $0x6100] sm:$0xff]
                %929 = vst [vmem:[%s151 + $0xc20] sm:$0xff] %v928
                %v930 = vld [vmem:[%s150 + $0x6108] sm:$0xff]
                %931 = vst [vmem:[%s151 + $0xc28] sm:$0xff] %v930
                %v932 = vld [vmem:[%s150 + $0x6180] sm:$0xff]
                %933 = vst [vmem:[%s151 + $0xc30] sm:$0xff] %v932
                %v934 = vld [vmem:[%s150 + $0x6188] sm:$0xff]
                %935 = vst [vmem:[%s151 + $0xc38] sm:$0xff] %v934
                %v936 = vld [vmem:[%s150 + $0x6200] sm:$0xff]
                %937 = vst [vmem:[%s151 + $0xc40] sm:$0xff] %v936
                %v938 = vld [vmem:[%s150 + $0x6208] sm:$0xff]
                %939 = vst [vmem:[%s151 + $0xc48] sm:$0xff] %v938
                %v940 = vld [vmem:[%s150 + $0x6280] sm:$0xff]
                %941 = vst [vmem:[%s151 + $0xc50] sm:$0xff] %v940
                %v942 = vld [vmem:[%s150 + $0x6288] sm:$0xff]
                %943 = vst [vmem:[%s151 + $0xc58] sm:$0xff] %v942
                %v944 = vld [vmem:[%s150 + $0x6300] sm:$0xff]
                %945 = vst [vmem:[%s151 + $0xc60] sm:$0xff] %v944
                %v946 = vld [vmem:[%s150 + $0x6308] sm:$0xff]
                %947 = vst [vmem:[%s151 + $0xc68] sm:$0xff] %v946
                %v948 = vld [vmem:[%s150 + $0x6380] sm:$0xff]
                %949 = vst [vmem:[%s151 + $0xc70] sm:$0xff] %v948
                %v950 = vld [vmem:[%s150 + $0x6388] sm:$0xff]
                %951 = vst [vmem:[%s151 + $0xc78] sm:$0xff] %v950
                %v952 = vld [vmem:[%s150 + $0x6400] sm:$0xff]
                %953 = vst [vmem:[%s151 + $0xc80] sm:$0xff] %v952
                %v954 = vld [vmem:[%s150 + $0x6408] sm:$0xff]
                %955 = vst [vmem:[%s151 + $0xc88] sm:$0xff] %v954
                %v956 = vld [vmem:[%s150 + $0x6480] sm:$0xff]
                %957 = vst [vmem:[%s151 + $0xc90] sm:$0xff] %v956
                %v958 = vld [vmem:[%s150 + $0x6488] sm:$0xff]
                %959 = vst [vmem:[%s151 + $0xc98] sm:$0xff] %v958
                %v960 = vld [vmem:[%s150 + $0x6500] sm:$0xff]
                %961 = vst [vmem:[%s151 + $0xca0] sm:$0xff] %v960
                %v962 = vld [vmem:[%s150 + $0x6508] sm:$0xff]
                %963 = vst [vmem:[%s151 + $0xca8] sm:$0xff] %v962
                %v964 = vld [vmem:[%s150 + $0x6580] sm:$0xff]
                %965 = vst [vmem:[%s151 + $0xcb0] sm:$0xff] %v964
                %v966 = vld [vmem:[%s150 + $0x6588] sm:$0xff]
                %967 = vst [vmem:[%s151 + $0xcb8] sm:$0xff] %v966
                %v968 = vld [vmem:[%s150 + $0x6600] sm:$0xff]
                %969 = vst [vmem:[%s151 + $0xcc0] sm:$0xff] %v968
                %v970 = vld [vmem:[%s150 + $0x6608] sm:$0xff]
                %971 = vst [vmem:[%s151 + $0xcc8] sm:$0xff] %v970
                %v972 = vld [vmem:[%s150 + $0x6680] sm:$0xff]
                %973 = vst [vmem:[%s151 + $0xcd0] sm:$0xff] %v972
                %v974 = vld [vmem:[%s150 + $0x6688] sm:$0xff]
                %975 = vst [vmem:[%s151 + $0xcd8] sm:$0xff] %v974
                %v976 = vld [vmem:[%s150 + $0x6700] sm:$0xff]
                %977 = vst [vmem:[%s151 + $0xce0] sm:$0xff] %v976
                %v978 = vld [vmem:[%s150 + $0x6708] sm:$0xff]
                %979 = vst [vmem:[%s151 + $0xce8] sm:$0xff] %v978
                %v980 = vld [vmem:[%s150 + $0x6780] sm:$0xff]
                %981 = vst [vmem:[%s151 + $0xcf0] sm:$0xff] %v980
                %v982 = vld [vmem:[%s150 + $0x6788] sm:$0xff]
                %983 = vst [vmem:[%s151 + $0xcf8] sm:$0xff] %v982
                %v984 = vld [vmem:[%s150 + $0x6800] sm:$0xff]
                %985 = vst [vmem:[%s151 + $0xd00] sm:$0xff] %v984
                %v986 = vld [vmem:[%s150 + $0x6808] sm:$0xff]
                %987 = vst [vmem:[%s151 + $0xd08] sm:$0xff] %v986
                %v988 = vld [vmem:[%s150 + $0x6880] sm:$0xff]
                %989 = vst [vmem:[%s151 + $0xd10] sm:$0xff] %v988
                %v990 = vld [vmem:[%s150 + $0x6888] sm:$0xff]
                %991 = vst [vmem:[%s151 + $0xd18] sm:$0xff] %v990
                %v992 = vld [vmem:[%s150 + $0x6900] sm:$0xff]
                %993 = vst [vmem:[%s151 + $0xd20] sm:$0xff] %v992
                %v994 = vld [vmem:[%s150 + $0x6908] sm:$0xff]
                %995 = vst [vmem:[%s151 + $0xd28] sm:$0xff] %v994
                %v996 = vld [vmem:[%s150 + $0x6980] sm:$0xff]
                %997 = vst [vmem:[%s151 + $0xd30] sm:$0xff] %v996
                %v998 = vld [vmem:[%s150 + $0x6988] sm:$0xff]
                %999 = vst [vmem:[%s151 + $0xd38] sm:$0xff] %v998
                %v1000 = vld [vmem:[%s150 + $0x6a00] sm:$0xff]
                %1001 = vst [vmem:[%s151 + $0xd40] sm:$0xff] %v1000
                %v1002 = vld [vmem:[%s150 + $0x6a08] sm:$0xff]
                %1003 = vst [vmem:[%s151 + $0xd48] sm:$0xff] %v1002
                %v1004 = vld [vmem:[%s150 + $0x6a80] sm:$0xff]
                %1005 = vst [vmem:[%s151 + $0xd50] sm:$0xff] %v1004
                %v1006 = vld [vmem:[%s150 + $0x6a88] sm:$0xff]
                %1007 = vst [vmem:[%s151 + $0xd58] sm:$0xff] %v1006
                %v1008 = vld [vmem:[%s150 + $0x6b00] sm:$0xff]
                %1009 = vst [vmem:[%s151 + $0xd60] sm:$0xff] %v1008
                %v1010 = vld [vmem:[%s150 + $0x6b08] sm:$0xff]
                %1011 = vst [vmem:[%s151 + $0xd68] sm:$0xff] %v1010
                %v1012 = vld [vmem:[%s150 + $0x6b80] sm:$0xff]
                %1013 = vst [vmem:[%s151 + $0xd70] sm:$0xff] %v1012
                %v1014 = vld [vmem:[%s150 + $0x6b88] sm:$0xff]
                %1015 = vst [vmem:[%s151 + $0xd78] sm:$0xff] %v1014
                %v1016 = vld [vmem:[%s150 + $0x6c00] sm:$0xff]
                %1017 = vst [vmem:[%s151 + $0xd80] sm:$0xff] %v1016
                %v1018 = vld [vmem:[%s150 + $0x6c08] sm:$0xff]
                %1019 = vst [vmem:[%s151 + $0xd88] sm:$0xff] %v1018
                %v1020 = vld [vmem:[%s150 + $0x6c80] sm:$0xff]
                %1021 = vst [vmem:[%s151 + $0xd90] sm:$0xff] %v1020
                %v1022 = vld [vmem:[%s150 + $0x6c88] sm:$0xff]
                %1023 = vst [vmem:[%s151 + $0xd98] sm:$0xff] %v1022
                %v1024 = vld [vmem:[%s150 + $0x6d00] sm:$0xff]
                %1025 = vst [vmem:[%s151 + $0xda0] sm:$0xff] %v1024
                %v1026 = vld [vmem:[%s150 + $0x6d08] sm:$0xff]
                %1027 = vst [vmem:[%s151 + $0xda8] sm:$0xff] %v1026
                %v1028 = vld [vmem:[%s150 + $0x6d80] sm:$0xff]
                %1029 = vst [vmem:[%s151 + $0xdb0] sm:$0xff] %v1028
                %v1030 = vld [vmem:[%s150 + $0x6d88] sm:$0xff]
                %1031 = vst [vmem:[%s151 + $0xdb8] sm:$0xff] %v1030
                %v1032 = vld [vmem:[%s150 + $0x6e00] sm:$0xff]
                %1033 = vst [vmem:[%s151 + $0xdc0] sm:$0xff] %v1032
                %v1034 = vld [vmem:[%s150 + $0x6e08] sm:$0xff]
                %1035 = vst [vmem:[%s151 + $0xdc8] sm:$0xff] %v1034
                %v1036 = vld [vmem:[%s150 + $0x6e80] sm:$0xff]
                %1037 = vst [vmem:[%s151 + $0xdd0] sm:$0xff] %v1036
                %v1038 = vld [vmem:[%s150 + $0x6e88] sm:$0xff]
                %1039 = vst [vmem:[%s151 + $0xdd8] sm:$0xff] %v1038
                %v1040 = vld [vmem:[%s150 + $0x6f00] sm:$0xff]
                %1041 = vst [vmem:[%s151 + $0xde0] sm:$0xff] %v1040
                %v1042 = vld [vmem:[%s150 + $0x6f08] sm:$0xff]
                %1043 = vst [vmem:[%s151 + $0xde8] sm:$0xff] %v1042
                %v1044 = vld [vmem:[%s150 + $0x6f80] sm:$0xff]
                %1045 = vst [vmem:[%s151 + $0xdf0] sm:$0xff] %v1044
                %v1046 = vld [vmem:[%s150 + $0x6f88] sm:$0xff]
                %1047 = vst [vmem:[%s151 + $0xdf8] sm:$0xff] %v1046
                %v1048 = vld [vmem:[%s150 + $0x7000] sm:$0xff]
                %1049 = vst [vmem:[%s151 + $0xe00] sm:$0xff] %v1048
                %v1050 = vld [vmem:[%s150 + $0x7008] sm:$0xff]
                %1051 = vst [vmem:[%s151 + $0xe08] sm:$0xff] %v1050
                %v1052 = vld [vmem:[%s150 + $0x7080] sm:$0xff]
                %1053 = vst [vmem:[%s151 + $0xe10] sm:$0xff] %v1052
                %v1054 = vld [vmem:[%s150 + $0x7088] sm:$0xff]
                %1055 = vst [vmem:[%s151 + $0xe18] sm:$0xff] %v1054
                %v1056 = vld [vmem:[%s150 + $0x7100] sm:$0xff]
                %1057 = vst [vmem:[%s151 + $0xe20] sm:$0xff] %v1056
                %v1058 = vld [vmem:[%s150 + $0x7108] sm:$0xff]
                %1059 = vst [vmem:[%s151 + $0xe28] sm:$0xff] %v1058
                %v1060 = vld [vmem:[%s150 + $0x7180] sm:$0xff]
                %1061 = vst [vmem:[%s151 + $0xe30] sm:$0xff] %v1060
                %v1062 = vld [vmem:[%s150 + $0x7188] sm:$0xff]
                %1063 = vst [vmem:[%s151 + $0xe38] sm:$0xff] %v1062
                %v1064 = vld [vmem:[%s150 + $0x7200] sm:$0xff]
                %1065 = vst [vmem:[%s151 + $0xe40] sm:$0xff] %v1064
                %v1066 = vld [vmem:[%s150 + $0x7208] sm:$0xff]
                %1067 = vst [vmem:[%s151 + $0xe48] sm:$0xff] %v1066
                %v1068 = vld [vmem:[%s150 + $0x7280] sm:$0xff]
                %1069 = vst [vmem:[%s151 + $0xe50] sm:$0xff] %v1068
                %v1070 = vld [vmem:[%s150 + $0x7288] sm:$0xff]
                %1071 = vst [vmem:[%s151 + $0xe58] sm:$0xff] %v1070
                %v1072 = vld [vmem:[%s150 + $0x7300] sm:$0xff]
                %1073 = vst [vmem:[%s151 + $0xe60] sm:$0xff] %v1072
                %v1074 = vld [vmem:[%s150 + $0x7308] sm:$0xff]
                %1075 = vst [vmem:[%s151 + $0xe68] sm:$0xff] %v1074
                %v1076 = vld [vmem:[%s150 + $0x7380] sm:$0xff]
                %1077 = vst [vmem:[%s151 + $0xe70] sm:$0xff] %v1076
                %v1078 = vld [vmem:[%s150 + $0x7388] sm:$0xff]
                %1079 = vst [vmem:[%s151 + $0xe78] sm:$0xff] %v1078
                %v1080 = vld [vmem:[%s150 + $0x7400] sm:$0xff]
                %1081 = vst [vmem:[%s151 + $0xe80] sm:$0xff] %v1080
                %v1082 = vld [vmem:[%s150 + $0x7408] sm:$0xff]
                %1083 = vst [vmem:[%s151 + $0xe88] sm:$0xff] %v1082
                %v1084 = vld [vmem:[%s150 + $0x7480] sm:$0xff]
                %1085 = vst [vmem:[%s151 + $0xe90] sm:$0xff] %v1084
                %v1086 = vld [vmem:[%s150 + $0x7488] sm:$0xff]
                %1087 = vst [vmem:[%s151 + $0xe98] sm:$0xff] %v1086
                %v1088 = vld [vmem:[%s150 + $0x7500] sm:$0xff]
                %1089 = vst [vmem:[%s151 + $0xea0] sm:$0xff] %v1088
                %v1090 = vld [vmem:[%s150 + $0x7508] sm:$0xff]
                %1091 = vst [vmem:[%s151 + $0xea8] sm:$0xff] %v1090
                %v1092 = vld [vmem:[%s150 + $0x7580] sm:$0xff]
                %1093 = vst [vmem:[%s151 + $0xeb0] sm:$0xff] %v1092
                %v1094 = vld [vmem:[%s150 + $0x7588] sm:$0xff]
                %1095 = vst [vmem:[%s151 + $0xeb8] sm:$0xff] %v1094
                %v1096 = vld [vmem:[%s150 + $0x7600] sm:$0xff]
                %1097 = vst [vmem:[%s151 + $0xec0] sm:$0xff] %v1096
                %v1098 = vld [vmem:[%s150 + $0x7608] sm:$0xff]
                %1099 = vst [vmem:[%s151 + $0xec8] sm:$0xff] %v1098
                %v1100 = vld [vmem:[%s150 + $0x7680] sm:$0xff]
                %1101 = vst [vmem:[%s151 + $0xed0] sm:$0xff] %v1100
                %v1102 = vld [vmem:[%s150 + $0x7688] sm:$0xff]
                %1103 = vst [vmem:[%s151 + $0xed8] sm:$0xff] %v1102
                %v1104 = vld [vmem:[%s150 + $0x7700] sm:$0xff]
                %1105 = vst [vmem:[%s151 + $0xee0] sm:$0xff] %v1104
                %v1106 = vld [vmem:[%s150 + $0x7708] sm:$0xff]
                %1107 = vst [vmem:[%s151 + $0xee8] sm:$0xff] %v1106
                %v1108 = vld [vmem:[%s150 + $0x7780] sm:$0xff]
                %1109 = vst [vmem:[%s151 + $0xef0] sm:$0xff] %v1108
                %v1110 = vld [vmem:[%s150 + $0x7788] sm:$0xff]
                %1111 = vst [vmem:[%s151 + $0xef8] sm:$0xff] %v1110
                %v1112 = vld [vmem:[%s150 + $0x7800] sm:$0xff]
                %1113 = vst [vmem:[%s151 + $0xf00] sm:$0xff] %v1112
                %v1114 = vld [vmem:[%s150 + $0x7808] sm:$0xff]
                %1115 = vst [vmem:[%s151 + $0xf08] sm:$0xff] %v1114
                %v1116 = vld [vmem:[%s150 + $0x7880] sm:$0xff]
                %1117 = vst [vmem:[%s151 + $0xf10] sm:$0xff] %v1116
                %v1118 = vld [vmem:[%s150 + $0x7888] sm:$0xff]
                %1119 = vst [vmem:[%s151 + $0xf18] sm:$0xff] %v1118
                %v1120 = vld [vmem:[%s150 + $0x7900] sm:$0xff]
                %1121 = vst [vmem:[%s151 + $0xf20] sm:$0xff] %v1120
                %v1122 = vld [vmem:[%s150 + $0x7908] sm:$0xff]
                %1123 = vst [vmem:[%s151 + $0xf28] sm:$0xff] %v1122
                %v1124 = vld [vmem:[%s150 + $0x7980] sm:$0xff]
                %1125 = vst [vmem:[%s151 + $0xf30] sm:$0xff] %v1124
                %v1126 = vld [vmem:[%s150 + $0x7988] sm:$0xff]
                %1127 = vst [vmem:[%s151 + $0xf38] sm:$0xff] %v1126
                %v1128 = vld [vmem:[%s150 + $0x7a00] sm:$0xff]
                %1129 = vst [vmem:[%s151 + $0xf40] sm:$0xff] %v1128
                %v1130 = vld [vmem:[%s150 + $0x7a08] sm:$0xff]
                %1131 = vst [vmem:[%s151 + $0xf48] sm:$0xff] %v1130
                %v1132 = vld [vmem:[%s150 + $0x7a80] sm:$0xff]
                %1133 = vst [vmem:[%s151 + $0xf50] sm:$0xff] %v1132
                %v1134 = vld [vmem:[%s150 + $0x7a88] sm:$0xff]
                %1135 = vst [vmem:[%s151 + $0xf58] sm:$0xff] %v1134
                %v1136 = vld [vmem:[%s150 + $0x7b00] sm:$0xff]
                %1137 = vst [vmem:[%s151 + $0xf60] sm:$0xff] %v1136
                %v1138 = vld [vmem:[%s150 + $0x7b08] sm:$0xff]
                %1139 = vst [vmem:[%s151 + $0xf68] sm:$0xff] %v1138
                %v1140 = vld [vmem:[%s150 + $0x7b80] sm:$0xff]
                %1141 = vst [vmem:[%s151 + $0xf70] sm:$0xff] %v1140
                %v1142 = vld [vmem:[%s150 + $0x7b88] sm:$0xff]
                %1143 = vst [vmem:[%s151 + $0xf78] sm:$0xff] %v1142
                %v1144 = vld [vmem:[%s150 + $0x7c00] sm:$0xff]
                %1145 = vst [vmem:[%s151 + $0xf80] sm:$0xff] %v1144
                %v1146 = vld [vmem:[%s150 + $0x7c08] sm:$0xff]
                %1147 = vst [vmem:[%s151 + $0xf88] sm:$0xff] %v1146
                %v1148 = vld [vmem:[%s150 + $0x7c80] sm:$0xff]
                %1149 = vst [vmem:[%s151 + $0xf90] sm:$0xff] %v1148
                %v1150 = vld [vmem:[%s150 + $0x7c88] sm:$0xff]
                %1151 = vst [vmem:[%s151 + $0xf98] sm:$0xff] %v1150
                %v1152 = vld [vmem:[%s150 + $0x7d00] sm:$0xff]
                %1153 = vst [vmem:[%s151 + $0xfa0] sm:$0xff] %v1152
                %v1154 = vld [vmem:[%s150 + $0x7d08] sm:$0xff]
                %1155 = vst [vmem:[%s151 + $0xfa8] sm:$0xff] %v1154
                %v1156 = vld [vmem:[%s150 + $0x7d80] sm:$0xff]
                %1157 = vst [vmem:[%s151 + $0xfb0] sm:$0xff] %v1156
                %v1158 = vld [vmem:[%s150 + $0x7d88] sm:$0xff]
                %1159 = vst [vmem:[%s151 + $0xfb8] sm:$0xff] %v1158
                %v1160 = vld [vmem:[%s150 + $0x7e00] sm:$0xff]
                %1161 = vst [vmem:[%s151 + $0xfc0] sm:$0xff] %v1160
                %v1162 = vld [vmem:[%s150 + $0x7e08] sm:$0xff]
                %1163 = vst [vmem:[%s151 + $0xfc8] sm:$0xff] %v1162
                %v1164 = vld [vmem:[%s150 + $0x7e80] sm:$0xff]
                %1165 = vst [vmem:[%s151 + $0xfd0] sm:$0xff] %v1164
                %v1166 = vld [vmem:[%s150 + $0x7e88] sm:$0xff]
                %1167 = vst [vmem:[%s151 + $0xfd8] sm:$0xff] %v1166
                %v1168 = vld [vmem:[%s150 + $0x7f00] sm:$0xff]
                %1169 = vst [vmem:[%s151 + $0xfe0] sm:$0xff] %v1168
                %v1170 = vld [vmem:[%s150 + $0x7f08] sm:$0xff]
                %1171 = vst [vmem:[%s151 + $0xfe8] sm:$0xff] %v1170
                %v1172 = vld [vmem:[%s150 + $0x7f80] sm:$0xff]
                %1173 = vst [vmem:[%s151 + $0xff0] sm:$0xff] %v1172
                %v1174 = vld [vmem:[%s150 + $0x7f88] sm:$0xff]
                %1175 = vst [vmem:[%s151 + $0xff8] sm:$0xff] %v1174
                %v1176 = vld [vmem:[%s150 + $0x8000] sm:$0xff]
                %1177 = vst [vmem:[%s151 + $0x1000] sm:$0xff] %v1176
                %v1178 = vld [vmem:[%s150 + $0x8008] sm:$0xff]
                %1179 = vst [vmem:[%s151 + $0x1008] sm:$0xff] %v1178
                %v1180 = vld [vmem:[%s150 + $0x8080] sm:$0xff]
                %1181 = vst [vmem:[%s151 + $0x1010] sm:$0xff] %v1180
                %v1182 = vld [vmem:[%s150 + $0x8088] sm:$0xff]
                %1183 = vst [vmem:[%s151 + $0x1018] sm:$0xff] %v1182
                %v1184 = vld [vmem:[%s150 + $0x8100] sm:$0xff]
                %1185 = vst [vmem:[%s151 + $0x1020] sm:$0xff] %v1184
                %v1186 = vld [vmem:[%s150 + $0x8108] sm:$0xff]
                %1187 = vst [vmem:[%s151 + $0x1028] sm:$0xff] %v1186
                %v1188 = vld [vmem:[%s150 + $0x8180] sm:$0xff]
                %1189 = vst [vmem:[%s151 + $0x1030] sm:$0xff] %v1188
                %v1190 = vld [vmem:[%s150 + $0x8188] sm:$0xff]
                %1191 = vst [vmem:[%s151 + $0x1038] sm:$0xff] %v1190
                %v1192 = vld [vmem:[%s150 + $0x8200] sm:$0xff]
                %1193 = vst [vmem:[%s151 + $0x1040] sm:$0xff] %v1192
                %v1194 = vld [vmem:[%s150 + $0x8208] sm:$0xff]
                %1195 = vst [vmem:[%s151 + $0x1048] sm:$0xff] %v1194
                %v1196 = vld [vmem:[%s150 + $0x8280] sm:$0xff]
                %1197 = vst [vmem:[%s151 + $0x1050] sm:$0xff] %v1196
                %v1198 = vld [vmem:[%s150 + $0x8288] sm:$0xff]
                %1199 = vst [vmem:[%s151 + $0x1058] sm:$0xff] %v1198
                %v1200 = vld [vmem:[%s150 + $0x8300] sm:$0xff]
                %1201 = vst [vmem:[%s151 + $0x1060] sm:$0xff] %v1200
                %v1202 = vld [vmem:[%s150 + $0x8308] sm:$0xff]
                %1203 = vst [vmem:[%s151 + $0x1068] sm:$0xff] %v1202
                %v1204 = vld [vmem:[%s150 + $0x8380] sm:$0xff]
                %1205 = vst [vmem:[%s151 + $0x1070] sm:$0xff] %v1204
                %v1206 = vld [vmem:[%s150 + $0x8388] sm:$0xff]
                %1207 = vst [vmem:[%s151 + $0x1078] sm:$0xff] %v1206
                %v1208 = vld [vmem:[%s150 + $0x8400] sm:$0xff]
                %1209 = vst [vmem:[%s151 + $0x1080] sm:$0xff] %v1208
                %v1210 = vld [vmem:[%s150 + $0x8408] sm:$0xff]
                %1211 = vst [vmem:[%s151 + $0x1088] sm:$0xff] %v1210
                %v1212 = vld [vmem:[%s150 + $0x8480] sm:$0xff]
                %1213 = vst [vmem:[%s151 + $0x1090] sm:$0xff] %v1212
                %v1214 = vld [vmem:[%s150 + $0x8488] sm:$0xff]
                %1215 = vst [vmem:[%s151 + $0x1098] sm:$0xff] %v1214
                %v1216 = vld [vmem:[%s150 + $0x8500] sm:$0xff]
                %1217 = vst [vmem:[%s151 + $0x10a0] sm:$0xff] %v1216
                %v1218 = vld [vmem:[%s150 + $0x8508] sm:$0xff]
                %1219 = vst [vmem:[%s151 + $0x10a8] sm:$0xff] %v1218
                %v1220 = vld [vmem:[%s150 + $0x8580] sm:$0xff]
                %1221 = vst [vmem:[%s151 + $0x10b0] sm:$0xff] %v1220
                %v1222 = vld [vmem:[%s150 + $0x8588] sm:$0xff]
                %1223 = vst [vmem:[%s151 + $0x10b8] sm:$0xff] %v1222
                %v1224 = vld [vmem:[%s150 + $0x8600] sm:$0xff]
                %1225 = vst [vmem:[%s151 + $0x10c0] sm:$0xff] %v1224
                %v1226 = vld [vmem:[%s150 + $0x8608] sm:$0xff]
                %1227 = vst [vmem:[%s151 + $0x10c8] sm:$0xff] %v1226
                %v1228 = vld [vmem:[%s150 + $0x8680] sm:$0xff]
                %1229 = vst [vmem:[%s151 + $0x10d0] sm:$0xff] %v1228
                %v1230 = vld [vmem:[%s150 + $0x8688] sm:$0xff]
                %1231 = vst [vmem:[%s151 + $0x10d8] sm:$0xff] %v1230
                %v1232 = vld [vmem:[%s150 + $0x8700] sm:$0xff]
                %1233 = vst [vmem:[%s151 + $0x10e0] sm:$0xff] %v1232
                %v1234 = vld [vmem:[%s150 + $0x8708] sm:$0xff]
                %1235 = vst [vmem:[%s151 + $0x10e8] sm:$0xff] %v1234
                %v1236 = vld [vmem:[%s150 + $0x8780] sm:$0xff]
                %1237 = vst [vmem:[%s151 + $0x10f0] sm:$0xff] %v1236
                %v1238 = vld [vmem:[%s150 + $0x8788] sm:$0xff]
                %1239 = vst [vmem:[%s151 + $0x10f8] sm:$0xff] %v1238
                %v1240 = vld [vmem:[%s150 + $0x8800] sm:$0xff]
                %1241 = vst [vmem:[%s151 + $0x1100] sm:$0xff] %v1240
                %v1242 = vld [vmem:[%s150 + $0x8808] sm:$0xff]
                %1243 = vst [vmem:[%s151 + $0x1108] sm:$0xff] %v1242
                %v1244 = vld [vmem:[%s150 + $0x8880] sm:$0xff]
                %1245 = vst [vmem:[%s151 + $0x1110] sm:$0xff] %v1244
                %v1246 = vld [vmem:[%s150 + $0x8888] sm:$0xff]
                %1247 = vst [vmem:[%s151 + $0x1118] sm:$0xff] %v1246
                %v1248 = vld [vmem:[%s150 + $0x8900] sm:$0xff]
                %1249 = vst [vmem:[%s151 + $0x1120] sm:$0xff] %v1248
                %v1250 = vld [vmem:[%s150 + $0x8908] sm:$0xff]
                %1251 = vst [vmem:[%s151 + $0x1128] sm:$0xff] %v1250
                %v1252 = vld [vmem:[%s150 + $0x8980] sm:$0xff]
                %1253 = vst [vmem:[%s151 + $0x1130] sm:$0xff] %v1252
                %v1254 = vld [vmem:[%s150 + $0x8988] sm:$0xff]
                %1255 = vst [vmem:[%s151 + $0x1138] sm:$0xff] %v1254
                %v1256 = vld [vmem:[%s150 + $0x8a00] sm:$0xff]
                %1257 = vst [vmem:[%s151 + $0x1140] sm:$0xff] %v1256
                %v1258 = vld [vmem:[%s150 + $0x8a08] sm:$0xff]
                %1259 = vst [vmem:[%s151 + $0x1148] sm:$0xff] %v1258
                %v1260 = vld [vmem:[%s150 + $0x8a80] sm:$0xff]
                %1261 = vst [vmem:[%s151 + $0x1150] sm:$0xff] %v1260
                %v1262 = vld [vmem:[%s150 + $0x8a88] sm:$0xff]
                %1263 = vst [vmem:[%s151 + $0x1158] sm:$0xff] %v1262
                %v1264 = vld [vmem:[%s150 + $0x8b00] sm:$0xff]
                %1265 = vst [vmem:[%s151 + $0x1160] sm:$0xff] %v1264
                %v1266 = vld [vmem:[%s150 + $0x8b08] sm:$0xff]
                %1267 = vst [vmem:[%s151 + $0x1168] sm:$0xff] %v1266
                %v1268 = vld [vmem:[%s150 + $0x8b80] sm:$0xff]
                %1269 = vst [vmem:[%s151 + $0x1170] sm:$0xff] %v1268
                %v1270 = vld [vmem:[%s150 + $0x8b88] sm:$0xff]
                %1271 = vst [vmem:[%s151 + $0x1178] sm:$0xff] %v1270
                %v1272 = vld [vmem:[%s150 + $0x8c00] sm:$0xff]
                %1273 = vst [vmem:[%s151 + $0x1180] sm:$0xff] %v1272
                %v1274 = vld [vmem:[%s150 + $0x8c08] sm:$0xff]
                %1275 = vst [vmem:[%s151 + $0x1188] sm:$0xff] %v1274
                %v1276 = vld [vmem:[%s150 + $0x8c80] sm:$0xff]
                %1277 = vst [vmem:[%s151 + $0x1190] sm:$0xff] %v1276
                %v1278 = vld [vmem:[%s150 + $0x8c88] sm:$0xff]
                %1279 = vst [vmem:[%s151 + $0x1198] sm:$0xff] %v1278
                %v1280 = vld [vmem:[%s150 + $0x8d00] sm:$0xff]
                %1281 = vst [vmem:[%s151 + $0x11a0] sm:$0xff] %v1280
                %v1282 = vld [vmem:[%s150 + $0x8d08] sm:$0xff]
                %1283 = vst [vmem:[%s151 + $0x11a8] sm:$0xff] %v1282
                %v1284 = vld [vmem:[%s150 + $0x8d80] sm:$0xff]
                %1285 = vst [vmem:[%s151 + $0x11b0] sm:$0xff] %v1284
                %v1286 = vld [vmem:[%s150 + $0x8d88] sm:$0xff]
                %1287 = vst [vmem:[%s151 + $0x11b8] sm:$0xff] %v1286
                %v1288 = vld [vmem:[%s150 + $0x8e00] sm:$0xff]
                %1289 = vst [vmem:[%s151 + $0x11c0] sm:$0xff] %v1288
                %v1290 = vld [vmem:[%s150 + $0x8e08] sm:$0xff]
                %1291 = vst [vmem:[%s151 + $0x11c8] sm:$0xff] %v1290
                %v1292 = vld [vmem:[%s150 + $0x8e80] sm:$0xff]
                %1293 = vst [vmem:[%s151 + $0x11d0] sm:$0xff] %v1292
                %v1294 = vld [vmem:[%s150 + $0x8e88] sm:$0xff]
                %1295 = vst [vmem:[%s151 + $0x11d8] sm:$0xff] %v1294
                %v1296 = vld [vmem:[%s150 + $0x8f00] sm:$0xff]
                %1297 = vst [vmem:[%s151 + $0x11e0] sm:$0xff] %v1296
                %v1298 = vld [vmem:[%s150 + $0x8f08] sm:$0xff]
                %1299 = vst [vmem:[%s151 + $0x11e8] sm:$0xff] %v1298
                %v1300 = vld [vmem:[%s150 + $0x8f80] sm:$0xff]
                %1301 = vst [vmem:[%s151 + $0x11f0] sm:$0xff] %v1300
                %v1302 = vld [vmem:[%s150 + $0x8f88] sm:$0xff]
                %1303 = vst [vmem:[%s151 + $0x11f8] sm:$0xff] %v1302
                %v1304 = vld [vmem:[%s150 + $0x9000] sm:$0xff]
                %1305 = vst [vmem:[%s151 + $0x1200] sm:$0xff] %v1304
                %v1306 = vld [vmem:[%s150 + $0x9008] sm:$0xff]
                %1307 = vst [vmem:[%s151 + $0x1208] sm:$0xff] %v1306
                %v1308 = vld [vmem:[%s150 + $0x9080] sm:$0xff]
                %1309 = vst [vmem:[%s151 + $0x1210] sm:$0xff] %v1308
                %v1310 = vld [vmem:[%s150 + $0x9088] sm:$0xff]
                %1311 = vst [vmem:[%s151 + $0x1218] sm:$0xff] %v1310
                %v1312 = vld [vmem:[%s150 + $0x9100] sm:$0xff]
                %1313 = vst [vmem:[%s151 + $0x1220] sm:$0xff] %v1312
                %v1314 = vld [vmem:[%s150 + $0x9108] sm:$0xff]
                %1315 = vst [vmem:[%s151 + $0x1228] sm:$0xff] %v1314
                %v1316 = vld [vmem:[%s150 + $0x9180] sm:$0xff]
                %1317 = vst [vmem:[%s151 + $0x1230] sm:$0xff] %v1316
                %v1318 = vld [vmem:[%s150 + $0x9188] sm:$0xff]
                %1319 = vst [vmem:[%s151 + $0x1238] sm:$0xff] %v1318
                %v1320 = vld [vmem:[%s150 + $0x9200] sm:$0xff]
                %1321 = vst [vmem:[%s151 + $0x1240] sm:$0xff] %v1320
                %v1322 = vld [vmem:[%s150 + $0x9208] sm:$0xff]
                %1323 = vst [vmem:[%s151 + $0x1248] sm:$0xff] %v1322
                %v1324 = vld [vmem:[%s150 + $0x9280] sm:$0xff]
                %1325 = vst [vmem:[%s151 + $0x1250] sm:$0xff] %v1324
                %v1326 = vld [vmem:[%s150 + $0x9288] sm:$0xff]
                %1327 = vst [vmem:[%s151 + $0x1258] sm:$0xff] %v1326
                %v1328 = vld [vmem:[%s150 + $0x9300] sm:$0xff]
                %1329 = vst [vmem:[%s151 + $0x1260] sm:$0xff] %v1328
                %v1330 = vld [vmem:[%s150 + $0x9308] sm:$0xff]
                %1331 = vst [vmem:[%s151 + $0x1268] sm:$0xff] %v1330
                %v1332 = vld [vmem:[%s150 + $0x9380] sm:$0xff]
                %1333 = vst [vmem:[%s151 + $0x1270] sm:$0xff] %v1332
                %v1334 = vld [vmem:[%s150 + $0x9388] sm:$0xff]
                %1335 = vst [vmem:[%s151 + $0x1278] sm:$0xff] %v1334
                %v1336 = vld [vmem:[%s150 + $0x9400] sm:$0xff]
                %1337 = vst [vmem:[%s151 + $0x1280] sm:$0xff] %v1336
                %v1338 = vld [vmem:[%s150 + $0x9408] sm:$0xff]
                %1339 = vst [vmem:[%s151 + $0x1288] sm:$0xff] %v1338
                %v1340 = vld [vmem:[%s150 + $0x9480] sm:$0xff]
                %1341 = vst [vmem:[%s151 + $0x1290] sm:$0xff] %v1340
                %v1342 = vld [vmem:[%s150 + $0x9488] sm:$0xff]
                %1343 = vst [vmem:[%s151 + $0x1298] sm:$0xff] %v1342
                %v1344 = vld [vmem:[%s150 + $0x9500] sm:$0xff]
                %1345 = vst [vmem:[%s151 + $0x12a0] sm:$0xff] %v1344
                %v1346 = vld [vmem:[%s150 + $0x9508] sm:$0xff]
                %1347 = vst [vmem:[%s151 + $0x12a8] sm:$0xff] %v1346
                %v1348 = vld [vmem:[%s150 + $0x9580] sm:$0xff]
                %1349 = vst [vmem:[%s151 + $0x12b0] sm:$0xff] %v1348
                %v1350 = vld [vmem:[%s150 + $0x9588] sm:$0xff]
                %1351 = vst [vmem:[%s151 + $0x12b8] sm:$0xff] %v1350
                %v1352 = vld [vmem:[%s150 + $0x9600] sm:$0xff]
                %1353 = vst [vmem:[%s151 + $0x12c0] sm:$0xff] %v1352
                %v1354 = vld [vmem:[%s150 + $0x9608] sm:$0xff]
                %1355 = vst [vmem:[%s151 + $0x12c8] sm:$0xff] %v1354
                %v1356 = vld [vmem:[%s150 + $0x9680] sm:$0xff]
                %1357 = vst [vmem:[%s151 + $0x12d0] sm:$0xff] %v1356
                %v1358 = vld [vmem:[%s150 + $0x9688] sm:$0xff]
                %1359 = vst [vmem:[%s151 + $0x12d8] sm:$0xff] %v1358
                %v1360 = vld [vmem:[%s150 + $0x9700] sm:$0xff]
                %1361 = vst [vmem:[%s151 + $0x12e0] sm:$0xff] %v1360
                %v1362 = vld [vmem:[%s150 + $0x9708] sm:$0xff]
                %1363 = vst [vmem:[%s151 + $0x12e8] sm:$0xff] %v1362
                %v1364 = vld [vmem:[%s150 + $0x9780] sm:$0xff]
                %1365 = vst [vmem:[%s151 + $0x12f0] sm:$0xff] %v1364
                %v1366 = vld [vmem:[%s150 + $0x9788] sm:$0xff]
                %1367 = vst [vmem:[%s151 + $0x12f8] sm:$0xff] %v1366
                %v1368 = vld [vmem:[%s150 + $0x9800] sm:$0xff]
                %1369 = vst [vmem:[%s151 + $0x1300] sm:$0xff] %v1368
                %v1370 = vld [vmem:[%s150 + $0x9808] sm:$0xff]
                %1371 = vst [vmem:[%s151 + $0x1308] sm:$0xff] %v1370
                %v1372 = vld [vmem:[%s150 + $0x9880] sm:$0xff]
                %1373 = vst [vmem:[%s151 + $0x1310] sm:$0xff] %v1372
                %v1374 = vld [vmem:[%s150 + $0x9888] sm:$0xff]
                %1375 = vst [vmem:[%s151 + $0x1318] sm:$0xff] %v1374
                %v1376 = vld [vmem:[%s150 + $0x9900] sm:$0xff]
                %1377 = vst [vmem:[%s151 + $0x1320] sm:$0xff] %v1376
                %v1378 = vld [vmem:[%s150 + $0x9908] sm:$0xff]
                %1379 = vst [vmem:[%s151 + $0x1328] sm:$0xff] %v1378
                %v1380 = vld [vmem:[%s150 + $0x9980] sm:$0xff]
                %1381 = vst [vmem:[%s151 + $0x1330] sm:$0xff] %v1380
                %v1382 = vld [vmem:[%s150 + $0x9988] sm:$0xff]
                %1383 = vst [vmem:[%s151 + $0x1338] sm:$0xff] %v1382
                %v1384 = vld [vmem:[%s150 + $0x9a00] sm:$0xff]
                %1385 = vst [vmem:[%s151 + $0x1340] sm:$0xff] %v1384
                %v1386 = vld [vmem:[%s150 + $0x9a08] sm:$0xff]
                %1387 = vst [vmem:[%s151 + $0x1348] sm:$0xff] %v1386
                %v1388 = vld [vmem:[%s150 + $0x9a80] sm:$0xff]
                %1389 = vst [vmem:[%s151 + $0x1350] sm:$0xff] %v1388
                %v1390 = vld [vmem:[%s150 + $0x9a88] sm:$0xff]
                %1391 = vst [vmem:[%s151 + $0x1358] sm:$0xff] %v1390
                %v1392 = vld [vmem:[%s150 + $0x9b00] sm:$0xff]
                %1393 = vst [vmem:[%s151 + $0x1360] sm:$0xff] %v1392
                %v1394 = vld [vmem:[%s150 + $0x9b08] sm:$0xff]
                %1395 = vst [vmem:[%s151 + $0x1368] sm:$0xff] %v1394
                %v1396 = vld [vmem:[%s150 + $0x9b80] sm:$0xff]
                %1397 = vst [vmem:[%s151 + $0x1370] sm:$0xff] %v1396
                %v1398 = vld [vmem:[%s150 + $0x9b88] sm:$0xff]
                %1399 = vst [vmem:[%s151 + $0x1378] sm:$0xff] %v1398
                %v1400 = vld [vmem:[%s150 + $0x9c00] sm:$0xff]
                %1401 = vst [vmem:[%s151 + $0x1380] sm:$0xff] %v1400
                %v1402 = vld [vmem:[%s150 + $0x9c08] sm:$0xff]
                %1403 = vst [vmem:[%s151 + $0x1388] sm:$0xff] %v1402
                %v1404 = vld [vmem:[%s150 + $0x9c80] sm:$0xff]
                %1405 = vst [vmem:[%s151 + $0x1390] sm:$0xff] %v1404
                %v1406 = vld [vmem:[%s150 + $0x9c88] sm:$0xff]
                %1407 = vst [vmem:[%s151 + $0x1398] sm:$0xff] %v1406
                %v1408 = vld [vmem:[%s150 + $0x9d00] sm:$0xff]
                %1409 = vst [vmem:[%s151 + $0x13a0] sm:$0xff] %v1408
                %v1410 = vld [vmem:[%s150 + $0x9d08] sm:$0xff]
                %1411 = vst [vmem:[%s151 + $0x13a8] sm:$0xff] %v1410
                %v1412 = vld [vmem:[%s150 + $0x9d80] sm:$0xff]
                %1413 = vst [vmem:[%s151 + $0x13b0] sm:$0xff] %v1412
                %v1414 = vld [vmem:[%s150 + $0x9d88] sm:$0xff]
                %1415 = vst [vmem:[%s151 + $0x13b8] sm:$0xff] %v1414
                %v1416 = vld [vmem:[%s150 + $0x9e00] sm:$0xff]
                %1417 = vst [vmem:[%s151 + $0x13c0] sm:$0xff] %v1416
                %v1418 = vld [vmem:[%s150 + $0x9e08] sm:$0xff]
                %1419 = vst [vmem:[%s151 + $0x13c8] sm:$0xff] %v1418
                %v1420 = vld [vmem:[%s150 + $0x9e80] sm:$0xff]
                %1421 = vst [vmem:[%s151 + $0x13d0] sm:$0xff] %v1420
                %v1422 = vld [vmem:[%s150 + $0x9e88] sm:$0xff]
                %1423 = vst [vmem:[%s151 + $0x13d8] sm:$0xff] %v1422
                %v1424 = vld [vmem:[%s150 + $0x9f00] sm:$0xff]
                %1425 = vst [vmem:[%s151 + $0x13e0] sm:$0xff] %v1424
                %v1426 = vld [vmem:[%s150 + $0x9f08] sm:$0xff]
                %1427 = vst [vmem:[%s151 + $0x13e8] sm:$0xff] %v1426
                %v1428 = vld [vmem:[%s150 + $0x9f80] sm:$0xff]
                %1429 = vst [vmem:[%s151 + $0x13f0] sm:$0xff] %v1428
                %v1430 = vld [vmem:[%s150 + $0x9f88] sm:$0xff]
                %1431 = vst [vmem:[%s151 + $0x13f8] sm:$0xff] %v1430
                %v1432 = vld [vmem:[%s150 + $0xa000] sm:$0xff]
                %1433 = vst [vmem:[%s151 + $0x1400] sm:$0xff] %v1432
                %v1434 = vld [vmem:[%s150 + $0xa008] sm:$0xff]
                %1435 = vst [vmem:[%s151 + $0x1408] sm:$0xff] %v1434
                %v1436 = vld [vmem:[%s150 + $0xa080] sm:$0xff]
                %1437 = vst [vmem:[%s151 + $0x1410] sm:$0xff] %v1436
                %v1438 = vld [vmem:[%s150 + $0xa088] sm:$0xff]
                %1439 = vst [vmem:[%s151 + $0x1418] sm:$0xff] %v1438
                %v1440 = vld [vmem:[%s150 + $0xa100] sm:$0xff]
                %1441 = vst [vmem:[%s151 + $0x1420] sm:$0xff] %v1440
                %v1442 = vld [vmem:[%s150 + $0xa108] sm:$0xff]
                %1443 = vst [vmem:[%s151 + $0x1428] sm:$0xff] %v1442
                %v1444 = vld [vmem:[%s150 + $0xa180] sm:$0xff]
                %1445 = vst [vmem:[%s151 + $0x1430] sm:$0xff] %v1444
                %v1446 = vld [vmem:[%s150 + $0xa188] sm:$0xff]
                %1447 = vst [vmem:[%s151 + $0x1438] sm:$0xff] %v1446
                %v1448 = vld [vmem:[%s150 + $0xa200] sm:$0xff]
                %1449 = vst [vmem:[%s151 + $0x1440] sm:$0xff] %v1448
                %v1450 = vld [vmem:[%s150 + $0xa208] sm:$0xff]
                %1451 = vst [vmem:[%s151 + $0x1448] sm:$0xff] %v1450
                %v1452 = vld [vmem:[%s150 + $0xa280] sm:$0xff]
                %1453 = vst [vmem:[%s151 + $0x1450] sm:$0xff] %v1452
                %v1454 = vld [vmem:[%s150 + $0xa288] sm:$0xff]
                %1455 = vst [vmem:[%s151 + $0x1458] sm:$0xff] %v1454
                %v1456 = vld [vmem:[%s150 + $0xa300] sm:$0xff]
                %1457 = vst [vmem:[%s151 + $0x1460] sm:$0xff] %v1456
                %v1458 = vld [vmem:[%s150 + $0xa308] sm:$0xff]
                %1459 = vst [vmem:[%s151 + $0x1468] sm:$0xff] %v1458
                %v1460 = vld [vmem:[%s150 + $0xa380] sm:$0xff]
                %1461 = vst [vmem:[%s151 + $0x1470] sm:$0xff] %v1460
                %v1462 = vld [vmem:[%s150 + $0xa388] sm:$0xff]
                %1463 = vst [vmem:[%s151 + $0x1478] sm:$0xff] %v1462
                %v1464 = vld [vmem:[%s150 + $0xa400] sm:$0xff]
                %1465 = vst [vmem:[%s151 + $0x1480] sm:$0xff] %v1464
                %v1466 = vld [vmem:[%s150 + $0xa408] sm:$0xff]
                %1467 = vst [vmem:[%s151 + $0x1488] sm:$0xff] %v1466
                %v1468 = vld [vmem:[%s150 + $0xa480] sm:$0xff]
                %1469 = vst [vmem:[%s151 + $0x1490] sm:$0xff] %v1468
                %v1470 = vld [vmem:[%s150 + $0xa488] sm:$0xff]
                %1471 = vst [vmem:[%s151 + $0x1498] sm:$0xff] %v1470
                %v1472 = vld [vmem:[%s150 + $0xa500] sm:$0xff]
                %1473 = vst [vmem:[%s151 + $0x14a0] sm:$0xff] %v1472
                %v1474 = vld [vmem:[%s150 + $0xa508] sm:$0xff]
                %1475 = vst [vmem:[%s151 + $0x14a8] sm:$0xff] %v1474
                %v1476 = vld [vmem:[%s150 + $0xa580] sm:$0xff]
                %1477 = vst [vmem:[%s151 + $0x14b0] sm:$0xff] %v1476
                %v1478 = vld [vmem:[%s150 + $0xa588] sm:$0xff]
                %1479 = vst [vmem:[%s151 + $0x14b8] sm:$0xff] %v1478
                %v1480 = vld [vmem:[%s150 + $0xa600] sm:$0xff]
                %1481 = vst [vmem:[%s151 + $0x14c0] sm:$0xff] %v1480
                %v1482 = vld [vmem:[%s150 + $0xa608] sm:$0xff]
                %1483 = vst [vmem:[%s151 + $0x14c8] sm:$0xff] %v1482
                %v1484 = vld [vmem:[%s150 + $0xa680] sm:$0xff]
                %1485 = vst [vmem:[%s151 + $0x14d0] sm:$0xff] %v1484
                %v1486 = vld [vmem:[%s150 + $0xa688] sm:$0xff]
                %1487 = vst [vmem:[%s151 + $0x14d8] sm:$0xff] %v1486
                %v1488 = vld [vmem:[%s150 + $0xa700] sm:$0xff]
                %1489 = vst [vmem:[%s151 + $0x14e0] sm:$0xff] %v1488
                %v1490 = vld [vmem:[%s150 + $0xa708] sm:$0xff]
                %1491 = vst [vmem:[%s151 + $0x14e8] sm:$0xff] %v1490
                %v1492 = vld [vmem:[%s150 + $0xa780] sm:$0xff]
                %1493 = vst [vmem:[%s151 + $0x14f0] sm:$0xff] %v1492
                %v1494 = vld [vmem:[%s150 + $0xa788] sm:$0xff]
                %1495 = vst [vmem:[%s151 + $0x14f8] sm:$0xff] %v1494
                %v1496 = vld [vmem:[%s150 + $0xa800] sm:$0xff]
                %1497 = vst [vmem:[%s151 + $0x1500] sm:$0xff] %v1496
                %v1498 = vld [vmem:[%s150 + $0xa808] sm:$0xff]
                %1499 = vst [vmem:[%s151 + $0x1508] sm:$0xff] %v1498
                %v1500 = vld [vmem:[%s150 + $0xa880] sm:$0xff]
                %1501 = vst [vmem:[%s151 + $0x1510] sm:$0xff] %v1500
                %v1502 = vld [vmem:[%s150 + $0xa888] sm:$0xff]
                %1503 = vst [vmem:[%s151 + $0x1518] sm:$0xff] %v1502
                %v1504 = vld [vmem:[%s150 + $0xa900] sm:$0xff]
                %1505 = vst [vmem:[%s151 + $0x1520] sm:$0xff] %v1504
                %v1506 = vld [vmem:[%s150 + $0xa908] sm:$0xff]
                %1507 = vst [vmem:[%s151 + $0x1528] sm:$0xff] %v1506
                %v1508 = vld [vmem:[%s150 + $0xa980] sm:$0xff]
                %1509 = vst [vmem:[%s151 + $0x1530] sm:$0xff] %v1508
                %v1510 = vld [vmem:[%s150 + $0xa988] sm:$0xff]
                %1511 = vst [vmem:[%s151 + $0x1538] sm:$0xff] %v1510
                %v1512 = vld [vmem:[%s150 + $0xaa00] sm:$0xff]
                %1513 = vst [vmem:[%s151 + $0x1540] sm:$0xff] %v1512
                %v1514 = vld [vmem:[%s150 + $0xaa08] sm:$0xff]
                %1515 = vst [vmem:[%s151 + $0x1548] sm:$0xff] %v1514
                %v1516 = vld [vmem:[%s150 + $0xaa80] sm:$0xff]
                %1517 = vst [vmem:[%s151 + $0x1550] sm:$0xff] %v1516
                %v1518 = vld [vmem:[%s150 + $0xaa88] sm:$0xff]
                %1519 = vst [vmem:[%s151 + $0x1558] sm:$0xff] %v1518
                %v1520 = vld [vmem:[%s150 + $0xab00] sm:$0xff]
                %1521 = vst [vmem:[%s151 + $0x1560] sm:$0xff] %v1520
                %v1522 = vld [vmem:[%s150 + $0xab08] sm:$0xff]
                %1523 = vst [vmem:[%s151 + $0x1568] sm:$0xff] %v1522
                %v1524 = vld [vmem:[%s150 + $0xab80] sm:$0xff]
                %1525 = vst [vmem:[%s151 + $0x1570] sm:$0xff] %v1524
                %v1526 = vld [vmem:[%s150 + $0xab88] sm:$0xff]
                %1527 = vst [vmem:[%s151 + $0x1578] sm:$0xff] %v1526
                %v1528 = vld [vmem:[%s150 + $0xac00] sm:$0xff]
                %1529 = vst [vmem:[%s151 + $0x1580] sm:$0xff] %v1528
                %v1530 = vld [vmem:[%s150 + $0xac08] sm:$0xff]
                %1531 = vst [vmem:[%s151 + $0x1588] sm:$0xff] %v1530
                %v1532 = vld [vmem:[%s150 + $0xac80] sm:$0xff]
                %1533 = vst [vmem:[%s151 + $0x1590] sm:$0xff] %v1532
                %v1534 = vld [vmem:[%s150 + $0xac88] sm:$0xff]
                %1535 = vst [vmem:[%s151 + $0x1598] sm:$0xff] %v1534
                %v1536 = vld [vmem:[%s150 + $0xad00] sm:$0xff]
                %1537 = vst [vmem:[%s151 + $0x15a0] sm:$0xff] %v1536
                %v1538 = vld [vmem:[%s150 + $0xad08] sm:$0xff]
                %1539 = vst [vmem:[%s151 + $0x15a8] sm:$0xff] %v1538
                %v1540 = vld [vmem:[%s150 + $0xad80] sm:$0xff]
                %1541 = vst [vmem:[%s151 + $0x15b0] sm:$0xff] %v1540
                %v1542 = vld [vmem:[%s150 + $0xad88] sm:$0xff]
                %1543 = vst [vmem:[%s151 + $0x15b8] sm:$0xff] %v1542
                %v1544 = vld [vmem:[%s150 + $0xae00] sm:$0xff]
                %1545 = vst [vmem:[%s151 + $0x15c0] sm:$0xff] %v1544
                %v1546 = vld [vmem:[%s150 + $0xae08] sm:$0xff]
                %1547 = vst [vmem:[%s151 + $0x15c8] sm:$0xff] %v1546
                %v1548 = vld [vmem:[%s150 + $0xae80] sm:$0xff]
                %1549 = vst [vmem:[%s151 + $0x15d0] sm:$0xff] %v1548
                %v1550 = vld [vmem:[%s150 + $0xae88] sm:$0xff]
                %1551 = vst [vmem:[%s151 + $0x15d8] sm:$0xff] %v1550
                %v1552 = vld [vmem:[%s150 + $0xaf00] sm:$0xff]
                %1553 = vst [vmem:[%s151 + $0x15e0] sm:$0xff] %v1552
                %v1554 = vld [vmem:[%s150 + $0xaf08] sm:$0xff]
                %1555 = vst [vmem:[%s151 + $0x15e8] sm:$0xff] %v1554
                %v1556 = vld [vmem:[%s150 + $0xaf80] sm:$0xff]
                %1557 = vst [vmem:[%s151 + $0x15f0] sm:$0xff] %v1556
                %v1558 = vld [vmem:[%s150 + $0xaf88] sm:$0xff]
                %1559 = vst [vmem:[%s151 + $0x15f8] sm:$0xff] %v1558
                %v1560 = vld [vmem:[%s150 + $0xb000] sm:$0xff]
                %1561 = vst [vmem:[%s151 + $0x1600] sm:$0xff] %v1560
                %v1562 = vld [vmem:[%s150 + $0xb008] sm:$0xff]
                %1563 = vst [vmem:[%s151 + $0x1608] sm:$0xff] %v1562
                %v1564 = vld [vmem:[%s150 + $0xb080] sm:$0xff]
                %1565 = vst [vmem:[%s151 + $0x1610] sm:$0xff] %v1564
                %v1566 = vld [vmem:[%s150 + $0xb088] sm:$0xff]
                %1567 = vst [vmem:[%s151 + $0x1618] sm:$0xff] %v1566
                %v1568 = vld [vmem:[%s150 + $0xb100] sm:$0xff]
                %1569 = vst [vmem:[%s151 + $0x1620] sm:$0xff] %v1568
                %v1570 = vld [vmem:[%s150 + $0xb108] sm:$0xff]
                %1571 = vst [vmem:[%s151 + $0x1628] sm:$0xff] %v1570
                %v1572 = vld [vmem:[%s150 + $0xb180] sm:$0xff]
                %1573 = vst [vmem:[%s151 + $0x1630] sm:$0xff] %v1572
                %v1574 = vld [vmem:[%s150 + $0xb188] sm:$0xff]
                %1575 = vst [vmem:[%s151 + $0x1638] sm:$0xff] %v1574
                %v1576 = vld [vmem:[%s150 + $0xb200] sm:$0xff]
                %1577 = vst [vmem:[%s151 + $0x1640] sm:$0xff] %v1576
                %v1578 = vld [vmem:[%s150 + $0xb208] sm:$0xff]
                %1579 = vst [vmem:[%s151 + $0x1648] sm:$0xff] %v1578
                %v1580 = vld [vmem:[%s150 + $0xb280] sm:$0xff]
                %1581 = vst [vmem:[%s151 + $0x1650] sm:$0xff] %v1580
                %v1582 = vld [vmem:[%s150 + $0xb288] sm:$0xff]
                %1583 = vst [vmem:[%s151 + $0x1658] sm:$0xff] %v1582
                %v1584 = vld [vmem:[%s150 + $0xb300] sm:$0xff]
                %1585 = vst [vmem:[%s151 + $0x1660] sm:$0xff] %v1584
                %v1586 = vld [vmem:[%s150 + $0xb308] sm:$0xff]
                %1587 = vst [vmem:[%s151 + $0x1668] sm:$0xff] %v1586
                %v1588 = vld [vmem:[%s150 + $0xb380] sm:$0xff]
                %1589 = vst [vmem:[%s151 + $0x1670] sm:$0xff] %v1588
                %v1590 = vld [vmem:[%s150 + $0xb388] sm:$0xff]
                %1591 = vst [vmem:[%s151 + $0x1678] sm:$0xff] %v1590
                %v1592 = vld [vmem:[%s150 + $0xb400] sm:$0xff]
                %1593 = vst [vmem:[%s151 + $0x1680] sm:$0xff] %v1592
                %v1594 = vld [vmem:[%s150 + $0xb408] sm:$0xff]
                %1595 = vst [vmem:[%s151 + $0x1688] sm:$0xff] %v1594
                %v1596 = vld [vmem:[%s150 + $0xb480] sm:$0xff]
                %1597 = vst [vmem:[%s151 + $0x1690] sm:$0xff] %v1596
                %v1598 = vld [vmem:[%s150 + $0xb488] sm:$0xff]
                %1599 = vst [vmem:[%s151 + $0x1698] sm:$0xff] %v1598
                %v1600 = vld [vmem:[%s150 + $0xb500] sm:$0xff]
                %1601 = vst [vmem:[%s151 + $0x16a0] sm:$0xff] %v1600
                %v1602 = vld [vmem:[%s150 + $0xb508] sm:$0xff]
                %1603 = vst [vmem:[%s151 + $0x16a8] sm:$0xff] %v1602
                %v1604 = vld [vmem:[%s150 + $0xb580] sm:$0xff]
                %1605 = vst [vmem:[%s151 + $0x16b0] sm:$0xff] %v1604
                %v1606 = vld [vmem:[%s150 + $0xb588] sm:$0xff]
                %1607 = vst [vmem:[%s151 + $0x16b8] sm:$0xff] %v1606
                %v1608 = vld [vmem:[%s150 + $0xb600] sm:$0xff]
                %1609 = vst [vmem:[%s151 + $0x16c0] sm:$0xff] %v1608
                %v1610 = vld [vmem:[%s150 + $0xb608] sm:$0xff]
                %1611 = vst [vmem:[%s151 + $0x16c8] sm:$0xff] %v1610
                %v1612 = vld [vmem:[%s150 + $0xb680] sm:$0xff]
                %1613 = vst [vmem:[%s151 + $0x16d0] sm:$0xff] %v1612
                %v1614 = vld [vmem:[%s150 + $0xb688] sm:$0xff]
                %1615 = vst [vmem:[%s151 + $0x16d8] sm:$0xff] %v1614
                %v1616 = vld [vmem:[%s150 + $0xb700] sm:$0xff]
                %1617 = vst [vmem:[%s151 + $0x16e0] sm:$0xff] %v1616
                %v1618 = vld [vmem:[%s150 + $0xb708] sm:$0xff]
                %1619 = vst [vmem:[%s151 + $0x16e8] sm:$0xff] %v1618
                %v1620 = vld [vmem:[%s150 + $0xb780] sm:$0xff]
                %1621 = vst [vmem:[%s151 + $0x16f0] sm:$0xff] %v1620
                %v1622 = vld [vmem:[%s150 + $0xb788] sm:$0xff]
                %1623 = vst [vmem:[%s151 + $0x16f8] sm:$0xff] %v1622
                %v1624 = vld [vmem:[%s150 + $0xb800] sm:$0xff]
                %1625 = vst [vmem:[%s151 + $0x1700] sm:$0xff] %v1624
                %v1626 = vld [vmem:[%s150 + $0xb808] sm:$0xff]
                %1627 = vst [vmem:[%s151 + $0x1708] sm:$0xff] %v1626
                %v1628 = vld [vmem:[%s150 + $0xb880] sm:$0xff]
                %1629 = vst [vmem:[%s151 + $0x1710] sm:$0xff] %v1628
                %v1630 = vld [vmem:[%s150 + $0xb888] sm:$0xff]
                %1631 = vst [vmem:[%s151 + $0x1718] sm:$0xff] %v1630
                %v1632 = vld [vmem:[%s150 + $0xb900] sm:$0xff]
                %1633 = vst [vmem:[%s151 + $0x1720] sm:$0xff] %v1632
                %v1634 = vld [vmem:[%s150 + $0xb908] sm:$0xff]
                %1635 = vst [vmem:[%s151 + $0x1728] sm:$0xff] %v1634
                %v1636 = vld [vmem:[%s150 + $0xb980] sm:$0xff]
                %1637 = vst [vmem:[%s151 + $0x1730] sm:$0xff] %v1636
                %v1638 = vld [vmem:[%s150 + $0xb988] sm:$0xff]
                %1639 = vst [vmem:[%s151 + $0x1738] sm:$0xff] %v1638
                %v1640 = vld [vmem:[%s150 + $0xba00] sm:$0xff]
                %1641 = vst [vmem:[%s151 + $0x1740] sm:$0xff] %v1640
                %v1642 = vld [vmem:[%s150 + $0xba08] sm:$0xff]
                %1643 = vst [vmem:[%s151 + $0x1748] sm:$0xff] %v1642
                %v1644 = vld [vmem:[%s150 + $0xba80] sm:$0xff]
                %1645 = vst [vmem:[%s151 + $0x1750] sm:$0xff] %v1644
                %v1646 = vld [vmem:[%s150 + $0xba88] sm:$0xff]
                %1647 = vst [vmem:[%s151 + $0x1758] sm:$0xff] %v1646
                %v1648 = vld [vmem:[%s150 + $0xbb00] sm:$0xff]
                %1649 = vst [vmem:[%s151 + $0x1760] sm:$0xff] %v1648
                %v1650 = vld [vmem:[%s150 + $0xbb08] sm:$0xff]
                %1651 = vst [vmem:[%s151 + $0x1768] sm:$0xff] %v1650
                %v1652 = vld [vmem:[%s150 + $0xbb80] sm:$0xff]
                %1653 = vst [vmem:[%s151 + $0x1770] sm:$0xff] %v1652
                %v1654 = vld [vmem:[%s150 + $0xbb88] sm:$0xff]
                %1655 = vst [vmem:[%s151 + $0x1778] sm:$0xff] %v1654
                %v1656 = vld [vmem:[%s150 + $0xbc00] sm:$0xff]
                %1657 = vst [vmem:[%s151 + $0x1780] sm:$0xff] %v1656
                %v1658 = vld [vmem:[%s150 + $0xbc08] sm:$0xff]
                %1659 = vst [vmem:[%s151 + $0x1788] sm:$0xff] %v1658
                %v1660 = vld [vmem:[%s150 + $0xbc80] sm:$0xff]
                %1661 = vst [vmem:[%s151 + $0x1790] sm:$0xff] %v1660
                %v1662 = vld [vmem:[%s150 + $0xbc88] sm:$0xff]
                %1663 = vst [vmem:[%s151 + $0x1798] sm:$0xff] %v1662
                %v1664 = vld [vmem:[%s150 + $0xbd00] sm:$0xff]
                %1665 = vst [vmem:[%s151 + $0x17a0] sm:$0xff] %v1664
                %v1666 = vld [vmem:[%s150 + $0xbd08] sm:$0xff]
                %1667 = vst [vmem:[%s151 + $0x17a8] sm:$0xff] %v1666
                %v1668 = vld [vmem:[%s150 + $0xbd80] sm:$0xff]
                %1669 = vst [vmem:[%s151 + $0x17b0] sm:$0xff] %v1668
                %v1670 = vld [vmem:[%s150 + $0xbd88] sm:$0xff]
                %1671 = vst [vmem:[%s151 + $0x17b8] sm:$0xff] %v1670
                %v1672 = vld [vmem:[%s150 + $0xbe00] sm:$0xff]
                %1673 = vst [vmem:[%s151 + $0x17c0] sm:$0xff] %v1672
                %v1674 = vld [vmem:[%s150 + $0xbe08] sm:$0xff]
                %1675 = vst [vmem:[%s151 + $0x17c8] sm:$0xff] %v1674
                %v1676 = vld [vmem:[%s150 + $0xbe80] sm:$0xff]
                %1677 = vst [vmem:[%s151 + $0x17d0] sm:$0xff] %v1676
                %v1678 = vld [vmem:[%s150 + $0xbe88] sm:$0xff]
                %1679 = vst [vmem:[%s151 + $0x17d8] sm:$0xff] %v1678
                %v1680 = vld [vmem:[%s150 + $0xbf00] sm:$0xff]
                %1681 = vst [vmem:[%s151 + $0x17e0] sm:$0xff] %v1680
                %v1682 = vld [vmem:[%s150 + $0xbf08] sm:$0xff]
                %1683 = vst [vmem:[%s151 + $0x17e8] sm:$0xff] %v1682
                %v1684 = vld [vmem:[%s150 + $0xbf80] sm:$0xff]
                %1685 = vst [vmem:[%s151 + $0x17f0] sm:$0xff] %v1684
                %v1686 = vld [vmem:[%s150 + $0xbf88] sm:$0xff]
                %1687 = vst [vmem:[%s151 + $0x17f8] sm:$0xff] %v1686
                %v1688 = vld [vmem:[%s150 + $0xc000] sm:$0xff]
                %1689 = vst [vmem:[%s151 + $0x1800] sm:$0xff] %v1688
                %v1690 = vld [vmem:[%s150 + $0xc008] sm:$0xff]
                %1691 = vst [vmem:[%s151 + $0x1808] sm:$0xff] %v1690
                %v1692 = vld [vmem:[%s150 + $0xc080] sm:$0xff]
                %1693 = vst [vmem:[%s151 + $0x1810] sm:$0xff] %v1692
                %v1694 = vld [vmem:[%s150 + $0xc088] sm:$0xff]
                %1695 = vst [vmem:[%s151 + $0x1818] sm:$0xff] %v1694
                %v1696 = vld [vmem:[%s150 + $0xc100] sm:$0xff]
                %1697 = vst [vmem:[%s151 + $0x1820] sm:$0xff] %v1696
                %v1698 = vld [vmem:[%s150 + $0xc108] sm:$0xff]
                %1699 = vst [vmem:[%s151 + $0x1828] sm:$0xff] %v1698
                %v1700 = vld [vmem:[%s150 + $0xc180] sm:$0xff]
                %1701 = vst [vmem:[%s151 + $0x1830] sm:$0xff] %v1700
                %v1702 = vld [vmem:[%s150 + $0xc188] sm:$0xff]
                %1703 = vst [vmem:[%s151 + $0x1838] sm:$0xff] %v1702
                %v1704 = vld [vmem:[%s150 + $0xc200] sm:$0xff]
                %1705 = vst [vmem:[%s151 + $0x1840] sm:$0xff] %v1704
                %v1706 = vld [vmem:[%s150 + $0xc208] sm:$0xff]
                %1707 = vst [vmem:[%s151 + $0x1848] sm:$0xff] %v1706
                %v1708 = vld [vmem:[%s150 + $0xc280] sm:$0xff]
                %1709 = vst [vmem:[%s151 + $0x1850] sm:$0xff] %v1708
                %v1710 = vld [vmem:[%s150 + $0xc288] sm:$0xff]
                %1711 = vst [vmem:[%s151 + $0x1858] sm:$0xff] %v1710
                %v1712 = vld [vmem:[%s150 + $0xc300] sm:$0xff]
                %1713 = vst [vmem:[%s151 + $0x1860] sm:$0xff] %v1712
                %v1714 = vld [vmem:[%s150 + $0xc308] sm:$0xff]
                %1715 = vst [vmem:[%s151 + $0x1868] sm:$0xff] %v1714
                %v1716 = vld [vmem:[%s150 + $0xc380] sm:$0xff]
                %1717 = vst [vmem:[%s151 + $0x1870] sm:$0xff] %v1716
                %v1718 = vld [vmem:[%s150 + $0xc388] sm:$0xff]
                %1719 = vst [vmem:[%s151 + $0x1878] sm:$0xff] %v1718
              $region37: #{encoder_forward.7} parent=31 // loop_footer
                %s149 = sadd.s32 1, %s145
              $region38: #{encoder_forward.7} parent=31 // loop_footer_branch
                %144 = sbr.rel target = $region34
              $region39: #{encoder_forward.7} parent=31 // loop_exit
                _
            $region32: #{encoder_forward.7} parent=27 // pred_fallthru
              _
            // Predicated region
            $region40: #{encoder_forward.7} parent=27 // pred_check
              _
            $region41: #{encoder_forward.7} parent=27 // pred_check_branch
              %1721 = sbr.rel target = $region43
            $region42: #{encoder_forward.7} parent=27 // pred_region
              _
            $region43: #{encoder_forward.7} parent=27 // pred_fallthru
              _
          $region28: #{encoder_forward.7} parent=23 // pred_fallthru
            _
          %1722 = vnop
        $region24: #{encoder_forward.7} parent=19 // pred_fallthru
          _
        // Predicated region
        $region44: #{encoder_forward.7} parent=19 // pred_check
          %p1723 = pneg %p76
        $region45: #{encoder_forward.7} parent=19 // pred_check_branch
          %1725 = sbr.rel (%p1723) target = $region47
        $region46: #{encoder_forward.7} parent=19 // pred_region
          %s1726 = smul.u32 4, %s9
          %p1727 = scmp.lt.s32.totalorder %s1726, 31
          %s1728 = scalar_select %p1727, %s1726, 31
          %s1729 = scalar_lea.vmem %s2, %s1728
          %s1730 = smul.u32 4, %s9
        $region47: #{encoder_forward.7} parent=19 // pred_fallthru
          _
      $region20: #{encoder_forward.7} parent=5 // pred_fallthru
        _
      %p1731 = scmp.le.s32.totalorder 1, %s9
      %p1732 = scmp.lt.s32.totalorder %s9, 9
      %p1733 = pnand %p1731, %p1732
      %p1734 = pneg %p1733
      // Predicated region
      $region48: #{encoder_forward.7} parent=5 // pred_check
        _
      $region49: #{encoder_forward.7} parent=5 // pred_check_branch
        %1736 = sbr.rel (%p1733) target = $region51
      $region50: #{encoder_forward.7} parent=5 // pred_region
        %s1737 = ssub.s32 %s9, 1
        %s1738 = sand.u32 %s43, 1
        %s1739 = sand.u32 %s43, 1
        %s1740 = smul.addr %s1739, 6272
        %s1741 = scalar_lea.vmem [#allocation2], %s1740
        // Predicated region
        $region52: #{encoder_forward.7} parent=50 // pred_check
          %p1742 = pneg %p56
        $region53: #{encoder_forward.7} parent=50 // pred_check_branch
          %1744 = sbr.rel (%p1742) target = $region55
        $region54: #{encoder_forward.7} parent=50 // pred_region
          _
        $region55: #{encoder_forward.7} parent=50 // pred_fallthru
          _
        %p1745 = pneg %p30
        %p1746 = pneg %p27
        %s1747 = sand.u32 %s43, 1
        %s1748 = sand.u32 %s43, 1
        %s1749 = smul.addr %s1748, 6272
        %s1750 = scalar_lea.vmem [#allocation2], %s1749
        %p1751 = pneg %p56
        %p1752 = pneg %p53
        %s1753 = smul.u32 4, %s14
        %p1754 = scmp.lt.s32.totalorder %s1753, 31
        %s1755 = scalar_select %p1754, %s1753, 31
        %s1756 = scalar_lea.vmem %s2, %s1755
        %p1757 = pneg %p82
        %p1758 = pneg %p79
        %p1759 = pneg %p108
        %p1760 = pneg %p105
        %s1761 = smul.u32 4, %s14
        %p1762 = scmp.lt.s32.totalorder %s1761, 31
        %s1763 = scalar_select %p1762, %s1761, 31
        %s1764 = smul.addr %s1763, 2
        %s1765 = scalar_lea.vmem %s3, %s1764
        %s1766 = smul.u32 4, %s14
        %s1767 = smul.u32 4, %s14
        %p1768 = scmp.lt.s32.totalorder %s1767, 31
        %s1769 = scalar_select %p1768, %s1767, 31
        %s1770 = scalar_lea.vmem %s2, %s1769
        %s1771 = smul.u32 4, %s14
        %s1772 = smul.u32 4, %s14
        %p1773 = scmp.lt.s32.totalorder %s1772, 31
        %s1774 = scalar_select %p1773, %s1772, 31
        %s1775 = smul.addr %s1774, 2
        %s1776 = scalar_lea.vmem %s3, %s1775
        %s1777 = smul.u32 4, %s14
        %v1779 = vld [vmem:[%s0] sm:$0xff]
        %v1780 = vld [vmem:[%s0 + $0x8] sm:$0xff]
        %v1781 = vld [vmem:[%s0 + $0x10] sm:$0xff]
        %v1782 = vld [vmem:[%s0 + $0x18] sm:$0xff]
        %v1783 = vld [vmem:[%s0 + $0x20] sm:$0xff]
        %v1784 = vld [vmem:[%s0 + $0x28] sm:$0xff]
        %v1785 = vld [vmem:[%s0 + $0x30] sm:$0x3]
        %v1793 = vcombine.high %v1779, %v1779
        %v1795 = vunpack.c.l.s4 1983009808
        %v1796 = vunpack.c.0.s8 %v1795
        %v1797 = vlaneseq
        %v1798 = vshrl.u32 %v1797, 7
        %v1799 = vsub.s32 %v1796, %v1798
        %v1800 = vrot.slane %v1779, %v1799
        %v1802 = vunpack.c.l.s4 1983009808
        %v1803 = vunpack.c.0.s8 %v1802
        %v1804 = vlaneseq
        %v1805 = vshrl.u32 %v1804, 7
        %v1806 = vsub.s32 %v1803, %v1805
        %v1807 = vrot.slane %v1793, %v1806
        %v1808 = vcombine.high %v1800, %v1800
        %v1809 = vcombine.high %v1807, %v1807
        %v1810 = vcombine.high %v1780, %v1780
        %v1812 = vunpack.c.l.s4 1983009808
        %v1813 = vunpack.c.0.s8 %v1812
        %v1814 = vlaneseq
        %v1815 = vshrl.u32 %v1814, 7
        %v1816 = vsub.s32 %v1813, %v1815
        %v1817 = vrot.slane %v1780, %v1816
        %v1819 = vunpack.c.l.s4 1983009808
        %v1820 = vunpack.c.0.s8 %v1819
        %v1821 = vlaneseq
        %v1822 = vshrl.u32 %v1821, 7
        %v1823 = vsub.s32 %v1820, %v1822
        %v1824 = vrot.slane %v1810, %v1823
        %v1825 = vcombine.high %v1817, %v1817
        %v1826 = vcombine.high %v1824, %v1824
        %v1827 = vcombine.high %v1781, %v1781
        %v1829 = vunpack.c.l.s4 1983009808
        %v1830 = vunpack.c.0.s8 %v1829
        %v1831 = vlaneseq
        %v1832 = vshrl.u32 %v1831, 7
        %v1833 = vsub.s32 %v1830, %v1832
        %v1834 = vrot.slane %v1781, %v1833
        %v1836 = vunpack.c.l.s4 1983009808
        %v1837 = vunpack.c.0.s8 %v1836
        %v1838 = vlaneseq
        %v1839 = vshrl.u32 %v1838, 7
        %v1840 = vsub.s32 %v1837, %v1839
        %v1841 = vrot.slane %v1827, %v1840
        %v1842 = vcombine.high %v1834, %v1834
        %v1843 = vcombine.high %v1841, %v1841
        %v1844 = vcombine.high %v1782, %v1782
        %v1846 = vunpack.c.l.s4 1983009808
        %v1847 = vunpack.c.0.s8 %v1846
        %v1848 = vlaneseq
        %v1849 = vshrl.u32 %v1848, 7
        %v1850 = vsub.s32 %v1847, %v1849
        %v1851 = vrot.slane %v1782, %v1850
        %v1853 = vunpack.c.l.s4 1983009808
        %v1854 = vunpack.c.0.s8 %v1853
        %v1855 = vlaneseq
        %v1856 = vshrl.u32 %v1855, 7
        %v1857 = vsub.s32 %v1854, %v1856
        %v1858 = vrot.slane %v1844, %v1857
        %v1859 = vcombine.high %v1851, %v1851
        %v1860 = vcombine.high %v1858, %v1858
        %v1861 = vcombine.high %v1783, %v1783
        %v1863 = vunpack.c.l.s4 1983009808
        %v1864 = vunpack.c.0.s8 %v1863
        %v1865 = vlaneseq
        %v1866 = vshrl.u32 %v1865, 7
        %v1867 = vsub.s32 %v1864, %v1866
        %v1868 = vrot.slane %v1783, %v1867
        %v1870 = vunpack.c.l.s4 1983009808
        %v1871 = vunpack.c.0.s8 %v1870
        %v1872 = vlaneseq
        %v1873 = vshrl.u32 %v1872, 7
        %v1874 = vsub.s32 %v1871, %v1873
        %v1875 = vrot.slane %v1861, %v1874
        %v1876 = vcombine.high %v1868, %v1868
        %v1877 = vcombine.high %v1875, %v1875
        %v1878 = vcombine.high %v1784, %v1784
        %v1880 = vunpack.c.l.s4 1983009808
        %v1881 = vunpack.c.0.s8 %v1880
        %v1882 = vlaneseq
        %v1883 = vshrl.u32 %v1882, 7
        %v1884 = vsub.s32 %v1881, %v1883
        %v1885 = vrot.slane %v1784, %v1884
        %v1887 = vunpack.c.l.s4 1983009808
        %v1888 = vunpack.c.0.s8 %v1887
        %v1889 = vlaneseq
        %v1890 = vshrl.u32 %v1889, 7
        %v1891 = vsub.s32 %v1888, %v1890
        %v1892 = vrot.slane %v1878, %v1891
        %v1893 = vcombine.high %v1885, %v1885
        %v1894 = vcombine.high %v1892, %v1892
        %v1896 = vunpack.c.l.s4 1983009808
        %v1897 = vunpack.c.0.s8 %v1896
        %v1898 = vlaneseq
        %v1899 = vshrl.u32 %v1898, 7
        %v1900 = vsub.s32 %v1897, %v1899
        %v1901 = vrot.slane %v1785, %v1900
        %v1927 = vpack.c.bf16 %v1800, %v1800
        %v1928 = vpack.c.bf16 %v1808, %v1808
        %v1929 = vpack.c.bf16 %v1807, %v1807
        %v1930 = vpack.c.bf16 %v1809, %v1809
        %v1931 = vpack.c.bf16 %v1817, %v1817
        %v1932 = vpack.c.bf16 %v1825, %v1825
        %v1933 = vpack.c.bf16 %v1824, %v1824
        %v1934 = vpack.c.bf16 %v1826, %v1826
        %v1935 = vpack.c.bf16 %v1834, %v1834
        %v1936 = vpack.c.bf16 %v1842, %v1842
        %v1937 = vpack.c.bf16 %v1841, %v1841
        %v1938 = vpack.c.bf16 %v1843, %v1843
        %v1939 = vpack.c.bf16 %v1851, %v1851
        %v1940 = vpack.c.bf16 %v1859, %v1859
        %v1941 = vpack.c.bf16 %v1858, %v1858
        %v1942 = vpack.c.bf16 %v1860, %v1860
        %v1943 = vpack.c.bf16 %v1868, %v1868
        %v1944 = vpack.c.bf16 %v1876, %v1876
        %v1945 = vpack.c.bf16 %v1875, %v1875
        %v1946 = vpack.c.bf16 %v1877, %v1877
        %v1947 = vpack.c.bf16 %v1885, %v1885
        %v1948 = vpack.c.bf16 %v1893, %v1893
        %v1949 = vpack.c.bf16 %v1892, %v1892
        %v1950 = vpack.c.bf16 %v1894, %v1894
        %v1951 = vpack.c.bf16 %v1901, %v1901
        %v1952 = vld [vmem:[%s1741] sm:$0xff]
        %v1953 = vld [vmem:[%s1741 + $0x8] sm:$0xff]
        %v1954 = vld [vmem:[%s1741 + $0x10] sm:$0xff]
        %v1955 = vld [vmem:[%s1741 + $0x18] sm:$0xff]
        %v1956 = vld [vmem:[%s1741 + $0x20] sm:$0xff]
        %v1957 = vld [vmem:[%s1741 + $0x28] sm:$0xff]
        %v1958 = vld [vmem:[%s1741 + $0x30] sm:$0xff]
        %v1959 = vld [vmem:[%s1741 + $0x38] sm:$0xff]
        %v1960 = vld [vmem:[%s1741 + $0x40] sm:$0xff]
        %v1961 = vld [vmem:[%s1741 + $0x48] sm:$0xff]
        %v1962 = vld [vmem:[%s1741 + $0x50] sm:$0xff]
        %v1963 = vld [vmem:[%s1741 + $0x58] sm:$0xff]
        %v1964 = vld [vmem:[%s1741 + $0x60] sm:$0xff]
        %v1965 = vld [vmem:[%s1741 + $0x68] sm:$0xff]
        %v1966 = vld [vmem:[%s1741 + $0x70] sm:$0xff]
        %v1967 = vld [vmem:[%s1741 + $0x78] sm:$0xff]
        %v1968 = vld [vmem:[%s1741 + $0x80] sm:$0xff]
        %v1969 = vld [vmem:[%s1741 + $0x88] sm:$0xff]
        %v1970 = vld [vmem:[%s1741 + $0x90] sm:$0xff]
        %v1971 = vld [vmem:[%s1741 + $0x98] sm:$0xff]
        %v1972 = vld [vmem:[%s1741 + $0xa0] sm:$0xff]
        %v1973 = vld [vmem:[%s1741 + $0xa8] sm:$0xff]
        %v1974 = vld [vmem:[%s1741 + $0xb0] sm:$0xff]
        %v1975 = vld [vmem:[%s1741 + $0xb8] sm:$0xff]
        %v1976 = vld [vmem:[%s1741 + $0xc0] sm:$0xff]
        %v1977 = vld [vmem:[%s1741 + $0xc8] sm:$0xff]
        %v1978 = vld [vmem:[%s1741 + $0xd0] sm:$0xff]
        %v1979 = vld [vmem:[%s1741 + $0xd8] sm:$0xff]
        %v1980 = vld [vmem:[%s1741 + $0xe0] sm:$0xff]
        %v1981 = vld [vmem:[%s1741 + $0xe8] sm:$0xff]
        %v1982 = vld [vmem:[%s1741 + $0xf0] sm:$0xff]
        %v1983 = vld [vmem:[%s1741 + $0xf8] sm:$0xff]
        %v1984 = vld [vmem:[%s1741 + $0x100] sm:$0xff]
        %v1985 = vld [vmem:[%s1741 + $0x108] sm:$0xff]
        %v1986 = vld [vmem:[%s1741 + $0x110] sm:$0xff]
        %v1987 = vld [vmem:[%s1741 + $0x118] sm:$0xff]
        %v1988 = vld [vmem:[%s1741 + $0x120] sm:$0xff]
        %v1989 = vld [vmem:[%s1741 + $0x128] sm:$0xff]
        %v1990 = vld [vmem:[%s1741 + $0x130] sm:$0xff]
        %v1991 = vld [vmem:[%s1741 + $0x138] sm:$0xff]
        %v1992 = vld [vmem:[%s1741 + $0x140] sm:$0xff]
        %v1993 = vld [vmem:[%s1741 + $0x148] sm:$0xff]
        %v1994 = vld [vmem:[%s1741 + $0x150] sm:$0xff]
        %v1995 = vld [vmem:[%s1741 + $0x158] sm:$0xff]
        %v1996 = vld [vmem:[%s1741 + $0x160] sm:$0xff]
        %v1997 = vld [vmem:[%s1741 + $0x168] sm:$0xff]
        %v1998 = vld [vmem:[%s1741 + $0x170] sm:$0xff]
        %v1999 = vld [vmem:[%s1741 + $0x178] sm:$0xff]
        %v2000 = vld [vmem:[%s1741 + $0x180] sm:$0xff]
        %v2001 = vld [vmem:[%s1741 + $0x188] sm:$0xff]
        %v2002 = vld [vmem:[%s1741 + $0x190] sm:$0xff]
        %v2003 = vld [vmem:[%s1741 + $0x198] sm:$0xff]
        %v2004 = vld [vmem:[%s1741 + $0x1a0] sm:$0xff]
        %v2005 = vld [vmem:[%s1741 + $0x1a8] sm:$0xff]
        %v2006 = vld [vmem:[%s1741 + $0x1b0] sm:$0xff]
        %v2007 = vld [vmem:[%s1741 + $0x1b8] sm:$0xff]
        %v2008 = vld [vmem:[%s1741 + $0x1c0] sm:$0xff]
        %v2009 = vld [vmem:[%s1741 + $0x1c8] sm:$0xff]
        %v2010 = vld [vmem:[%s1741 + $0x1d0] sm:$0xff]
        %v2011 = vld [vmem:[%s1741 + $0x1d8] sm:$0xff]
        %v2012 = vld [vmem:[%s1741 + $0x1e0] sm:$0xff]
        %v2013 = vld [vmem:[%s1741 + $0x1e8] sm:$0xff]
        %v2014 = vld [vmem:[%s1741 + $0x1f0] sm:$0xff]
        %v2015 = vld [vmem:[%s1741 + $0x1f8] sm:$0xff]
        %v2016 = vld [vmem:[%s1741 + $0x200] sm:$0xff]
        %v2017 = vld [vmem:[%s1741 + $0x208] sm:$0xff]
        %v2018 = vld [vmem:[%s1741 + $0x210] sm:$0xff]
        %v2019 = vld [vmem:[%s1741 + $0x218] sm:$0xff]
        %v2020 = vld [vmem:[%s1741 + $0x220] sm:$0xff]
        %v2021 = vld [vmem:[%s1741 + $0x228] sm:$0xff]
        %v2022 = vld [vmem:[%s1741 + $0x230] sm:$0xff]
        %v2023 = vld [vmem:[%s1741 + $0x238] sm:$0xff]
        %v2024 = vld [vmem:[%s1741 + $0x240] sm:$0xff]
        %v2025 = vld [vmem:[%s1741 + $0x248] sm:$0xff]
        %v2026 = vld [vmem:[%s1741 + $0x250] sm:$0xff]
        %v2027 = vld [vmem:[%s1741 + $0x258] sm:$0xff]
        %v2028 = vld [vmem:[%s1741 + $0x260] sm:$0xff]
        %v2029 = vld [vmem:[%s1741 + $0x268] sm:$0xff]
        %v2030 = vld [vmem:[%s1741 + $0x270] sm:$0xff]
        %v2031 = vld [vmem:[%s1741 + $0x278] sm:$0xff]
        %v2032 = vld [vmem:[%s1741 + $0x280] sm:$0xff]
        %v2033 = vld [vmem:[%s1741 + $0x288] sm:$0xff]
        %v2034 = vld [vmem:[%s1741 + $0x290] sm:$0xff]
        %v2035 = vld [vmem:[%s1741 + $0x298] sm:$0xff]
        %v2036 = vld [vmem:[%s1741 + $0x2a0] sm:$0xff]
        %v2037 = vld [vmem:[%s1741 + $0x2a8] sm:$0xff]
        %v2038 = vld [vmem:[%s1741 + $0x2b0] sm:$0xff]
        %v2039 = vld [vmem:[%s1741 + $0x2b8] sm:$0xff]
        %v2040 = vld [vmem:[%s1741 + $0x2c0] sm:$0xff]
        %v2041 = vld [vmem:[%s1741 + $0x2c8] sm:$0xff]
        %v2042 = vld [vmem:[%s1741 + $0x2d0] sm:$0xff]
        %v2043 = vld [vmem:[%s1741 + $0x2d8] sm:$0xff]
        %v2044 = vld [vmem:[%s1741 + $0x2e0] sm:$0xff]
        %v2045 = vld [vmem:[%s1741 + $0x2e8] sm:$0xff]
        %v2046 = vld [vmem:[%s1741 + $0x2f0] sm:$0xff]
        %v2047 = vld [vmem:[%s1741 + $0x2f8] sm:$0xff]
        %v2048 = vld [vmem:[%s1741 + $0x300] sm:$0xff]
        %v2049 = vld [vmem:[%s1741 + $0x308] sm:$0xff]
        %v2050 = vld [vmem:[%s1741 + $0x310] sm:$0xff]
        %v2051 = vld [vmem:[%s1741 + $0x318] sm:$0xff]
        %v2052 = vld [vmem:[%s1741 + $0x320] sm:$0xff]
        %v2053 = vld [vmem:[%s1741 + $0x328] sm:$0xff]
        %v2054 = vld [vmem:[%s1741 + $0x330] sm:$0xff]
        %v2055 = vld [vmem:[%s1741 + $0x338] sm:$0xff]
        %v2056 = vld [vmem:[%s1741 + $0x340] sm:$0xff]
        %v2057 = vld [vmem:[%s1741 + $0x348] sm:$0xff]
        %v2058 = vld [vmem:[%s1741 + $0x350] sm:$0xff]
        %v2059 = vld [vmem:[%s1741 + $0x358] sm:$0xff]
        %v2060 = vld [vmem:[%s1741 + $0x360] sm:$0xff]
        %v2061 = vld [vmem:[%s1741 + $0x368] sm:$0xff]
        %v2062 = vld [vmem:[%s1741 + $0x370] sm:$0xff]
        %v2063 = vld [vmem:[%s1741 + $0x378] sm:$0xff]
        %v2064 = vld [vmem:[%s1741 + $0x380] sm:$0xff]
        %v2065 = vld [vmem:[%s1741 + $0x388] sm:$0xff]
        %v2066 = vld [vmem:[%s1741 + $0x390] sm:$0xff]
        %v2067 = vld [vmem:[%s1741 + $0x398] sm:$0xff]
        %v2068 = vld [vmem:[%s1741 + $0x3a0] sm:$0xff]
        %v2069 = vld [vmem:[%s1741 + $0x3a8] sm:$0xff]
        %v2070 = vld [vmem:[%s1741 + $0x3b0] sm:$0xff]
        %v2071 = vld [vmem:[%s1741 + $0x3b8] sm:$0xff]
        %v2072 = vld [vmem:[%s1741 + $0x3c0] sm:$0xff]
        %v2073 = vld [vmem:[%s1741 + $0x3c8] sm:$0xff]
        %v2074 = vld [vmem:[%s1741 + $0x3d0] sm:$0xff]
        %v2075 = vld [vmem:[%s1741 + $0x3d8] sm:$0xff]
        %v2076 = vld [vmem:[%s1741 + $0x3e0] sm:$0xff]
        %v2077 = vld [vmem:[%s1741 + $0x3e8] sm:$0xff]
        %v2078 = vld [vmem:[%s1741 + $0x3f0] sm:$0xff]
        %v2079 = vld [vmem:[%s1741 + $0x3f8] sm:$0xff]
        %v2080 = vld [vmem:[%s1741 + $0x400] sm:$0xff]
        %v2081 = vld [vmem:[%s1741 + $0x408] sm:$0xff]
        %v2082 = vld [vmem:[%s1741 + $0x410] sm:$0xff]
        %v2083 = vld [vmem:[%s1741 + $0x418] sm:$0xff]
        %v2084 = vld [vmem:[%s1741 + $0x420] sm:$0xff]
        %v2085 = vld [vmem:[%s1741 + $0x428] sm:$0xff]
        %v2086 = vld [vmem:[%s1741 + $0x430] sm:$0xff]
        %v2087 = vld [vmem:[%s1741 + $0x438] sm:$0xff]
        %v2088 = vld [vmem:[%s1741 + $0x440] sm:$0xff]
        %v2089 = vld [vmem:[%s1741 + $0x448] sm:$0xff]
        %v2090 = vld [vmem:[%s1741 + $0x450] sm:$0xff]
        %v2091 = vld [vmem:[%s1741 + $0x458] sm:$0xff]
        %v2092 = vld [vmem:[%s1741 + $0x460] sm:$0xff]
        %v2093 = vld [vmem:[%s1741 + $0x468] sm:$0xff]
        %v2094 = vld [vmem:[%s1741 + $0x470] sm:$0xff]
        %v2095 = vld [vmem:[%s1741 + $0x478] sm:$0xff]
        %v2096 = vld [vmem:[%s1741 + $0x480] sm:$0xff]
        %v2097 = vld [vmem:[%s1741 + $0x488] sm:$0xff]
        %v2098 = vld [vmem:[%s1741 + $0x490] sm:$0xff]
        %v2099 = vld [vmem:[%s1741 + $0x498] sm:$0xff]
        %v2100 = vld [vmem:[%s1741 + $0x4a0] sm:$0xff]
        %v2101 = vld [vmem:[%s1741 + $0x4a8] sm:$0xff]
        %v2102 = vld [vmem:[%s1741 + $0x4b0] sm:$0xff]
        %v2103 = vld [vmem:[%s1741 + $0x4b8] sm:$0xff]
        %v2104 = vld [vmem:[%s1741 + $0x4c0] sm:$0xff]
        %v2105 = vld [vmem:[%s1741 + $0x4c8] sm:$0xff]
        %v2106 = vld [vmem:[%s1741 + $0x4d0] sm:$0xff]
        %v2107 = vld [vmem:[%s1741 + $0x4d8] sm:$0xff]
        %v2108 = vld [vmem:[%s1741 + $0x4e0] sm:$0xff]
        %v2109 = vld [vmem:[%s1741 + $0x4e8] sm:$0xff]
        %v2110 = vld [vmem:[%s1741 + $0x4f0] sm:$0xff]
        %v2111 = vld [vmem:[%s1741 + $0x4f8] sm:$0xff]
        %v2112 = vld [vmem:[%s1741 + $0x500] sm:$0xff]
        %v2113 = vld [vmem:[%s1741 + $0x508] sm:$0xff]
        %v2114 = vld [vmem:[%s1741 + $0x510] sm:$0xff]
        %v2115 = vld [vmem:[%s1741 + $0x518] sm:$0xff]
        %v2116 = vld [vmem:[%s1741 + $0x520] sm:$0xff]
        %v2117 = vld [vmem:[%s1741 + $0x528] sm:$0xff]
        %v2118 = vld [vmem:[%s1741 + $0x530] sm:$0xff]
        %v2119 = vld [vmem:[%s1741 + $0x538] sm:$0xff]
        %v2120 = vld [vmem:[%s1741 + $0x540] sm:$0xff]
        %v2121 = vld [vmem:[%s1741 + $0x548] sm:$0xff]
        %v2122 = vld [vmem:[%s1741 + $0x550] sm:$0xff]
        %v2123 = vld [vmem:[%s1741 + $0x558] sm:$0xff]
        %v2124 = vld [vmem:[%s1741 + $0x560] sm:$0xff]
        %v2125 = vld [vmem:[%s1741 + $0x568] sm:$0xff]
        %v2126 = vld [vmem:[%s1741 + $0x570] sm:$0xff]
        %v2127 = vld [vmem:[%s1741 + $0x578] sm:$0xff]
        %v2128 = vld [vmem:[%s1741 + $0x580] sm:$0xff]
        %v2129 = vld [vmem:[%s1741 + $0x588] sm:$0xff]
        %v2130 = vld [vmem:[%s1741 + $0x590] sm:$0xff]
        %v2131 = vld [vmem:[%s1741 + $0x598] sm:$0xff]
        %v2132 = vld [vmem:[%s1741 + $0x5a0] sm:$0xff]
        %v2133 = vld [vmem:[%s1741 + $0x5a8] sm:$0xff]
        %v2134 = vld [vmem:[%s1741 + $0x5b0] sm:$0xff]
        %v2135 = vld [vmem:[%s1741 + $0x5b8] sm:$0xff]
        %v2136 = vld [vmem:[%s1741 + $0x5c0] sm:$0xff]
        %v2137 = vld [vmem:[%s1741 + $0x5c8] sm:$0xff]
        %v2138 = vld [vmem:[%s1741 + $0x5d0] sm:$0xff]
        %v2139 = vld [vmem:[%s1741 + $0x5d8] sm:$0xff]
        %v2140 = vld [vmem:[%s1741 + $0x5e0] sm:$0xff]
        %v2141 = vld [vmem:[%s1741 + $0x5e8] sm:$0xff]
        %v2142 = vld [vmem:[%s1741 + $0x5f0] sm:$0xff]
        %v2143 = vld [vmem:[%s1741 + $0x5f8] sm:$0xff]
        %v2144 = vld [vmem:[%s1741 + $0x600] sm:$0xff]
        %v2145 = vld [vmem:[%s1741 + $0x608] sm:$0xff]
        %v2146 = vld [vmem:[%s1741 + $0x610] sm:$0xff]
        %v2147 = vld [vmem:[%s1741 + $0x618] sm:$0xff]
        %v2148 = vld [vmem:[%s1741 + $0x620] sm:$0xff]
        %v2149 = vld [vmem:[%s1741 + $0x628] sm:$0xff]
        %v2150 = vld [vmem:[%s1741 + $0x630] sm:$0xff]
        %v2151 = vld [vmem:[%s1741 + $0x638] sm:$0xff]
        %v2152 = vld [vmem:[%s1741 + $0x640] sm:$0xff]
        %v2153 = vld [vmem:[%s1741 + $0x648] sm:$0xff]
        %v2154 = vld [vmem:[%s1741 + $0x650] sm:$0xff]
        %v2155 = vld [vmem:[%s1741 + $0x658] sm:$0xff]
        %v2156 = vld [vmem:[%s1741 + $0x660] sm:$0xff]
        %v2157 = vld [vmem:[%s1741 + $0x668] sm:$0xff]
        %v2158 = vld [vmem:[%s1741 + $0x670] sm:$0xff]
        %v2159 = vld [vmem:[%s1741 + $0x678] sm:$0xff]
        %v2160 = vld [vmem:[%s1741 + $0x680] sm:$0xff]
        %v2161 = vld [vmem:[%s1741 + $0x688] sm:$0xff]
        %v2162 = vld [vmem:[%s1741 + $0x690] sm:$0xff]
        %v2163 = vld [vmem:[%s1741 + $0x698] sm:$0xff]
        %v2164 = vld [vmem:[%s1741 + $0x6a0] sm:$0xff]
        %v2165 = vld [vmem:[%s1741 + $0x6a8] sm:$0xff]
        %v2166 = vld [vmem:[%s1741 + $0x6b0] sm:$0xff]
        %v2167 = vld [vmem:[%s1741 + $0x6b8] sm:$0xff]
        %v2168 = vld [vmem:[%s1741 + $0x6c0] sm:$0xff]
        %v2169 = vld [vmem:[%s1741 + $0x6c8] sm:$0xff]
        %v2170 = vld [vmem:[%s1741 + $0x6d0] sm:$0xff]
        %v2171 = vld [vmem:[%s1741 + $0x6d8] sm:$0xff]
        %v2172 = vld [vmem:[%s1741 + $0x6e0] sm:$0xff]
        %v2173 = vld [vmem:[%s1741 + $0x6e8] sm:$0xff]
        %v2174 = vld [vmem:[%s1741 + $0x6f0] sm:$0xff]
        %v2175 = vld [vmem:[%s1741 + $0x6f8] sm:$0xff]
        %v2176 = vld [vmem:[%s1741 + $0x700] sm:$0xff]
        %v2177 = vld [vmem:[%s1741 + $0x708] sm:$0xff]
        %v2178 = vld [vmem:[%s1741 + $0x710] sm:$0xff]
        %v2179 = vld [vmem:[%s1741 + $0x718] sm:$0xff]
        %v2180 = vld [vmem:[%s1741 + $0x720] sm:$0xff]
        %v2181 = vld [vmem:[%s1741 + $0x728] sm:$0xff]
        %v2182 = vld [vmem:[%s1741 + $0x730] sm:$0xff]
        %v2183 = vld [vmem:[%s1741 + $0x738] sm:$0xff]
        %v2184 = vld [vmem:[%s1741 + $0x740] sm:$0xff]
        %v2185 = vld [vmem:[%s1741 + $0x748] sm:$0xff]
        %v2186 = vld [vmem:[%s1741 + $0x750] sm:$0xff]
        %v2187 = vld [vmem:[%s1741 + $0x758] sm:$0xff]
        %v2188 = vld [vmem:[%s1741 + $0x760] sm:$0xff]
        %v2189 = vld [vmem:[%s1741 + $0x768] sm:$0xff]
        %v2190 = vld [vmem:[%s1741 + $0x770] sm:$0xff]
        %v2191 = vld [vmem:[%s1741 + $0x778] sm:$0xff]
        %v2192 = vld [vmem:[%s1741 + $0x780] sm:$0xff]
        %v2193 = vld [vmem:[%s1741 + $0x788] sm:$0xff]
        %v2194 = vld [vmem:[%s1741 + $0x790] sm:$0xff]
        %v2195 = vld [vmem:[%s1741 + $0x798] sm:$0xff]
        %v2196 = vld [vmem:[%s1741 + $0x7a0] sm:$0xff]
        %v2197 = vld [vmem:[%s1741 + $0x7a8] sm:$0xff]
        %v2198 = vld [vmem:[%s1741 + $0x7b0] sm:$0xff]
        %v2199 = vld [vmem:[%s1741 + $0x7b8] sm:$0xff]
        %v2200 = vld [vmem:[%s1741 + $0x7c0] sm:$0xff]
        %v2201 = vld [vmem:[%s1741 + $0x7c8] sm:$0xff]
        %v2202 = vld [vmem:[%s1741 + $0x7d0] sm:$0xff]
        %v2203 = vld [vmem:[%s1741 + $0x7d8] sm:$0xff]
        %v2204 = vld [vmem:[%s1741 + $0x7e0] sm:$0xff]
        %v2205 = vld [vmem:[%s1741 + $0x7e8] sm:$0xff]
        %v2206 = vld [vmem:[%s1741 + $0x7f0] sm:$0xff]
        %v2207 = vld [vmem:[%s1741 + $0x7f8] sm:$0xff]
        %v2208 = vld [vmem:[%s1741 + $0x800] sm:$0xff]
        %v2209 = vld [vmem:[%s1741 + $0x808] sm:$0xff]
        %v2210 = vld [vmem:[%s1741 + $0x810] sm:$0xff]
        %v2211 = vld [vmem:[%s1741 + $0x818] sm:$0xff]
        %v2212 = vld [vmem:[%s1741 + $0x820] sm:$0xff]
        %v2213 = vld [vmem:[%s1741 + $0x828] sm:$0xff]
        %v2214 = vld [vmem:[%s1741 + $0x830] sm:$0xff]
        %v2215 = vld [vmem:[%s1741 + $0x838] sm:$0xff]
        %v2216 = vld [vmem:[%s1741 + $0x840] sm:$0xff]
        %v2217 = vld [vmem:[%s1741 + $0x848] sm:$0xff]
        %v2218 = vld [vmem:[%s1741 + $0x850] sm:$0xff]
        %v2219 = vld [vmem:[%s1741 + $0x858] sm:$0xff]
        %v2220 = vld [vmem:[%s1741 + $0x860] sm:$0xff]
        %v2221 = vld [vmem:[%s1741 + $0x868] sm:$0xff]
        %v2222 = vld [vmem:[%s1741 + $0x870] sm:$0xff]
        %v2223 = vld [vmem:[%s1741 + $0x878] sm:$0xff]
        %v2224 = vld [vmem:[%s1741 + $0x880] sm:$0xff]
        %v2225 = vld [vmem:[%s1741 + $0x888] sm:$0xff]
        %v2226 = vld [vmem:[%s1741 + $0x890] sm:$0xff]
        %v2227 = vld [vmem:[%s1741 + $0x898] sm:$0xff]
        %v2228 = vld [vmem:[%s1741 + $0x8a0] sm:$0xff]
        %v2229 = vld [vmem:[%s1741 + $0x8a8] sm:$0xff]
        %v2230 = vld [vmem:[%s1741 + $0x8b0] sm:$0xff]
        %v2231 = vld [vmem:[%s1741 + $0x8b8] sm:$0xff]
        %v2232 = vld [vmem:[%s1741 + $0x8c0] sm:$0xff]
        %v2233 = vld [vmem:[%s1741 + $0x8c8] sm:$0xff]
        %v2234 = vld [vmem:[%s1741 + $0x8d0] sm:$0xff]
        %v2235 = vld [vmem:[%s1741 + $0x8d8] sm:$0xff]
        %v2236 = vld [vmem:[%s1741 + $0x8e0] sm:$0xff]
        %v2237 = vld [vmem:[%s1741 + $0x8e8] sm:$0xff]
        %v2238 = vld [vmem:[%s1741 + $0x8f0] sm:$0xff]
        %v2239 = vld [vmem:[%s1741 + $0x8f8] sm:$0xff]
        %v2240 = vld [vmem:[%s1741 + $0x900] sm:$0xff]
        %v2241 = vld [vmem:[%s1741 + $0x908] sm:$0xff]
        %v2242 = vld [vmem:[%s1741 + $0x910] sm:$0xff]
        %v2243 = vld [vmem:[%s1741 + $0x918] sm:$0xff]
        %v2244 = vld [vmem:[%s1741 + $0x920] sm:$0xff]
        %v2245 = vld [vmem:[%s1741 + $0x928] sm:$0xff]
        %v2246 = vld [vmem:[%s1741 + $0x930] sm:$0xff]
        %v2247 = vld [vmem:[%s1741 + $0x938] sm:$0xff]
        %v2248 = vld [vmem:[%s1741 + $0x940] sm:$0xff]
        %v2249 = vld [vmem:[%s1741 + $0x948] sm:$0xff]
        %v2250 = vld [vmem:[%s1741 + $0x950] sm:$0xff]
        %v2251 = vld [vmem:[%s1741 + $0x958] sm:$0xff]
        %v2252 = vld [vmem:[%s1741 + $0x960] sm:$0xff]
        %v2253 = vld [vmem:[%s1741 + $0x968] sm:$0xff]
        %v2254 = vld [vmem:[%s1741 + $0x970] sm:$0xff]
        %v2255 = vld [vmem:[%s1741 + $0x978] sm:$0xff]
        %v2256 = vld [vmem:[%s1741 + $0x980] sm:$0xff]
        %v2257 = vld [vmem:[%s1741 + $0x988] sm:$0xff]
        %v2258 = vld [vmem:[%s1741 + $0x990] sm:$0xff]
        %v2259 = vld [vmem:[%s1741 + $0x998] sm:$0xff]
        %v2260 = vld [vmem:[%s1741 + $0x9a0] sm:$0xff]
        %v2261 = vld [vmem:[%s1741 + $0x9a8] sm:$0xff]
        %v2262 = vld [vmem:[%s1741 + $0x9b0] sm:$0xff]
        %v2263 = vld [vmem:[%s1741 + $0x9b8] sm:$0xff]
        %v2264 = vld [vmem:[%s1741 + $0x9c0] sm:$0xff]
        %v2265 = vld [vmem:[%s1741 + $0x9c8] sm:$0xff]
        %v2266 = vld [vmem:[%s1741 + $0x9d0] sm:$0xff]
        %v2267 = vld [vmem:[%s1741 + $0x9d8] sm:$0xff]
        %v2268 = vld [vmem:[%s1741 + $0x9e0] sm:$0xff]
        %v2269 = vld [vmem:[%s1741 + $0x9e8] sm:$0xff]
        %v2270 = vld [vmem:[%s1741 + $0x9f0] sm:$0xff]
        %v2271 = vld [vmem:[%s1741 + $0x9f8] sm:$0xff]
        %v2272 = vld [vmem:[%s1741 + $0xa00] sm:$0xff]
        %v2273 = vld [vmem:[%s1741 + $0xa08] sm:$0xff]
        %v2274 = vld [vmem:[%s1741 + $0xa10] sm:$0xff]
        %v2275 = vld [vmem:[%s1741 + $0xa18] sm:$0xff]
        %v2276 = vld [vmem:[%s1741 + $0xa20] sm:$0xff]
        %v2277 = vld [vmem:[%s1741 + $0xa28] sm:$0xff]
        %v2278 = vld [vmem:[%s1741 + $0xa30] sm:$0xff]
        %v2279 = vld [vmem:[%s1741 + $0xa38] sm:$0xff]
        %v2280 = vld [vmem:[%s1741 + $0xa40] sm:$0xff]
        %v2281 = vld [vmem:[%s1741 + $0xa48] sm:$0xff]
        %v2282 = vld [vmem:[%s1741 + $0xa50] sm:$0xff]
        %v2283 = vld [vmem:[%s1741 + $0xa58] sm:$0xff]
        %v2284 = vld [vmem:[%s1741 + $0xa60] sm:$0xff]
        %v2285 = vld [vmem:[%s1741 + $0xa68] sm:$0xff]
        %v2286 = vld [vmem:[%s1741 + $0xa70] sm:$0xff]
        %v2287 = vld [vmem:[%s1741 + $0xa78] sm:$0xff]
        %v2288 = vld [vmem:[%s1741 + $0xa80] sm:$0xff]
        %v2289 = vld [vmem:[%s1741 + $0xa88] sm:$0xff]
        %v2290 = vld [vmem:[%s1741 + $0xa90] sm:$0xff]
        %v2291 = vld [vmem:[%s1741 + $0xa98] sm:$0xff]
        %v2292 = vld [vmem:[%s1741 + $0xaa0] sm:$0xff]
        %v2293 = vld [vmem:[%s1741 + $0xaa8] sm:$0xff]
        %v2294 = vld [vmem:[%s1741 + $0xab0] sm:$0xff]
        %v2295 = vld [vmem:[%s1741 + $0xab8] sm:$0xff]
        %v2296 = vld [vmem:[%s1741 + $0xac0] sm:$0xff]
        %v2297 = vld [vmem:[%s1741 + $0xac8] sm:$0xff]
        %v2298 = vld [vmem:[%s1741 + $0xad0] sm:$0xff]
        %v2299 = vld [vmem:[%s1741 + $0xad8] sm:$0xff]
        %v2300 = vld [vmem:[%s1741 + $0xae0] sm:$0xff]
        %v2301 = vld [vmem:[%s1741 + $0xae8] sm:$0xff]
        %v2302 = vld [vmem:[%s1741 + $0xaf0] sm:$0xff]
        %v2303 = vld [vmem:[%s1741 + $0xaf8] sm:$0xff]
        %v2304 = vld [vmem:[%s1741 + $0xb00] sm:$0xff]
        %v2305 = vld [vmem:[%s1741 + $0xb08] sm:$0xff]
        %v2306 = vld [vmem:[%s1741 + $0xb10] sm:$0xff]
        %v2307 = vld [vmem:[%s1741 + $0xb18] sm:$0xff]
        %v2308 = vld [vmem:[%s1741 + $0xb20] sm:$0xff]
        %v2309 = vld [vmem:[%s1741 + $0xb28] sm:$0xff]
        %v2310 = vld [vmem:[%s1741 + $0xb30] sm:$0xff]
        %v2311 = vld [vmem:[%s1741 + $0xb38] sm:$0xff]
        %v2312 = vld [vmem:[%s1741 + $0xb40] sm:$0xff]
        %v2313 = vld [vmem:[%s1741 + $0xb48] sm:$0xff]
        %v2314 = vld [vmem:[%s1741 + $0xb50] sm:$0xff]
        %v2315 = vld [vmem:[%s1741 + $0xb58] sm:$0xff]
        %v2316 = vld [vmem:[%s1741 + $0xb60] sm:$0xff]
        %v2317 = vld [vmem:[%s1741 + $0xb68] sm:$0xff]
        %v2318 = vld [vmem:[%s1741 + $0xb70] sm:$0xff]
        %v2319 = vld [vmem:[%s1741 + $0xb78] sm:$0xff]
        %v2320 = vld [vmem:[%s1741 + $0xb80] sm:$0xff]
        %v2321 = vld [vmem:[%s1741 + $0xb88] sm:$0xff]
        %v2322 = vld [vmem:[%s1741 + $0xb90] sm:$0xff]
        %v2323 = vld [vmem:[%s1741 + $0xb98] sm:$0xff]
        %v2324 = vld [vmem:[%s1741 + $0xba0] sm:$0xff]
        %v2325 = vld [vmem:[%s1741 + $0xba8] sm:$0xff]
        %v2326 = vld [vmem:[%s1741 + $0xbb0] sm:$0xff]
        %v2327 = vld [vmem:[%s1741 + $0xbb8] sm:$0xff]
        %v2328 = vld [vmem:[%s1741 + $0xbc0] sm:$0xff]
        %v2329 = vld [vmem:[%s1741 + $0xbc8] sm:$0xff]
        %v2330 = vld [vmem:[%s1741 + $0xbd0] sm:$0xff]
        %v2331 = vld [vmem:[%s1741 + $0xbd8] sm:$0xff]
        %v2332 = vld [vmem:[%s1741 + $0xbe0] sm:$0xff]
        %v2333 = vld [vmem:[%s1741 + $0xbe8] sm:$0xff]
        %v2334 = vld [vmem:[%s1741 + $0xbf0] sm:$0xff]
        %v2335 = vld [vmem:[%s1741 + $0xbf8] sm:$0xff]
        %v2336 = vld [vmem:[%s1741 + $0xc00] sm:$0xff]
        %v2337 = vld [vmem:[%s1741 + $0xc08] sm:$0xff]
        %v2338 = vld [vmem:[%s1741 + $0xc10] sm:$0xff]
        %v2339 = vld [vmem:[%s1741 + $0xc18] sm:$0xff]
        %v2340 = vld [vmem:[%s1741 + $0xc20] sm:$0xff]
        %v2341 = vld [vmem:[%s1741 + $0xc28] sm:$0xff]
        %v2342 = vld [vmem:[%s1741 + $0xc30] sm:$0xff]
        %v2343 = vld [vmem:[%s1741 + $0xc38] sm:$0xff]
        %v2344 = vld [vmem:[%s1741 + $0xc40] sm:$0xff]
        %v2345 = vld [vmem:[%s1741 + $0xc48] sm:$0xff]
        %v2346 = vld [vmem:[%s1741 + $0xc50] sm:$0xff]
        %v2347 = vld [vmem:[%s1741 + $0xc58] sm:$0xff]
        %v2348 = vld [vmem:[%s1741 + $0xc60] sm:$0xff]
        %v2349 = vld [vmem:[%s1741 + $0xc68] sm:$0xff]
        %v2350 = vld [vmem:[%s1741 + $0xc70] sm:$0xff]
        %v2351 = vld [vmem:[%s1741 + $0xc78] sm:$0xff]
        %v2352 = vld [vmem:[%s1741 + $0xc80] sm:$0xff]
        %v2353 = vld [vmem:[%s1741 + $0xc88] sm:$0xff]
        %v2354 = vld [vmem:[%s1741 + $0xc90] sm:$0xff]
        %v2355 = vld [vmem:[%s1741 + $0xc98] sm:$0xff]
        %v2356 = vld [vmem:[%s1741 + $0xca0] sm:$0xff]
        %v2357 = vld [vmem:[%s1741 + $0xca8] sm:$0xff]
        %v2358 = vld [vmem:[%s1741 + $0xcb0] sm:$0xff]
        %v2359 = vld [vmem:[%s1741 + $0xcb8] sm:$0xff]
        %v2360 = vld [vmem:[%s1741 + $0xcc0] sm:$0xff]
        %v2361 = vld [vmem:[%s1741 + $0xcc8] sm:$0xff]
        %v2362 = vld [vmem:[%s1741 + $0xcd0] sm:$0xff]
        %v2363 = vld [vmem:[%s1741 + $0xcd8] sm:$0xff]
        %v2364 = vld [vmem:[%s1741 + $0xce0] sm:$0xff]
        %v2365 = vld [vmem:[%s1741 + $0xce8] sm:$0xff]
        %v2366 = vld [vmem:[%s1741 + $0xcf0] sm:$0xff]
        %v2367 = vld [vmem:[%s1741 + $0xcf8] sm:$0xff]
        %v2368 = vld [vmem:[%s1741 + $0xd00] sm:$0xff]
        %v2369 = vld [vmem:[%s1741 + $0xd08] sm:$0xff]
        %v2370 = vld [vmem:[%s1741 + $0xd10] sm:$0xff]
        %v2371 = vld [vmem:[%s1741 + $0xd18] sm:$0xff]
        %v2372 = vld [vmem:[%s1741 + $0xd20] sm:$0xff]
        %v2373 = vld [vmem:[%s1741 + $0xd28] sm:$0xff]
        %v2374 = vld [vmem:[%s1741 + $0xd30] sm:$0xff]
        %v2375 = vld [vmem:[%s1741 + $0xd38] sm:$0xff]
        %v2376 = vld [vmem:[%s1741 + $0xd40] sm:$0xff]
        %v2377 = vld [vmem:[%s1741 + $0xd48] sm:$0xff]
        %v2378 = vld [vmem:[%s1741 + $0xd50] sm:$0xff]
        %v2379 = vld [vmem:[%s1741 + $0xd58] sm:$0xff]
        %v2380 = vld [vmem:[%s1741 + $0xd60] sm:$0xff]
        %v2381 = vld [vmem:[%s1741 + $0xd68] sm:$0xff]
        %v2382 = vld [vmem:[%s1741 + $0xd70] sm:$0xff]
        %v2383 = vld [vmem:[%s1741 + $0xd78] sm:$0xff]
        %v2384 = vld [vmem:[%s1741 + $0xd80] sm:$0xff]
        %v2385 = vld [vmem:[%s1741 + $0xd88] sm:$0xff]
        %v2386 = vld [vmem:[%s1741 + $0xd90] sm:$0xff]
        %v2387 = vld [vmem:[%s1741 + $0xd98] sm:$0xff]
        %v2388 = vld [vmem:[%s1741 + $0xda0] sm:$0xff]
        %v2389 = vld [vmem:[%s1741 + $0xda8] sm:$0xff]
        %v2390 = vld [vmem:[%s1741 + $0xdb0] sm:$0xff]
        %v2391 = vld [vmem:[%s1741 + $0xdb8] sm:$0xff]
        %v2392 = vld [vmem:[%s1741 + $0xdc0] sm:$0xff]
        %v2393 = vld [vmem:[%s1741 + $0xdc8] sm:$0xff]
        %v2394 = vld [vmem:[%s1741 + $0xdd0] sm:$0xff]
        %v2395 = vld [vmem:[%s1741 + $0xdd8] sm:$0xff]
        %v2396 = vld [vmem:[%s1741 + $0xde0] sm:$0xff]
        %v2397 = vld [vmem:[%s1741 + $0xde8] sm:$0xff]
        %v2398 = vld [vmem:[%s1741 + $0xdf0] sm:$0xff]
        %v2399 = vld [vmem:[%s1741 + $0xdf8] sm:$0xff]
        %v2400 = vld [vmem:[%s1741 + $0xe00] sm:$0xff]
        %v2401 = vld [vmem:[%s1741 + $0xe08] sm:$0xff]
        %v2402 = vld [vmem:[%s1741 + $0xe10] sm:$0xff]
        %v2403 = vld [vmem:[%s1741 + $0xe18] sm:$0xff]
        %v2404 = vld [vmem:[%s1741 + $0xe20] sm:$0xff]
        %v2405 = vld [vmem:[%s1741 + $0xe28] sm:$0xff]
        %v2406 = vld [vmem:[%s1741 + $0xe30] sm:$0xff]
        %v2407 = vld [vmem:[%s1741 + $0xe38] sm:$0xff]
        %v2408 = vld [vmem:[%s1741 + $0xe40] sm:$0xff]
        %v2409 = vld [vmem:[%s1741 + $0xe48] sm:$0xff]
        %v2410 = vld [vmem:[%s1741 + $0xe50] sm:$0xff]
        %v2411 = vld [vmem:[%s1741 + $0xe58] sm:$0xff]
        %v2412 = vld [vmem:[%s1741 + $0xe60] sm:$0xff]
        %v2413 = vld [vmem:[%s1741 + $0xe68] sm:$0xff]
        %v2414 = vld [vmem:[%s1741 + $0xe70] sm:$0xff]
        %v2415 = vld [vmem:[%s1741 + $0xe78] sm:$0xff]
        %v2416 = vld [vmem:[%s1741 + $0xe80] sm:$0xff]
        %v2417 = vld [vmem:[%s1741 + $0xe88] sm:$0xff]
        %v2418 = vld [vmem:[%s1741 + $0xe90] sm:$0xff]
        %v2419 = vld [vmem:[%s1741 + $0xe98] sm:$0xff]
        %v2420 = vld [vmem:[%s1741 + $0xea0] sm:$0xff]
        %v2421 = vld [vmem:[%s1741 + $0xea8] sm:$0xff]
        %v2422 = vld [vmem:[%s1741 + $0xeb0] sm:$0xff]
        %v2423 = vld [vmem:[%s1741 + $0xeb8] sm:$0xff]
        %v2424 = vld [vmem:[%s1741 + $0xec0] sm:$0xff]
        %v2425 = vld [vmem:[%s1741 + $0xec8] sm:$0xff]
        %v2426 = vld [vmem:[%s1741 + $0xed0] sm:$0xff]
        %v2427 = vld [vmem:[%s1741 + $0xed8] sm:$0xff]
        %v2428 = vld [vmem:[%s1741 + $0xee0] sm:$0xff]
        %v2429 = vld [vmem:[%s1741 + $0xee8] sm:$0xff]
        %v2430 = vld [vmem:[%s1741 + $0xef0] sm:$0xff]
        %v2431 = vld [vmem:[%s1741 + $0xef8] sm:$0xff]
        %v2432 = vld [vmem:[%s1741 + $0xf00] sm:$0xff]
        %v2433 = vld [vmem:[%s1741 + $0xf08] sm:$0xff]
        %v2434 = vld [vmem:[%s1741 + $0xf10] sm:$0xff]
        %v2435 = vld [vmem:[%s1741 + $0xf18] sm:$0xff]
        %v2436 = vld [vmem:[%s1741 + $0xf20] sm:$0xff]
        %v2437 = vld [vmem:[%s1741 + $0xf28] sm:$0xff]
        %v2438 = vld [vmem:[%s1741 + $0xf30] sm:$0xff]
        %v2439 = vld [vmem:[%s1741 + $0xf38] sm:$0xff]
        %v2440 = vld [vmem:[%s1741 + $0xf40] sm:$0xff]
        %v2441 = vld [vmem:[%s1741 + $0xf48] sm:$0xff]
        %v2442 = vld [vmem:[%s1741 + $0xf50] sm:$0xff]
        %v2443 = vld [vmem:[%s1741 + $0xf58] sm:$0xff]
        %v2444 = vld [vmem:[%s1741 + $0xf60] sm:$0xff]
        %v2445 = vld [vmem:[%s1741 + $0xf68] sm:$0xff]
        %v2446 = vld [vmem:[%s1741 + $0xf70] sm:$0xff]
        %v2447 = vld [vmem:[%s1741 + $0xf78] sm:$0xff]
        %v2448 = vld [vmem:[%s1741 + $0xf80] sm:$0xff]
        %v2449 = vld [vmem:[%s1741 + $0xf88] sm:$0xff]
        %v2450 = vld [vmem:[%s1741 + $0xf90] sm:$0xff]
        %v2451 = vld [vmem:[%s1741 + $0xf98] sm:$0xff]
        %v2452 = vld [vmem:[%s1741 + $0xfa0] sm:$0xff]
        %v2453 = vld [vmem:[%s1741 + $0xfa8] sm:$0xff]
        %v2454 = vld [vmem:[%s1741 + $0xfb0] sm:$0xff]
        %v2455 = vld [vmem:[%s1741 + $0xfb8] sm:$0xff]
        %v2456 = vld [vmem:[%s1741 + $0xfc0] sm:$0xff]
        %v2457 = vld [vmem:[%s1741 + $0xfc8] sm:$0xff]
        %v2458 = vld [vmem:[%s1741 + $0xfd0] sm:$0xff]
        %v2459 = vld [vmem:[%s1741 + $0xfd8] sm:$0xff]
        %v2460 = vld [vmem:[%s1741 + $0xfe0] sm:$0xff]
        %v2461 = vld [vmem:[%s1741 + $0xfe8] sm:$0xff]
        %v2462 = vld [vmem:[%s1741 + $0xff0] sm:$0xff]
        %v2463 = vld [vmem:[%s1741 + $0xff8] sm:$0xff]
        %v2464 = vld [vmem:[%s1741 + $0x1000] sm:$0xff]
        %v2465 = vld [vmem:[%s1741 + $0x1008] sm:$0xff]
        %v2466 = vld [vmem:[%s1741 + $0x1010] sm:$0xff]
        %v2467 = vld [vmem:[%s1741 + $0x1018] sm:$0xff]
        %v2468 = vld [vmem:[%s1741 + $0x1020] sm:$0xff]
        %v2469 = vld [vmem:[%s1741 + $0x1028] sm:$0xff]
        %v2470 = vld [vmem:[%s1741 + $0x1030] sm:$0xff]
        %v2471 = vld [vmem:[%s1741 + $0x1038] sm:$0xff]
        %v2472 = vld [vmem:[%s1741 + $0x1040] sm:$0xff]
        %v2473 = vld [vmem:[%s1741 + $0x1048] sm:$0xff]
        %v2474 = vld [vmem:[%s1741 + $0x1050] sm:$0xff]
        %v2475 = vld [vmem:[%s1741 + $0x1058] sm:$0xff]
        %v2476 = vld [vmem:[%s1741 + $0x1060] sm:$0xff]
        %v2477 = vld [vmem:[%s1741 + $0x1068] sm:$0xff]
        %v2478 = vld [vmem:[%s1741 + $0x1070] sm:$0xff]
        %v2479 = vld [vmem:[%s1741 + $0x1078] sm:$0xff]
        %v2480 = vld [vmem:[%s1741 + $0x1080] sm:$0xff]
        %v2481 = vld [vmem:[%s1741 + $0x1088] sm:$0xff]
        %v2482 = vld [vmem:[%s1741 + $0x1090] sm:$0xff]
        %v2483 = vld [vmem:[%s1741 + $0x1098] sm:$0xff]
        %v2484 = vld [vmem:[%s1741 + $0x10a0] sm:$0xff]
        %v2485 = vld [vmem:[%s1741 + $0x10a8] sm:$0xff]
        %v2486 = vld [vmem:[%s1741 + $0x10b0] sm:$0xff]
        %v2487 = vld [vmem:[%s1741 + $0x10b8] sm:$0xff]
        %v2488 = vld [vmem:[%s1741 + $0x10c0] sm:$0xff]
        %v2489 = vld [vmem:[%s1741 + $0x10c8] sm:$0xff]
        %v2490 = vld [vmem:[%s1741 + $0x10d0] sm:$0xff]
        %v2491 = vld [vmem:[%s1741 + $0x10d8] sm:$0xff]
        %v2492 = vld [vmem:[%s1741 + $0x10e0] sm:$0xff]
        %v2493 = vld [vmem:[%s1741 + $0x10e8] sm:$0xff]
        %v2494 = vld [vmem:[%s1741 + $0x10f0] sm:$0xff]
        %v2495 = vld [vmem:[%s1741 + $0x10f8] sm:$0xff]
        %v2496 = vld [vmem:[%s1741 + $0x1100] sm:$0xff]
        %v2497 = vld [vmem:[%s1741 + $0x1108] sm:$0xff]
        %v2498 = vld [vmem:[%s1741 + $0x1110] sm:$0xff]
        %v2499 = vld [vmem:[%s1741 + $0x1118] sm:$0xff]
        %v2500 = vld [vmem:[%s1741 + $0x1120] sm:$0xff]
        %v2501 = vld [vmem:[%s1741 + $0x1128] sm:$0xff]
        %v2502 = vld [vmem:[%s1741 + $0x1130] sm:$0xff]
        %v2503 = vld [vmem:[%s1741 + $0x1138] sm:$0xff]
        %v2504 = vld [vmem:[%s1741 + $0x1140] sm:$0xff]
        %v2505 = vld [vmem:[%s1741 + $0x1148] sm:$0xff]
        %v2506 = vld [vmem:[%s1741 + $0x1150] sm:$0xff]
        %v2507 = vld [vmem:[%s1741 + $0x1158] sm:$0xff]
        %v2508 = vld [vmem:[%s1741 + $0x1160] sm:$0xff]
        %v2509 = vld [vmem:[%s1741 + $0x1168] sm:$0xff]
        %v2510 = vld [vmem:[%s1741 + $0x1170] sm:$0xff]
        %v2511 = vld [vmem:[%s1741 + $0x1178] sm:$0xff]
        %v2512 = vld [vmem:[%s1741 + $0x1180] sm:$0xff]
        %v2513 = vld [vmem:[%s1741 + $0x1188] sm:$0xff]
        %v2514 = vld [vmem:[%s1741 + $0x1190] sm:$0xff]
        %v2515 = vld [vmem:[%s1741 + $0x1198] sm:$0xff]
        %v2516 = vld [vmem:[%s1741 + $0x11a0] sm:$0xff]
        %v2517 = vld [vmem:[%s1741 + $0x11a8] sm:$0xff]
        %v2518 = vld [vmem:[%s1741 + $0x11b0] sm:$0xff]
        %v2519 = vld [vmem:[%s1741 + $0x11b8] sm:$0xff]
        %v2520 = vld [vmem:[%s1741 + $0x11c0] sm:$0xff]
        %v2521 = vld [vmem:[%s1741 + $0x11c8] sm:$0xff]
        %v2522 = vld [vmem:[%s1741 + $0x11d0] sm:$0xff]
        %v2523 = vld [vmem:[%s1741 + $0x11d8] sm:$0xff]
        %v2524 = vld [vmem:[%s1741 + $0x11e0] sm:$0xff]
        %v2525 = vld [vmem:[%s1741 + $0x11e8] sm:$0xff]
        %v2526 = vld [vmem:[%s1741 + $0x11f0] sm:$0xff]
        %v2527 = vld [vmem:[%s1741 + $0x11f8] sm:$0xff]
        %v2528 = vld [vmem:[%s1741 + $0x1200] sm:$0xff]
        %v2529 = vld [vmem:[%s1741 + $0x1208] sm:$0xff]
        %v2530 = vld [vmem:[%s1741 + $0x1210] sm:$0xff]
        %v2531 = vld [vmem:[%s1741 + $0x1218] sm:$0xff]
        %v2532 = vld [vmem:[%s1741 + $0x1220] sm:$0xff]
        %v2533 = vld [vmem:[%s1741 + $0x1228] sm:$0xff]
        %v2534 = vld [vmem:[%s1741 + $0x1230] sm:$0xff]
        %v2535 = vld [vmem:[%s1741 + $0x1238] sm:$0xff]
        %v2536 = vld [vmem:[%s1741 + $0x1240] sm:$0xff]
        %v2537 = vld [vmem:[%s1741 + $0x1248] sm:$0xff]
        %v2538 = vld [vmem:[%s1741 + $0x1250] sm:$0xff]
        %v2539 = vld [vmem:[%s1741 + $0x1258] sm:$0xff]
        %v2540 = vld [vmem:[%s1741 + $0x1260] sm:$0xff]
        %v2541 = vld [vmem:[%s1741 + $0x1268] sm:$0xff]
        %v2542 = vld [vmem:[%s1741 + $0x1270] sm:$0xff]
        %v2543 = vld [vmem:[%s1741 + $0x1278] sm:$0xff]
        %v2544 = vld [vmem:[%s1741 + $0x1280] sm:$0xff]
        %v2545 = vld [vmem:[%s1741 + $0x1288] sm:$0xff]
        %v2546 = vld [vmem:[%s1741 + $0x1290] sm:$0xff]
        %v2547 = vld [vmem:[%s1741 + $0x1298] sm:$0xff]
        %v2548 = vld [vmem:[%s1741 + $0x12a0] sm:$0xff]
        %v2549 = vld [vmem:[%s1741 + $0x12a8] sm:$0xff]
        %v2550 = vld [vmem:[%s1741 + $0x12b0] sm:$0xff]
        %v2551 = vld [vmem:[%s1741 + $0x12b8] sm:$0xff]
        %v2552 = vld [vmem:[%s1741 + $0x12c0] sm:$0xff]
        %v2553 = vld [vmem:[%s1741 + $0x12c8] sm:$0xff]
        %v2554 = vld [vmem:[%s1741 + $0x12d0] sm:$0xff]
        %v2555 = vld [vmem:[%s1741 + $0x12d8] sm:$0xff]
        %v2556 = vld [vmem:[%s1741 + $0x12e0] sm:$0xff]
        %v2557 = vld [vmem:[%s1741 + $0x12e8] sm:$0xff]
        %v2558 = vld [vmem:[%s1741 + $0x12f0] sm:$0xff]
        %v2559 = vld [vmem:[%s1741 + $0x12f8] sm:$0xff]
        %v2560 = vld [vmem:[%s1741 + $0x1300] sm:$0xff]
        %v2561 = vld [vmem:[%s1741 + $0x1308] sm:$0xff]
        %v2562 = vld [vmem:[%s1741 + $0x1310] sm:$0xff]
        %v2563 = vld [vmem:[%s1741 + $0x1318] sm:$0xff]
        %v2564 = vld [vmem:[%s1741 + $0x1320] sm:$0xff]
        %v2565 = vld [vmem:[%s1741 + $0x1328] sm:$0xff]
        %v2566 = vld [vmem:[%s1741 + $0x1330] sm:$0xff]
        %v2567 = vld [vmem:[%s1741 + $0x1338] sm:$0xff]
        %v2568 = vld [vmem:[%s1741 + $0x1340] sm:$0xff]
        %v2569 = vld [vmem:[%s1741 + $0x1348] sm:$0xff]
        %v2570 = vld [vmem:[%s1741 + $0x1350] sm:$0xff]
        %v2571 = vld [vmem:[%s1741 + $0x1358] sm:$0xff]
        %v2572 = vld [vmem:[%s1741 + $0x1360] sm:$0xff]
        %v2573 = vld [vmem:[%s1741 + $0x1368] sm:$0xff]
        %v2574 = vld [vmem:[%s1741 + $0x1370] sm:$0xff]
        %v2575 = vld [vmem:[%s1741 + $0x1378] sm:$0xff]
        %v2576 = vld [vmem:[%s1741 + $0x1380] sm:$0xff]
        %v2577 = vld [vmem:[%s1741 + $0x1388] sm:$0xff]
        %v2578 = vld [vmem:[%s1741 + $0x1390] sm:$0xff]
        %v2579 = vld [vmem:[%s1741 + $0x1398] sm:$0xff]
        %v2580 = vld [vmem:[%s1741 + $0x13a0] sm:$0xff]
        %v2581 = vld [vmem:[%s1741 + $0x13a8] sm:$0xff]
        %v2582 = vld [vmem:[%s1741 + $0x13b0] sm:$0xff]
        %v2583 = vld [vmem:[%s1741 + $0x13b8] sm:$0xff]
        %v2584 = vld [vmem:[%s1741 + $0x13c0] sm:$0xff]
        %v2585 = vld [vmem:[%s1741 + $0x13c8] sm:$0xff]
        %v2586 = vld [vmem:[%s1741 + $0x13d0] sm:$0xff]
        %v2587 = vld [vmem:[%s1741 + $0x13d8] sm:$0xff]
        %v2588 = vld [vmem:[%s1741 + $0x13e0] sm:$0xff]
        %v2589 = vld [vmem:[%s1741 + $0x13e8] sm:$0xff]
        %v2590 = vld [vmem:[%s1741 + $0x13f0] sm:$0xff]
        %v2591 = vld [vmem:[%s1741 + $0x13f8] sm:$0xff]
        %v2592 = vld [vmem:[%s1741 + $0x1400] sm:$0xff]
        %v2593 = vld [vmem:[%s1741 + $0x1408] sm:$0xff]
        %v2594 = vld [vmem:[%s1741 + $0x1410] sm:$0xff]
        %v2595 = vld [vmem:[%s1741 + $0x1418] sm:$0xff]
        %v2596 = vld [vmem:[%s1741 + $0x1420] sm:$0xff]
        %v2597 = vld [vmem:[%s1741 + $0x1428] sm:$0xff]
        %v2598 = vld [vmem:[%s1741 + $0x1430] sm:$0xff]
        %v2599 = vld [vmem:[%s1741 + $0x1438] sm:$0xff]
        %v2600 = vld [vmem:[%s1741 + $0x1440] sm:$0xff]
        %v2601 = vld [vmem:[%s1741 + $0x1448] sm:$0xff]
        %v2602 = vld [vmem:[%s1741 + $0x1450] sm:$0xff]
        %v2603 = vld [vmem:[%s1741 + $0x1458] sm:$0xff]
        %v2604 = vld [vmem:[%s1741 + $0x1460] sm:$0xff]
        %v2605 = vld [vmem:[%s1741 + $0x1468] sm:$0xff]
        %v2606 = vld [vmem:[%s1741 + $0x1470] sm:$0xff]
        %v2607 = vld [vmem:[%s1741 + $0x1478] sm:$0xff]
        %v2608 = vld [vmem:[%s1741 + $0x1480] sm:$0xff]
        %v2609 = vld [vmem:[%s1741 + $0x1488] sm:$0xff]
        %v2610 = vld [vmem:[%s1741 + $0x1490] sm:$0xff]
        %v2611 = vld [vmem:[%s1741 + $0x1498] sm:$0xff]
        %v2612 = vld [vmem:[%s1741 + $0x14a0] sm:$0xff]
        %v2613 = vld [vmem:[%s1741 + $0x14a8] sm:$0xff]
        %v2614 = vld [vmem:[%s1741 + $0x14b0] sm:$0xff]
        %v2615 = vld [vmem:[%s1741 + $0x14b8] sm:$0xff]
        %v2616 = vld [vmem:[%s1741 + $0x14c0] sm:$0xff]
        %v2617 = vld [vmem:[%s1741 + $0x14c8] sm:$0xff]
        %v2618 = vld [vmem:[%s1741 + $0x14d0] sm:$0xff]
        %v2619 = vld [vmem:[%s1741 + $0x14d8] sm:$0xff]
        %v2620 = vld [vmem:[%s1741 + $0x14e0] sm:$0xff]
        %v2621 = vld [vmem:[%s1741 + $0x14e8] sm:$0xff]
        %v2622 = vld [vmem:[%s1741 + $0x14f0] sm:$0xff]
        %v2623 = vld [vmem:[%s1741 + $0x14f8] sm:$0xff]
        %v2624 = vld [vmem:[%s1741 + $0x1500] sm:$0xff]
        %v2625 = vld [vmem:[%s1741 + $0x1508] sm:$0xff]
        %v2626 = vld [vmem:[%s1741 + $0x1510] sm:$0xff]
        %v2627 = vld [vmem:[%s1741 + $0x1518] sm:$0xff]
        %v2628 = vld [vmem:[%s1741 + $0x1520] sm:$0xff]
        %v2629 = vld [vmem:[%s1741 + $0x1528] sm:$0xff]
        %v2630 = vld [vmem:[%s1741 + $0x1530] sm:$0xff]
        %v2631 = vld [vmem:[%s1741 + $0x1538] sm:$0xff]
        %v2632 = vld [vmem:[%s1741 + $0x1540] sm:$0xff]
        %v2633 = vld [vmem:[%s1741 + $0x1548] sm:$0xff]
        %v2634 = vld [vmem:[%s1741 + $0x1550] sm:$0xff]
        %v2635 = vld [vmem:[%s1741 + $0x1558] sm:$0xff]
        %v2636 = vld [vmem:[%s1741 + $0x1560] sm:$0xff]
        %v2637 = vld [vmem:[%s1741 + $0x1568] sm:$0xff]
        %v2638 = vld [vmem:[%s1741 + $0x1570] sm:$0xff]
        %v2639 = vld [vmem:[%s1741 + $0x1578] sm:$0xff]
        %v2640 = vld [vmem:[%s1741 + $0x1580] sm:$0xff]
        %v2641 = vld [vmem:[%s1741 + $0x1588] sm:$0xff]
        %v2642 = vld [vmem:[%s1741 + $0x1590] sm:$0xff]
        %v2643 = vld [vmem:[%s1741 + $0x1598] sm:$0xff]
        %v2644 = vld [vmem:[%s1741 + $0x15a0] sm:$0xff]
        %v2645 = vld [vmem:[%s1741 + $0x15a8] sm:$0xff]
        %v2646 = vld [vmem:[%s1741 + $0x15b0] sm:$0xff]
        %v2647 = vld [vmem:[%s1741 + $0x15b8] sm:$0xff]
        %v2648 = vld [vmem:[%s1741 + $0x15c0] sm:$0xff]
        %v2649 = vld [vmem:[%s1741 + $0x15c8] sm:$0xff]
        %v2650 = vld [vmem:[%s1741 + $0x15d0] sm:$0xff]
        %v2651 = vld [vmem:[%s1741 + $0x15d8] sm:$0xff]
        %v2652 = vld [vmem:[%s1741 + $0x15e0] sm:$0xff]
        %v2653 = vld [vmem:[%s1741 + $0x15e8] sm:$0xff]
        %v2654 = vld [vmem:[%s1741 + $0x15f0] sm:$0xff]
        %v2655 = vld [vmem:[%s1741 + $0x15f8] sm:$0xff]
        %v2656 = vld [vmem:[%s1741 + $0x1600] sm:$0xff]
        %v2657 = vld [vmem:[%s1741 + $0x1608] sm:$0xff]
        %v2658 = vld [vmem:[%s1741 + $0x1610] sm:$0xff]
        %v2659 = vld [vmem:[%s1741 + $0x1618] sm:$0xff]
        %v2660 = vld [vmem:[%s1741 + $0x1620] sm:$0xff]
        %v2661 = vld [vmem:[%s1741 + $0x1628] sm:$0xff]
        %v2662 = vld [vmem:[%s1741 + $0x1630] sm:$0xff]
        %v2663 = vld [vmem:[%s1741 + $0x1638] sm:$0xff]
        %v2664 = vld [vmem:[%s1741 + $0x1640] sm:$0xff]
        %v2665 = vld [vmem:[%s1741 + $0x1648] sm:$0xff]
        %v2666 = vld [vmem:[%s1741 + $0x1650] sm:$0xff]
        %v2667 = vld [vmem:[%s1741 + $0x1658] sm:$0xff]
        %v2668 = vld [vmem:[%s1741 + $0x1660] sm:$0xff]
        %v2669 = vld [vmem:[%s1741 + $0x1668] sm:$0xff]
        %v2670 = vld [vmem:[%s1741 + $0x1670] sm:$0xff]
        %v2671 = vld [vmem:[%s1741 + $0x1678] sm:$0xff]
        %v2672 = vld [vmem:[%s1741 + $0x1680] sm:$0xff]
        %v2673 = vld [vmem:[%s1741 + $0x1688] sm:$0xff]
        %v2674 = vld [vmem:[%s1741 + $0x1690] sm:$0xff]
        %v2675 = vld [vmem:[%s1741 + $0x1698] sm:$0xff]
        %v2676 = vld [vmem:[%s1741 + $0x16a0] sm:$0xff]
        %v2677 = vld [vmem:[%s1741 + $0x16a8] sm:$0xff]
        %v2678 = vld [vmem:[%s1741 + $0x16b0] sm:$0xff]
        %v2679 = vld [vmem:[%s1741 + $0x16b8] sm:$0xff]
        %v2680 = vld [vmem:[%s1741 + $0x16c0] sm:$0xff]
        %v2681 = vld [vmem:[%s1741 + $0x16c8] sm:$0xff]
        %v2682 = vld [vmem:[%s1741 + $0x16d0] sm:$0xff]
        %v2683 = vld [vmem:[%s1741 + $0x16d8] sm:$0xff]
        %v2684 = vld [vmem:[%s1741 + $0x16e0] sm:$0xff]
        %v2685 = vld [vmem:[%s1741 + $0x16e8] sm:$0xff]
        %v2686 = vld [vmem:[%s1741 + $0x16f0] sm:$0xff]
        %v2687 = vld [vmem:[%s1741 + $0x16f8] sm:$0xff]
        %v2688 = vld [vmem:[%s1741 + $0x1700] sm:$0xff]
        %v2689 = vld [vmem:[%s1741 + $0x1708] sm:$0xff]
        %v2690 = vld [vmem:[%s1741 + $0x1710] sm:$0xff]
        %v2691 = vld [vmem:[%s1741 + $0x1718] sm:$0xff]
        %v2692 = vld [vmem:[%s1741 + $0x1720] sm:$0xff]
        %v2693 = vld [vmem:[%s1741 + $0x1728] sm:$0xff]
        %v2694 = vld [vmem:[%s1741 + $0x1730] sm:$0xff]
        %v2695 = vld [vmem:[%s1741 + $0x1738] sm:$0xff]
        %v2696 = vld [vmem:[%s1741 + $0x1740] sm:$0xff]
        %v2697 = vld [vmem:[%s1741 + $0x1748] sm:$0xff]
        %v2698 = vld [vmem:[%s1741 + $0x1750] sm:$0xff]
        %v2699 = vld [vmem:[%s1741 + $0x1758] sm:$0xff]
        %v2700 = vld [vmem:[%s1741 + $0x1760] sm:$0xff]
        %v2701 = vld [vmem:[%s1741 + $0x1768] sm:$0xff]
        %v2702 = vld [vmem:[%s1741 + $0x1770] sm:$0xff]
        %v2703 = vld [vmem:[%s1741 + $0x1778] sm:$0xff]
        %v2704 = vld [vmem:[%s1741 + $0x1780] sm:$0xff]
        %v2705 = vld [vmem:[%s1741 + $0x1788] sm:$0xff]
        %v2706 = vld [vmem:[%s1741 + $0x1790] sm:$0xff]
        %v2707 = vld [vmem:[%s1741 + $0x1798] sm:$0xff]
        %v2708 = vld [vmem:[%s1741 + $0x17a0] sm:$0xff]
        %v2709 = vld [vmem:[%s1741 + $0x17a8] sm:$0xff]
        %v2710 = vld [vmem:[%s1741 + $0x17b0] sm:$0xff]
        %v2711 = vld [vmem:[%s1741 + $0x17b8] sm:$0xff]
        %v2712 = vld [vmem:[%s1741 + $0x17c0] sm:$0xff]
        %v2713 = vld [vmem:[%s1741 + $0x17c8] sm:$0xff]
        %v2714 = vld [vmem:[%s1741 + $0x17d0] sm:$0xff]
        %v2715 = vld [vmem:[%s1741 + $0x17d8] sm:$0xff]
        %v2716 = vld [vmem:[%s1741 + $0x17e0] sm:$0xff]
        %v2717 = vld [vmem:[%s1741 + $0x17e8] sm:$0xff]
        %v2718 = vld [vmem:[%s1741 + $0x17f0] sm:$0xff]
        %v2719 = vld [vmem:[%s1741 + $0x17f8] sm:$0xff]
        %v2720 = vld [vmem:[%s1741 + $0x1800] sm:$0xff]
        %v2721 = vld [vmem:[%s1741 + $0x1808] sm:$0xff]
        %v2722 = vld [vmem:[%s1741 + $0x1810] sm:$0xff]
        %v2723 = vld [vmem:[%s1741 + $0x1818] sm:$0xff]
        %v2724 = vld [vmem:[%s1741 + $0x1820] sm:$0xff]
        %v2725 = vld [vmem:[%s1741 + $0x1828] sm:$0xff]
        %v2726 = vld [vmem:[%s1741 + $0x1830] sm:$0xff]
        %v2727 = vld [vmem:[%s1741 + $0x1838] sm:$0xff]
        %v2728 = vld [vmem:[%s1741 + $0x1840] sm:$0xff]
        %v2729 = vld [vmem:[%s1741 + $0x1848] sm:$0xff]
        %v2730 = vld [vmem:[%s1741 + $0x1850] sm:$0xff]
        %v2731 = vld [vmem:[%s1741 + $0x1858] sm:$0xff]
        %v2732 = vld [vmem:[%s1741 + $0x1860] sm:$0xff]
        %v2733 = vld [vmem:[%s1741 + $0x1868] sm:$0xff]
        %v2734 = vld [vmem:[%s1741 + $0x1870] sm:$0xff]
        %v2735 = vld [vmem:[%s1741 + $0x1878] sm:$0xff]
        %v2736 = vld [vmem:[%s1770] sm:$0xf]
        %v2738 = vlaneseq
        %v2739 = vshrl.u32 %v2738, 7
        %v2740 = vsub.s32 0, %v2739
        %v2741 = vrot.slane %v2736, %v2740
        %v2742 = vlaneseq
        %v2743 = vshrl.u32 %v2742, 7
        %v2744 = vsub.s32 1, %v2743
        %v2745 = vrot.slane %v2736, %v2744
        %v2746 = vlaneseq
        %v2747 = vshrl.u32 %v2746, 7
        %v2748 = vsub.s32 2, %v2747
        %v2749 = vrot.slane %v2736, %v2748
        %v2750 = vlaneseq
        %v2751 = vshrl.u32 %v2750, 7
        %v2752 = vsub.s32 3, %v2751
        %v2753 = vrot.slane %v2736, %v2752
        %v3542 = vunpack.c.l.b16 %v1952
        %v3543 = vunpack.c.h.b16 %v1952
        %v3544 = vunpack.c.l.b16 %v1953
        %v3545 = vunpack.c.h.b16 %v1953
        %v3546 = vunpack.c.l.b16 %v1954
        %v3547 = vunpack.c.h.b16 %v1954
        %v3548 = vunpack.c.l.b16 %v1955
        %v3549 = vunpack.c.h.b16 %v1955
        %v3550 = vunpack.c.l.b16 %v1956
        %v3551 = vunpack.c.h.b16 %v1956
        %v3552 = vunpack.c.l.b16 %v1957
        %v3553 = vunpack.c.h.b16 %v1957
        %v3554 = vunpack.c.l.b16 %v1958
        %v3555 = vunpack.c.h.b16 %v1958
        %v3556 = vunpack.c.l.b16 %v1959
        %v3557 = vunpack.c.h.b16 %v1959
        %v3558 = vunpack.c.l.b16 %v1960
        %v3559 = vunpack.c.h.b16 %v1960
        %v3560 = vunpack.c.l.b16 %v1961
        %v3561 = vunpack.c.h.b16 %v1961
        %v3562 = vunpack.c.l.b16 %v1962
        %v3563 = vunpack.c.h.b16 %v1962
        %v3564 = vunpack.c.l.b16 %v1963
        %v3565 = vunpack.c.h.b16 %v1963
        %v3566 = vunpack.c.l.b16 %v1964
        %v3567 = vunpack.c.h.b16 %v1964
        %v3568 = vunpack.c.l.b16 %v1965
        %v3569 = vunpack.c.h.b16 %v1965
        %v3570 = vunpack.c.l.b16 %v1966
        %v3571 = vunpack.c.h.b16 %v1966
        %v3572 = vunpack.c.l.b16 %v1967
        %v3573 = vunpack.c.h.b16 %v1967
        %v3574 = vunpack.c.l.b16 %v1968
        %v3575 = vunpack.c.h.b16 %v1968
        %v3576 = vunpack.c.l.b16 %v1969
        %v3577 = vunpack.c.h.b16 %v1969
        %v3578 = vunpack.c.l.b16 %v1970
        %v3579 = vunpack.c.h.b16 %v1970
        %v3580 = vunpack.c.l.b16 %v1971
        %v3581 = vunpack.c.h.b16 %v1971
        %v3582 = vunpack.c.l.b16 %v1972
        %v3583 = vunpack.c.h.b16 %v1972
        %v3584 = vunpack.c.l.b16 %v1973
        %v3585 = vunpack.c.h.b16 %v1973
        %v3586 = vunpack.c.l.b16 %v1974
        %v3587 = vunpack.c.h.b16 %v1974
        %v3588 = vunpack.c.l.b16 %v1975
        %v3589 = vunpack.c.h.b16 %v1975
        %v3590 = vunpack.c.l.b16 %v1976
        %v3591 = vunpack.c.h.b16 %v1976
        %v3592 = vunpack.c.l.b16 %v1977
        %v3593 = vunpack.c.h.b16 %v1977
        %v3594 = vunpack.c.l.b16 %v1978
        %v3595 = vunpack.c.h.b16 %v1978
        %v3596 = vunpack.c.l.b16 %v1979
        %v3597 = vunpack.c.h.b16 %v1979
        %v3598 = vunpack.c.l.b16 %v1980
        %v3599 = vunpack.c.h.b16 %v1980
        %v3600 = vunpack.c.l.b16 %v1981
        %v3601 = vunpack.c.h.b16 %v1981
        %v3602 = vunpack.c.l.b16 %v1982
        %v3603 = vunpack.c.h.b16 %v1982
        %v3604 = vunpack.c.l.b16 %v1983
        %v3605 = vunpack.c.h.b16 %v1983
        %v3606 = vunpack.c.l.b16 %v1984
        %v3607 = vunpack.c.h.b16 %v1984
        %v3608 = vunpack.c.l.b16 %v1985
        %v3609 = vunpack.c.h.b16 %v1985
        %v3610 = vunpack.c.l.b16 %v1986
        %v3611 = vunpack.c.h.b16 %v1986
        %v3612 = vunpack.c.l.b16 %v1987
        %v3613 = vunpack.c.h.b16 %v1987
        %v3614 = vunpack.c.l.b16 %v1988
        %v3615 = vunpack.c.h.b16 %v1988
        %v3616 = vunpack.c.l.b16 %v1989
        %v3617 = vunpack.c.h.b16 %v1989
        %v3618 = vunpack.c.l.b16 %v1990
        %v3619 = vunpack.c.h.b16 %v1990
        %v3620 = vunpack.c.l.b16 %v1991
        %v3621 = vunpack.c.h.b16 %v1991
        %v3622 = vunpack.c.l.b16 %v1992
        %v3623 = vunpack.c.h.b16 %v1992
        %v3624 = vunpack.c.l.b16 %v1993
        %v3625 = vunpack.c.h.b16 %v1993
        %v3626 = vunpack.c.l.b16 %v1994
        %v3627 = vunpack.c.h.b16 %v1994
        %v3628 = vunpack.c.l.b16 %v1995
        %v3629 = vunpack.c.h.b16 %v1995
        %v3630 = vunpack.c.l.b16 %v1996
        %v3631 = vunpack.c.h.b16 %v1996
        %v3632 = vunpack.c.l.b16 %v1997
        %v3633 = vunpack.c.h.b16 %v1997
        %v3634 = vunpack.c.l.b16 %v1998
        %v3635 = vunpack.c.h.b16 %v1998
        %v3636 = vunpack.c.l.b16 %v1999
        %v3637 = vunpack.c.h.b16 %v1999
        %v3638 = vunpack.c.l.b16 %v2000
        %v3639 = vunpack.c.h.b16 %v2000
        %v3640 = vunpack.c.l.b16 %v2001
        %v3641 = vunpack.c.h.b16 %v2001
        %v3642 = vunpack.c.l.b16 %v2002
        %v3643 = vunpack.c.h.b16 %v2002
        %v3644 = vunpack.c.l.b16 %v2003
        %v3645 = vunpack.c.h.b16 %v2003
        %v3646 = vunpack.c.l.b16 %v2004
        %v3647 = vunpack.c.h.b16 %v2004
        %v3648 = vunpack.c.l.b16 %v2005
        %v3649 = vunpack.c.h.b16 %v2005
        %v3650 = vunpack.c.l.b16 %v2006
        %v3651 = vunpack.c.h.b16 %v2006
        %v3652 = vunpack.c.l.b16 %v2007
        %v3653 = vunpack.c.h.b16 %v2007
        %v3654 = vunpack.c.l.b16 %v2008
        %v3655 = vunpack.c.h.b16 %v2008
        %v3656 = vunpack.c.l.b16 %v2009
        %v3657 = vunpack.c.h.b16 %v2009
        %v3658 = vunpack.c.l.b16 %v2010
        %v3659 = vunpack.c.h.b16 %v2010
        %v3660 = vunpack.c.l.b16 %v2011
        %v3661 = vunpack.c.h.b16 %v2011
        %v3662 = vunpack.c.l.b16 %v2012
        %v3663 = vunpack.c.h.b16 %v2012
        %v3664 = vunpack.c.l.b16 %v2013
        %v3665 = vunpack.c.h.b16 %v2013
        %v3666 = vunpack.c.l.b16 %v2014
        %v3667 = vunpack.c.h.b16 %v2014
        %v3668 = vunpack.c.l.b16 %v2015
        %v3669 = vunpack.c.h.b16 %v2015
        %v3670 = vunpack.c.l.b16 %v2016
        %v3671 = vunpack.c.h.b16 %v2016
        %v3672 = vunpack.c.l.b16 %v2017
        %v3673 = vunpack.c.h.b16 %v2017
        %v3674 = vunpack.c.l.b16 %v2018
        %v3675 = vunpack.c.h.b16 %v2018
        %v3676 = vunpack.c.l.b16 %v2019
        %v3677 = vunpack.c.h.b16 %v2019
        %v3678 = vunpack.c.l.b16 %v2020
        %v3679 = vunpack.c.h.b16 %v2020
        %v3680 = vunpack.c.l.b16 %v2021
        %v3681 = vunpack.c.h.b16 %v2021
        %v3682 = vunpack.c.l.b16 %v2022
        %v3683 = vunpack.c.h.b16 %v2022
        %v3684 = vunpack.c.l.b16 %v2023
        %v3685 = vunpack.c.h.b16 %v2023
        %v3686 = vunpack.c.l.b16 %v2024
        %v3687 = vunpack.c.h.b16 %v2024
        %v3688 = vunpack.c.l.b16 %v2025
        %v3689 = vunpack.c.h.b16 %v2025
        %v3690 = vunpack.c.l.b16 %v2026
        %v3691 = vunpack.c.h.b16 %v2026
        %v3692 = vunpack.c.l.b16 %v2027
        %v3693 = vunpack.c.h.b16 %v2027
        %v3694 = vunpack.c.l.b16 %v2028
        %v3695 = vunpack.c.h.b16 %v2028
        %v3696 = vunpack.c.l.b16 %v2029
        %v3697 = vunpack.c.h.b16 %v2029
        %v3698 = vunpack.c.l.b16 %v2030
        %v3699 = vunpack.c.h.b16 %v2030
        %v3700 = vunpack.c.l.b16 %v2031
        %v3701 = vunpack.c.h.b16 %v2031
        %v3702 = vunpack.c.l.b16 %v2032
        %v3703 = vunpack.c.h.b16 %v2032
        %v3704 = vunpack.c.l.b16 %v2033
        %v3705 = vunpack.c.h.b16 %v2033
        %v3706 = vunpack.c.l.b16 %v2034
        %v3707 = vunpack.c.h.b16 %v2034
        %v3708 = vunpack.c.l.b16 %v2035
        %v3709 = vunpack.c.h.b16 %v2035
        %v3710 = vunpack.c.l.b16 %v2036
        %v3711 = vunpack.c.h.b16 %v2036
        %v3712 = vunpack.c.l.b16 %v2037
        %v3713 = vunpack.c.h.b16 %v2037
        %v3714 = vunpack.c.l.b16 %v2038
        %v3715 = vunpack.c.h.b16 %v2038
        %v3716 = vunpack.c.l.b16 %v2039
        %v3717 = vunpack.c.h.b16 %v2039
        %v3718 = vunpack.c.l.b16 %v2040
        %v3719 = vunpack.c.h.b16 %v2040
        %v3720 = vunpack.c.l.b16 %v2041
        %v3721 = vunpack.c.h.b16 %v2041
        %v3722 = vunpack.c.l.b16 %v2042
        %v3723 = vunpack.c.h.b16 %v2042
        %v3724 = vunpack.c.l.b16 %v2043
        %v3725 = vunpack.c.h.b16 %v2043
        %v3726 = vunpack.c.l.b16 %v2044
        %v3727 = vunpack.c.h.b16 %v2044
        %v3728 = vunpack.c.l.b16 %v2045
        %v3729 = vunpack.c.h.b16 %v2045
        %v3730 = vunpack.c.l.b16 %v2046
        %v3731 = vunpack.c.h.b16 %v2046
        %v3732 = vunpack.c.l.b16 %v2047
        %v3733 = vunpack.c.h.b16 %v2047
        %v3734 = vunpack.c.l.b16 %v2048
        %v3735 = vunpack.c.h.b16 %v2048
        %v3736 = vunpack.c.l.b16 %v2049
        %v3737 = vunpack.c.h.b16 %v2049
        %v3738 = vunpack.c.l.b16 %v2050
        %v3739 = vunpack.c.h.b16 %v2050
        %v3740 = vunpack.c.l.b16 %v2051
        %v3741 = vunpack.c.h.b16 %v2051
        %v3742 = vunpack.c.l.b16 %v2052
        %v3743 = vunpack.c.h.b16 %v2052
        %v3744 = vunpack.c.l.b16 %v2053
        %v3745 = vunpack.c.h.b16 %v2053
        %v3746 = vunpack.c.l.b16 %v2054
        %v3747 = vunpack.c.h.b16 %v2054
        %v3748 = vunpack.c.l.b16 %v2055
        %v3749 = vunpack.c.h.b16 %v2055
        %v3750 = vunpack.c.l.b16 %v2056
        %v3751 = vunpack.c.h.b16 %v2056
        %v3752 = vunpack.c.l.b16 %v2057
        %v3753 = vunpack.c.h.b16 %v2057
        %v3754 = vunpack.c.l.b16 %v2058
        %v3755 = vunpack.c.h.b16 %v2058
        %v3756 = vunpack.c.l.b16 %v2059
        %v3757 = vunpack.c.h.b16 %v2059
        %v3758 = vunpack.c.l.b16 %v2060
        %v3759 = vunpack.c.h.b16 %v2060
        %v3760 = vunpack.c.l.b16 %v2061
        %v3761 = vunpack.c.h.b16 %v2061
        %v3762 = vunpack.c.l.b16 %v2062
        %v3763 = vunpack.c.h.b16 %v2062
        %v3764 = vunpack.c.l.b16 %v2063
        %v3765 = vunpack.c.h.b16 %v2063
        %v3766 = vunpack.c.l.b16 %v2064
        %v3767 = vunpack.c.h.b16 %v2064
        %v3768 = vunpack.c.l.b16 %v2065
        %v3769 = vunpack.c.h.b16 %v2065
        %v3770 = vunpack.c.l.b16 %v2066
        %v3771 = vunpack.c.h.b16 %v2066
        %v3772 = vunpack.c.l.b16 %v2067
        %v3773 = vunpack.c.h.b16 %v2067
        %v3774 = vunpack.c.l.b16 %v2068
        %v3775 = vunpack.c.h.b16 %v2068
        %v3776 = vunpack.c.l.b16 %v2069
        %v3777 = vunpack.c.h.b16 %v2069
        %v3778 = vunpack.c.l.b16 %v2070
        %v3779 = vunpack.c.h.b16 %v2070
        %v3780 = vunpack.c.l.b16 %v2071
        %v3781 = vunpack.c.h.b16 %v2071
        %v3782 = vunpack.c.l.b16 %v2072
        %v3783 = vunpack.c.h.b16 %v2072
        %v3784 = vunpack.c.l.b16 %v2073
        %v3785 = vunpack.c.h.b16 %v2073
        %v3786 = vunpack.c.l.b16 %v2074
        %v3787 = vunpack.c.h.b16 %v2074
        %v3788 = vunpack.c.l.b16 %v2075
        %v3789 = vunpack.c.h.b16 %v2075
        %v3790 = vunpack.c.l.b16 %v2076
        %v3791 = vunpack.c.h.b16 %v2076
        %v3792 = vunpack.c.l.b16 %v2077
        %v3793 = vunpack.c.h.b16 %v2077
        %v3794 = vunpack.c.l.b16 %v2078
        %v3795 = vunpack.c.h.b16 %v2078
        %v3796 = vunpack.c.l.b16 %v2079
        %v3797 = vunpack.c.h.b16 %v2079
        %v3798 = vunpack.c.l.b16 %v2080
        %v3799 = vunpack.c.h.b16 %v2080
        %v3800 = vunpack.c.l.b16 %v2081
        %v3801 = vunpack.c.h.b16 %v2081
        %v3802 = vunpack.c.l.b16 %v2082
        %v3803 = vunpack.c.h.b16 %v2082
        %v3804 = vunpack.c.l.b16 %v2083
        %v3805 = vunpack.c.h.b16 %v2083
        %v3806 = vunpack.c.l.b16 %v2084
        %v3807 = vunpack.c.h.b16 %v2084
        %v3808 = vunpack.c.l.b16 %v2085
        %v3809 = vunpack.c.h.b16 %v2085
        %v3810 = vunpack.c.l.b16 %v2086
        %v3811 = vunpack.c.h.b16 %v2086
        %v3812 = vunpack.c.l.b16 %v2087
        %v3813 = vunpack.c.h.b16 %v2087
        %v3814 = vunpack.c.l.b16 %v2088
        %v3815 = vunpack.c.h.b16 %v2088
        %v3816 = vunpack.c.l.b16 %v2089
        %v3817 = vunpack.c.h.b16 %v2089
        %v3818 = vunpack.c.l.b16 %v2090
        %v3819 = vunpack.c.h.b16 %v2090
        %v3820 = vunpack.c.l.b16 %v2091
        %v3821 = vunpack.c.h.b16 %v2091
        %v3822 = vunpack.c.l.b16 %v2092
        %v3823 = vunpack.c.h.b16 %v2092
        %v3824 = vunpack.c.l.b16 %v2093
        %v3825 = vunpack.c.h.b16 %v2093
        %v3826 = vunpack.c.l.b16 %v2094
        %v3827 = vunpack.c.h.b16 %v2094
        %v3828 = vunpack.c.l.b16 %v2095
        %v3829 = vunpack.c.h.b16 %v2095
        %v3830 = vunpack.c.l.b16 %v2096
        %v3831 = vunpack.c.h.b16 %v2096
        %v3832 = vunpack.c.l.b16 %v2097
        %v3833 = vunpack.c.h.b16 %v2097
        %v3834 = vunpack.c.l.b16 %v2098
        %v3835 = vunpack.c.h.b16 %v2098
        %v3836 = vunpack.c.l.b16 %v2099
        %v3837 = vunpack.c.h.b16 %v2099
        %v3838 = vunpack.c.l.b16 %v2100
        %v3839 = vunpack.c.h.b16 %v2100
        %v3840 = vunpack.c.l.b16 %v2101
        %v3841 = vunpack.c.h.b16 %v2101
        %v3842 = vunpack.c.l.b16 %v2102
        %v3843 = vunpack.c.h.b16 %v2102
        %v3844 = vunpack.c.l.b16 %v2103
        %v3845 = vunpack.c.h.b16 %v2103
        %v3846 = vunpack.c.l.b16 %v2104
        %v3847 = vunpack.c.h.b16 %v2104
        %v3848 = vunpack.c.l.b16 %v2105
        %v3849 = vunpack.c.h.b16 %v2105
        %v3850 = vunpack.c.l.b16 %v2106
        %v3851 = vunpack.c.h.b16 %v2106
        %v3852 = vunpack.c.l.b16 %v2107
        %v3853 = vunpack.c.h.b16 %v2107
        %v3854 = vunpack.c.l.b16 %v2108
        %v3855 = vunpack.c.h.b16 %v2108
        %v3856 = vunpack.c.l.b16 %v2109
        %v3857 = vunpack.c.h.b16 %v2109
        %v3858 = vunpack.c.l.b16 %v2110
        %v3859 = vunpack.c.h.b16 %v2110
        %v3860 = vunpack.c.l.b16 %v2111
        %v3861 = vunpack.c.h.b16 %v2111
        %v3862 = vunpack.c.l.b16 %v2112
        %v3863 = vunpack.c.h.b16 %v2112
        %v3864 = vunpack.c.l.b16 %v2113
        %v3865 = vunpack.c.h.b16 %v2113
        %v3866 = vunpack.c.l.b16 %v2114
        %v3867 = vunpack.c.h.b16 %v2114
        %v3868 = vunpack.c.l.b16 %v2115
        %v3869 = vunpack.c.h.b16 %v2115
        %v3870 = vunpack.c.l.b16 %v2116
        %v3871 = vunpack.c.h.b16 %v2116
        %v3872 = vunpack.c.l.b16 %v2117
        %v3873 = vunpack.c.h.b16 %v2117
        %v3874 = vunpack.c.l.b16 %v2118
        %v3875 = vunpack.c.h.b16 %v2118
        %v3876 = vunpack.c.l.b16 %v2119
        %v3877 = vunpack.c.h.b16 %v2119
        %v3878 = vunpack.c.l.b16 %v2120
        %v3879 = vunpack.c.h.b16 %v2120
        %v3880 = vunpack.c.l.b16 %v2121
        %v3881 = vunpack.c.h.b16 %v2121
        %v3882 = vunpack.c.l.b16 %v2122
        %v3883 = vunpack.c.h.b16 %v2122
        %v3884 = vunpack.c.l.b16 %v2123
        %v3885 = vunpack.c.h.b16 %v2123
        %v3886 = vunpack.c.l.b16 %v2124
        %v3887 = vunpack.c.h.b16 %v2124
        %v3888 = vunpack.c.l.b16 %v2125
        %v3889 = vunpack.c.h.b16 %v2125
        %v3890 = vunpack.c.l.b16 %v2126
        %v3891 = vunpack.c.h.b16 %v2126
        %v3892 = vunpack.c.l.b16 %v2127
        %v3893 = vunpack.c.h.b16 %v2127
        %v3894 = vunpack.c.l.b16 %v2128
        %v3895 = vunpack.c.h.b16 %v2128
        %v3896 = vunpack.c.l.b16 %v2129
        %v3897 = vunpack.c.h.b16 %v2129
        %v3898 = vunpack.c.l.b16 %v2130
        %v3899 = vunpack.c.h.b16 %v2130
        %v3900 = vunpack.c.l.b16 %v2131
        %v3901 = vunpack.c.h.b16 %v2131
        %v3902 = vunpack.c.l.b16 %v2132
        %v3903 = vunpack.c.h.b16 %v2132
        %v3904 = vunpack.c.l.b16 %v2133
        %v3905 = vunpack.c.h.b16 %v2133
        %v3906 = vunpack.c.l.b16 %v2134
        %v3907 = vunpack.c.h.b16 %v2134
        %v3908 = vunpack.c.l.b16 %v2135
        %v3909 = vunpack.c.h.b16 %v2135
        %v3910 = vunpack.c.l.b16 %v2136
        %v3911 = vunpack.c.h.b16 %v2136
        %v3912 = vunpack.c.l.b16 %v2137
        %v3913 = vunpack.c.h.b16 %v2137
        %v3914 = vunpack.c.l.b16 %v2138
        %v3915 = vunpack.c.h.b16 %v2138
        %v3916 = vunpack.c.l.b16 %v2139
        %v3917 = vunpack.c.h.b16 %v2139
        %v3918 = vunpack.c.l.b16 %v2140
        %v3919 = vunpack.c.h.b16 %v2140
        %v3920 = vunpack.c.l.b16 %v2141
        %v3921 = vunpack.c.h.b16 %v2141
        %v3922 = vunpack.c.l.b16 %v2142
        %v3923 = vunpack.c.h.b16 %v2142
        %v3924 = vunpack.c.l.b16 %v2143
        %v3925 = vunpack.c.h.b16 %v2143
        %v3926 = vunpack.c.l.b16 %v2144
        %v3927 = vunpack.c.h.b16 %v2144
        %v3928 = vunpack.c.l.b16 %v2145
        %v3929 = vunpack.c.h.b16 %v2145
        %v3930 = vunpack.c.l.b16 %v2146
        %v3931 = vunpack.c.h.b16 %v2146
        %v3932 = vunpack.c.l.b16 %v2147
        %v3933 = vunpack.c.h.b16 %v2147
        %v3934 = vunpack.c.l.b16 %v2148
        %v3935 = vunpack.c.h.b16 %v2148
        %v3936 = vunpack.c.l.b16 %v2149
        %v3937 = vunpack.c.h.b16 %v2149
        %v3938 = vunpack.c.l.b16 %v2150
        %v3939 = vunpack.c.h.b16 %v2150
        %v3940 = vunpack.c.l.b16 %v2151
        %v3941 = vunpack.c.h.b16 %v2151
        %v3942 = vunpack.c.l.b16 %v2152
        %v3943 = vunpack.c.h.b16 %v2152
        %v3944 = vunpack.c.l.b16 %v2153
        %v3945 = vunpack.c.h.b16 %v2153
        %v3946 = vunpack.c.l.b16 %v2154
        %v3947 = vunpack.c.h.b16 %v2154
        %v3948 = vunpack.c.l.b16 %v2155
        %v3949 = vunpack.c.h.b16 %v2155
        %v3950 = vunpack.c.l.b16 %v2156
        %v3951 = vunpack.c.h.b16 %v2156
        %v3952 = vunpack.c.l.b16 %v2157
        %v3953 = vunpack.c.h.b16 %v2157
        %v3954 = vunpack.c.l.b16 %v2158
        %v3955 = vunpack.c.h.b16 %v2158
        %v3956 = vunpack.c.l.b16 %v2159
        %v3957 = vunpack.c.h.b16 %v2159
        %v3958 = vunpack.c.l.b16 %v2160
        %v3959 = vunpack.c.h.b16 %v2160
        %v3960 = vunpack.c.l.b16 %v2161
        %v3961 = vunpack.c.h.b16 %v2161
        %v3962 = vunpack.c.l.b16 %v2162
        %v3963 = vunpack.c.h.b16 %v2162
        %v3964 = vunpack.c.l.b16 %v2163
        %v3965 = vunpack.c.h.b16 %v2163
        %v3966 = vunpack.c.l.b16 %v2164
        %v3967 = vunpack.c.h.b16 %v2164
        %v3968 = vunpack.c.l.b16 %v2165
        %v3969 = vunpack.c.h.b16 %v2165
        %v3970 = vunpack.c.l.b16 %v2166
        %v3971 = vunpack.c.h.b16 %v2166
        %v3972 = vunpack.c.l.b16 %v2167
        %v3973 = vunpack.c.h.b16 %v2167
        %v3974 = vunpack.c.l.b16 %v2168
        %v3975 = vunpack.c.h.b16 %v2168
        %v3976 = vunpack.c.l.b16 %v2169
        %v3977 = vunpack.c.h.b16 %v2169
        %v3978 = vunpack.c.l.b16 %v2170
        %v3979 = vunpack.c.h.b16 %v2170
        %v3980 = vunpack.c.l.b16 %v2171
        %v3981 = vunpack.c.h.b16 %v2171
        %v3982 = vunpack.c.l.b16 %v2172
        %v3983 = vunpack.c.h.b16 %v2172
        %v3984 = vunpack.c.l.b16 %v2173
        %v3985 = vunpack.c.h.b16 %v2173
        %v3986 = vunpack.c.l.b16 %v2174
        %v3987 = vunpack.c.h.b16 %v2174
        %v3988 = vunpack.c.l.b16 %v2175
        %v3989 = vunpack.c.h.b16 %v2175
        %v3990 = vunpack.c.l.b16 %v2176
        %v3991 = vunpack.c.h.b16 %v2176
        %v3992 = vunpack.c.l.b16 %v2177
        %v3993 = vunpack.c.h.b16 %v2177
        %v3994 = vunpack.c.l.b16 %v2178
        %v3995 = vunpack.c.h.b16 %v2178
        %v3996 = vunpack.c.l.b16 %v2179
        %v3997 = vunpack.c.h.b16 %v2179
        %v3998 = vunpack.c.l.b16 %v2180
        %v3999 = vunpack.c.h.b16 %v2180
        %v4000 = vunpack.c.l.b16 %v2181
        %v4001 = vunpack.c.h.b16 %v2181
        %v4002 = vunpack.c.l.b16 %v2182
        %v4003 = vunpack.c.h.b16 %v2182
        %v4004 = vunpack.c.l.b16 %v2183
        %v4005 = vunpack.c.h.b16 %v2183
        %v4006 = vunpack.c.l.b16 %v2184
        %v4007 = vunpack.c.h.b16 %v2184
        %v4008 = vunpack.c.l.b16 %v2185
        %v4009 = vunpack.c.h.b16 %v2185
        %v4010 = vunpack.c.l.b16 %v2186
        %v4011 = vunpack.c.h.b16 %v2186
        %v4012 = vunpack.c.l.b16 %v2187
        %v4013 = vunpack.c.h.b16 %v2187
        %v4014 = vunpack.c.l.b16 %v2188
        %v4015 = vunpack.c.h.b16 %v2188
        %v4016 = vunpack.c.l.b16 %v2189
        %v4017 = vunpack.c.h.b16 %v2189
        %v4018 = vunpack.c.l.b16 %v2190
        %v4019 = vunpack.c.h.b16 %v2190
        %v4020 = vunpack.c.l.b16 %v2191
        %v4021 = vunpack.c.h.b16 %v2191
        %v4022 = vunpack.c.l.b16 %v2192
        %v4023 = vunpack.c.h.b16 %v2192
        %v4024 = vunpack.c.l.b16 %v2193
        %v4025 = vunpack.c.h.b16 %v2193
        %v4026 = vunpack.c.l.b16 %v2194
        %v4027 = vunpack.c.h.b16 %v2194
        %v4028 = vunpack.c.l.b16 %v2195
        %v4029 = vunpack.c.h.b16 %v2195
        %v4030 = vunpack.c.l.b16 %v2196
        %v4031 = vunpack.c.h.b16 %v2196
        %v4032 = vunpack.c.l.b16 %v2197
        %v4033 = vunpack.c.h.b16 %v2197
        %v4034 = vunpack.c.l.b16 %v2198
        %v4035 = vunpack.c.h.b16 %v2198
        %v4036 = vunpack.c.l.b16 %v2199
        %v4037 = vunpack.c.h.b16 %v2199
        %v4038 = vunpack.c.l.b16 %v2200
        %v4039 = vunpack.c.h.b16 %v2200
        %v4040 = vunpack.c.l.b16 %v2201
        %v4041 = vunpack.c.h.b16 %v2201
        %v4042 = vunpack.c.l.b16 %v2202
        %v4043 = vunpack.c.h.b16 %v2202
        %v4044 = vunpack.c.l.b16 %v2203
        %v4045 = vunpack.c.h.b16 %v2203
        %v4046 = vunpack.c.l.b16 %v2204
        %v4047 = vunpack.c.h.b16 %v2204
        %v4048 = vunpack.c.l.b16 %v2205
        %v4049 = vunpack.c.h.b16 %v2205
        %v4050 = vunpack.c.l.b16 %v2206
        %v4051 = vunpack.c.h.b16 %v2206
        %v4052 = vunpack.c.l.b16 %v2207
        %v4053 = vunpack.c.h.b16 %v2207
        %v4054 = vunpack.c.l.b16 %v2208
        %v4055 = vunpack.c.h.b16 %v2208
        %v4056 = vunpack.c.l.b16 %v2209
        %v4057 = vunpack.c.h.b16 %v2209
        %v4058 = vunpack.c.l.b16 %v2210
        %v4059 = vunpack.c.h.b16 %v2210
        %v4060 = vunpack.c.l.b16 %v2211
        %v4061 = vunpack.c.h.b16 %v2211
        %v4062 = vunpack.c.l.b16 %v2212
        %v4063 = vunpack.c.h.b16 %v2212
        %v4064 = vunpack.c.l.b16 %v2213
        %v4065 = vunpack.c.h.b16 %v2213
        %v4066 = vunpack.c.l.b16 %v2214
        %v4067 = vunpack.c.h.b16 %v2214
        %v4068 = vunpack.c.l.b16 %v2215
        %v4069 = vunpack.c.h.b16 %v2215
        %v4070 = vunpack.c.l.b16 %v2216
        %v4071 = vunpack.c.h.b16 %v2216
        %v4072 = vunpack.c.l.b16 %v2217
        %v4073 = vunpack.c.h.b16 %v2217
        %v4074 = vunpack.c.l.b16 %v2218
        %v4075 = vunpack.c.h.b16 %v2218
        %v4076 = vunpack.c.l.b16 %v2219
        %v4077 = vunpack.c.h.b16 %v2219
        %v4078 = vunpack.c.l.b16 %v2220
        %v4079 = vunpack.c.h.b16 %v2220
        %v4080 = vunpack.c.l.b16 %v2221
        %v4081 = vunpack.c.h.b16 %v2221
        %v4082 = vunpack.c.l.b16 %v2222
        %v4083 = vunpack.c.h.b16 %v2222
        %v4084 = vunpack.c.l.b16 %v2223
        %v4085 = vunpack.c.h.b16 %v2223
        %v4086 = vunpack.c.l.b16 %v2224
        %v4087 = vunpack.c.h.b16 %v2224
        %v4088 = vunpack.c.l.b16 %v2225
        %v4089 = vunpack.c.h.b16 %v2225
        %v4090 = vunpack.c.l.b16 %v2226
        %v4091 = vunpack.c.h.b16 %v2226
        %v4092 = vunpack.c.l.b16 %v2227
        %v4093 = vunpack.c.h.b16 %v2227
        %v4094 = vunpack.c.l.b16 %v2228
        %v4095 = vunpack.c.h.b16 %v2228
        %v4096 = vunpack.c.l.b16 %v2229
        %v4097 = vunpack.c.h.b16 %v2229
        %v4098 = vunpack.c.l.b16 %v2230
        %v4099 = vunpack.c.h.b16 %v2230
        %v4100 = vunpack.c.l.b16 %v2231
        %v4101 = vunpack.c.h.b16 %v2231
        %v4102 = vunpack.c.l.b16 %v2232
        %v4103 = vunpack.c.h.b16 %v2232
        %v4104 = vunpack.c.l.b16 %v2233
        %v4105 = vunpack.c.h.b16 %v2233
        %v4106 = vunpack.c.l.b16 %v2234
        %v4107 = vunpack.c.h.b16 %v2234
        %v4108 = vunpack.c.l.b16 %v2235
        %v4109 = vunpack.c.h.b16 %v2235
        %v4110 = vunpack.c.l.b16 %v2236
        %v4111 = vunpack.c.h.b16 %v2236
        %v4112 = vunpack.c.l.b16 %v2237
        %v4113 = vunpack.c.h.b16 %v2237
        %v4114 = vunpack.c.l.b16 %v2238
        %v4115 = vunpack.c.h.b16 %v2238
        %v4116 = vunpack.c.l.b16 %v2239
        %v4117 = vunpack.c.h.b16 %v2239
        %v4118 = vunpack.c.l.b16 %v2240
        %v4119 = vunpack.c.h.b16 %v2240
        %v4120 = vunpack.c.l.b16 %v2241
        %v4121 = vunpack.c.h.b16 %v2241
        %v4122 = vunpack.c.l.b16 %v2242
        %v4123 = vunpack.c.h.b16 %v2242
        %v4124 = vunpack.c.l.b16 %v2243
        %v4125 = vunpack.c.h.b16 %v2243
        %v4126 = vunpack.c.l.b16 %v2244
        %v4127 = vunpack.c.h.b16 %v2244
        %v4128 = vunpack.c.l.b16 %v2245
        %v4129 = vunpack.c.h.b16 %v2245
        %v4130 = vunpack.c.l.b16 %v2246
        %v4131 = vunpack.c.h.b16 %v2246
        %v4132 = vunpack.c.l.b16 %v2247
        %v4133 = vunpack.c.h.b16 %v2247
        %v4134 = vunpack.c.l.b16 %v2248
        %v4135 = vunpack.c.h.b16 %v2248
        %v4136 = vunpack.c.l.b16 %v2249
        %v4137 = vunpack.c.h.b16 %v2249
        %v4138 = vunpack.c.l.b16 %v2250
        %v4139 = vunpack.c.h.b16 %v2250
        %v4140 = vunpack.c.l.b16 %v2251
        %v4141 = vunpack.c.h.b16 %v2251
        %v4142 = vunpack.c.l.b16 %v2252
        %v4143 = vunpack.c.h.b16 %v2252
        %v4144 = vunpack.c.l.b16 %v2253
        %v4145 = vunpack.c.h.b16 %v2253
        %v4146 = vunpack.c.l.b16 %v2254
        %v4147 = vunpack.c.h.b16 %v2254
        %v4148 = vunpack.c.l.b16 %v2255
        %v4149 = vunpack.c.h.b16 %v2255
        %v4150 = vunpack.c.l.b16 %v2256
        %v4151 = vunpack.c.h.b16 %v2256
        %v4152 = vunpack.c.l.b16 %v2257
        %v4153 = vunpack.c.h.b16 %v2257
        %v4154 = vunpack.c.l.b16 %v2258
        %v4155 = vunpack.c.h.b16 %v2258
        %v4156 = vunpack.c.l.b16 %v2259
        %v4157 = vunpack.c.h.b16 %v2259
        %v4158 = vunpack.c.l.b16 %v2260
        %v4159 = vunpack.c.h.b16 %v2260
        %v4160 = vunpack.c.l.b16 %v2261
        %v4161 = vunpack.c.h.b16 %v2261
        %v4162 = vunpack.c.l.b16 %v2262
        %v4163 = vunpack.c.h.b16 %v2262
        %v4164 = vunpack.c.l.b16 %v2263
        %v4165 = vunpack.c.h.b16 %v2263
        %v4166 = vunpack.c.l.b16 %v2264
        %v4167 = vunpack.c.h.b16 %v2264
        %v4168 = vunpack.c.l.b16 %v2265
        %v4169 = vunpack.c.h.b16 %v2265
        %v4170 = vunpack.c.l.b16 %v2266
        %v4171 = vunpack.c.h.b16 %v2266
        %v4172 = vunpack.c.l.b16 %v2267
        %v4173 = vunpack.c.h.b16 %v2267
        %v4174 = vunpack.c.l.b16 %v2268
        %v4175 = vunpack.c.h.b16 %v2268
        %v4176 = vunpack.c.l.b16 %v2269
        %v4177 = vunpack.c.h.b16 %v2269
        %v4178 = vunpack.c.l.b16 %v2270
        %v4179 = vunpack.c.h.b16 %v2270
        %v4180 = vunpack.c.l.b16 %v2271
        %v4181 = vunpack.c.h.b16 %v2271
        %v4182 = vunpack.c.l.b16 %v2272
        %v4183 = vunpack.c.h.b16 %v2272
        %v4184 = vunpack.c.l.b16 %v2273
        %v4185 = vunpack.c.h.b16 %v2273
        %v4186 = vunpack.c.l.b16 %v2274
        %v4187 = vunpack.c.h.b16 %v2274
        %v4188 = vunpack.c.l.b16 %v2275
        %v4189 = vunpack.c.h.b16 %v2275
        %v4190 = vunpack.c.l.b16 %v2276
        %v4191 = vunpack.c.h.b16 %v2276
        %v4192 = vunpack.c.l.b16 %v2277
        %v4193 = vunpack.c.h.b16 %v2277
        %v4194 = vunpack.c.l.b16 %v2278
        %v4195 = vunpack.c.h.b16 %v2278
        %v4196 = vunpack.c.l.b16 %v2279
        %v4197 = vunpack.c.h.b16 %v2279
        %v4198 = vunpack.c.l.b16 %v2280
        %v4199 = vunpack.c.h.b16 %v2280
        %v4200 = vunpack.c.l.b16 %v2281
        %v4201 = vunpack.c.h.b16 %v2281
        %v4202 = vunpack.c.l.b16 %v2282
        %v4203 = vunpack.c.h.b16 %v2282
        %v4204 = vunpack.c.l.b16 %v2283
        %v4205 = vunpack.c.h.b16 %v2283
        %v4206 = vunpack.c.l.b16 %v2284
        %v4207 = vunpack.c.h.b16 %v2284
        %v4208 = vunpack.c.l.b16 %v2285
        %v4209 = vunpack.c.h.b16 %v2285
        %v4210 = vunpack.c.l.b16 %v2286
        %v4211 = vunpack.c.h.b16 %v2286
        %v4212 = vunpack.c.l.b16 %v2287
        %v4213 = vunpack.c.h.b16 %v2287
        %v4214 = vunpack.c.l.b16 %v2288
        %v4215 = vunpack.c.h.b16 %v2288
        %v4216 = vunpack.c.l.b16 %v2289
        %v4217 = vunpack.c.h.b16 %v2289
        %v4218 = vunpack.c.l.b16 %v2290
        %v4219 = vunpack.c.h.b16 %v2290
        %v4220 = vunpack.c.l.b16 %v2291
        %v4221 = vunpack.c.h.b16 %v2291
        %v4222 = vunpack.c.l.b16 %v2292
        %v4223 = vunpack.c.h.b16 %v2292
        %v4224 = vunpack.c.l.b16 %v2293
        %v4225 = vunpack.c.h.b16 %v2293
        %v4226 = vunpack.c.l.b16 %v2294
        %v4227 = vunpack.c.h.b16 %v2294
        %v4228 = vunpack.c.l.b16 %v2295
        %v4229 = vunpack.c.h.b16 %v2295
        %v4230 = vunpack.c.l.b16 %v2296
        %v4231 = vunpack.c.h.b16 %v2296
        %v4232 = vunpack.c.l.b16 %v2297
        %v4233 = vunpack.c.h.b16 %v2297
        %v4234 = vunpack.c.l.b16 %v2298
        %v4235 = vunpack.c.h.b16 %v2298
        %v4236 = vunpack.c.l.b16 %v2299
        %v4237 = vunpack.c.h.b16 %v2299
        %v4238 = vunpack.c.l.b16 %v2300
        %v4239 = vunpack.c.h.b16 %v2300
        %v4240 = vunpack.c.l.b16 %v2301
        %v4241 = vunpack.c.h.b16 %v2301
        %v4242 = vunpack.c.l.b16 %v2302
        %v4243 = vunpack.c.h.b16 %v2302
        %v4244 = vunpack.c.l.b16 %v2303
        %v4245 = vunpack.c.h.b16 %v2303
        %v4246 = vunpack.c.l.b16 %v2304
        %v4247 = vunpack.c.h.b16 %v2304
        %v4248 = vunpack.c.l.b16 %v2305
        %v4249 = vunpack.c.h.b16 %v2305
        %v4250 = vunpack.c.l.b16 %v2306
        %v4251 = vunpack.c.h.b16 %v2306
        %v4252 = vunpack.c.l.b16 %v2307
        %v4253 = vunpack.c.h.b16 %v2307
        %v4254 = vunpack.c.l.b16 %v2308
        %v4255 = vunpack.c.h.b16 %v2308
        %v4256 = vunpack.c.l.b16 %v2309
        %v4257 = vunpack.c.h.b16 %v2309
        %v4258 = vunpack.c.l.b16 %v2310
        %v4259 = vunpack.c.h.b16 %v2310
        %v4260 = vunpack.c.l.b16 %v2311
        %v4261 = vunpack.c.h.b16 %v2311
        %v4262 = vunpack.c.l.b16 %v2312
        %v4263 = vunpack.c.h.b16 %v2312
        %v4264 = vunpack.c.l.b16 %v2313
        %v4265 = vunpack.c.h.b16 %v2313
        %v4266 = vunpack.c.l.b16 %v2314
        %v4267 = vunpack.c.h.b16 %v2314
        %v4268 = vunpack.c.l.b16 %v2315
        %v4269 = vunpack.c.h.b16 %v2315
        %v4270 = vunpack.c.l.b16 %v2316
        %v4271 = vunpack.c.h.b16 %v2316
        %v4272 = vunpack.c.l.b16 %v2317
        %v4273 = vunpack.c.h.b16 %v2317
        %v4274 = vunpack.c.l.b16 %v2318
        %v4275 = vunpack.c.h.b16 %v2318
        %v4276 = vunpack.c.l.b16 %v2319
        %v4277 = vunpack.c.h.b16 %v2319
        %v4278 = vunpack.c.l.b16 %v2320
        %v4279 = vunpack.c.h.b16 %v2320
        %v4280 = vunpack.c.l.b16 %v2321
        %v4281 = vunpack.c.h.b16 %v2321
        %v4282 = vunpack.c.l.b16 %v2322
        %v4283 = vunpack.c.h.b16 %v2322
        %v4284 = vunpack.c.l.b16 %v2323
        %v4285 = vunpack.c.h.b16 %v2323
        %v4286 = vunpack.c.l.b16 %v2324
        %v4287 = vunpack.c.h.b16 %v2324
        %v4288 = vunpack.c.l.b16 %v2325
        %v4289 = vunpack.c.h.b16 %v2325
        %v4290 = vunpack.c.l.b16 %v2326
        %v4291 = vunpack.c.h.b16 %v2326
        %v4292 = vunpack.c.l.b16 %v2327
        %v4293 = vunpack.c.h.b16 %v2327
        %v4294 = vunpack.c.l.b16 %v2328
        %v4295 = vunpack.c.h.b16 %v2328
        %v4296 = vunpack.c.l.b16 %v2329
        %v4297 = vunpack.c.h.b16 %v2329
        %v4298 = vunpack.c.l.b16 %v2330
        %v4299 = vunpack.c.h.b16 %v2330
        %v4300 = vunpack.c.l.b16 %v2331
        %v4301 = vunpack.c.h.b16 %v2331
        %v4302 = vunpack.c.l.b16 %v2332
        %v4303 = vunpack.c.h.b16 %v2332
        %v4304 = vunpack.c.l.b16 %v2333
        %v4305 = vunpack.c.h.b16 %v2333
        %v4306 = vunpack.c.l.b16 %v2334
        %v4307 = vunpack.c.h.b16 %v2334
        %v4308 = vunpack.c.l.b16 %v2335
        %v4309 = vunpack.c.h.b16 %v2335
        %v4310 = vunpack.c.l.b16 %v2336
        %v4311 = vunpack.c.h.b16 %v2336
        %v4312 = vunpack.c.l.b16 %v2337
        %v4313 = vunpack.c.h.b16 %v2337
        %v4314 = vunpack.c.l.b16 %v2338
        %v4315 = vunpack.c.h.b16 %v2338
        %v4316 = vunpack.c.l.b16 %v2339
        %v4317 = vunpack.c.h.b16 %v2339
        %v4318 = vunpack.c.l.b16 %v2340
        %v4319 = vunpack.c.h.b16 %v2340
        %v4320 = vunpack.c.l.b16 %v2341
        %v4321 = vunpack.c.h.b16 %v2341
        %v4322 = vunpack.c.l.b16 %v2342
        %v4323 = vunpack.c.h.b16 %v2342
        %v4324 = vunpack.c.l.b16 %v2343
        %v4325 = vunpack.c.h.b16 %v2343
        %v4326 = vunpack.c.l.b16 %v2344
        %v4327 = vunpack.c.h.b16 %v2344
        %v4328 = vunpack.c.l.b16 %v2345
        %v4329 = vunpack.c.h.b16 %v2345
        %v4330 = vunpack.c.l.b16 %v2346
        %v4331 = vunpack.c.h.b16 %v2346
        %v4332 = vunpack.c.l.b16 %v2347
        %v4333 = vunpack.c.h.b16 %v2347
        %v4334 = vunpack.c.l.b16 %v2348
        %v4335 = vunpack.c.h.b16 %v2348
        %v4336 = vunpack.c.l.b16 %v2349
        %v4337 = vunpack.c.h.b16 %v2349
        %v4338 = vunpack.c.l.b16 %v2350
        %v4339 = vunpack.c.h.b16 %v2350
        %v4340 = vunpack.c.l.b16 %v2351
        %v4341 = vunpack.c.h.b16 %v2351
        %v4342 = vunpack.c.l.b16 %v2352
        %v4343 = vunpack.c.h.b16 %v2352
        %v4344 = vunpack.c.l.b16 %v2353
        %v4345 = vunpack.c.h.b16 %v2353
        %v4346 = vunpack.c.l.b16 %v2354
        %v4347 = vunpack.c.h.b16 %v2354
        %v4348 = vunpack.c.l.b16 %v2355
        %v4349 = vunpack.c.h.b16 %v2355
        %v4350 = vunpack.c.l.b16 %v2356
        %v4351 = vunpack.c.h.b16 %v2356
        %v4352 = vunpack.c.l.b16 %v2357
        %v4353 = vunpack.c.h.b16 %v2357
        %v4354 = vunpack.c.l.b16 %v2358
        %v4355 = vunpack.c.h.b16 %v2358
        %v4356 = vunpack.c.l.b16 %v2359
        %v4357 = vunpack.c.h.b16 %v2359
        %v4358 = vunpack.c.l.b16 %v2360
        %v4359 = vunpack.c.h.b16 %v2360
        %v4360 = vunpack.c.l.b16 %v2361
        %v4361 = vunpack.c.h.b16 %v2361
        %v4362 = vunpack.c.l.b16 %v2362
        %v4363 = vunpack.c.h.b16 %v2362
        %v4364 = vunpack.c.l.b16 %v2363
        %v4365 = vunpack.c.h.b16 %v2363
        %v4366 = vunpack.c.l.b16 %v2364
        %v4367 = vunpack.c.h.b16 %v2364
        %v4368 = vunpack.c.l.b16 %v2365
        %v4369 = vunpack.c.h.b16 %v2365
        %v4370 = vunpack.c.l.b16 %v2366
        %v4371 = vunpack.c.h.b16 %v2366
        %v4372 = vunpack.c.l.b16 %v2367
        %v4373 = vunpack.c.h.b16 %v2367
        %v4374 = vunpack.c.l.b16 %v2368
        %v4375 = vunpack.c.h.b16 %v2368
        %v4376 = vunpack.c.l.b16 %v2369
        %v4377 = vunpack.c.h.b16 %v2369
        %v4378 = vunpack.c.l.b16 %v2370
        %v4379 = vunpack.c.h.b16 %v2370
        %v4380 = vunpack.c.l.b16 %v2371
        %v4381 = vunpack.c.h.b16 %v2371
        %v4382 = vunpack.c.l.b16 %v2372
        %v4383 = vunpack.c.h.b16 %v2372
        %v4384 = vunpack.c.l.b16 %v2373
        %v4385 = vunpack.c.h.b16 %v2373
        %v4386 = vunpack.c.l.b16 %v2374
        %v4387 = vunpack.c.h.b16 %v2374
        %v4388 = vunpack.c.l.b16 %v2375
        %v4389 = vunpack.c.h.b16 %v2375
        %v4390 = vunpack.c.l.b16 %v2376
        %v4391 = vunpack.c.h.b16 %v2376
        %v4392 = vunpack.c.l.b16 %v2377
        %v4393 = vunpack.c.h.b16 %v2377
        %v4394 = vunpack.c.l.b16 %v2378
        %v4395 = vunpack.c.h.b16 %v2378
        %v4396 = vunpack.c.l.b16 %v2379
        %v4397 = vunpack.c.h.b16 %v2379
        %v4398 = vunpack.c.l.b16 %v2380
        %v4399 = vunpack.c.h.b16 %v2380
        %v4400 = vunpack.c.l.b16 %v2381
        %v4401 = vunpack.c.h.b16 %v2381
        %v4402 = vunpack.c.l.b16 %v2382
        %v4403 = vunpack.c.h.b16 %v2382
        %v4404 = vunpack.c.l.b16 %v2383
        %v4405 = vunpack.c.h.b16 %v2383
        %v4406 = vunpack.c.l.b16 %v2384
        %v4407 = vunpack.c.h.b16 %v2384
        %v4408 = vunpack.c.l.b16 %v2385
        %v4409 = vunpack.c.h.b16 %v2385
        %v4410 = vunpack.c.l.b16 %v2386
        %v4411 = vunpack.c.h.b16 %v2386
        %v4412 = vunpack.c.l.b16 %v2387
        %v4413 = vunpack.c.h.b16 %v2387
        %v4414 = vunpack.c.l.b16 %v2388
        %v4415 = vunpack.c.h.b16 %v2388
        %v4416 = vunpack.c.l.b16 %v2389
        %v4417 = vunpack.c.h.b16 %v2389
        %v4418 = vunpack.c.l.b16 %v2390
        %v4419 = vunpack.c.h.b16 %v2390
        %v4420 = vunpack.c.l.b16 %v2391
        %v4421 = vunpack.c.h.b16 %v2391
        %v4422 = vunpack.c.l.b16 %v2392
        %v4423 = vunpack.c.h.b16 %v2392
        %v4424 = vunpack.c.l.b16 %v2393
        %v4425 = vunpack.c.h.b16 %v2393
        %v4426 = vunpack.c.l.b16 %v2394
        %v4427 = vunpack.c.h.b16 %v2394
        %v4428 = vunpack.c.l.b16 %v2395
        %v4429 = vunpack.c.h.b16 %v2395
        %v4430 = vunpack.c.l.b16 %v2396
        %v4431 = vunpack.c.h.b16 %v2396
        %v4432 = vunpack.c.l.b16 %v2397
        %v4433 = vunpack.c.h.b16 %v2397
        %v4434 = vunpack.c.l.b16 %v2398
        %v4435 = vunpack.c.h.b16 %v2398
        %v4436 = vunpack.c.l.b16 %v2399
        %v4437 = vunpack.c.h.b16 %v2399
        %v4438 = vunpack.c.l.b16 %v2400
        %v4439 = vunpack.c.h.b16 %v2400
        %v4440 = vunpack.c.l.b16 %v2401
        %v4441 = vunpack.c.h.b16 %v2401
        %v4442 = vunpack.c.l.b16 %v2402
        %v4443 = vunpack.c.h.b16 %v2402
        %v4444 = vunpack.c.l.b16 %v2403
        %v4445 = vunpack.c.h.b16 %v2403
        %v4446 = vunpack.c.l.b16 %v2404
        %v4447 = vunpack.c.h.b16 %v2404
        %v4448 = vunpack.c.l.b16 %v2405
        %v4449 = vunpack.c.h.b16 %v2405
        %v4450 = vunpack.c.l.b16 %v2406
        %v4451 = vunpack.c.h.b16 %v2406
        %v4452 = vunpack.c.l.b16 %v2407
        %v4453 = vunpack.c.h.b16 %v2407
        %v4454 = vunpack.c.l.b16 %v2408
        %v4455 = vunpack.c.h.b16 %v2408
        %v4456 = vunpack.c.l.b16 %v2409
        %v4457 = vunpack.c.h.b16 %v2409
        %v4458 = vunpack.c.l.b16 %v2410
        %v4459 = vunpack.c.h.b16 %v2410
        %v4460 = vunpack.c.l.b16 %v2411
        %v4461 = vunpack.c.h.b16 %v2411
        %v4462 = vunpack.c.l.b16 %v2412
        %v4463 = vunpack.c.h.b16 %v2412
        %v4464 = vunpack.c.l.b16 %v2413
        %v4465 = vunpack.c.h.b16 %v2413
        %v4466 = vunpack.c.l.b16 %v2414
        %v4467 = vunpack.c.h.b16 %v2414
        %v4468 = vunpack.c.l.b16 %v2415
        %v4469 = vunpack.c.h.b16 %v2415
        %v4470 = vunpack.c.l.b16 %v2416
        %v4471 = vunpack.c.h.b16 %v2416
        %v4472 = vunpack.c.l.b16 %v2417
        %v4473 = vunpack.c.h.b16 %v2417
        %v4474 = vunpack.c.l.b16 %v2418
        %v4475 = vunpack.c.h.b16 %v2418
        %v4476 = vunpack.c.l.b16 %v2419
        %v4477 = vunpack.c.h.b16 %v2419
        %v4478 = vunpack.c.l.b16 %v2420
        %v4479 = vunpack.c.h.b16 %v2420
        %v4480 = vunpack.c.l.b16 %v2421
        %v4481 = vunpack.c.h.b16 %v2421
        %v4482 = vunpack.c.l.b16 %v2422
        %v4483 = vunpack.c.h.b16 %v2422
        %v4484 = vunpack.c.l.b16 %v2423
        %v4485 = vunpack.c.h.b16 %v2423
        %v4486 = vunpack.c.l.b16 %v2424
        %v4487 = vunpack.c.h.b16 %v2424
        %v4488 = vunpack.c.l.b16 %v2425
        %v4489 = vunpack.c.h.b16 %v2425
        %v4490 = vunpack.c.l.b16 %v2426
        %v4491 = vunpack.c.h.b16 %v2426
        %v4492 = vunpack.c.l.b16 %v2427
        %v4493 = vunpack.c.h.b16 %v2427
        %v4494 = vunpack.c.l.b16 %v2428
        %v4495 = vunpack.c.h.b16 %v2428
        %v4496 = vunpack.c.l.b16 %v2429
        %v4497 = vunpack.c.h.b16 %v2429
        %v4498 = vunpack.c.l.b16 %v2430
        %v4499 = vunpack.c.h.b16 %v2430
        %v4500 = vunpack.c.l.b16 %v2431
        %v4501 = vunpack.c.h.b16 %v2431
        %v4502 = vunpack.c.l.b16 %v2432
        %v4503 = vunpack.c.h.b16 %v2432
        %v4504 = vunpack.c.l.b16 %v2433
        %v4505 = vunpack.c.h.b16 %v2433
        %v4506 = vunpack.c.l.b16 %v2434
        %v4507 = vunpack.c.h.b16 %v2434
        %v4508 = vunpack.c.l.b16 %v2435
        %v4509 = vunpack.c.h.b16 %v2435
        %v4510 = vunpack.c.l.b16 %v2436
        %v4511 = vunpack.c.h.b16 %v2436
        %v4512 = vunpack.c.l.b16 %v2437
        %v4513 = vunpack.c.h.b16 %v2437
        %v4514 = vunpack.c.l.b16 %v2438
        %v4515 = vunpack.c.h.b16 %v2438
        %v4516 = vunpack.c.l.b16 %v2439
        %v4517 = vunpack.c.h.b16 %v2439
        %v4518 = vunpack.c.l.b16 %v2440
        %v4519 = vunpack.c.h.b16 %v2440
        %v4520 = vunpack.c.l.b16 %v2441
        %v4521 = vunpack.c.h.b16 %v2441
        %v4522 = vunpack.c.l.b16 %v2442
        %v4523 = vunpack.c.h.b16 %v2442
        %v4524 = vunpack.c.l.b16 %v2443
        %v4525 = vunpack.c.h.b16 %v2443
        %v4526 = vunpack.c.l.b16 %v2444
        %v4527 = vunpack.c.h.b16 %v2444
        %v4528 = vunpack.c.l.b16 %v2445
        %v4529 = vunpack.c.h.b16 %v2445
        %v4530 = vunpack.c.l.b16 %v2446
        %v4531 = vunpack.c.h.b16 %v2446
        %v4532 = vunpack.c.l.b16 %v2447
        %v4533 = vunpack.c.h.b16 %v2447
        %v4534 = vunpack.c.l.b16 %v2448
        %v4535 = vunpack.c.h.b16 %v2448
        %v4536 = vunpack.c.l.b16 %v2449
        %v4537 = vunpack.c.h.b16 %v2449
        %v4538 = vunpack.c.l.b16 %v2450
        %v4539 = vunpack.c.h.b16 %v2450
        %v4540 = vunpack.c.l.b16 %v2451
        %v4541 = vunpack.c.h.b16 %v2451
        %v4542 = vunpack.c.l.b16 %v2452
        %v4543 = vunpack.c.h.b16 %v2452
        %v4544 = vunpack.c.l.b16 %v2453
        %v4545 = vunpack.c.h.b16 %v2453
        %v4546 = vunpack.c.l.b16 %v2454
        %v4547 = vunpack.c.h.b16 %v2454
        %v4548 = vunpack.c.l.b16 %v2455
        %v4549 = vunpack.c.h.b16 %v2455
        %v4550 = vunpack.c.l.b16 %v2456
        %v4551 = vunpack.c.h.b16 %v2456
        %v4552 = vunpack.c.l.b16 %v2457
        %v4553 = vunpack.c.h.b16 %v2457
        %v4554 = vunpack.c.l.b16 %v2458
        %v4555 = vunpack.c.h.b16 %v2458
        %v4556 = vunpack.c.l.b16 %v2459
        %v4557 = vunpack.c.h.b16 %v2459
        %v4558 = vunpack.c.l.b16 %v2460
        %v4559 = vunpack.c.h.b16 %v2460
        %v4560 = vunpack.c.l.b16 %v2461
        %v4561 = vunpack.c.h.b16 %v2461
        %v4562 = vunpack.c.l.b16 %v2462
        %v4563 = vunpack.c.h.b16 %v2462
        %v4564 = vunpack.c.l.b16 %v2463
        %v4565 = vunpack.c.h.b16 %v2463
        %v4566 = vunpack.c.l.b16 %v2464
        %v4567 = vunpack.c.h.b16 %v2464
        %v4568 = vunpack.c.l.b16 %v2465
        %v4569 = vunpack.c.h.b16 %v2465
        %v4570 = vunpack.c.l.b16 %v2466
        %v4571 = vunpack.c.h.b16 %v2466
        %v4572 = vunpack.c.l.b16 %v2467
        %v4573 = vunpack.c.h.b16 %v2467
        %v4574 = vunpack.c.l.b16 %v2468
        %v4575 = vunpack.c.h.b16 %v2468
        %v4576 = vunpack.c.l.b16 %v2469
        %v4577 = vunpack.c.h.b16 %v2469
        %v4578 = vunpack.c.l.b16 %v2470
        %v4579 = vunpack.c.h.b16 %v2470
        %v4580 = vunpack.c.l.b16 %v2471
        %v4581 = vunpack.c.h.b16 %v2471
        %v4582 = vunpack.c.l.b16 %v2472
        %v4583 = vunpack.c.h.b16 %v2472
        %v4584 = vunpack.c.l.b16 %v2473
        %v4585 = vunpack.c.h.b16 %v2473
        %v4586 = vunpack.c.l.b16 %v2474
        %v4587 = vunpack.c.h.b16 %v2474
        %v4588 = vunpack.c.l.b16 %v2475
        %v4589 = vunpack.c.h.b16 %v2475
        %v4590 = vunpack.c.l.b16 %v2476
        %v4591 = vunpack.c.h.b16 %v2476
        %v4592 = vunpack.c.l.b16 %v2477
        %v4593 = vunpack.c.h.b16 %v2477
        %v4594 = vunpack.c.l.b16 %v2478
        %v4595 = vunpack.c.h.b16 %v2478
        %v4596 = vunpack.c.l.b16 %v2479
        %v4597 = vunpack.c.h.b16 %v2479
        %v4598 = vunpack.c.l.b16 %v2480
        %v4599 = vunpack.c.h.b16 %v2480
        %v4600 = vunpack.c.l.b16 %v2481
        %v4601 = vunpack.c.h.b16 %v2481
        %v4602 = vunpack.c.l.b16 %v2482
        %v4603 = vunpack.c.h.b16 %v2482
        %v4604 = vunpack.c.l.b16 %v2483
        %v4605 = vunpack.c.h.b16 %v2483
        %v4606 = vunpack.c.l.b16 %v2484
        %v4607 = vunpack.c.h.b16 %v2484
        %v4608 = vunpack.c.l.b16 %v2485
        %v4609 = vunpack.c.h.b16 %v2485
        %v4610 = vunpack.c.l.b16 %v2486
        %v4611 = vunpack.c.h.b16 %v2486
        %v4612 = vunpack.c.l.b16 %v2487
        %v4613 = vunpack.c.h.b16 %v2487
        %v4614 = vunpack.c.l.b16 %v2488
        %v4615 = vunpack.c.h.b16 %v2488
        %v4616 = vunpack.c.l.b16 %v2489
        %v4617 = vunpack.c.h.b16 %v2489
        %v4618 = vunpack.c.l.b16 %v2490
        %v4619 = vunpack.c.h.b16 %v2490
        %v4620 = vunpack.c.l.b16 %v2491
        %v4621 = vunpack.c.h.b16 %v2491
        %v4622 = vunpack.c.l.b16 %v2492
        %v4623 = vunpack.c.h.b16 %v2492
        %v4624 = vunpack.c.l.b16 %v2493
        %v4625 = vunpack.c.h.b16 %v2493
        %v4626 = vunpack.c.l.b16 %v2494
        %v4627 = vunpack.c.h.b16 %v2494
        %v4628 = vunpack.c.l.b16 %v2495
        %v4629 = vunpack.c.h.b16 %v2495
        %v4630 = vunpack.c.l.b16 %v2496
        %v4631 = vunpack.c.h.b16 %v2496
        %v4632 = vunpack.c.l.b16 %v2497
        %v4633 = vunpack.c.h.b16 %v2497
        %v4634 = vunpack.c.l.b16 %v2498
        %v4635 = vunpack.c.h.b16 %v2498
        %v4636 = vunpack.c.l.b16 %v2499
        %v4637 = vunpack.c.h.b16 %v2499
        %v4638 = vunpack.c.l.b16 %v2500
        %v4639 = vunpack.c.h.b16 %v2500
        %v4640 = vunpack.c.l.b16 %v2501
        %v4641 = vunpack.c.h.b16 %v2501
        %v4642 = vunpack.c.l.b16 %v2502
        %v4643 = vunpack.c.h.b16 %v2502
        %v4644 = vunpack.c.l.b16 %v2503
        %v4645 = vunpack.c.h.b16 %v2503
        %v4646 = vunpack.c.l.b16 %v2504
        %v4647 = vunpack.c.h.b16 %v2504
        %v4648 = vunpack.c.l.b16 %v2505
        %v4649 = vunpack.c.h.b16 %v2505
        %v4650 = vunpack.c.l.b16 %v2506
        %v4651 = vunpack.c.h.b16 %v2506
        %v4652 = vunpack.c.l.b16 %v2507
        %v4653 = vunpack.c.h.b16 %v2507
        %v4654 = vunpack.c.l.b16 %v2508
        %v4655 = vunpack.c.h.b16 %v2508
        %v4656 = vunpack.c.l.b16 %v2509
        %v4657 = vunpack.c.h.b16 %v2509
        %v4658 = vunpack.c.l.b16 %v2510
        %v4659 = vunpack.c.h.b16 %v2510
        %v4660 = vunpack.c.l.b16 %v2511
        %v4661 = vunpack.c.h.b16 %v2511
        %v4662 = vunpack.c.l.b16 %v2512
        %v4663 = vunpack.c.h.b16 %v2512
        %v4664 = vunpack.c.l.b16 %v2513
        %v4665 = vunpack.c.h.b16 %v2513
        %v4666 = vunpack.c.l.b16 %v2514
        %v4667 = vunpack.c.h.b16 %v2514
        %v4668 = vunpack.c.l.b16 %v2515
        %v4669 = vunpack.c.h.b16 %v2515
        %v4670 = vunpack.c.l.b16 %v2516
        %v4671 = vunpack.c.h.b16 %v2516
        %v4672 = vunpack.c.l.b16 %v2517
        %v4673 = vunpack.c.h.b16 %v2517
        %v4674 = vunpack.c.l.b16 %v2518
        %v4675 = vunpack.c.h.b16 %v2518
        %v4676 = vunpack.c.l.b16 %v2519
        %v4677 = vunpack.c.h.b16 %v2519
        %v4678 = vunpack.c.l.b16 %v2520
        %v4679 = vunpack.c.h.b16 %v2520
        %v4680 = vunpack.c.l.b16 %v2521
        %v4681 = vunpack.c.h.b16 %v2521
        %v4682 = vunpack.c.l.b16 %v2522
        %v4683 = vunpack.c.h.b16 %v2522
        %v4684 = vunpack.c.l.b16 %v2523
        %v4685 = vunpack.c.h.b16 %v2523
        %v4686 = vunpack.c.l.b16 %v2524
        %v4687 = vunpack.c.h.b16 %v2524
        %v4688 = vunpack.c.l.b16 %v2525
        %v4689 = vunpack.c.h.b16 %v2525
        %v4690 = vunpack.c.l.b16 %v2526
        %v4691 = vunpack.c.h.b16 %v2526
        %v4692 = vunpack.c.l.b16 %v2527
        %v4693 = vunpack.c.h.b16 %v2527
        %v4694 = vunpack.c.l.b16 %v2528
        %v4695 = vunpack.c.h.b16 %v2528
        %v4696 = vunpack.c.l.b16 %v2529
        %v4697 = vunpack.c.h.b16 %v2529
        %v4698 = vunpack.c.l.b16 %v2530
        %v4699 = vunpack.c.h.b16 %v2530
        %v4700 = vunpack.c.l.b16 %v2531
        %v4701 = vunpack.c.h.b16 %v2531
        %v4702 = vunpack.c.l.b16 %v2532
        %v4703 = vunpack.c.h.b16 %v2532
        %v4704 = vunpack.c.l.b16 %v2533
        %v4705 = vunpack.c.h.b16 %v2533
        %v4706 = vunpack.c.l.b16 %v2534
        %v4707 = vunpack.c.h.b16 %v2534
        %v4708 = vunpack.c.l.b16 %v2535
        %v4709 = vunpack.c.h.b16 %v2535
        %v4710 = vunpack.c.l.b16 %v2536
        %v4711 = vunpack.c.h.b16 %v2536
        %v4712 = vunpack.c.l.b16 %v2537
        %v4713 = vunpack.c.h.b16 %v2537
        %v4714 = vunpack.c.l.b16 %v2538
        %v4715 = vunpack.c.h.b16 %v2538
        %v4716 = vunpack.c.l.b16 %v2539
        %v4717 = vunpack.c.h.b16 %v2539
        %v4718 = vunpack.c.l.b16 %v2540
        %v4719 = vunpack.c.h.b16 %v2540
        %v4720 = vunpack.c.l.b16 %v2541
        %v4721 = vunpack.c.h.b16 %v2541
        %v4722 = vunpack.c.l.b16 %v2542
        %v4723 = vunpack.c.h.b16 %v2542
        %v4724 = vunpack.c.l.b16 %v2543
        %v4725 = vunpack.c.h.b16 %v2543
        %v4726 = vunpack.c.l.b16 %v2544
        %v4727 = vunpack.c.h.b16 %v2544
        %v4728 = vunpack.c.l.b16 %v2545
        %v4729 = vunpack.c.h.b16 %v2545
        %v4730 = vunpack.c.l.b16 %v2546
        %v4731 = vunpack.c.h.b16 %v2546
        %v4732 = vunpack.c.l.b16 %v2547
        %v4733 = vunpack.c.h.b16 %v2547
        %v4734 = vunpack.c.l.b16 %v2548
        %v4735 = vunpack.c.h.b16 %v2548
        %v4736 = vunpack.c.l.b16 %v2549
        %v4737 = vunpack.c.h.b16 %v2549
        %v4738 = vunpack.c.l.b16 %v2550
        %v4739 = vunpack.c.h.b16 %v2550
        %v4740 = vunpack.c.l.b16 %v2551
        %v4741 = vunpack.c.h.b16 %v2551
        %v4742 = vunpack.c.l.b16 %v2552
        %v4743 = vunpack.c.h.b16 %v2552
        %v4744 = vunpack.c.l.b16 %v2553
        %v4745 = vunpack.c.h.b16 %v2553
        %v4746 = vunpack.c.l.b16 %v2554
        %v4747 = vunpack.c.h.b16 %v2554
        %v4748 = vunpack.c.l.b16 %v2555
        %v4749 = vunpack.c.h.b16 %v2555
        %v4750 = vunpack.c.l.b16 %v2556
        %v4751 = vunpack.c.h.b16 %v2556
        %v4752 = vunpack.c.l.b16 %v2557
        %v4753 = vunpack.c.h.b16 %v2557
        %v4754 = vunpack.c.l.b16 %v2558
        %v4755 = vunpack.c.h.b16 %v2558
        %v4756 = vunpack.c.l.b16 %v2559
        %v4757 = vunpack.c.h.b16 %v2559
        %v4758 = vunpack.c.l.b16 %v2560
        %v4759 = vunpack.c.h.b16 %v2560
        %v4760 = vunpack.c.l.b16 %v2561
        %v4761 = vunpack.c.h.b16 %v2561
        %v4762 = vunpack.c.l.b16 %v2562
        %v4763 = vunpack.c.h.b16 %v2562
        %v4764 = vunpack.c.l.b16 %v2563
        %v4765 = vunpack.c.h.b16 %v2563
        %v4766 = vunpack.c.l.b16 %v2564
        %v4767 = vunpack.c.h.b16 %v2564
        %v4768 = vunpack.c.l.b16 %v2565
        %v4769 = vunpack.c.h.b16 %v2565
        %v4770 = vunpack.c.l.b16 %v2566
        %v4771 = vunpack.c.h.b16 %v2566
        %v4772 = vunpack.c.l.b16 %v2567
        %v4773 = vunpack.c.h.b16 %v2567
        %v4774 = vunpack.c.l.b16 %v2568
        %v4775 = vunpack.c.h.b16 %v2568
        %v4776 = vunpack.c.l.b16 %v2569
        %v4777 = vunpack.c.h.b16 %v2569
        %v4778 = vunpack.c.l.b16 %v2570
        %v4779 = vunpack.c.h.b16 %v2570
        %v4780 = vunpack.c.l.b16 %v2571
        %v4781 = vunpack.c.h.b16 %v2571
        %v4782 = vunpack.c.l.b16 %v2572
        %v4783 = vunpack.c.h.b16 %v2572
        %v4784 = vunpack.c.l.b16 %v2573
        %v4785 = vunpack.c.h.b16 %v2573
        %v4786 = vunpack.c.l.b16 %v2574
        %v4787 = vunpack.c.h.b16 %v2574
        %v4788 = vunpack.c.l.b16 %v2575
        %v4789 = vunpack.c.h.b16 %v2575
        %v4790 = vunpack.c.l.b16 %v2576
        %v4791 = vunpack.c.h.b16 %v2576
        %v4792 = vunpack.c.l.b16 %v2577
        %v4793 = vunpack.c.h.b16 %v2577
        %v4794 = vunpack.c.l.b16 %v2578
        %v4795 = vunpack.c.h.b16 %v2578
        %v4796 = vunpack.c.l.b16 %v2579
        %v4797 = vunpack.c.h.b16 %v2579
        %v4798 = vunpack.c.l.b16 %v2580
        %v4799 = vunpack.c.h.b16 %v2580
        %v4800 = vunpack.c.l.b16 %v2581
        %v4801 = vunpack.c.h.b16 %v2581
        %v4802 = vunpack.c.l.b16 %v2582
        %v4803 = vunpack.c.h.b16 %v2582
        %v4804 = vunpack.c.l.b16 %v2583
        %v4805 = vunpack.c.h.b16 %v2583
        %v4806 = vunpack.c.l.b16 %v2584
        %v4807 = vunpack.c.h.b16 %v2584
        %v4808 = vunpack.c.l.b16 %v2585
        %v4809 = vunpack.c.h.b16 %v2585
        %v4810 = vunpack.c.l.b16 %v2586
        %v4811 = vunpack.c.h.b16 %v2586
        %v4812 = vunpack.c.l.b16 %v2587
        %v4813 = vunpack.c.h.b16 %v2587
        %v4814 = vunpack.c.l.b16 %v2588
        %v4815 = vunpack.c.h.b16 %v2588
        %v4816 = vunpack.c.l.b16 %v2589
        %v4817 = vunpack.c.h.b16 %v2589
        %v4818 = vunpack.c.l.b16 %v2590
        %v4819 = vunpack.c.h.b16 %v2590
        %v4820 = vunpack.c.l.b16 %v2591
        %v4821 = vunpack.c.h.b16 %v2591
        %v4822 = vunpack.c.l.b16 %v2592
        %v4823 = vunpack.c.h.b16 %v2592
        %v4824 = vunpack.c.l.b16 %v2593
        %v4825 = vunpack.c.h.b16 %v2593
        %v4826 = vunpack.c.l.b16 %v2594
        %v4827 = vunpack.c.h.b16 %v2594
        %v4828 = vunpack.c.l.b16 %v2595
        %v4829 = vunpack.c.h.b16 %v2595
        %v4830 = vunpack.c.l.b16 %v2596
        %v4831 = vunpack.c.h.b16 %v2596
        %v4832 = vunpack.c.l.b16 %v2597
        %v4833 = vunpack.c.h.b16 %v2597
        %v4834 = vunpack.c.l.b16 %v2598
        %v4835 = vunpack.c.h.b16 %v2598
        %v4836 = vunpack.c.l.b16 %v2599
        %v4837 = vunpack.c.h.b16 %v2599
        %v4838 = vunpack.c.l.b16 %v2600
        %v4839 = vunpack.c.h.b16 %v2600
        %v4840 = vunpack.c.l.b16 %v2601
        %v4841 = vunpack.c.h.b16 %v2601
        %v4842 = vunpack.c.l.b16 %v2602
        %v4843 = vunpack.c.h.b16 %v2602
        %v4844 = vunpack.c.l.b16 %v2603
        %v4845 = vunpack.c.h.b16 %v2603
        %v4846 = vunpack.c.l.b16 %v2604
        %v4847 = vunpack.c.h.b16 %v2604
        %v4848 = vunpack.c.l.b16 %v2605
        %v4849 = vunpack.c.h.b16 %v2605
        %v4850 = vunpack.c.l.b16 %v2606
        %v4851 = vunpack.c.h.b16 %v2606
        %v4852 = vunpack.c.l.b16 %v2607
        %v4853 = vunpack.c.h.b16 %v2607
        %v4854 = vunpack.c.l.b16 %v2608
        %v4855 = vunpack.c.h.b16 %v2608
        %v4856 = vunpack.c.l.b16 %v2609
        %v4857 = vunpack.c.h.b16 %v2609
        %v4858 = vunpack.c.l.b16 %v2610
        %v4859 = vunpack.c.h.b16 %v2610
        %v4860 = vunpack.c.l.b16 %v2611
        %v4861 = vunpack.c.h.b16 %v2611
        %v4862 = vunpack.c.l.b16 %v2612
        %v4863 = vunpack.c.h.b16 %v2612
        %v4864 = vunpack.c.l.b16 %v2613
        %v4865 = vunpack.c.h.b16 %v2613
        %v4866 = vunpack.c.l.b16 %v2614
        %v4867 = vunpack.c.h.b16 %v2614
        %v4868 = vunpack.c.l.b16 %v2615
        %v4869 = vunpack.c.h.b16 %v2615
        %v4870 = vunpack.c.l.b16 %v2616
        %v4871 = vunpack.c.h.b16 %v2616
        %v4872 = vunpack.c.l.b16 %v2617
        %v4873 = vunpack.c.h.b16 %v2617
        %v4874 = vunpack.c.l.b16 %v2618
        %v4875 = vunpack.c.h.b16 %v2618
        %v4876 = vunpack.c.l.b16 %v2619
        %v4877 = vunpack.c.h.b16 %v2619
        %v4878 = vunpack.c.l.b16 %v2620
        %v4879 = vunpack.c.h.b16 %v2620
        %v4880 = vunpack.c.l.b16 %v2621
        %v4881 = vunpack.c.h.b16 %v2621
        %v4882 = vunpack.c.l.b16 %v2622
        %v4883 = vunpack.c.h.b16 %v2622
        %v4884 = vunpack.c.l.b16 %v2623
        %v4885 = vunpack.c.h.b16 %v2623
        %v4886 = vunpack.c.l.b16 %v2624
        %v4887 = vunpack.c.h.b16 %v2624
        %v4888 = vunpack.c.l.b16 %v2625
        %v4889 = vunpack.c.h.b16 %v2625
        %v4890 = vunpack.c.l.b16 %v2626
        %v4891 = vunpack.c.h.b16 %v2626
        %v4892 = vunpack.c.l.b16 %v2627
        %v4893 = vunpack.c.h.b16 %v2627
        %v4894 = vunpack.c.l.b16 %v2628
        %v4895 = vunpack.c.h.b16 %v2628
        %v4896 = vunpack.c.l.b16 %v2629
        %v4897 = vunpack.c.h.b16 %v2629
        %v4898 = vunpack.c.l.b16 %v2630
        %v4899 = vunpack.c.h.b16 %v2630
        %v4900 = vunpack.c.l.b16 %v2631
        %v4901 = vunpack.c.h.b16 %v2631
        %v4902 = vunpack.c.l.b16 %v2632
        %v4903 = vunpack.c.h.b16 %v2632
        %v4904 = vunpack.c.l.b16 %v2633
        %v4905 = vunpack.c.h.b16 %v2633
        %v4906 = vunpack.c.l.b16 %v2634
        %v4907 = vunpack.c.h.b16 %v2634
        %v4908 = vunpack.c.l.b16 %v2635
        %v4909 = vunpack.c.h.b16 %v2635
        %v4910 = vunpack.c.l.b16 %v2636
        %v4911 = vunpack.c.h.b16 %v2636
        %v4912 = vunpack.c.l.b16 %v2637
        %v4913 = vunpack.c.h.b16 %v2637
        %v4914 = vunpack.c.l.b16 %v2638
        %v4915 = vunpack.c.h.b16 %v2638
        %v4916 = vunpack.c.l.b16 %v2639
        %v4917 = vunpack.c.h.b16 %v2639
        %v4918 = vunpack.c.l.b16 %v2640
        %v4919 = vunpack.c.h.b16 %v2640
        %v4920 = vunpack.c.l.b16 %v2641
        %v4921 = vunpack.c.h.b16 %v2641
        %v4922 = vunpack.c.l.b16 %v2642
        %v4923 = vunpack.c.h.b16 %v2642
        %v4924 = vunpack.c.l.b16 %v2643
        %v4925 = vunpack.c.h.b16 %v2643
        %v4926 = vunpack.c.l.b16 %v2644
        %v4927 = vunpack.c.h.b16 %v2644
        %v4928 = vunpack.c.l.b16 %v2645
        %v4929 = vunpack.c.h.b16 %v2645
        %v4930 = vunpack.c.l.b16 %v2646
        %v4931 = vunpack.c.h.b16 %v2646
        %v4932 = vunpack.c.l.b16 %v2647
        %v4933 = vunpack.c.h.b16 %v2647
        %v4934 = vunpack.c.l.b16 %v2648
        %v4935 = vunpack.c.h.b16 %v2648
        %v4936 = vunpack.c.l.b16 %v2649
        %v4937 = vunpack.c.h.b16 %v2649
        %v4938 = vunpack.c.l.b16 %v2650
        %v4939 = vunpack.c.h.b16 %v2650
        %v4940 = vunpack.c.l.b16 %v2651
        %v4941 = vunpack.c.h.b16 %v2651
        %v4942 = vunpack.c.l.b16 %v2652
        %v4943 = vunpack.c.h.b16 %v2652
        %v4944 = vunpack.c.l.b16 %v2653
        %v4945 = vunpack.c.h.b16 %v2653
        %v4946 = vunpack.c.l.b16 %v2654
        %v4947 = vunpack.c.h.b16 %v2654
        %v4948 = vunpack.c.l.b16 %v2655
        %v4949 = vunpack.c.h.b16 %v2655
        %v4950 = vunpack.c.l.b16 %v2656
        %v4951 = vunpack.c.h.b16 %v2656
        %v4952 = vunpack.c.l.b16 %v2657
        %v4953 = vunpack.c.h.b16 %v2657
        %v4954 = vunpack.c.l.b16 %v2658
        %v4955 = vunpack.c.h.b16 %v2658
        %v4956 = vunpack.c.l.b16 %v2659
        %v4957 = vunpack.c.h.b16 %v2659
        %v4958 = vunpack.c.l.b16 %v2660
        %v4959 = vunpack.c.h.b16 %v2660
        %v4960 = vunpack.c.l.b16 %v2661
        %v4961 = vunpack.c.h.b16 %v2661
        %v4962 = vunpack.c.l.b16 %v2662
        %v4963 = vunpack.c.h.b16 %v2662
        %v4964 = vunpack.c.l.b16 %v2663
        %v4965 = vunpack.c.h.b16 %v2663
        %v4966 = vunpack.c.l.b16 %v2664
        %v4967 = vunpack.c.h.b16 %v2664
        %v4968 = vunpack.c.l.b16 %v2665
        %v4969 = vunpack.c.h.b16 %v2665
        %v4970 = vunpack.c.l.b16 %v2666
        %v4971 = vunpack.c.h.b16 %v2666
        %v4972 = vunpack.c.l.b16 %v2667
        %v4973 = vunpack.c.h.b16 %v2667
        %v4974 = vunpack.c.l.b16 %v2668
        %v4975 = vunpack.c.h.b16 %v2668
        %v4976 = vunpack.c.l.b16 %v2669
        %v4977 = vunpack.c.h.b16 %v2669
        %v4978 = vunpack.c.l.b16 %v2670
        %v4979 = vunpack.c.h.b16 %v2670
        %v4980 = vunpack.c.l.b16 %v2671
        %v4981 = vunpack.c.h.b16 %v2671
        %v4982 = vunpack.c.l.b16 %v2672
        %v4983 = vunpack.c.h.b16 %v2672
        %v4984 = vunpack.c.l.b16 %v2673
        %v4985 = vunpack.c.h.b16 %v2673
        %v4986 = vunpack.c.l.b16 %v2674
        %v4987 = vunpack.c.h.b16 %v2674
        %v4988 = vunpack.c.l.b16 %v2675
        %v4989 = vunpack.c.h.b16 %v2675
        %v4990 = vunpack.c.l.b16 %v2676
        %v4991 = vunpack.c.h.b16 %v2676
        %v4992 = vunpack.c.l.b16 %v2677
        %v4993 = vunpack.c.h.b16 %v2677
        %v4994 = vunpack.c.l.b16 %v2678
        %v4995 = vunpack.c.h.b16 %v2678
        %v4996 = vunpack.c.l.b16 %v2679
        %v4997 = vunpack.c.h.b16 %v2679
        %v4998 = vunpack.c.l.b16 %v2680
        %v4999 = vunpack.c.h.b16 %v2680
        %v5000 = vunpack.c.l.b16 %v2681
        %v5001 = vunpack.c.h.b16 %v2681
        %v5002 = vunpack.c.l.b16 %v2682
        %v5003 = vunpack.c.h.b16 %v2682
        %v5004 = vunpack.c.l.b16 %v2683
        %v5005 = vunpack.c.h.b16 %v2683
        %v5006 = vunpack.c.l.b16 %v2684
        %v5007 = vunpack.c.h.b16 %v2684
        %v5008 = vunpack.c.l.b16 %v2685
        %v5009 = vunpack.c.h.b16 %v2685
        %v5010 = vunpack.c.l.b16 %v2686
        %v5011 = vunpack.c.h.b16 %v2686
        %v5012 = vunpack.c.l.b16 %v2687
        %v5013 = vunpack.c.h.b16 %v2687
        %v5014 = vunpack.c.l.b16 %v2688
        %v5015 = vunpack.c.h.b16 %v2688
        %v5016 = vunpack.c.l.b16 %v2689
        %v5017 = vunpack.c.h.b16 %v2689
        %v5018 = vunpack.c.l.b16 %v2690
        %v5019 = vunpack.c.h.b16 %v2690
        %v5020 = vunpack.c.l.b16 %v2691
        %v5021 = vunpack.c.h.b16 %v2691
        %v5022 = vunpack.c.l.b16 %v2692
        %v5023 = vunpack.c.h.b16 %v2692
        %v5024 = vunpack.c.l.b16 %v2693
        %v5025 = vunpack.c.h.b16 %v2693
        %v5026 = vunpack.c.l.b16 %v2694
        %v5027 = vunpack.c.h.b16 %v2694
        %v5028 = vunpack.c.l.b16 %v2695
        %v5029 = vunpack.c.h.b16 %v2695
        %v5030 = vunpack.c.l.b16 %v2696
        %v5031 = vunpack.c.h.b16 %v2696
        %v5032 = vunpack.c.l.b16 %v2697
        %v5033 = vunpack.c.h.b16 %v2697
        %v5034 = vunpack.c.l.b16 %v2698
        %v5035 = vunpack.c.h.b16 %v2698
        %v5036 = vunpack.c.l.b16 %v2699
        %v5037 = vunpack.c.h.b16 %v2699
        %v5038 = vunpack.c.l.b16 %v2700
        %v5039 = vunpack.c.h.b16 %v2700
        %v5040 = vunpack.c.l.b16 %v2701
        %v5041 = vunpack.c.h.b16 %v2701
        %v5042 = vunpack.c.l.b16 %v2702
        %v5043 = vunpack.c.h.b16 %v2702
        %v5044 = vunpack.c.l.b16 %v2703
        %v5045 = vunpack.c.h.b16 %v2703
        %v5046 = vunpack.c.l.b16 %v2704
        %v5047 = vunpack.c.h.b16 %v2704
        %v5048 = vunpack.c.l.b16 %v2705
        %v5049 = vunpack.c.h.b16 %v2705
        %v5050 = vunpack.c.l.b16 %v2706
        %v5051 = vunpack.c.h.b16 %v2706
        %v5052 = vunpack.c.l.b16 %v2707
        %v5053 = vunpack.c.h.b16 %v2707
        %v5054 = vunpack.c.l.b16 %v2708
        %v5055 = vunpack.c.h.b16 %v2708
        %v5056 = vunpack.c.l.b16 %v2709
        %v5057 = vunpack.c.h.b16 %v2709
        %v5058 = vunpack.c.l.b16 %v2710
        %v5059 = vunpack.c.h.b16 %v2710
        %v5060 = vunpack.c.l.b16 %v2711
        %v5061 = vunpack.c.h.b16 %v2711
        %v5062 = vunpack.c.l.b16 %v2712
        %v5063 = vunpack.c.h.b16 %v2712
        %v5064 = vunpack.c.l.b16 %v2713
        %v5065 = vunpack.c.h.b16 %v2713
        %v5066 = vunpack.c.l.b16 %v2714
        %v5067 = vunpack.c.h.b16 %v2714
        %v5068 = vunpack.c.l.b16 %v2715
        %v5069 = vunpack.c.h.b16 %v2715
        %v5070 = vunpack.c.l.b16 %v2716
        %v5071 = vunpack.c.h.b16 %v2716
        %v5072 = vunpack.c.l.b16 %v2717
        %v5073 = vunpack.c.h.b16 %v2717
        %v5074 = vunpack.c.l.b16 %v2718
        %v5075 = vunpack.c.h.b16 %v2718
        %v5076 = vunpack.c.l.b16 %v2719
        %v5077 = vunpack.c.h.b16 %v2719
        %v5078 = vunpack.c.l.b16 %v2720
        %v5079 = vunpack.c.h.b16 %v2720
        %v5080 = vunpack.c.l.b16 %v2721
        %v5081 = vunpack.c.h.b16 %v2721
        %v5082 = vunpack.c.l.b16 %v2722
        %v5083 = vunpack.c.h.b16 %v2722
        %v5084 = vunpack.c.l.b16 %v2723
        %v5085 = vunpack.c.h.b16 %v2723
        %v5086 = vunpack.c.l.b16 %v2724
        %v5087 = vunpack.c.h.b16 %v2724
        %v5088 = vunpack.c.l.b16 %v2725
        %v5089 = vunpack.c.h.b16 %v2725
        %v5090 = vunpack.c.l.b16 %v2726
        %v5091 = vunpack.c.h.b16 %v2726
        %v5092 = vunpack.c.l.b16 %v2727
        %v5093 = vunpack.c.h.b16 %v2727
        %v5094 = vunpack.c.l.b16 %v2728
        %v5095 = vunpack.c.h.b16 %v2728
        %v5096 = vunpack.c.l.b16 %v2729
        %v5097 = vunpack.c.h.b16 %v2729
        %v5098 = vunpack.c.l.b16 %v2730
        %v5099 = vunpack.c.h.b16 %v2730
        %v5100 = vunpack.c.l.b16 %v2731
        %v5101 = vunpack.c.h.b16 %v2731
        %v5102 = vunpack.c.l.b16 %v2732
        %v5103 = vunpack.c.h.b16 %v2732
        %v5104 = vunpack.c.l.b16 %v2733
        %v5105 = vunpack.c.h.b16 %v2733
        %v5106 = vunpack.c.l.b16 %v2734
        %v5107 = vunpack.c.h.b16 %v2734
        %v5108 = vunpack.c.l.b16 %v2735
        %v5109 = vunpack.c.h.b16 %v2735
        %v5110 = vpack.c.b16 %v3546, %v3542
        %v5111 = vpack.c.b16 %v3547, %v3543
        %v5112 = vpack.c.b16 %v3548, %v3544
        %v5113 = vpack.c.b16 %v3549, %v3545
        %v5114 = vpack.c.b16 %v3554, %v3550
        %v5115 = vpack.c.b16 %v3555, %v3551
        %v5116 = vpack.c.b16 %v3556, %v3552
        %v5117 = vpack.c.b16 %v3557, %v3553
        %v5118 = vpack.c.b16 %v3562, %v3558
        %v5119 = vpack.c.b16 %v3563, %v3559
        %v5120 = vpack.c.b16 %v3564, %v3560
        %v5121 = vpack.c.b16 %v3565, %v3561
        %v5122 = vpack.c.b16 %v3570, %v3566
        %v5123 = vpack.c.b16 %v3571, %v3567
        %v5124 = vpack.c.b16 %v3572, %v3568
        %v5125 = vpack.c.b16 %v3573, %v3569
        %v5126 = vpack.c.b16 %v3578, %v3574
        %v5127 = vpack.c.b16 %v3579, %v3575
        %v5128 = vpack.c.b16 %v3580, %v3576
        %v5129 = vpack.c.b16 %v3581, %v3577
        %v5130 = vpack.c.b16 %v3586, %v3582
        %v5131 = vpack.c.b16 %v3587, %v3583
        %v5132 = vpack.c.b16 %v3588, %v3584
        %v5133 = vpack.c.b16 %v3589, %v3585
        %v5134 = vpack.c.b16 %v3594, %v3590
        %v5135 = vpack.c.b16 %v3595, %v3591
        %v5136 = vpack.c.b16 %v3596, %v3592
        %v5137 = vpack.c.b16 %v3597, %v3593
        %v5138 = vpack.c.b16 %v3602, %v3598
        %v5139 = vpack.c.b16 %v3603, %v3599
        %v5140 = vpack.c.b16 %v3604, %v3600
        %v5141 = vpack.c.b16 %v3605, %v3601
        %v5142 = vpack.c.b16 %v3610, %v3606
        %v5143 = vpack.c.b16 %v3611, %v3607
        %v5144 = vpack.c.b16 %v3612, %v3608
        %v5145 = vpack.c.b16 %v3613, %v3609
        %v5146 = vpack.c.b16 %v3618, %v3614
        %v5147 = vpack.c.b16 %v3619, %v3615
        %v5148 = vpack.c.b16 %v3620, %v3616
        %v5149 = vpack.c.b16 %v3621, %v3617
        %v5150 = vpack.c.b16 %v3626, %v3622
        %v5151 = vpack.c.b16 %v3627, %v3623
        %v5152 = vpack.c.b16 %v3628, %v3624
        %v5153 = vpack.c.b16 %v3629, %v3625
        %v5154 = vpack.c.b16 %v3634, %v3630
        %v5155 = vpack.c.b16 %v3635, %v3631
        %v5156 = vpack.c.b16 %v3636, %v3632
        %v5157 = vpack.c.b16 %v3637, %v3633
        %v5158 = vpack.c.b16 %v3642, %v3638
        %v5159 = vpack.c.b16 %v3643, %v3639
        %v5160 = vpack.c.b16 %v3644, %v3640
        %v5161 = vpack.c.b16 %v3645, %v3641
        %v5162 = vpack.c.b16 %v3650, %v3646
        %v5163 = vpack.c.b16 %v3651, %v3647
        %v5164 = vpack.c.b16 %v3652, %v3648
        %v5165 = vpack.c.b16 %v3653, %v3649
        %v5166 = vpack.c.b16 %v3658, %v3654
        %v5167 = vpack.c.b16 %v3659, %v3655
        %v5168 = vpack.c.b16 %v3660, %v3656
        %v5169 = vpack.c.b16 %v3661, %v3657
        %v5170 = vpack.c.b16 %v3666, %v3662
        %v5171 = vpack.c.b16 %v3667, %v3663
        %v5172 = vpack.c.b16 %v3668, %v3664
        %v5173 = vpack.c.b16 %v3669, %v3665
        %v5174 = vpack.c.b16 %v3674, %v3670
        %v5175 = vpack.c.b16 %v3675, %v3671
        %v5176 = vpack.c.b16 %v3676, %v3672
        %v5177 = vpack.c.b16 %v3677, %v3673
        %v5178 = vpack.c.b16 %v3682, %v3678
        %v5179 = vpack.c.b16 %v3683, %v3679
        %v5180 = vpack.c.b16 %v3684, %v3680
        %v5181 = vpack.c.b16 %v3685, %v3681
        %v5182 = vpack.c.b16 %v3690, %v3686
        %v5183 = vpack.c.b16 %v3691, %v3687
        %v5184 = vpack.c.b16 %v3692, %v3688
        %v5185 = vpack.c.b16 %v3693, %v3689
        %v5186 = vpack.c.b16 %v3698, %v3694
        %v5187 = vpack.c.b16 %v3699, %v3695
        %v5188 = vpack.c.b16 %v3700, %v3696
        %v5189 = vpack.c.b16 %v3701, %v3697
        %v5190 = vpack.c.b16 %v3706, %v3702
        %v5191 = vpack.c.b16 %v3707, %v3703
        %v5192 = vpack.c.b16 %v3708, %v3704
        %v5193 = vpack.c.b16 %v3709, %v3705
        %v5194 = vpack.c.b16 %v3714, %v3710
        %v5195 = vpack.c.b16 %v3715, %v3711
        %v5196 = vpack.c.b16 %v3716, %v3712
        %v5197 = vpack.c.b16 %v3717, %v3713
        %v5198 = vpack.c.b16 %v3722, %v3718
        %v5199 = vpack.c.b16 %v3723, %v3719
        %v5200 = vpack.c.b16 %v3724, %v3720
        %v5201 = vpack.c.b16 %v3725, %v3721
        %v5202 = vpack.c.b16 %v3730, %v3726
        %v5203 = vpack.c.b16 %v3731, %v3727
        %v5204 = vpack.c.b16 %v3732, %v3728
        %v5205 = vpack.c.b16 %v3733, %v3729
        %v5206 = vpack.c.b16 %v3738, %v3734
        %v5207 = vpack.c.b16 %v3739, %v3735
        %v5208 = vpack.c.b16 %v3740, %v3736
        %v5209 = vpack.c.b16 %v3741, %v3737
        %v5210 = vpack.c.b16 %v3746, %v3742
        %v5211 = vpack.c.b16 %v3747, %v3743
        %v5212 = vpack.c.b16 %v3748, %v3744
        %v5213 = vpack.c.b16 %v3749, %v3745
        %v5214 = vpack.c.b16 %v3754, %v3750
        %v5215 = vpack.c.b16 %v3755, %v3751
        %v5216 = vpack.c.b16 %v3756, %v3752
        %v5217 = vpack.c.b16 %v3757, %v3753
        %v5218 = vpack.c.b16 %v3762, %v3758
        %v5219 = vpack.c.b16 %v3763, %v3759
        %v5220 = vpack.c.b16 %v3764, %v3760
        %v5221 = vpack.c.b16 %v3765, %v3761
        %v5222 = vpack.c.b16 %v3770, %v3766
        %v5223 = vpack.c.b16 %v3771, %v3767
        %v5224 = vpack.c.b16 %v3772, %v3768
        %v5225 = vpack.c.b16 %v3773, %v3769
        %v5226 = vpack.c.b16 %v3778, %v3774
        %v5227 = vpack.c.b16 %v3779, %v3775
        %v5228 = vpack.c.b16 %v3780, %v3776
        %v5229 = vpack.c.b16 %v3781, %v3777
        %v5230 = vpack.c.b16 %v3786, %v3782
        %v5231 = vpack.c.b16 %v3787, %v3783
        %v5232 = vpack.c.b16 %v3788, %v3784
        %v5233 = vpack.c.b16 %v3789, %v3785
        %v5234 = vpack.c.b16 %v3794, %v3790
        %v5235 = vpack.c.b16 %v3795, %v3791
        %v5236 = vpack.c.b16 %v3796, %v3792
        %v5237 = vpack.c.b16 %v3797, %v3793
        %v5238 = vpack.c.b16 %v3802, %v3798
        %v5239 = vpack.c.b16 %v3803, %v3799
        %v5240 = vpack.c.b16 %v3804, %v3800
        %v5241 = vpack.c.b16 %v3805, %v3801
        %v5242 = vpack.c.b16 %v3810, %v3806
        %v5243 = vpack.c.b16 %v3811, %v3807
        %v5244 = vpack.c.b16 %v3812, %v3808
        %v5245 = vpack.c.b16 %v3813, %v3809
        %v5246 = vpack.c.b16 %v3818, %v3814
        %v5247 = vpack.c.b16 %v3819, %v3815
        %v5248 = vpack.c.b16 %v3820, %v3816
        %v5249 = vpack.c.b16 %v3821, %v3817
        %v5250 = vpack.c.b16 %v3826, %v3822
        %v5251 = vpack.c.b16 %v3827, %v3823
        %v5252 = vpack.c.b16 %v3828, %v3824
        %v5253 = vpack.c.b16 %v3829, %v3825
        %v5254 = vpack.c.b16 %v3834, %v3830
        %v5255 = vpack.c.b16 %v3835, %v3831
        %v5256 = vpack.c.b16 %v3836, %v3832
        %v5257 = vpack.c.b16 %v3837, %v3833
        %v5258 = vpack.c.b16 %v3842, %v3838
        %v5259 = vpack.c.b16 %v3843, %v3839
        %v5260 = vpack.c.b16 %v3844, %v3840
        %v5261 = vpack.c.b16 %v3845, %v3841
        %v5262 = vpack.c.b16 %v3850, %v3846
        %v5263 = vpack.c.b16 %v3851, %v3847
        %v5264 = vpack.c.b16 %v3852, %v3848
        %v5265 = vpack.c.b16 %v3853, %v3849
        %v5266 = vpack.c.b16 %v3858, %v3854
        %v5267 = vpack.c.b16 %v3859, %v3855
        %v5268 = vpack.c.b16 %v3860, %v3856
        %v5269 = vpack.c.b16 %v3861, %v3857
        %v5270 = vpack.c.b16 %v3866, %v3862
        %v5271 = vpack.c.b16 %v3867, %v3863
        %v5272 = vpack.c.b16 %v3868, %v3864
        %v5273 = vpack.c.b16 %v3869, %v3865
        %v5274 = vpack.c.b16 %v3874, %v3870
        %v5275 = vpack.c.b16 %v3875, %v3871
        %v5276 = vpack.c.b16 %v3876, %v3872
        %v5277 = vpack.c.b16 %v3877, %v3873
        %v5278 = vpack.c.b16 %v3882, %v3878
        %v5279 = vpack.c.b16 %v3883, %v3879
        %v5280 = vpack.c.b16 %v3884, %v3880
        %v5281 = vpack.c.b16 %v3885, %v3881
        %v5282 = vpack.c.b16 %v3890, %v3886
        %v5283 = vpack.c.b16 %v3891, %v3887
        %v5284 = vpack.c.b16 %v3892, %v3888
        %v5285 = vpack.c.b16 %v3893, %v3889
        %v5286 = vpack.c.b16 %v3898, %v3894
        %v5287 = vpack.c.b16 %v3899, %v3895
        %v5288 = vpack.c.b16 %v3900, %v3896
        %v5289 = vpack.c.b16 %v3901, %v3897
        %v5290 = vpack.c.b16 %v3906, %v3902
        %v5291 = vpack.c.b16 %v3907, %v3903
        %v5292 = vpack.c.b16 %v3908, %v3904
        %v5293 = vpack.c.b16 %v3909, %v3905
        %v5294 = vpack.c.b16 %v3914, %v3910
        %v5295 = vpack.c.b16 %v3915, %v3911
        %v5296 = vpack.c.b16 %v3916, %v3912
        %v5297 = vpack.c.b16 %v3917, %v3913
        %v5298 = vpack.c.b16 %v3922, %v3918
        %v5299 = vpack.c.b16 %v3923, %v3919
        %v5300 = vpack.c.b16 %v3924, %v3920
        %v5301 = vpack.c.b16 %v3925, %v3921
        %v5302 = vpack.c.b16 %v3930, %v3926
        %v5303 = vpack.c.b16 %v3931, %v3927
        %v5304 = vpack.c.b16 %v3932, %v3928
        %v5305 = vpack.c.b16 %v3933, %v3929
        %v5306 = vpack.c.b16 %v3938, %v3934
        %v5307 = vpack.c.b16 %v3939, %v3935
        %v5308 = vpack.c.b16 %v3940, %v3936
        %v5309 = vpack.c.b16 %v3941, %v3937
        %v5310 = vpack.c.b16 %v3946, %v3942
        %v5311 = vpack.c.b16 %v3947, %v3943
        %v5312 = vpack.c.b16 %v3948, %v3944
        %v5313 = vpack.c.b16 %v3949, %v3945
        %v5314 = vpack.c.b16 %v3954, %v3950
        %v5315 = vpack.c.b16 %v3955, %v3951
        %v5316 = vpack.c.b16 %v3956, %v3952
        %v5317 = vpack.c.b16 %v3957, %v3953
        %v5318 = vpack.c.b16 %v3962, %v3958
        %v5319 = vpack.c.b16 %v3963, %v3959
        %v5320 = vpack.c.b16 %v3964, %v3960
        %v5321 = vpack.c.b16 %v3965, %v3961
        %v5322 = vpack.c.b16 %v3970, %v3966
        %v5323 = vpack.c.b16 %v3971, %v3967
        %v5324 = vpack.c.b16 %v3972, %v3968
        %v5325 = vpack.c.b16 %v3973, %v3969
        %v5326 = vpack.c.b16 %v3978, %v3974
        %v5327 = vpack.c.b16 %v3979, %v3975
        %v5328 = vpack.c.b16 %v3980, %v3976
        %v5329 = vpack.c.b16 %v3981, %v3977
        %v5330 = vpack.c.b16 %v3986, %v3982
        %v5331 = vpack.c.b16 %v3987, %v3983
        %v5332 = vpack.c.b16 %v3988, %v3984
        %v5333 = vpack.c.b16 %v3989, %v3985
        %v5334 = vpack.c.b16 %v3994, %v3990
        %v5335 = vpack.c.b16 %v3995, %v3991
        %v5336 = vpack.c.b16 %v3996, %v3992
        %v5337 = vpack.c.b16 %v3997, %v3993
        %v5338 = vpack.c.b16 %v4002, %v3998
        %v5339 = vpack.c.b16 %v4003, %v3999
        %v5340 = vpack.c.b16 %v4004, %v4000
        %v5341 = vpack.c.b16 %v4005, %v4001
        %v5342 = vpack.c.b16 %v4010, %v4006
        %v5343 = vpack.c.b16 %v4011, %v4007
        %v5344 = vpack.c.b16 %v4012, %v4008
        %v5345 = vpack.c.b16 %v4013, %v4009
        %v5346 = vpack.c.b16 %v4018, %v4014
        %v5347 = vpack.c.b16 %v4019, %v4015
        %v5348 = vpack.c.b16 %v4020, %v4016
        %v5349 = vpack.c.b16 %v4021, %v4017
        %v5350 = vpack.c.b16 %v4026, %v4022
        %v5351 = vpack.c.b16 %v4027, %v4023
        %v5352 = vpack.c.b16 %v4028, %v4024
        %v5353 = vpack.c.b16 %v4029, %v4025
        %v5354 = vpack.c.b16 %v4034, %v4030
        %v5355 = vpack.c.b16 %v4035, %v4031
        %v5356 = vpack.c.b16 %v4036, %v4032
        %v5357 = vpack.c.b16 %v4037, %v4033
        %v5358 = vpack.c.b16 %v4042, %v4038
        %v5359 = vpack.c.b16 %v4043, %v4039
        %v5360 = vpack.c.b16 %v4044, %v4040
        %v5361 = vpack.c.b16 %v4045, %v4041
        %v5362 = vpack.c.b16 %v4050, %v4046
        %v5363 = vpack.c.b16 %v4051, %v4047
        %v5364 = vpack.c.b16 %v4052, %v4048
        %v5365 = vpack.c.b16 %v4053, %v4049
        %v5366 = vpack.c.b16 %v4058, %v4054
        %v5367 = vpack.c.b16 %v4059, %v4055
        %v5368 = vpack.c.b16 %v4060, %v4056
        %v5369 = vpack.c.b16 %v4061, %v4057
        %v5370 = vpack.c.b16 %v4066, %v4062
        %v5371 = vpack.c.b16 %v4067, %v4063
        %v5372 = vpack.c.b16 %v4068, %v4064
        %v5373 = vpack.c.b16 %v4069, %v4065
        %v5374 = vpack.c.b16 %v4074, %v4070
        %v5375 = vpack.c.b16 %v4075, %v4071
        %v5376 = vpack.c.b16 %v4076, %v4072
        %v5377 = vpack.c.b16 %v4077, %v4073
        %v5378 = vpack.c.b16 %v4082, %v4078
        %v5379 = vpack.c.b16 %v4083, %v4079
        %v5380 = vpack.c.b16 %v4084, %v4080
        %v5381 = vpack.c.b16 %v4085, %v4081
        %v5382 = vpack.c.b16 %v4090, %v4086
        %v5383 = vpack.c.b16 %v4091, %v4087
        %v5384 = vpack.c.b16 %v4092, %v4088
        %v5385 = vpack.c.b16 %v4093, %v4089
        %v5386 = vpack.c.b16 %v4098, %v4094
        %v5387 = vpack.c.b16 %v4099, %v4095
        %v5388 = vpack.c.b16 %v4100, %v4096
        %v5389 = vpack.c.b16 %v4101, %v4097
        %v5390 = vpack.c.b16 %v4106, %v4102
        %v5391 = vpack.c.b16 %v4107, %v4103
        %v5392 = vpack.c.b16 %v4108, %v4104
        %v5393 = vpack.c.b16 %v4109, %v4105
        %v5394 = vpack.c.b16 %v4114, %v4110
        %v5395 = vpack.c.b16 %v4115, %v4111
        %v5396 = vpack.c.b16 %v4116, %v4112
        %v5397 = vpack.c.b16 %v4117, %v4113
        %v5398 = vpack.c.b16 %v4122, %v4118
        %v5399 = vpack.c.b16 %v4123, %v4119
        %v5400 = vpack.c.b16 %v4124, %v4120
        %v5401 = vpack.c.b16 %v4125, %v4121
        %v5402 = vpack.c.b16 %v4130, %v4126
        %v5403 = vpack.c.b16 %v4131, %v4127
        %v5404 = vpack.c.b16 %v4132, %v4128
        %v5405 = vpack.c.b16 %v4133, %v4129
        %v5406 = vpack.c.b16 %v4138, %v4134
        %v5407 = vpack.c.b16 %v4139, %v4135
        %v5408 = vpack.c.b16 %v4140, %v4136
        %v5409 = vpack.c.b16 %v4141, %v4137
        %v5410 = vpack.c.b16 %v4146, %v4142
        %v5411 = vpack.c.b16 %v4147, %v4143
        %v5412 = vpack.c.b16 %v4148, %v4144
        %v5413 = vpack.c.b16 %v4149, %v4145
        %v5414 = vpack.c.b16 %v4154, %v4150
        %v5415 = vpack.c.b16 %v4155, %v4151
        %v5416 = vpack.c.b16 %v4156, %v4152
        %v5417 = vpack.c.b16 %v4157, %v4153
        %v5418 = vpack.c.b16 %v4162, %v4158
        %v5419 = vpack.c.b16 %v4163, %v4159
        %v5420 = vpack.c.b16 %v4164, %v4160
        %v5421 = vpack.c.b16 %v4165, %v4161
        %v5422 = vpack.c.b16 %v4170, %v4166
        %v5423 = vpack.c.b16 %v4171, %v4167
        %v5424 = vpack.c.b16 %v4172, %v4168
        %v5425 = vpack.c.b16 %v4173, %v4169
        %v5426 = vpack.c.b16 %v4178, %v4174
        %v5427 = vpack.c.b16 %v4179, %v4175
        %v5428 = vpack.c.b16 %v4180, %v4176
        %v5429 = vpack.c.b16 %v4181, %v4177
        %v5430 = vpack.c.b16 %v4186, %v4182
        %v5431 = vpack.c.b16 %v4187, %v4183
        %v5432 = vpack.c.b16 %v4188, %v4184
        %v5433 = vpack.c.b16 %v4189, %v4185
        %v5434 = vpack.c.b16 %v4194, %v4190
        %v5435 = vpack.c.b16 %v4195, %v4191
        %v5436 = vpack.c.b16 %v4196, %v4192
        %v5437 = vpack.c.b16 %v4197, %v4193
        %v5438 = vpack.c.b16 %v4202, %v4198
        %v5439 = vpack.c.b16 %v4203, %v4199
        %v5440 = vpack.c.b16 %v4204, %v4200
        %v5441 = vpack.c.b16 %v4205, %v4201
        %v5442 = vpack.c.b16 %v4210, %v4206
        %v5443 = vpack.c.b16 %v4211, %v4207
        %v5444 = vpack.c.b16 %v4212, %v4208
        %v5445 = vpack.c.b16 %v4213, %v4209
        %v5446 = vpack.c.b16 %v4218, %v4214
        %v5447 = vpack.c.b16 %v4219, %v4215
        %v5448 = vpack.c.b16 %v4220, %v4216
        %v5449 = vpack.c.b16 %v4221, %v4217
        %v5450 = vpack.c.b16 %v4226, %v4222
        %v5451 = vpack.c.b16 %v4227, %v4223
        %v5452 = vpack.c.b16 %v4228, %v4224
        %v5453 = vpack.c.b16 %v4229, %v4225
        %v5454 = vpack.c.b16 %v4234, %v4230
        %v5455 = vpack.c.b16 %v4235, %v4231
        %v5456 = vpack.c.b16 %v4236, %v4232
        %v5457 = vpack.c.b16 %v4237, %v4233
        %v5458 = vpack.c.b16 %v4242, %v4238
        %v5459 = vpack.c.b16 %v4243, %v4239
        %v5460 = vpack.c.b16 %v4244, %v4240
        %v5461 = vpack.c.b16 %v4245, %v4241
        %v5462 = vpack.c.b16 %v4250, %v4246
        %v5463 = vpack.c.b16 %v4251, %v4247
        %v5464 = vpack.c.b16 %v4252, %v4248
        %v5465 = vpack.c.b16 %v4253, %v4249
        %v5466 = vpack.c.b16 %v4258, %v4254
        %v5467 = vpack.c.b16 %v4259, %v4255
        %v5468 = vpack.c.b16 %v4260, %v4256
        %v5469 = vpack.c.b16 %v4261, %v4257
        %v5470 = vpack.c.b16 %v4266, %v4262
        %v5471 = vpack.c.b16 %v4267, %v4263
        %v5472 = vpack.c.b16 %v4268, %v4264
        %v5473 = vpack.c.b16 %v4269, %v4265
        %v5474 = vpack.c.b16 %v4274, %v4270
        %v5475 = vpack.c.b16 %v4275, %v4271
        %v5476 = vpack.c.b16 %v4276, %v4272
        %v5477 = vpack.c.b16 %v4277, %v4273
        %v5478 = vpack.c.b16 %v4282, %v4278
        %v5479 = vpack.c.b16 %v4283, %v4279
        %v5480 = vpack.c.b16 %v4284, %v4280
        %v5481 = vpack.c.b16 %v4285, %v4281
        %v5482 = vpack.c.b16 %v4290, %v4286
        %v5483 = vpack.c.b16 %v4291, %v4287
        %v5484 = vpack.c.b16 %v4292, %v4288
        %v5485 = vpack.c.b16 %v4293, %v4289
        %v5486 = vpack.c.b16 %v4298, %v4294
        %v5487 = vpack.c.b16 %v4299, %v4295
        %v5488 = vpack.c.b16 %v4300, %v4296
        %v5489 = vpack.c.b16 %v4301, %v4297
        %v5490 = vpack.c.b16 %v4306, %v4302
        %v5491 = vpack.c.b16 %v4307, %v4303
        %v5492 = vpack.c.b16 %v4308, %v4304
        %v5493 = vpack.c.b16 %v4309, %v4305
        %v5494 = vpack.c.b16 %v4314, %v4310
        %v5495 = vpack.c.b16 %v4315, %v4311
        %v5496 = vpack.c.b16 %v4316, %v4312
        %v5497 = vpack.c.b16 %v4317, %v4313
        %v5498 = vpack.c.b16 %v4322, %v4318
        %v5499 = vpack.c.b16 %v4323, %v4319
        %v5500 = vpack.c.b16 %v4324, %v4320
        %v5501 = vpack.c.b16 %v4325, %v4321
        %v5502 = vpack.c.b16 %v4330, %v4326
        %v5503 = vpack.c.b16 %v4331, %v4327
        %v5504 = vpack.c.b16 %v4332, %v4328
        %v5505 = vpack.c.b16 %v4333, %v4329
        %v5506 = vpack.c.b16 %v4338, %v4334
        %v5507 = vpack.c.b16 %v4339, %v4335
        %v5508 = vpack.c.b16 %v4340, %v4336
        %v5509 = vpack.c.b16 %v4341, %v4337
        %v5510 = vpack.c.b16 %v4346, %v4342
        %v5511 = vpack.c.b16 %v4347, %v4343
        %v5512 = vpack.c.b16 %v4348, %v4344
        %v5513 = vpack.c.b16 %v4349, %v4345
        %v5514 = vpack.c.b16 %v4354, %v4350
        %v5515 = vpack.c.b16 %v4355, %v4351
        %v5516 = vpack.c.b16 %v4356, %v4352
        %v5517 = vpack.c.b16 %v4357, %v4353
        %v5518 = vpack.c.b16 %v4362, %v4358
        %v5519 = vpack.c.b16 %v4363, %v4359
        %v5520 = vpack.c.b16 %v4364, %v4360
        %v5521 = vpack.c.b16 %v4365, %v4361
        %v5522 = vpack.c.b16 %v4370, %v4366
        %v5523 = vpack.c.b16 %v4371, %v4367
        %v5524 = vpack.c.b16 %v4372, %v4368
        %v5525 = vpack.c.b16 %v4373, %v4369
        %v5526 = vpack.c.b16 %v4378, %v4374
        %v5527 = vpack.c.b16 %v4379, %v4375
        %v5528 = vpack.c.b16 %v4380, %v4376
        %v5529 = vpack.c.b16 %v4381, %v4377
        %v5530 = vpack.c.b16 %v4386, %v4382
        %v5531 = vpack.c.b16 %v4387, %v4383
        %v5532 = vpack.c.b16 %v4388, %v4384
        %v5533 = vpack.c.b16 %v4389, %v4385
        %v5534 = vpack.c.b16 %v4394, %v4390
        %v5535 = vpack.c.b16 %v4395, %v4391
        %v5536 = vpack.c.b16 %v4396, %v4392
        %v5537 = vpack.c.b16 %v4397, %v4393
        %v5538 = vpack.c.b16 %v4402, %v4398
        %v5539 = vpack.c.b16 %v4403, %v4399
        %v5540 = vpack.c.b16 %v4404, %v4400
        %v5541 = vpack.c.b16 %v4405, %v4401
        %v5542 = vpack.c.b16 %v4410, %v4406
        %v5543 = vpack.c.b16 %v4411, %v4407
        %v5544 = vpack.c.b16 %v4412, %v4408
        %v5545 = vpack.c.b16 %v4413, %v4409
        %v5546 = vpack.c.b16 %v4418, %v4414
        %v5547 = vpack.c.b16 %v4419, %v4415
        %v5548 = vpack.c.b16 %v4420, %v4416
        %v5549 = vpack.c.b16 %v4421, %v4417
        %v5550 = vpack.c.b16 %v4426, %v4422
        %v5551 = vpack.c.b16 %v4427, %v4423
        %v5552 = vpack.c.b16 %v4428, %v4424
        %v5553 = vpack.c.b16 %v4429, %v4425
        %v5554 = vpack.c.b16 %v4434, %v4430
        %v5555 = vpack.c.b16 %v4435, %v4431
        %v5556 = vpack.c.b16 %v4436, %v4432
        %v5557 = vpack.c.b16 %v4437, %v4433
        %v5558 = vpack.c.b16 %v4442, %v4438
        %v5559 = vpack.c.b16 %v4443, %v4439
        %v5560 = vpack.c.b16 %v4444, %v4440
        %v5561 = vpack.c.b16 %v4445, %v4441
        %v5562 = vpack.c.b16 %v4450, %v4446
        %v5563 = vpack.c.b16 %v4451, %v4447
        %v5564 = vpack.c.b16 %v4452, %v4448
        %v5565 = vpack.c.b16 %v4453, %v4449
        %v5566 = vpack.c.b16 %v4458, %v4454
        %v5567 = vpack.c.b16 %v4459, %v4455
        %v5568 = vpack.c.b16 %v4460, %v4456
        %v5569 = vpack.c.b16 %v4461, %v4457
        %v5570 = vpack.c.b16 %v4466, %v4462
        %v5571 = vpack.c.b16 %v4467, %v4463
        %v5572 = vpack.c.b16 %v4468, %v4464
        %v5573 = vpack.c.b16 %v4469, %v4465
        %v5574 = vpack.c.b16 %v4474, %v4470
        %v5575 = vpack.c.b16 %v4475, %v4471
        %v5576 = vpack.c.b16 %v4476, %v4472
        %v5577 = vpack.c.b16 %v4477, %v4473
        %v5578 = vpack.c.b16 %v4482, %v4478
        %v5579 = vpack.c.b16 %v4483, %v4479
        %v5580 = vpack.c.b16 %v4484, %v4480
        %v5581 = vpack.c.b16 %v4485, %v4481
        %v5582 = vpack.c.b16 %v4490, %v4486
        %v5583 = vpack.c.b16 %v4491, %v4487
        %v5584 = vpack.c.b16 %v4492, %v4488
        %v5585 = vpack.c.b16 %v4493, %v4489
        %v5586 = vpack.c.b16 %v4498, %v4494
        %v5587 = vpack.c.b16 %v4499, %v4495
        %v5588 = vpack.c.b16 %v4500, %v4496
        %v5589 = vpack.c.b16 %v4501, %v4497
        %v5590 = vpack.c.b16 %v4506, %v4502
        %v5591 = vpack.c.b16 %v4507, %v4503
        %v5592 = vpack.c.b16 %v4508, %v4504
        %v5593 = vpack.c.b16 %v4509, %v4505
        %v5594 = vpack.c.b16 %v4514, %v4510
        %v5595 = vpack.c.b16 %v4515, %v4511
        %v5596 = vpack.c.b16 %v4516, %v4512
        %v5597 = vpack.c.b16 %v4517, %v4513
        %v5598 = vpack.c.b16 %v4522, %v4518
        %v5599 = vpack.c.b16 %v4523, %v4519
        %v5600 = vpack.c.b16 %v4524, %v4520
        %v5601 = vpack.c.b16 %v4525, %v4521
        %v5602 = vpack.c.b16 %v4530, %v4526
        %v5603 = vpack.c.b16 %v4531, %v4527
        %v5604 = vpack.c.b16 %v4532, %v4528
        %v5605 = vpack.c.b16 %v4533, %v4529
        %v5606 = vpack.c.b16 %v4538, %v4534
        %v5607 = vpack.c.b16 %v4539, %v4535
        %v5608 = vpack.c.b16 %v4540, %v4536
        %v5609 = vpack.c.b16 %v4541, %v4537
        %v5610 = vpack.c.b16 %v4546, %v4542
        %v5611 = vpack.c.b16 %v4547, %v4543
        %v5612 = vpack.c.b16 %v4548, %v4544
        %v5613 = vpack.c.b16 %v4549, %v4545
        %v5614 = vpack.c.b16 %v4554, %v4550
        %v5615 = vpack.c.b16 %v4555, %v4551
        %v5616 = vpack.c.b16 %v4556, %v4552
        %v5617 = vpack.c.b16 %v4557, %v4553
        %v5618 = vpack.c.b16 %v4562, %v4558
        %v5619 = vpack.c.b16 %v4563, %v4559
        %v5620 = vpack.c.b16 %v4564, %v4560
        %v5621 = vpack.c.b16 %v4565, %v4561
        %v5622 = vpack.c.b16 %v4570, %v4566
        %v5623 = vpack.c.b16 %v4571, %v4567
        %v5624 = vpack.c.b16 %v4572, %v4568
        %v5625 = vpack.c.b16 %v4573, %v4569
        %v5626 = vpack.c.b16 %v4578, %v4574
        %v5627 = vpack.c.b16 %v4579, %v4575
        %v5628 = vpack.c.b16 %v4580, %v4576
        %v5629 = vpack.c.b16 %v4581, %v4577
        %v5630 = vpack.c.b16 %v4586, %v4582
        %v5631 = vpack.c.b16 %v4587, %v4583
        %v5632 = vpack.c.b16 %v4588, %v4584
        %v5633 = vpack.c.b16 %v4589, %v4585
        %v5634 = vpack.c.b16 %v4594, %v4590
        %v5635 = vpack.c.b16 %v4595, %v4591
        %v5636 = vpack.c.b16 %v4596, %v4592
        %v5637 = vpack.c.b16 %v4597, %v4593
        %v5638 = vpack.c.b16 %v4602, %v4598
        %v5639 = vpack.c.b16 %v4603, %v4599
        %v5640 = vpack.c.b16 %v4604, %v4600
        %v5641 = vpack.c.b16 %v4605, %v4601
        %v5642 = vpack.c.b16 %v4610, %v4606
        %v5643 = vpack.c.b16 %v4611, %v4607
        %v5644 = vpack.c.b16 %v4612, %v4608
        %v5645 = vpack.c.b16 %v4613, %v4609
        %v5646 = vpack.c.b16 %v4618, %v4614
        %v5647 = vpack.c.b16 %v4619, %v4615
        %v5648 = vpack.c.b16 %v4620, %v4616
        %v5649 = vpack.c.b16 %v4621, %v4617
        %v5650 = vpack.c.b16 %v4626, %v4622
        %v5651 = vpack.c.b16 %v4627, %v4623
        %v5652 = vpack.c.b16 %v4628, %v4624
        %v5653 = vpack.c.b16 %v4629, %v4625
        %v5654 = vpack.c.b16 %v4634, %v4630
        %v5655 = vpack.c.b16 %v4635, %v4631
        %v5656 = vpack.c.b16 %v4636, %v4632
        %v5657 = vpack.c.b16 %v4637, %v4633
        %v5658 = vpack.c.b16 %v4642, %v4638
        %v5659 = vpack.c.b16 %v4643, %v4639
        %v5660 = vpack.c.b16 %v4644, %v4640
        %v5661 = vpack.c.b16 %v4645, %v4641
        %v5662 = vpack.c.b16 %v4650, %v4646
        %v5663 = vpack.c.b16 %v4651, %v4647
        %v5664 = vpack.c.b16 %v4652, %v4648
        %v5665 = vpack.c.b16 %v4653, %v4649
        %v5666 = vpack.c.b16 %v4658, %v4654
        %v5667 = vpack.c.b16 %v4659, %v4655
        %v5668 = vpack.c.b16 %v4660, %v4656
        %v5669 = vpack.c.b16 %v4661, %v4657
        %v5670 = vpack.c.b16 %v4666, %v4662
        %v5671 = vpack.c.b16 %v4667, %v4663
        %v5672 = vpack.c.b16 %v4668, %v4664
        %v5673 = vpack.c.b16 %v4669, %v4665
        %v5674 = vpack.c.b16 %v4674, %v4670
        %v5675 = vpack.c.b16 %v4675, %v4671
        %v5676 = vpack.c.b16 %v4676, %v4672
        %v5677 = vpack.c.b16 %v4677, %v4673
        %v5678 = vpack.c.b16 %v4682, %v4678
        %v5679 = vpack.c.b16 %v4683, %v4679
        %v5680 = vpack.c.b16 %v4684, %v4680
        %v5681 = vpack.c.b16 %v4685, %v4681
        %v5682 = vpack.c.b16 %v4690, %v4686
        %v5683 = vpack.c.b16 %v4691, %v4687
        %v5684 = vpack.c.b16 %v4692, %v4688
        %v5685 = vpack.c.b16 %v4693, %v4689
        %v5686 = vpack.c.b16 %v4698, %v4694
        %v5687 = vpack.c.b16 %v4699, %v4695
        %v5688 = vpack.c.b16 %v4700, %v4696
        %v5689 = vpack.c.b16 %v4701, %v4697
        %v5690 = vpack.c.b16 %v4706, %v4702
        %v5691 = vpack.c.b16 %v4707, %v4703
        %v5692 = vpack.c.b16 %v4708, %v4704
        %v5693 = vpack.c.b16 %v4709, %v4705
        %v5694 = vpack.c.b16 %v4714, %v4710
        %v5695 = vpack.c.b16 %v4715, %v4711
        %v5696 = vpack.c.b16 %v4716, %v4712
        %v5697 = vpack.c.b16 %v4717, %v4713
        %v5698 = vpack.c.b16 %v4722, %v4718
        %v5699 = vpack.c.b16 %v4723, %v4719
        %v5700 = vpack.c.b16 %v4724, %v4720
        %v5701 = vpack.c.b16 %v4725, %v4721
        %v5702 = vpack.c.b16 %v4730, %v4726
        %v5703 = vpack.c.b16 %v4731, %v4727
        %v5704 = vpack.c.b16 %v4732, %v4728
        %v5705 = vpack.c.b16 %v4733, %v4729
        %v5706 = vpack.c.b16 %v4738, %v4734
        %v5707 = vpack.c.b16 %v4739, %v4735
        %v5708 = vpack.c.b16 %v4740, %v4736
        %v5709 = vpack.c.b16 %v4741, %v4737
        %v5710 = vpack.c.b16 %v4746, %v4742
        %v5711 = vpack.c.b16 %v4747, %v4743
        %v5712 = vpack.c.b16 %v4748, %v4744
        %v5713 = vpack.c.b16 %v4749, %v4745
        %v5714 = vpack.c.b16 %v4754, %v4750
        %v5715 = vpack.c.b16 %v4755, %v4751
        %v5716 = vpack.c.b16 %v4756, %v4752
        %v5717 = vpack.c.b16 %v4757, %v4753
        %v5718 = vpack.c.b16 %v4762, %v4758
        %v5719 = vpack.c.b16 %v4763, %v4759
        %v5720 = vpack.c.b16 %v4764, %v4760
        %v5721 = vpack.c.b16 %v4765, %v4761
        %v5722 = vpack.c.b16 %v4770, %v4766
        %v5723 = vpack.c.b16 %v4771, %v4767
        %v5724 = vpack.c.b16 %v4772, %v4768
        %v5725 = vpack.c.b16 %v4773, %v4769
        %v5726 = vpack.c.b16 %v4778, %v4774
        %v5727 = vpack.c.b16 %v4779, %v4775
        %v5728 = vpack.c.b16 %v4780, %v4776
        %v5729 = vpack.c.b16 %v4781, %v4777
        %v5730 = vpack.c.b16 %v4786, %v4782
        %v5731 = vpack.c.b16 %v4787, %v4783
        %v5732 = vpack.c.b16 %v4788, %v4784
        %v5733 = vpack.c.b16 %v4789, %v4785
        %v5734 = vpack.c.b16 %v4794, %v4790
        %v5735 = vpack.c.b16 %v4795, %v4791
        %v5736 = vpack.c.b16 %v4796, %v4792
        %v5737 = vpack.c.b16 %v4797, %v4793
        %v5738 = vpack.c.b16 %v4802, %v4798
        %v5739 = vpack.c.b16 %v4803, %v4799
        %v5740 = vpack.c.b16 %v4804, %v4800
        %v5741 = vpack.c.b16 %v4805, %v4801
        %v5742 = vpack.c.b16 %v4810, %v4806
        %v5743 = vpack.c.b16 %v4811, %v4807
        %v5744 = vpack.c.b16 %v4812, %v4808
        %v5745 = vpack.c.b16 %v4813, %v4809
        %v5746 = vpack.c.b16 %v4818, %v4814
        %v5747 = vpack.c.b16 %v4819, %v4815
        %v5748 = vpack.c.b16 %v4820, %v4816
        %v5749 = vpack.c.b16 %v4821, %v4817
        %v5750 = vpack.c.b16 %v4826, %v4822
        %v5751 = vpack.c.b16 %v4827, %v4823
        %v5752 = vpack.c.b16 %v4828, %v4824
        %v5753 = vpack.c.b16 %v4829, %v4825
        %v5754 = vpack.c.b16 %v4834, %v4830
        %v5755 = vpack.c.b16 %v4835, %v4831
        %v5756 = vpack.c.b16 %v4836, %v4832
        %v5757 = vpack.c.b16 %v4837, %v4833
        %v5758 = vpack.c.b16 %v4842, %v4838
        %v5759 = vpack.c.b16 %v4843, %v4839
        %v5760 = vpack.c.b16 %v4844, %v4840
        %v5761 = vpack.c.b16 %v4845, %v4841
        %v5762 = vpack.c.b16 %v4850, %v4846
        %v5763 = vpack.c.b16 %v4851, %v4847
        %v5764 = vpack.c.b16 %v4852, %v4848
        %v5765 = vpack.c.b16 %v4853, %v4849
        %v5766 = vpack.c.b16 %v4858, %v4854
        %v5767 = vpack.c.b16 %v4859, %v4855
        %v5768 = vpack.c.b16 %v4860, %v4856
        %v5769 = vpack.c.b16 %v4861, %v4857
        %v5770 = vpack.c.b16 %v4866, %v4862
        %v5771 = vpack.c.b16 %v4867, %v4863
        %v5772 = vpack.c.b16 %v4868, %v4864
        %v5773 = vpack.c.b16 %v4869, %v4865
        %v5774 = vpack.c.b16 %v4874, %v4870
        %v5775 = vpack.c.b16 %v4875, %v4871
        %v5776 = vpack.c.b16 %v4876, %v4872
        %v5777 = vpack.c.b16 %v4877, %v4873
        %v5778 = vpack.c.b16 %v4882, %v4878
        %v5779 = vpack.c.b16 %v4883, %v4879
        %v5780 = vpack.c.b16 %v4884, %v4880
        %v5781 = vpack.c.b16 %v4885, %v4881
        %v5782 = vpack.c.b16 %v4890, %v4886
        %v5783 = vpack.c.b16 %v4891, %v4887
        %v5784 = vpack.c.b16 %v4892, %v4888
        %v5785 = vpack.c.b16 %v4893, %v4889
        %v5786 = vpack.c.b16 %v4898, %v4894
        %v5787 = vpack.c.b16 %v4899, %v4895
        %v5788 = vpack.c.b16 %v4900, %v4896
        %v5789 = vpack.c.b16 %v4901, %v4897
        %v5790 = vpack.c.b16 %v4906, %v4902
        %v5791 = vpack.c.b16 %v4907, %v4903
        %v5792 = vpack.c.b16 %v4908, %v4904
        %v5793 = vpack.c.b16 %v4909, %v4905
        %v5794 = vpack.c.b16 %v4914, %v4910
        %v5795 = vpack.c.b16 %v4915, %v4911
        %v5796 = vpack.c.b16 %v4916, %v4912
        %v5797 = vpack.c.b16 %v4917, %v4913
        %v5798 = vpack.c.b16 %v4922, %v4918
        %v5799 = vpack.c.b16 %v4923, %v4919
        %v5800 = vpack.c.b16 %v4924, %v4920
        %v5801 = vpack.c.b16 %v4925, %v4921
        %v5802 = vpack.c.b16 %v4930, %v4926
        %v5803 = vpack.c.b16 %v4931, %v4927
        %v5804 = vpack.c.b16 %v4932, %v4928
        %v5805 = vpack.c.b16 %v4933, %v4929
        %v5806 = vpack.c.b16 %v4938, %v4934
        %v5807 = vpack.c.b16 %v4939, %v4935
        %v5808 = vpack.c.b16 %v4940, %v4936
        %v5809 = vpack.c.b16 %v4941, %v4937
        %v5810 = vpack.c.b16 %v4946, %v4942
        %v5811 = vpack.c.b16 %v4947, %v4943
        %v5812 = vpack.c.b16 %v4948, %v4944
        %v5813 = vpack.c.b16 %v4949, %v4945
        %v5814 = vpack.c.b16 %v4954, %v4950
        %v5815 = vpack.c.b16 %v4955, %v4951
        %v5816 = vpack.c.b16 %v4956, %v4952
        %v5817 = vpack.c.b16 %v4957, %v4953
        %v5818 = vpack.c.b16 %v4962, %v4958
        %v5819 = vpack.c.b16 %v4963, %v4959
        %v5820 = vpack.c.b16 %v4964, %v4960
        %v5821 = vpack.c.b16 %v4965, %v4961
        %v5822 = vpack.c.b16 %v4970, %v4966
        %v5823 = vpack.c.b16 %v4971, %v4967
        %v5824 = vpack.c.b16 %v4972, %v4968
        %v5825 = vpack.c.b16 %v4973, %v4969
        %v5826 = vpack.c.b16 %v4978, %v4974
        %v5827 = vpack.c.b16 %v4979, %v4975
        %v5828 = vpack.c.b16 %v4980, %v4976
        %v5829 = vpack.c.b16 %v4981, %v4977
        %v5830 = vpack.c.b16 %v4986, %v4982
        %v5831 = vpack.c.b16 %v4987, %v4983
        %v5832 = vpack.c.b16 %v4988, %v4984
        %v5833 = vpack.c.b16 %v4989, %v4985
        %v5834 = vpack.c.b16 %v4994, %v4990
        %v5835 = vpack.c.b16 %v4995, %v4991
        %v5836 = vpack.c.b16 %v4996, %v4992
        %v5837 = vpack.c.b16 %v4997, %v4993
        %v5838 = vpack.c.b16 %v5002, %v4998
        %v5839 = vpack.c.b16 %v5003, %v4999
        %v5840 = vpack.c.b16 %v5004, %v5000
        %v5841 = vpack.c.b16 %v5005, %v5001
        %v5842 = vpack.c.b16 %v5010, %v5006
        %v5843 = vpack.c.b16 %v5011, %v5007
        %v5844 = vpack.c.b16 %v5012, %v5008
        %v5845 = vpack.c.b16 %v5013, %v5009
        %v5846 = vpack.c.b16 %v5018, %v5014
        %v5847 = vpack.c.b16 %v5019, %v5015
        %v5848 = vpack.c.b16 %v5020, %v5016
        %v5849 = vpack.c.b16 %v5021, %v5017
        %v5850 = vpack.c.b16 %v5026, %v5022
        %v5851 = vpack.c.b16 %v5027, %v5023
        %v5852 = vpack.c.b16 %v5028, %v5024
        %v5853 = vpack.c.b16 %v5029, %v5025
        %v5854 = vpack.c.b16 %v5034, %v5030
        %v5855 = vpack.c.b16 %v5035, %v5031
        %v5856 = vpack.c.b16 %v5036, %v5032
        %v5857 = vpack.c.b16 %v5037, %v5033
        %v5858 = vpack.c.b16 %v5042, %v5038
        %v5859 = vpack.c.b16 %v5043, %v5039
        %v5860 = vpack.c.b16 %v5044, %v5040
        %v5861 = vpack.c.b16 %v5045, %v5041
        %v5862 = vpack.c.b16 %v5050, %v5046
        %v5863 = vpack.c.b16 %v5051, %v5047
        %v5864 = vpack.c.b16 %v5052, %v5048
        %v5865 = vpack.c.b16 %v5053, %v5049
        %v5866 = vpack.c.b16 %v5058, %v5054
        %v5867 = vpack.c.b16 %v5059, %v5055
        %v5868 = vpack.c.b16 %v5060, %v5056
        %v5869 = vpack.c.b16 %v5061, %v5057
        %v5870 = vpack.c.b16 %v5066, %v5062
        %v5871 = vpack.c.b16 %v5067, %v5063
        %v5872 = vpack.c.b16 %v5068, %v5064
        %v5873 = vpack.c.b16 %v5069, %v5065
        %v5874 = vpack.c.b16 %v5074, %v5070
        %v5875 = vpack.c.b16 %v5075, %v5071
        %v5876 = vpack.c.b16 %v5076, %v5072
        %v5877 = vpack.c.b16 %v5077, %v5073
        %v5878 = vpack.c.b16 %v5082, %v5078
        %v5879 = vpack.c.b16 %v5083, %v5079
        %v5880 = vpack.c.b16 %v5084, %v5080
        %v5881 = vpack.c.b16 %v5085, %v5081
        %v5882 = vpack.c.b16 %v5090, %v5086
        %v5883 = vpack.c.b16 %v5091, %v5087
        %v5884 = vpack.c.b16 %v5092, %v5088
        %v5885 = vpack.c.b16 %v5093, %v5089
        %v5886 = vpack.c.b16 %v5098, %v5094
        %v5887 = vpack.c.b16 %v5099, %v5095
        %v5888 = vpack.c.b16 %v5100, %v5096
        %v5889 = vpack.c.b16 %v5101, %v5097
        %v5890 = vpack.c.b16 %v5106, %v5102
        %v5891 = vpack.c.b16 %v5107, %v5103
        %v5892 = vpack.c.b16 %v5108, %v5104
        %v5893 = vpack.c.b16 %v5109, %v5105
        %vm6678 = vcmask 523264
        %v6680 = vsel %vm6678, %v1951, 0
        %6682 = vmatprep.subr.bf16.mxu0 %v5111
        %6683 = vmatpush1.bf16.msra.mxu0 %v5110
        %6684 = vmatprep.subr.bf16.mxu0 %v5115
        %6685 = vmatpush1.bf16.msra.mxu0 %v5114
        %6686 = vmatprep.subr.bf16.mxu0 %v5119
        %6687 = vmatpush1.bf16.msra.mxu0 %v5118
        %6688 = vmatprep.subr.bf16.mxu0 %v5123
        %6689 = vmatpush1.bf16.msra.mxu0 %v5122
        %6690 = vmatprep.subr.bf16.mxu0 %v5127
        %6691 = vmatpush1.bf16.msra.mxu0 %v5126
        %6692 = vmatprep.subr.bf16.mxu0 %v5131
        %6693 = vmatpush1.bf16.msra.mxu0 %v5130
        %6694 = vmatprep.subr.bf16.mxu0 %v5135
        %6695 = vmatpush1.bf16.msra.mxu0 %v5134
        %6696 = vmatprep.subr.bf16.mxu0 %v5139
        %6697 = vmatpush1.bf16.msra.mxu0 %v5138
        %6698 = vmatprep.subr.bf16.mxu0 %v5143
        %6699 = vmatpush1.bf16.msra.mxu0 %v5142
        %6700 = vmatprep.subr.bf16.mxu0 %v5147
        %6701 = vmatpush1.bf16.msra.mxu0 %v5146
        %6702 = vmatprep.subr.bf16.mxu0 %v5151
        %6703 = vmatpush1.bf16.msra.mxu0 %v5150
        %6704 = vmatprep.subr.bf16.mxu0 %v5155
        %6705 = vmatpush1.bf16.msra.mxu0 %v5154
        %6706 = vmatprep.subr.bf16.mxu0 %v5159
        %6707 = vmatpush1.bf16.msra.mxu0 %v5158
        %6708 = vmatprep.subr.bf16.mxu0 %v5163
        %6709 = vmatpush1.bf16.msra.mxu0 %v5162
        %6710 = vmatprep.subr.bf16.mxu0 %v5167
        %6711 = vmatpush1.bf16.msra.mxu0 %v5166
        %6712 = vmatprep.subr.bf16.mxu0 %v5171
        %6713 = vmatpush1.bf16.msra.mxu0 %v5170
        %6714 = vmatprep.mubr.bf16.mxu0 %v1928
        %6715 = vmatmul.mubr.bf16.gmra.mrb[0].mxu0 %v1927
        %v6716 = vpop.f32.mrb[0].mxu0
        %v6717 = vadd.f32 %v2741, %v6716
        %v6718 = vpop.f32.mrb[0].mxu0
        %v6719 = vadd.f32 %v2745, %v6718
        %v6720 = vpop.f32.mrb[0].mxu0
        %v6721 = vpop.f32.mrb[0].mxu0
        %6722 = vdwg.mxu0
        %6723 = vmatprep.subr.bf16.mxu0 %v5175
        %6724 = vmatpush1.bf16.msra.mxu0 %v5174
        %6725 = vmatprep.subr.bf16.mxu0 %v5179
        %6726 = vmatpush1.bf16.msra.mxu0 %v5178
        %6727 = vmatprep.subr.bf16.mxu0 %v5183
        %6728 = vmatpush1.bf16.msra.mxu0 %v5182
        %6729 = vmatprep.subr.bf16.mxu0 %v5187
        %6730 = vmatpush1.bf16.msra.mxu0 %v5186
        %6731 = vmatprep.subr.bf16.mxu0 %v5191
        %6732 = vmatpush1.bf16.msra.mxu0 %v5190
        %6733 = vmatprep.subr.bf16.mxu0 %v5195
        %6734 = vmatpush1.bf16.msra.mxu0 %v5194
        %6735 = vmatprep.subr.bf16.mxu0 %v5199
        %6736 = vmatpush1.bf16.msra.mxu0 %v5198
        %6737 = vmatprep.subr.bf16.mxu0 %v5203
        %6738 = vmatpush1.bf16.msra.mxu0 %v5202
        %6739 = vmatprep.subr.bf16.mxu0 %v5207
        %6740 = vmatpush1.bf16.msra.mxu0 %v5206
        %6741 = vmatprep.subr.bf16.mxu0 %v5211
        %6742 = vmatpush1.bf16.msra.mxu0 %v5210
        %6743 = vmatprep.subr.bf16.mxu0 %v5215
        %6744 = vmatpush1.bf16.msra.mxu0 %v5214
        %6745 = vmatprep.subr.bf16.mxu0 %v5219
        %6746 = vmatpush1.bf16.msra.mxu0 %v5218
        %6747 = vmatprep.subr.bf16.mxu0 %v5223
        %6748 = vmatpush1.bf16.msra.mxu0 %v5222
        %6749 = vmatprep.subr.bf16.mxu0 %v5227
        %6750 = vmatpush1.bf16.msra.mxu0 %v5226
        %6751 = vmatprep.subr.bf16.mxu0 %v5231
        %6752 = vmatpush1.bf16.msra.mxu0 %v5230
        %6753 = vmatprep.subr.bf16.mxu0 %v5235
        %6754 = vmatpush1.bf16.msra.mxu0 %v5234
        %6755 = vmatprep.mubr.bf16.mxu0 %v1930
        %6756 = vmatmul.mubr.bf16.gmra.mrb[0].mxu0 %v1929
        %v6757 = vpop.f32.mrb[0].mxu0
        %v6758 = vadd.f32 %v6717, %v6757
        %v6759 = vpop.f32.mrb[0].mxu0
        %v6760 = vadd.f32 %v6719, %v6759
        %v6761 = vpop.f32.mrb[0].mxu0
        %v6762 = vpop.f32.mrb[0].mxu0
        %6763 = vdwg.mxu0
        %6764 = vmatprep.subr.bf16.mxu0 %v5239
        %6765 = vmatpush1.bf16.msra.mxu0 %v5238
        %6766 = vmatprep.subr.bf16.mxu0 %v5243
        %6767 = vmatpush1.bf16.msra.mxu0 %v5242
        %6768 = vmatprep.subr.bf16.mxu0 %v5247
        %6769 = vmatpush1.bf16.msra.mxu0 %v5246
        %6770 = vmatprep.subr.bf16.mxu0 %v5251
        %6771 = vmatpush1.bf16.msra.mxu0 %v5250
        %6772 = vmatprep.subr.bf16.mxu0 %v5255
        %6773 = vmatpush1.bf16.msra.mxu0 %v5254
        %6774 = vmatprep.subr.bf16.mxu0 %v5259
        %6775 = vmatpush1.bf16.msra.mxu0 %v5258
        %6776 = vmatprep.subr.bf16.mxu0 %v5263
        %6777 = vmatpush1.bf16.msra.mxu0 %v5262
        %6778 = vmatprep.subr.bf16.mxu0 %v5267
        %6779 = vmatpush1.bf16.msra.mxu0 %v5266
        %6780 = vmatprep.subr.bf16.mxu0 %v5271
        %6781 = vmatpush1.bf16.msra.mxu0 %v5270
        %6782 = vmatprep.subr.bf16.mxu0 %v5275
        %6783 = vmatpush1.bf16.msra.mxu0 %v5274
        %6784 = vmatprep.subr.bf16.mxu0 %v5279
        %6785 = vmatpush1.bf16.msra.mxu0 %v5278
        %6786 = vmatprep.subr.bf16.mxu0 %v5283
        %6787 = vmatpush1.bf16.msra.mxu0 %v5282
        %6788 = vmatprep.subr.bf16.mxu0 %v5287
        %6789 = vmatpush1.bf16.msra.mxu0 %v5286
        %6790 = vmatprep.subr.bf16.mxu0 %v5291
        %6791 = vmatpush1.bf16.msra.mxu0 %v5290
        %6792 = vmatprep.subr.bf16.mxu0 %v5295
        %6793 = vmatpush1.bf16.msra.mxu0 %v5294
        %6794 = vmatprep.subr.bf16.mxu0 %v5299
        %6795 = vmatpush1.bf16.msra.mxu0 %v5298
        %6796 = vmatprep.mubr.bf16.mxu0 %v1932
        %6797 = vmatmul.mubr.bf16.gmra.mrb[0].mxu0 %v1931
        %v6798 = vpop.f32.mrb[0].mxu0
        %v6799 = vadd.f32 %v6758, %v6798
        %v6800 = vpop.f32.mrb[0].mxu0
        %v6801 = vadd.f32 %v6760, %v6800
        %v6802 = vpop.f32.mrb[0].mxu0
        %v6803 = vpop.f32.mrb[0].mxu0
        %6804 = vdwg.mxu0
        %6805 = vmatprep.subr.bf16.mxu0 %v5303
        %6806 = vmatpush1.bf16.msra.mxu0 %v5302
        %6807 = vmatprep.subr.bf16.mxu0 %v5307
        %6808 = vmatpush1.bf16.msra.mxu0 %v5306
        %6809 = vmatprep.subr.bf16.mxu0 %v5311
        %6810 = vmatpush1.bf16.msra.mxu0 %v5310
        %6811 = vmatprep.subr.bf16.mxu0 %v5315
        %6812 = vmatpush1.bf16.msra.mxu0 %v5314
        %6813 = vmatprep.subr.bf16.mxu0 %v5319
        %6814 = vmatpush1.bf16.msra.mxu0 %v5318
        %6815 = vmatprep.subr.bf16.mxu0 %v5323
        %6816 = vmatpush1.bf16.msra.mxu0 %v5322
        %6817 = vmatprep.subr.bf16.mxu0 %v5327
        %6818 = vmatpush1.bf16.msra.mxu0 %v5326
        %6819 = vmatprep.subr.bf16.mxu0 %v5331
        %6820 = vmatpush1.bf16.msra.mxu0 %v5330
        %6821 = vmatprep.subr.bf16.mxu0 %v5335
        %6822 = vmatpush1.bf16.msra.mxu0 %v5334
        %6823 = vmatprep.subr.bf16.mxu0 %v5339
        %6824 = vmatpush1.bf16.msra.mxu0 %v5338
        %6825 = vmatprep.subr.bf16.mxu0 %v5343
        %6826 = vmatpush1.bf16.msra.mxu0 %v5342
        %6827 = vmatprep.subr.bf16.mxu0 %v5347
        %6828 = vmatpush1.bf16.msra.mxu0 %v5346
        %6829 = vmatprep.subr.bf16.mxu0 %v5351
        %6830 = vmatpush1.bf16.msra.mxu0 %v5350
        %6831 = vmatprep.subr.bf16.mxu0 %v5355
        %6832 = vmatpush1.bf16.msra.mxu0 %v5354
        %6833 = vmatprep.subr.bf16.mxu0 %v5359
        %6834 = vmatpush1.bf16.msra.mxu0 %v5358
        %6835 = vmatprep.subr.bf16.mxu0 %v5363
        %6836 = vmatpush1.bf16.msra.mxu0 %v5362
        %6837 = vmatprep.mubr.bf16.mxu0 %v1934
        %6838 = vmatmul.mubr.bf16.gmra.mrb[0].mxu0 %v1933
        %v6839 = vpop.f32.mrb[0].mxu0
        %v6840 = vadd.f32 %v6799, %v6839
        %v6841 = vpop.f32.mrb[0].mxu0
        %v6842 = vadd.f32 %v6801, %v6841
        %v6843 = vpop.f32.mrb[0].mxu0
        %v6844 = vpop.f32.mrb[0].mxu0
        %6845 = vdwg.mxu0
        %6846 = vmatprep.subr.bf16.mxu0 %v5367
        %6847 = vmatpush1.bf16.msra.mxu0 %v5366
        %6848 = vmatprep.subr.bf16.mxu0 %v5371
        %6849 = vmatpush1.bf16.msra.mxu0 %v5370
        %6850 = vmatprep.subr.bf16.mxu0 %v5375
        %6851 = vmatpush1.bf16.msra.mxu0 %v5374
        %6852 = vmatprep.subr.bf16.mxu0 %v5379
        %6853 = vmatpush1.bf16.msra.mxu0 %v5378
        %6854 = vmatprep.subr.bf16.mxu0 %v5383
        %6855 = vmatpush1.bf16.msra.mxu0 %v5382
        %6856 = vmatprep.subr.bf16.mxu0 %v5387
        %6857 = vmatpush1.bf16.msra.mxu0 %v5386
        %6858 = vmatprep.subr.bf16.mxu0 %v5391
        %6859 = vmatpush1.bf16.msra.mxu0 %v5390
        %6860 = vmatprep.subr.bf16.mxu0 %v5395
        %6861 = vmatpush1.bf16.msra.mxu0 %v5394
        %6862 = vmatprep.subr.bf16.mxu0 %v5399
        %6863 = vmatpush1.bf16.msra.mxu0 %v5398
        %6864 = vmatprep.subr.bf16.mxu0 %v5403
        %6865 = vmatpush1.bf16.msra.mxu0 %v5402
        %6866 = vmatprep.subr.bf16.mxu0 %v5407
        %6867 = vmatpush1.bf16.msra.mxu0 %v5406
        %6868 = vmatprep.subr.bf16.mxu0 %v5411
        %6869 = vmatpush1.bf16.msra.mxu0 %v5410
        %6870 = vmatprep.subr.bf16.mxu0 %v5415
        %6871 = vmatpush1.bf16.msra.mxu0 %v5414
        %6872 = vmatprep.subr.bf16.mxu0 %v5419
        %6873 = vmatpush1.bf16.msra.mxu0 %v5418
        %6874 = vmatprep.subr.bf16.mxu0 %v5423
        %6875 = vmatpush1.bf16.msra.mxu0 %v5422
        %6876 = vmatprep.subr.bf16.mxu0 %v5427
        %6877 = vmatpush1.bf16.msra.mxu0 %v5426
        %6878 = vmatprep.mubr.bf16.mxu0 %v1936
        %6879 = vmatmul.mubr.bf16.gmra.mrb[0].mxu0 %v1935
        %v6880 = vpop.f32.mrb[0].mxu0
        %v6881 = vadd.f32 %v6840, %v6880
        %v6882 = vpop.f32.mrb[0].mxu0
        %v6883 = vadd.f32 %v6842, %v6882
        %v6884 = vpop.f32.mrb[0].mxu0
        %v6885 = vpop.f32.mrb[0].mxu0
        %6886 = vdwg.mxu0
        %6887 = vmatprep.subr.bf16.mxu0 %v5431
        %6888 = vmatpush1.bf16.msra.mxu0 %v5430
        %6889 = vmatprep.subr.bf16.mxu0 %v5435
        %6890 = vmatpush1.bf16.msra.mxu0 %v5434
        %6891 = vmatprep.subr.bf16.mxu0 %v5439
        %6892 = vmatpush1.bf16.msra.mxu0 %v5438
        %6893 = vmatprep.subr.bf16.mxu0 %v5443
        %6894 = vmatpush1.bf16.msra.mxu0 %v5442
        %6895 = vmatprep.subr.bf16.mxu0 %v5447
        %6896 = vmatpush1.bf16.msra.mxu0 %v5446
        %6897 = vmatprep.subr.bf16.mxu0 %v5451
        %6898 = vmatpush1.bf16.msra.mxu0 %v5450
        %6899 = vmatprep.subr.bf16.mxu0 %v5455
        %6900 = vmatpush1.bf16.msra.mxu0 %v5454
        %6901 = vmatprep.subr.bf16.mxu0 %v5459
        %6902 = vmatpush1.bf16.msra.mxu0 %v5458
        %6903 = vmatprep.subr.bf16.mxu0 %v5463
        %6904 = vmatpush1.bf16.msra.mxu0 %v5462
        %6905 = vmatprep.subr.bf16.mxu0 %v5467
        %6906 = vmatpush1.bf16.msra.mxu0 %v5466
        %6907 = vmatprep.subr.bf16.mxu0 %v5471
        %6908 = vmatpush1.bf16.msra.mxu0 %v5470
        %6909 = vmatprep.subr.bf16.mxu0 %v5475
        %6910 = vmatpush1.bf16.msra.mxu0 %v5474
        %6911 = vmatprep.subr.bf16.mxu0 %v5479
        %6912 = vmatpush1.bf16.msra.mxu0 %v5478
        %6913 = vmatprep.subr.bf16.mxu0 %v5483
        %6914 = vmatpush1.bf16.msra.mxu0 %v5482
        %6915 = vmatprep.subr.bf16.mxu0 %v5487
        %6916 = vmatpush1.bf16.msra.mxu0 %v5486
        %6917 = vmatprep.subr.bf16.mxu0 %v5491
        %6918 = vmatpush1.bf16.msra.mxu0 %v5490
        %6919 = vmatprep.mubr.bf16.mxu0 %v1938
        %6920 = vmatmul.mubr.bf16.gmra.mrb[0].mxu0 %v1937
        %v6921 = vpop.f32.mrb[0].mxu0
        %v6922 = vadd.f32 %v6881, %v6921
        %v6923 = vpop.f32.mrb[0].mxu0
        %v6924 = vadd.f32 %v6883, %v6923
        %v6925 = vpop.f32.mrb[0].mxu0
        %v6926 = vpop.f32.mrb[0].mxu0
        %6927 = vdwg.mxu0
        %6928 = vmatprep.subr.bf16.mxu0 %v5495
        %6929 = vmatpush1.bf16.msra.mxu0 %v5494
        %6930 = vmatprep.subr.bf16.mxu0 %v5499
        %6931 = vmatpush1.bf16.msra.mxu0 %v5498
        %6932 = vmatprep.subr.bf16.mxu0 %v5503
        %6933 = vmatpush1.bf16.msra.mxu0 %v5502
        %6934 = vmatprep.subr.bf16.mxu0 %v5507
        %6935 = vmatpush1.bf16.msra.mxu0 %v5506
        %6936 = vmatprep.subr.bf16.mxu0 %v5511
        %6937 = vmatpush1.bf16.msra.mxu0 %v5510
        %6938 = vmatprep.subr.bf16.mxu0 %v5515
        %6939 = vmatpush1.bf16.msra.mxu0 %v5514
        %6940 = vmatprep.subr.bf16.mxu0 %v5519
        %6941 = vmatpush1.bf16.msra.mxu0 %v5518
        %6942 = vmatprep.subr.bf16.mxu0 %v5523
        %6943 = vmatpush1.bf16.msra.mxu0 %v5522
        %6944 = vmatprep.subr.bf16.mxu0 %v5527
        %6945 = vmatpush1.bf16.msra.mxu0 %v5526
        %6946 = vmatprep.subr.bf16.mxu0 %v5531
        %6947 = vmatpush1.bf16.msra.mxu0 %v5530
        %6948 = vmatprep.subr.bf16.mxu0 %v5535
        %6949 = vmatpush1.bf16.msra.mxu0 %v5534
        %6950 = vmatprep.subr.bf16.mxu0 %v5539
        %6951 = vmatpush1.bf16.msra.mxu0 %v5538
        %6952 = vmatprep.subr.bf16.mxu0 %v5543
        %6953 = vmatpush1.bf16.msra.mxu0 %v5542
        %6954 = vmatprep.subr.bf16.mxu0 %v5547
        %6955 = vmatpush1.bf16.msra.mxu0 %v5546
        %6956 = vmatprep.subr.bf16.mxu0 %v5551
        %6957 = vmatpush1.bf16.msra.mxu0 %v5550
        %6958 = vmatprep.subr.bf16.mxu0 %v5555
        %6959 = vmatpush1.bf16.msra.mxu0 %v5554
        %6960 = vmatprep.mubr.bf16.mxu0 %v1940
        %6961 = vmatmul.mubr.bf16.gmra.mrb[0].mxu0 %v1939
        %v6962 = vpop.f32.mrb[0].mxu0
        %v6963 = vadd.f32 %v6922, %v6962
        %v6964 = vpop.f32.mrb[0].mxu0
        %v6965 = vadd.f32 %v6924, %v6964
        %v6966 = vpop.f32.mrb[0].mxu0
        %v6967 = vpop.f32.mrb[0].mxu0
        %6968 = vdwg.mxu0
        %6969 = vmatprep.subr.bf16.mxu0 %v5559
        %6970 = vmatpush1.bf16.msra.mxu0 %v5558
        %6971 = vmatprep.subr.bf16.mxu0 %v5563
        %6972 = vmatpush1.bf16.msra.mxu0 %v5562
        %6973 = vmatprep.subr.bf16.mxu0 %v5567
        %6974 = vmatpush1.bf16.msra.mxu0 %v5566
        %6975 = vmatprep.subr.bf16.mxu0 %v5571
        %6976 = vmatpush1.bf16.msra.mxu0 %v5570
        %6977 = vmatprep.subr.bf16.mxu0 %v5575
        %6978 = vmatpush1.bf16.msra.mxu0 %v5574
        %6979 = vmatprep.subr.bf16.mxu0 %v5579
        %6980 = vmatpush1.bf16.msra.mxu0 %v5578
        %6981 = vmatprep.subr.bf16.mxu0 %v5583
        %6982 = vmatpush1.bf16.msra.mxu0 %v5582
        %6983 = vmatprep.subr.bf16.mxu0 %v5587
        %6984 = vmatpush1.bf16.msra.mxu0 %v5586
        %6985 = vmatprep.subr.bf16.mxu0 %v5591
        %6986 = vmatpush1.bf16.msra.mxu0 %v5590
        %6987 = vmatprep.subr.bf16.mxu0 %v5595
        %6988 = vmatpush1.bf16.msra.mxu0 %v5594
        %6989 = vmatprep.subr.bf16.mxu0 %v5599
        %6990 = vmatpush1.bf16.msra.mxu0 %v5598
        %6991 = vmatprep.subr.bf16.mxu0 %v5603
        %6992 = vmatpush1.bf16.msra.mxu0 %v5602
        %6993 = vmatprep.subr.bf16.mxu0 %v5607
        %6994 = vmatpush1.bf16.msra.mxu0 %v5606
        %6995 = vmatprep.subr.bf16.mxu0 %v5611
        %6996 = vmatpush1.bf16.msra.mxu0 %v5610
        %6997 = vmatprep.subr.bf16.mxu0 %v5615
        %6998 = vmatpush1.bf16.msra.mxu0 %v5614
        %6999 = vmatprep.subr.bf16.mxu0 %v5619
        %7000 = vmatpush1.bf16.msra.mxu0 %v5618
        %7001 = vmatprep.mubr.bf16.mxu0 %v1942
        %7002 = vmatmul.mubr.bf16.gmra.mrb[0].mxu0 %v1941
        %v7003 = vpop.f32.mrb[0].mxu0
        %v7004 = vadd.f32 %v6963, %v7003
        %v7005 = vpop.f32.mrb[0].mxu0
        %v7006 = vadd.f32 %v6965, %v7005
        %v7007 = vpop.f32.mrb[0].mxu0
        %v7008 = vpop.f32.mrb[0].mxu0
        %7009 = vdwg.mxu0
        %7010 = vmatprep.subr.bf16.mxu0 %v5623
        %7011 = vmatpush1.bf16.msra.mxu0 %v5622
        %7012 = vmatprep.subr.bf16.mxu0 %v5627
        %7013 = vmatpush1.bf16.msra.mxu0 %v5626
        %7014 = vmatprep.subr.bf16.mxu0 %v5631
        %7015 = vmatpush1.bf16.msra.mxu0 %v5630
        %7016 = vmatprep.subr.bf16.mxu0 %v5635
        %7017 = vmatpush1.bf16.msra.mxu0 %v5634
        %7018 = vmatprep.subr.bf16.mxu0 %v5639
        %7019 = vmatpush1.bf16.msra.mxu0 %v5638
        %7020 = vmatprep.subr.bf16.mxu0 %v5643
        %7021 = vmatpush1.bf16.msra.mxu0 %v5642
        %7022 = vmatprep.subr.bf16.mxu0 %v5647
        %7023 = vmatpush1.bf16.msra.mxu0 %v5646
        %7024 = vmatprep.subr.bf16.mxu0 %v5651
        %7025 = vmatpush1.bf16.msra.mxu0 %v5650
        %7026 = vmatprep.subr.bf16.mxu0 %v5655
        %7027 = vmatpush1.bf16.msra.mxu0 %v5654
        %7028 = vmatprep.subr.bf16.mxu0 %v5659
        %7029 = vmatpush1.bf16.msra.mxu0 %v5658
        %7030 = vmatprep.subr.bf16.mxu0 %v5663
        %7031 = vmatpush1.bf16.msra.mxu0 %v5662
        %7032 = vmatprep.subr.bf16.mxu0 %v5667
        %7033 = vmatpush1.bf16.msra.mxu0 %v5666
        %7034 = vmatprep.subr.bf16.mxu0 %v5671
        %7035 = vmatpush1.bf16.msra.mxu0 %v5670
        %7036 = vmatprep.subr.bf16.mxu0 %v5675
        %7037 = vmatpush1.bf16.msra.mxu0 %v5674
        %7038 = vmatprep.subr.bf16.mxu0 %v5679
        %7039 = vmatpush1.bf16.msra.mxu0 %v5678
        %7040 = vmatprep.subr.bf16.mxu0 %v5683
        %7041 = vmatpush1.bf16.msra.mxu0 %v5682
        %7042 = vmatprep.mubr.bf16.mxu0 %v1944
        %7043 = vmatmul.mubr.bf16.gmra.mrb[0].mxu0 %v1943
        %v7044 = vpop.f32.mrb[0].mxu0
        %v7045 = vadd.f32 %v7004, %v7044
        %v7046 = vpop.f32.mrb[0].mxu0
        %v7047 = vadd.f32 %v7006, %v7046
        %v7048 = vpop.f32.mrb[0].mxu0
        %v7049 = vpop.f32.mrb[0].mxu0
        %7050 = vdwg.mxu0
        %7051 = vmatprep.subr.bf16.mxu0 %v5687
        %7052 = vmatpush1.bf16.msra.mxu0 %v5686
        %7053 = vmatprep.subr.bf16.mxu0 %v5691
        %7054 = vmatpush1.bf16.msra.mxu0 %v5690
        %7055 = vmatprep.subr.bf16.mxu0 %v5695
        %7056 = vmatpush1.bf16.msra.mxu0 %v5694
        %7057 = vmatprep.subr.bf16.mxu0 %v5699
        %7058 = vmatpush1.bf16.msra.mxu0 %v5698
        %7059 = vmatprep.subr.bf16.mxu0 %v5703
        %7060 = vmatpush1.bf16.msra.mxu0 %v5702
        %7061 = vmatprep.subr.bf16.mxu0 %v5707
        %7062 = vmatpush1.bf16.msra.mxu0 %v5706
        %7063 = vmatprep.subr.bf16.mxu0 %v5711
        %7064 = vmatpush1.bf16.msra.mxu0 %v5710
        %7065 = vmatprep.subr.bf16.mxu0 %v5715
        %7066 = vmatpush1.bf16.msra.mxu0 %v5714
        %7067 = vmatprep.subr.bf16.mxu0 %v5719
        %7068 = vmatpush1.bf16.msra.mxu0 %v5718
        %7069 = vmatprep.subr.bf16.mxu0 %v5723
        %7070 = vmatpush1.bf16.msra.mxu0 %v5722
        %7071 = vmatprep.subr.bf16.mxu0 %v5727
        %7072 = vmatpush1.bf16.msra.mxu0 %v5726
        %7073 = vmatprep.subr.bf16.mxu0 %v5731
        %7074 = vmatpush1.bf16.msra.mxu0 %v5730
        %7075 = vmatprep.subr.bf16.mxu0 %v5735
        %7076 = vmatpush1.bf16.msra.mxu0 %v5734
        %7077 = vmatprep.subr.bf16.mxu0 %v5739
        %7078 = vmatpush1.bf16.msra.mxu0 %v5738
        %7079 = vmatprep.subr.bf16.mxu0 %v5743
        %7080 = vmatpush1.bf16.msra.mxu0 %v5742
        %7081 = vmatprep.subr.bf16.mxu0 %v5747
        %7082 = vmatpush1.bf16.msra.mxu0 %v5746
        %7083 = vmatprep.mubr.bf16.mxu0 %v1946
        %7084 = vmatmul.mubr.bf16.gmra.mrb[0].mxu0 %v1945
        %v7085 = vpop.f32.mrb[0].mxu0
        %v7086 = vadd.f32 %v7045, %v7085
        %v7087 = vpop.f32.mrb[0].mxu0
        %v7088 = vadd.f32 %v7047, %v7087
        %v7089 = vpop.f32.mrb[0].mxu0
        %v7090 = vpop.f32.mrb[0].mxu0
        %7091 = vdwg.mxu0
        %7092 = vmatprep.subr.bf16.mxu0 %v5751
        %7093 = vmatpush1.bf16.msra.mxu0 %v5750
        %7094 = vmatprep.subr.bf16.mxu0 %v5755
        %7095 = vmatpush1.bf16.msra.mxu0 %v5754
        %7096 = vmatprep.subr.bf16.mxu0 %v5759
        %7097 = vmatpush1.bf16.msra.mxu0 %v5758
        %7098 = vmatprep.subr.bf16.mxu0 %v5763
        %7099 = vmatpush1.bf16.msra.mxu0 %v5762
        %7100 = vmatprep.subr.bf16.mxu0 %v5767
        %7101 = vmatpush1.bf16.msra.mxu0 %v5766
        %7102 = vmatprep.subr.bf16.mxu0 %v5771
        %7103 = vmatpush1.bf16.msra.mxu0 %v5770
        %7104 = vmatprep.subr.bf16.mxu0 %v5775
        %7105 = vmatpush1.bf16.msra.mxu0 %v5774
        %7106 = vmatprep.subr.bf16.mxu0 %v5779
        %7107 = vmatpush1.bf16.msra.mxu0 %v5778
        %7108 = vmatprep.subr.bf16.mxu0 %v5783
        %7109 = vmatpush1.bf16.msra.mxu0 %v5782
        %7110 = vmatprep.subr.bf16.mxu0 %v5787
        %7111 = vmatpush1.bf16.msra.mxu0 %v5786
        %7112 = vmatprep.subr.bf16.mxu0 %v5791
        %7113 = vmatpush1.bf16.msra.mxu0 %v5790
        %7114 = vmatprep.subr.bf16.mxu0 %v5795
        %7115 = vmatpush1.bf16.msra.mxu0 %v5794
        %7116 = vmatprep.subr.bf16.mxu0 %v5799
        %7117 = vmatpush1.bf16.msra.mxu0 %v5798
        %7118 = vmatprep.subr.bf16.mxu0 %v5803
        %7119 = vmatpush1.bf16.msra.mxu0 %v5802
        %7120 = vmatprep.subr.bf16.mxu0 %v5807
        %7121 = vmatpush1.bf16.msra.mxu0 %v5806
        %7122 = vmatprep.subr.bf16.mxu0 %v5811
        %7123 = vmatpush1.bf16.msra.mxu0 %v5810
        %7124 = vmatprep.mubr.bf16.mxu0 %v1948
        %7125 = vmatmul.mubr.bf16.gmra.mrb[0].mxu0 %v1947
        %v7126 = vpop.f32.mrb[0].mxu0
        %v7127 = vadd.f32 %v7086, %v7126
        %v7128 = vpop.f32.mrb[0].mxu0
        %v7129 = vadd.f32 %v7088, %v7128
        %v7130 = vpop.f32.mrb[0].mxu0
        %v7131 = vpop.f32.mrb[0].mxu0
        %7132 = vdwg.mxu0
        %7133 = vmatprep.subr.bf16.mxu0 %v5815
        %7134 = vmatpush1.bf16.msra.mxu0 %v5814
        %7135 = vmatprep.subr.bf16.mxu0 %v5819
        %7136 = vmatpush1.bf16.msra.mxu0 %v5818
        %7137 = vmatprep.subr.bf16.mxu0 %v5823
        %7138 = vmatpush1.bf16.msra.mxu0 %v5822
        %7139 = vmatprep.subr.bf16.mxu0 %v5827
        %7140 = vmatpush1.bf16.msra.mxu0 %v5826
        %7141 = vmatprep.subr.bf16.mxu0 %v5831
        %7142 = vmatpush1.bf16.msra.mxu0 %v5830
        %7143 = vmatprep.subr.bf16.mxu0 %v5835
        %7144 = vmatpush1.bf16.msra.mxu0 %v5834
        %7145 = vmatprep.subr.bf16.mxu0 %v5839
        %7146 = vmatpush1.bf16.msra.mxu0 %v5838
        %7147 = vmatprep.subr.bf16.mxu0 %v5843
        %7148 = vmatpush1.bf16.msra.mxu0 %v5842
        %7149 = vmatprep.subr.bf16.mxu0 %v5847
        %7150 = vmatpush1.bf16.msra.mxu0 %v5846
        %7151 = vmatprep.subr.bf16.mxu0 %v5851
        %7152 = vmatpush1.bf16.msra.mxu0 %v5850
        %7153 = vmatprep.subr.bf16.mxu0 %v5855
        %7154 = vmatpush1.bf16.msra.mxu0 %v5854
        %7155 = vmatprep.subr.bf16.mxu0 %v5859
        %7156 = vmatpush1.bf16.msra.mxu0 %v5858
        %7157 = vmatprep.subr.bf16.mxu0 %v5863
        %7158 = vmatpush1.bf16.msra.mxu0 %v5862
        %7159 = vmatprep.subr.bf16.mxu0 %v5867
        %7160 = vmatpush1.bf16.msra.mxu0 %v5866
        %7161 = vmatprep.subr.bf16.mxu0 %v5871
        %7162 = vmatpush1.bf16.msra.mxu0 %v5870
        %7163 = vmatprep.subr.bf16.mxu0 %v5875
        %7164 = vmatpush1.bf16.msra.mxu0 %v5874
        %7165 = vmatprep.mubr.bf16.mxu0 %v1950
        %7166 = vmatmul.mubr.bf16.gmra.mrb[0].mxu0 %v1949
        %v7167 = vpop.f32.mrb[0].mxu0
        %v7168 = vadd.f32 %v7127, %v7167
        %v7169 = vpop.f32.mrb[0].mxu0
        %v7170 = vadd.f32 %v7129, %v7169
        %v7171 = vpop.f32.mrb[0].mxu0
        %v7172 = vpop.f32.mrb[0].mxu0
        %7173 = vdwg.mxu0
        %7174 = vmatprep.subr.bf16.mxu0 %v5879
        %7175 = vmatpush1.bf16.msra.mxu0 %v5878
        %7176 = vmatprep.subr.bf16.mxu0 %v5883
        %7177 = vmatpush1.bf16.msra.mxu0 %v5882
        %7178 = vmatprep.subr.bf16.mxu0 %v5887
        %7179 = vmatpush1.bf16.msra.mxu0 %v5886
        %7180 = vmatprep.subr.bf16.mxu0 %v5891
        %7181 = vmatpush1.bf16.msra.mxu0 %v5890
        %7182 = vmatprep.subr.bf16.mxu0 0
        %7183 = vmatpush1.bf16.msra.mxu0 0
        %7184 = vmatprep.subr.bf16.mxu0 0
        %7185 = vmatpush1.bf16.msra.mxu0 0
        %7186 = vmatprep.subr.bf16.mxu0 0
        %7187 = vmatpush1.bf16.msra.mxu0 0
        %7188 = vmatprep.subr.bf16.mxu0 0
        %7189 = vmatpush1.bf16.msra.mxu0 0
        %7190 = vmatprep.subr.bf16.mxu0 0
        %7191 = vmatpush1.bf16.msra.mxu0 0
        %7192 = vmatprep.subr.bf16.mxu0 0
        %7193 = vmatpush1.bf16.msra.mxu0 0
        %7194 = vmatprep.subr.bf16.mxu0 0
        %7195 = vmatpush1.bf16.msra.mxu0 0
        %7196 = vmatprep.subr.bf16.mxu0 0
        %7197 = vmatpush1.bf16.msra.mxu0 0
        %7198 = vmatprep.subr.bf16.mxu0 0
        %7199 = vmatpush1.bf16.msra.mxu0 0
        %7200 = vmatprep.subr.bf16.mxu0 0
        %7201 = vmatpush1.bf16.msra.mxu0 0
        %7202 = vmatprep.subr.bf16.mxu0 0
        %7203 = vmatpush1.bf16.msra.mxu0 0
        %7204 = vmatprep.subr.bf16.mxu0 0
        %7205 = vmatpush1.bf16.msra.mxu0 0
        %7206 = vmatprep.mubr.bf16.mxu0 0
        %7207 = vmatmul.mubr.bf16.gmra.mrb[0].mxu0 %v6680
        %v7208 = vpop.f32.mrb[0].mxu0
        %v7209 = vadd.f32 %v7168, %v7208
        %v7210 = vpop.f32.mrb[0].mxu0
        %v7211 = vadd.f32 %v7170, %v7210
        %v7212 = vpop.f32.mrb[0].mxu0
        %v7213 = vpop.f32.mrb[0].mxu0
        %7214 = vdwg.mxu0
        %7215 = vmatprep.subr.bf16.mxu0 %v5113
        %7216 = vmatpush1.bf16.msra.mxu0 %v5112
        %7217 = vmatprep.subr.bf16.mxu0 %v5117
        %7218 = vmatpush1.bf16.msra.mxu0 %v5116
        %7219 = vmatprep.subr.bf16.mxu0 %v5121
        %7220 = vmatpush1.bf16.msra.mxu0 %v5120
        %7221 = vmatprep.subr.bf16.mxu0 %v5125
        %7222 = vmatpush1.bf16.msra.mxu0 %v5124
        %7223 = vmatprep.subr.bf16.mxu0 %v5129
        %7224 = vmatpush1.bf16.msra.mxu0 %v5128
        %7225 = vmatprep.subr.bf16.mxu0 %v5133
        %7226 = vmatpush1.bf16.msra.mxu0 %v5132
        %7227 = vmatprep.subr.bf16.mxu0 %v5137
        %7228 = vmatpush1.bf16.msra.mxu0 %v5136
        %7229 = vmatprep.subr.bf16.mxu0 %v5141
        %7230 = vmatpush1.bf16.msra.mxu0 %v5140
        %7231 = vmatprep.subr.bf16.mxu0 %v5145
        %7232 = vmatpush1.bf16.msra.mxu0 %v5144
        %7233 = vmatprep.subr.bf16.mxu0 %v5149
        %7234 = vmatpush1.bf16.msra.mxu0 %v5148
        %7235 = vmatprep.subr.bf16.mxu0 %v5153
        %7236 = vmatpush1.bf16.msra.mxu0 %v5152
        %7237 = vmatprep.subr.bf16.mxu0 %v5157
        %7238 = vmatpush1.bf16.msra.mxu0 %v5156
        %7239 = vmatprep.subr.bf16.mxu0 %v5161
        %7240 = vmatpush1.bf16.msra.mxu0 %v5160
        %7241 = vmatprep.subr.bf16.mxu0 %v5165
        %7242 = vmatpush1.bf16.msra.mxu0 %v5164
        %7243 = vmatprep.subr.bf16.mxu0 %v5169
        %7244 = vmatpush1.bf16.msra.mxu0 %v5168
        %7245 = vmatprep.subr.bf16.mxu0 %v5173
        %7246 = vmatpush1.bf16.msra.mxu0 %v5172
        %7247 = vmatprep.mubr.bf16.mxu0 %v1928
        %7248 = vmatmul.mubr.bf16.gmra.mrb[0].mxu0 %v1927
        %v7249 = vpop.f32.mrb[0].mxu0
        %v7250 = vadd.f32 %v2749, %v7249
        %v7251 = vpop.f32.mrb[0].mxu0
        %v7252 = vadd.f32 %v2753, %v7251
        %v7253 = vpop.f32.mrb[0].mxu0
        %v7254 = vpop.f32.mrb[0].mxu0
        %7255 = vdwg.mxu0
        %7256 = vmatprep.subr.bf16.mxu0 %v5177
        %7257 = vmatpush1.bf16.msra.mxu0 %v5176
        %7258 = vmatprep.subr.bf16.mxu0 %v5181
        %7259 = vmatpush1.bf16.msra.mxu0 %v5180
        %7260 = vmatprep.subr.bf16.mxu0 %v5185
        %7261 = vmatpush1.bf16.msra.mxu0 %v5184
        %7262 = vmatprep.subr.bf16.mxu0 %v5189
        %7263 = vmatpush1.bf16.msra.mxu0 %v5188
        %7264 = vmatprep.subr.bf16.mxu0 %v5193
        %7265 = vmatpush1.bf16.msra.mxu0 %v5192
        %7266 = vmatprep.subr.bf16.mxu0 %v5197
        %7267 = vmatpush1.bf16.msra.mxu0 %v5196
        %7268 = vmatprep.subr.bf16.mxu0 %v5201
        %7269 = vmatpush1.bf16.msra.mxu0 %v5200
        %7270 = vmatprep.subr.bf16.mxu0 %v5205
        %7271 = vmatpush1.bf16.msra.mxu0 %v5204
        %7272 = vmatprep.subr.bf16.mxu0 %v5209
        %7273 = vmatpush1.bf16.msra.mxu0 %v5208
        %7274 = vmatprep.subr.bf16.mxu0 %v5213
        %7275 = vmatpush1.bf16.msra.mxu0 %v5212
        %7276 = vmatprep.subr.bf16.mxu0 %v5217
        %7277 = vmatpush1.bf16.msra.mxu0 %v5216
        %7278 = vmatprep.subr.bf16.mxu0 %v5221
        %7279 = vmatpush1.bf16.msra.mxu0 %v5220
        %7280 = vmatprep.subr.bf16.mxu0 %v5225
        %7281 = vmatpush1.bf16.msra.mxu0 %v5224
        %7282 = vmatprep.subr.bf16.mxu0 %v5229
        %7283 = vmatpush1.bf16.msra.mxu0 %v5228
        %7284 = vmatprep.subr.bf16.mxu0 %v5233
        %7285 = vmatpush1.bf16.msra.mxu0 %v5232
        %7286 = vmatprep.subr.bf16.mxu0 %v5237
        %7287 = vmatpush1.bf16.msra.mxu0 %v5236
        %7288 = vmatprep.mubr.bf16.mxu0 %v1930
        %7289 = vmatmul.mubr.bf16.gmra.mrb[0].mxu0 %v1929
        %v7290 = vpop.f32.mrb[0].mxu0
        %v7291 = vadd.f32 %v7250, %v7290
        %v7292 = vpop.f32.mrb[0].mxu0
        %v7293 = vadd.f32 %v7252, %v7292
        %v7294 = vpop.f32.mrb[0].mxu0
        %v7295 = vpop.f32.mrb[0].mxu0
        %7296 = vdwg.mxu0
        %7297 = vmatprep.subr.bf16.mxu0 %v5241
        %7298 = vmatpush1.bf16.msra.mxu0 %v5240
        %7299 = vmatprep.subr.bf16.mxu0 %v5245
        %7300 = vmatpush1.bf16.msra.mxu0 %v5244
        %7301 = vmatprep.subr.bf16.mxu0 %v5249
        %7302 = vmatpush1.bf16.msra.mxu0 %v5248
        %7303 = vmatprep.subr.bf16.mxu0 %v5253
        %7304 = vmatpush1.bf16.msra.mxu0 %v5252
        %7305 = vmatprep.subr.bf16.mxu0 %v5257
        %7306 = vmatpush1.bf16.msra.mxu0 %v5256
        %7307 = vmatprep.subr.bf16.mxu0 %v5261
        %7308 = vmatpush1.bf16.msra.mxu0 %v5260
        %7309 = vmatprep.subr.bf16.mxu0 %v5265
        %7310 = vmatpush1.bf16.msra.mxu0 %v5264
        %7311 = vmatprep.subr.bf16.mxu0 %v5269
        %7312 = vmatpush1.bf16.msra.mxu0 %v5268
        %7313 = vmatprep.subr.bf16.mxu0 %v5273
        %7314 = vmatpush1.bf16.msra.mxu0 %v5272
        %7315 = vmatprep.subr.bf16.mxu0 %v5277
        %7316 = vmatpush1.bf16.msra.mxu0 %v5276
        %7317 = vmatprep.subr.bf16.mxu0 %v5281
        %7318 = vmatpush1.bf16.msra.mxu0 %v5280
        %7319 = vmatprep.subr.bf16.mxu0 %v5285
        %7320 = vmatpush1.bf16.msra.mxu0 %v5284
        %7321 = vmatprep.subr.bf16.mxu0 %v5289
        %7322 = vmatpush1.bf16.msra.mxu0 %v5288
        %7323 = vmatprep.subr.bf16.mxu0 %v5293
        %7324 = vmatpush1.bf16.msra.mxu0 %v5292
        %7325 = vmatprep.subr.bf16.mxu0 %v5297
        %7326 = vmatpush1.bf16.msra.mxu0 %v5296
        %7327 = vmatprep.subr.bf16.mxu0 %v5301
        %7328 = vmatpush1.bf16.msra.mxu0 %v5300
        %7329 = vmatprep.mubr.bf16.mxu0 %v1932
        %7330 = vmatmul.mubr.bf16.gmra.mrb[0].mxu0 %v1931
        %v7331 = vpop.f32.mrb[0].mxu0
        %v7332 = vadd.f32 %v7291, %v7331
        %v7333 = vpop.f32.mrb[0].mxu0
        %v7334 = vadd.f32 %v7293, %v7333
        %v7335 = vpop.f32.mrb[0].mxu0
        %v7336 = vpop.f32.mrb[0].mxu0
        %7337 = vdwg.mxu0
        %7338 = vmatprep.subr.bf16.mxu0 %v5305
        %7339 = vmatpush1.bf16.msra.mxu0 %v5304
        %7340 = vmatprep.subr.bf16.mxu0 %v5309
        %7341 = vmatpush1.bf16.msra.mxu0 %v5308
        %7342 = vmatprep.subr.bf16.mxu0 %v5313
        %7343 = vmatpush1.bf16.msra.mxu0 %v5312
        %7344 = vmatprep.subr.bf16.mxu0 %v5317
        %7345 = vmatpush1.bf16.msra.mxu0 %v5316
        %7346 = vmatprep.subr.bf16.mxu0 %v5321
        %7347 = vmatpush1.bf16.msra.mxu0 %v5320
        %7348 = vmatprep.subr.bf16.mxu0 %v5325
        %7349 = vmatpush1.bf16.msra.mxu0 %v5324
        %7350 = vmatprep.subr.bf16.mxu0 %v5329
        %7351 = vmatpush1.bf16.msra.mxu0 %v5328
        %7352 = vmatprep.subr.bf16.mxu0 %v5333
        %7353 = vmatpush1.bf16.msra.mxu0 %v5332
        %7354 = vmatprep.subr.bf16.mxu0 %v5337
        %7355 = vmatpush1.bf16.msra.mxu0 %v5336
        %7356 = vmatprep.subr.bf16.mxu0 %v5341
        %7357 = vmatpush1.bf16.msra.mxu0 %v5340
        %7358 = vmatprep.subr.bf16.mxu0 %v5345
        %7359 = vmatpush1.bf16.msra.mxu0 %v5344
        %7360 = vmatprep.subr.bf16.mxu0 %v5349
        %7361 = vmatpush1.bf16.msra.mxu0 %v5348
        %7362 = vmatprep.subr.bf16.mxu0 %v5353
        %7363 = vmatpush1.bf16.msra.mxu0 %v5352
        %7364 = vmatprep.subr.bf16.mxu0 %v5357
        %7365 = vmatpush1.bf16.msra.mxu0 %v5356
        %7366 = vmatprep.subr.bf16.mxu0 %v5361
        %7367 = vmatpush1.bf16.msra.mxu0 %v5360
        %7368 = vmatprep.subr.bf16.mxu0 %v5365
        %7369 = vmatpush1.bf16.msra.mxu0 %v5364
        %7370 = vmatprep.mubr.bf16.mxu0 %v1934
        %7371 = vmatmul.mubr.bf16.gmra.mrb[0].mxu0 %v1933
        %v7372 = vpop.f32.mrb[0].mxu0
        %v7373 = vadd.f32 %v7332, %v7372
        %v7374 = vpop.f32.mrb[0].mxu0
        %v7375 = vadd.f32 %v7334, %v7374
        %v7376 = vpop.f32.mrb[0].mxu0
        %v7377 = vpop.f32.mrb[0].mxu0
        %7378 = vdwg.mxu0
        %7379 = vmatprep.subr.bf16.mxu0 %v5369
        %7380 = vmatpush1.bf16.msra.mxu0 %v5368
        %7381 = vmatprep.subr.bf16.mxu0 %v5373
        %7382 = vmatpush1.bf16.msra.mxu0 %v5372
        %7383 = vmatprep.subr.bf16.mxu0 %v5377
        %7384 = vmatpush1.bf16.msra.mxu0 %v5376
        %7385 = vmatprep.subr.bf16.mxu0 %v5381
        %7386 = vmatpush1.bf16.msra.mxu0 %v5380
        %7387 = vmatprep.subr.bf16.mxu0 %v5385
        %7388 = vmatpush1.bf16.msra.mxu0 %v5384
        %7389 = vmatprep.subr.bf16.mxu0 %v5389
        %7390 = vmatpush1.bf16.msra.mxu0 %v5388
        %7391 = vmatprep.subr.bf16.mxu0 %v5393
        %7392 = vmatpush1.bf16.msra.mxu0 %v5392
        %7393 = vmatprep.subr.bf16.mxu0 %v5397
        %7394 = vmatpush1.bf16.msra.mxu0 %v5396
        %7395 = vmatprep.subr.bf16.mxu0 %v5401
        %7396 = vmatpush1.bf16.msra.mxu0 %v5400
        %7397 = vmatprep.subr.bf16.mxu0 %v5405
        %7398 = vmatpush1.bf16.msra.mxu0 %v5404
        %7399 = vmatprep.subr.bf16.mxu0 %v5409
        %7400 = vmatpush1.bf16.msra.mxu0 %v5408
        %7401 = vmatprep.subr.bf16.mxu0 %v5413
        %7402 = vmatpush1.bf16.msra.mxu0 %v5412
        %7403 = vmatprep.subr.bf16.mxu0 %v5417
        %7404 = vmatpush1.bf16.msra.mxu0 %v5416
        %7405 = vmatprep.subr.bf16.mxu0 %v5421
        %7406 = vmatpush1.bf16.msra.mxu0 %v5420
        %7407 = vmatprep.subr.bf16.mxu0 %v5425
        %7408 = vmatpush1.bf16.msra.mxu0 %v5424
        %7409 = vmatprep.subr.bf16.mxu0 %v5429
        %7410 = vmatpush1.bf16.msra.mxu0 %v5428
        %7411 = vmatprep.mubr.bf16.mxu0 %v1936
        %7412 = vmatmul.mubr.bf16.gmra.mrb[0].mxu0 %v1935
        %v7413 = vpop.f32.mrb[0].mxu0
        %v7414 = vadd.f32 %v7373, %v7413
        %v7415 = vpop.f32.mrb[0].mxu0
        %v7416 = vadd.f32 %v7375, %v7415
        %v7417 = vpop.f32.mrb[0].mxu0
        %v7418 = vpop.f32.mrb[0].mxu0
        %7419 = vdwg.mxu0
        %7420 = vmatprep.subr.bf16.mxu0 %v5433
        %7421 = vmatpush1.bf16.msra.mxu0 %v5432
        %7422 = vmatprep.subr.bf16.mxu0 %v5437
        %7423 = vmatpush1.bf16.msra.mxu0 %v5436
        %7424 = vmatprep.subr.bf16.mxu0 %v5441
        %7425 = vmatpush1.bf16.msra.mxu0 %v5440
        %7426 = vmatprep.subr.bf16.mxu0 %v5445
        %7427 = vmatpush1.bf16.msra.mxu0 %v5444
        %7428 = vmatprep.subr.bf16.mxu0 %v5449
        %7429 = vmatpush1.bf16.msra.mxu0 %v5448
        %7430 = vmatprep.subr.bf16.mxu0 %v5453
        %7431 = vmatpush1.bf16.msra.mxu0 %v5452
        %7432 = vmatprep.subr.bf16.mxu0 %v5457
        %7433 = vmatpush1.bf16.msra.mxu0 %v5456
        %7434 = vmatprep.subr.bf16.mxu0 %v5461
        %7435 = vmatpush1.bf16.msra.mxu0 %v5460
        %7436 = vmatprep.subr.bf16.mxu0 %v5465
        %7437 = vmatpush1.bf16.msra.mxu0 %v5464
        %7438 = vmatprep.subr.bf16.mxu0 %v5469
        %7439 = vmatpush1.bf16.msra.mxu0 %v5468
        %7440 = vmatprep.subr.bf16.mxu0 %v5473
        %7441 = vmatpush1.bf16.msra.mxu0 %v5472
        %7442 = vmatprep.subr.bf16.mxu0 %v5477
        %7443 = vmatpush1.bf16.msra.mxu0 %v5476
        %7444 = vmatprep.subr.bf16.mxu0 %v5481
        %7445 = vmatpush1.bf16.msra.mxu0 %v5480
        %7446 = vmatprep.subr.bf16.mxu0 %v5485
        %7447 = vmatpush1.bf16.msra.mxu0 %v5484
        %7448 = vmatprep.subr.bf16.mxu0 %v5489
        %7449 = vmatpush1.bf16.msra.mxu0 %v5488
        %7450 = vmatprep.subr.bf16.mxu0 %v5493
        %7451 = vmatpush1.bf16.msra.mxu0 %v5492
        %7452 = vmatprep.mubr.bf16.mxu0 %v1938
        %7453 = vmatmul.mubr.bf16.gmra.mrb[0].mxu0 %v1937
        %v7454 = vpop.f32.mrb[0].mxu0
        %v7455 = vadd.f32 %v7414, %v7454
        %v7456 = vpop.f32.mrb[0].mxu0
        %v7457 = vadd.f32 %v7416, %v7456
        %v7458 = vpop.f32.mrb[0].mxu0
        %v7459 = vpop.f32.mrb[0].mxu0
        %7460 = vdwg.mxu0
        %7461 = vmatprep.subr.bf16.mxu0 %v5497
        %7462 = vmatpush1.bf16.msra.mxu0 %v5496
        %7463 = vmatprep.subr.bf16.mxu0 %v5501
        %7464 = vmatpush1.bf16.msra.mxu0 %v5500
        %7465 = vmatprep.subr.bf16.mxu0 %v5505
        %7466 = vmatpush1.bf16.msra.mxu0 %v5504
        %7467 = vmatprep.subr.bf16.mxu0 %v5509
        %7468 = vmatpush1.bf16.msra.mxu0 %v5508
        %7469 = vmatprep.subr.bf16.mxu0 %v5513
        %7470 = vmatpush1.bf16.msra.mxu0 %v5512
        %7471 = vmatprep.subr.bf16.mxu0 %v5517
        %7472 = vmatpush1.bf16.msra.mxu0 %v5516
        %7473 = vmatprep.subr.bf16.mxu0 %v5521
        %7474 = vmatpush1.bf16.msra.mxu0 %v5520
        %7475 = vmatprep.subr.bf16.mxu0 %v5525
        %7476 = vmatpush1.bf16.msra.mxu0 %v5524
        %7477 = vmatprep.subr.bf16.mxu0 %v5529
        %7478 = vmatpush1.bf16.msra.mxu0 %v5528
        %7479 = vmatprep.subr.bf16.mxu0 %v5533
        %7480 = vmatpush1.bf16.msra.mxu0 %v5532
        %7481 = vmatprep.subr.bf16.mxu0 %v5537
        %7482 = vmatpush1.bf16.msra.mxu0 %v5536
        %7483 = vmatprep.subr.bf16.mxu0 %v5541
        %7484 = vmatpush1.bf16.msra.mxu0 %v5540
        %7485 = vmatprep.subr.bf16.mxu0 %v5545
        %7486 = vmatpush1.bf16.msra.mxu0 %v5544
        %7487 = vmatprep.subr.bf16.mxu0 %v5549
        %7488 = vmatpush1.bf16.msra.mxu0 %v5548
        %7489 = vmatprep.subr.bf16.mxu0 %v5553
        %7490 = vmatpush1.bf16.msra.mxu0 %v5552
        %7491 = vmatprep.subr.bf16.mxu0 %v5557
        %7492 = vmatpush1.bf16.msra.mxu0 %v5556
        %7493 = vmatprep.mubr.bf16.mxu0 %v1940
        %7494 = vmatmul.mubr.bf16.gmra.mrb[0].mxu0 %v1939
        %v7495 = vpop.f32.mrb[0].mxu0
        %v7496 = vadd.f32 %v7455, %v7495
        %v7497 = vpop.f32.mrb[0].mxu0
        %v7498 = vadd.f32 %v7457, %v7497
        %v7499 = vpop.f32.mrb[0].mxu0
        %v7500 = vpop.f32.mrb[0].mxu0
        %7501 = vdwg.mxu0
        %7502 = vmatprep.subr.bf16.mxu0 %v5561
        %7503 = vmatpush1.bf16.msra.mxu0 %v5560
        %7504 = vmatprep.subr.bf16.mxu0 %v5565
        %7505 = vmatpush1.bf16.msra.mxu0 %v5564
        %7506 = vmatprep.subr.bf16.mxu0 %v5569
        %7507 = vmatpush1.bf16.msra.mxu0 %v5568
        %7508 = vmatprep.subr.bf16.mxu0 %v5573
        %7509 = vmatpush1.bf16.msra.mxu0 %v5572
        %7510 = vmatprep.subr.bf16.mxu0 %v5577
        %7511 = vmatpush1.bf16.msra.mxu0 %v5576
        %7512 = vmatprep.subr.bf16.mxu0 %v5581
        %7513 = vmatpush1.bf16.msra.mxu0 %v5580
        %7514 = vmatprep.subr.bf16.mxu0 %v5585
        %7515 = vmatpush1.bf16.msra.mxu0 %v5584
        %7516 = vmatprep.subr.bf16.mxu0 %v5589
        %7517 = vmatpush1.bf16.msra.mxu0 %v5588
        %7518 = vmatprep.subr.bf16.mxu0 %v5593
        %7519 = vmatpush1.bf16.msra.mxu0 %v5592
        %7520 = vmatprep.subr.bf16.mxu0 %v5597
        %7521 = vmatpush1.bf16.msra.mxu0 %v5596
        %7522 = vmatprep.subr.bf16.mxu0 %v5601
        %7523 = vmatpush1.bf16.msra.mxu0 %v5600
        %7524 = vmatprep.subr.bf16.mxu0 %v5605
        %7525 = vmatpush1.bf16.msra.mxu0 %v5604
        %7526 = vmatprep.subr.bf16.mxu0 %v5609
        %7527 = vmatpush1.bf16.msra.mxu0 %v5608
        %7528 = vmatprep.subr.bf16.mxu0 %v5613
        %7529 = vmatpush1.bf16.msra.mxu0 %v5612
        %7530 = vmatprep.subr.bf16.mxu0 %v5617
        %7531 = vmatpush1.bf16.msra.mxu0 %v5616
        %7532 = vmatprep.subr.bf16.mxu0 %v5621
        %7533 = vmatpush1.bf16.msra.mxu0 %v5620
        %7534 = vmatprep.mubr.bf16.mxu0 %v1942
        %7535 = vmatmul.mubr.bf16.gmra.mrb[0].mxu0 %v1941
        %v7536 = vpop.f32.mrb[0].mxu0
        %v7537 = vadd.f32 %v7496, %v7536
        %v7538 = vpop.f32.mrb[0].mxu0
        %v7539 = vadd.f32 %v7498, %v7538
        %v7540 = vpop.f32.mrb[0].mxu0
        %v7541 = vpop.f32.mrb[0].mxu0
        %7542 = vdwg.mxu0
        %7543 = vmatprep.subr.bf16.mxu0 %v5625
        %7544 = vmatpush1.bf16.msra.mxu0 %v5624
        %7545 = vmatprep.subr.bf16.mxu0 %v5629
        %7546 = vmatpush1.bf16.msra.mxu0 %v5628
        %7547 = vmatprep.subr.bf16.mxu0 %v5633
        %7548 = vmatpush1.bf16.msra.mxu0 %v5632
        %7549 = vmatprep.subr.bf16.mxu0 %v5637
        %7550 = vmatpush1.bf16.msra.mxu0 %v5636
        %7551 = vmatprep.subr.bf16.mxu0 %v5641
        %7552 = vmatpush1.bf16.msra.mxu0 %v5640
        %7553 = vmatprep.subr.bf16.mxu0 %v5645
        %7554 = vmatpush1.bf16.msra.mxu0 %v5644
        %7555 = vmatprep.subr.bf16.mxu0 %v5649
        %7556 = vmatpush1.bf16.msra.mxu0 %v5648
        %7557 = vmatprep.subr.bf16.mxu0 %v5653
        %7558 = vmatpush1.bf16.msra.mxu0 %v5652
        %7559 = vmatprep.subr.bf16.mxu0 %v5657
        %7560 = vmatpush1.bf16.msra.mxu0 %v5656
        %7561 = vmatprep.subr.bf16.mxu0 %v5661
        %7562 = vmatpush1.bf16.msra.mxu0 %v5660
        %7563 = vmatprep.subr.bf16.mxu0 %v5665
        %7564 = vmatpush1.bf16.msra.mxu0 %v5664
        %7565 = vmatprep.subr.bf16.mxu0 %v5669
        %7566 = vmatpush1.bf16.msra.mxu0 %v5668
        %7567 = vmatprep.subr.bf16.mxu0 %v5673
        %7568 = vmatpush1.bf16.msra.mxu0 %v5672
        %7569 = vmatprep.subr.bf16.mxu0 %v5677
        %7570 = vmatpush1.bf16.msra.mxu0 %v5676
        %7571 = vmatprep.subr.bf16.mxu0 %v5681
        %7572 = vmatpush1.bf16.msra.mxu0 %v5680
        %7573 = vmatprep.subr.bf16.mxu0 %v5685
        %7574 = vmatpush1.bf16.msra.mxu0 %v5684
        %7575 = vmatprep.mubr.bf16.mxu0 %v1944
        %7576 = vmatmul.mubr.bf16.gmra.mrb[0].mxu0 %v1943
        %v7577 = vpop.f32.mrb[0].mxu0
        %v7578 = vadd.f32 %v7537, %v7577
        %v7579 = vpop.f32.mrb[0].mxu0
        %v7580 = vadd.f32 %v7539, %v7579
        %v7581 = vpop.f32.mrb[0].mxu0
        %v7582 = vpop.f32.mrb[0].mxu0
        %7583 = vdwg.mxu0
        %7584 = vmatprep.subr.bf16.mxu0 %v5689
        %7585 = vmatpush1.bf16.msra.mxu0 %v5688
        %7586 = vmatprep.subr.bf16.mxu0 %v5693
        %7587 = vmatpush1.bf16.msra.mxu0 %v5692
        %7588 = vmatprep.subr.bf16.mxu0 %v5697
        %7589 = vmatpush1.bf16.msra.mxu0 %v5696
        %7590 = vmatprep.subr.bf16.mxu0 %v5701
        %7591 = vmatpush1.bf16.msra.mxu0 %v5700
        %7592 = vmatprep.subr.bf16.mxu0 %v5705
        %7593 = vmatpush1.bf16.msra.mxu0 %v5704
        %7594 = vmatprep.subr.bf16.mxu0 %v5709
        %7595 = vmatpush1.bf16.msra.mxu0 %v5708
        %7596 = vmatprep.subr.bf16.mxu0 %v5713
        %7597 = vmatpush1.bf16.msra.mxu0 %v5712
        %7598 = vmatprep.subr.bf16.mxu0 %v5717
        %7599 = vmatpush1.bf16.msra.mxu0 %v5716
        %7600 = vmatprep.subr.bf16.mxu0 %v5721
        %7601 = vmatpush1.bf16.msra.mxu0 %v5720
        %7602 = vmatprep.subr.bf16.mxu0 %v5725
        %7603 = vmatpush1.bf16.msra.mxu0 %v5724
        %7604 = vmatprep.subr.bf16.mxu0 %v5729
        %7605 = vmatpush1.bf16.msra.mxu0 %v5728
        %7606 = vmatprep.subr.bf16.mxu0 %v5733
        %7607 = vmatpush1.bf16.msra.mxu0 %v5732
        %7608 = vmatprep.subr.bf16.mxu0 %v5737
        %7609 = vmatpush1.bf16.msra.mxu0 %v5736
        %7610 = vmatprep.subr.bf16.mxu0 %v5741
        %7611 = vmatpush1.bf16.msra.mxu0 %v5740
        %7612 = vmatprep.subr.bf16.mxu0 %v5745
        %7613 = vmatpush1.bf16.msra.mxu0 %v5744
        %7614 = vmatprep.subr.bf16.mxu0 %v5749
        %7615 = vmatpush1.bf16.msra.mxu0 %v5748
        %7616 = vmatprep.mubr.bf16.mxu0 %v1946
        %7617 = vmatmul.mubr.bf16.gmra.mrb[0].mxu0 %v1945
        %v7618 = vpop.f32.mrb[0].mxu0
        %v7619 = vadd.f32 %v7578, %v7618
        %v7620 = vpop.f32.mrb[0].mxu0
        %v7621 = vadd.f32 %v7580, %v7620
        %v7622 = vpop.f32.mrb[0].mxu0
        %v7623 = vpop.f32.mrb[0].mxu0
        %7624 = vdwg.mxu0
        %7625 = vmatprep.subr.bf16.mxu0 %v5753
        %7626 = vmatpush1.bf16.msra.mxu0 %v5752
        %7627 = vmatprep.subr.bf16.mxu0 %v5757
        %7628 = vmatpush1.bf16.msra.mxu0 %v5756
        %7629 = vmatprep.subr.bf16.mxu0 %v5761
        %7630 = vmatpush1.bf16.msra.mxu0 %v5760
        %7631 = vmatprep.subr.bf16.mxu0 %v5765
        %7632 = vmatpush1.bf16.msra.mxu0 %v5764
        %7633 = vmatprep.subr.bf16.mxu0 %v5769
        %7634 = vmatpush1.bf16.msra.mxu0 %v5768
        %7635 = vmatprep.subr.bf16.mxu0 %v5773
        %7636 = vmatpush1.bf16.msra.mxu0 %v5772
        %7637 = vmatprep.subr.bf16.mxu0 %v5777
        %7638 = vmatpush1.bf16.msra.mxu0 %v5776
        %7639 = vmatprep.subr.bf16.mxu0 %v5781
        %7640 = vmatpush1.bf16.msra.mxu0 %v5780
        %7641 = vmatprep.subr.bf16.mxu0 %v5785
        %7642 = vmatpush1.bf16.msra.mxu0 %v5784
        %7643 = vmatprep.subr.bf16.mxu0 %v5789
        %7644 = vmatpush1.bf16.msra.mxu0 %v5788
        %7645 = vmatprep.subr.bf16.mxu0 %v5793
        %7646 = vmatpush1.bf16.msra.mxu0 %v5792
        %7647 = vmatprep.subr.bf16.mxu0 %v5797
        %7648 = vmatpush1.bf16.msra.mxu0 %v5796
        %7649 = vmatprep.subr.bf16.mxu0 %v5801
        %7650 = vmatpush1.bf16.msra.mxu0 %v5800
        %7651 = vmatprep.subr.bf16.mxu0 %v5805
        %7652 = vmatpush1.bf16.msra.mxu0 %v5804
        %7653 = vmatprep.subr.bf16.mxu0 %v5809
        %7654 = vmatpush1.bf16.msra.mxu0 %v5808
        %7655 = vmatprep.subr.bf16.mxu0 %v5813
        %7656 = vmatpush1.bf16.msra.mxu0 %v5812
        %7657 = vmatprep.mubr.bf16.mxu0 %v1948
        %7658 = vmatmul.mubr.bf16.gmra.mrb[0].mxu0 %v1947
        %v7659 = vpop.f32.mrb[0].mxu0
        %v7660 = vadd.f32 %v7619, %v7659
        %v7661 = vpop.f32.mrb[0].mxu0
        %v7662 = vadd.f32 %v7621, %v7661
        %v7663 = vpop.f32.mrb[0].mxu0
        %v7664 = vpop.f32.mrb[0].mxu0
        %7665 = vdwg.mxu0
        %7666 = vmatprep.subr.bf16.mxu0 %v5817
        %7667 = vmatpush1.bf16.msra.mxu0 %v5816
        %7668 = vmatprep.subr.bf16.mxu0 %v5821
        %7669 = vmatpush1.bf16.msra.mxu0 %v5820
        %7670 = vmatprep.subr.bf16.mxu0 %v5825
        %7671 = vmatpush1.bf16.msra.mxu0 %v5824
        %7672 = vmatprep.subr.bf16.mxu0 %v5829
        %7673 = vmatpush1.bf16.msra.mxu0 %v5828
        %7674 = vmatprep.subr.bf16.mxu0 %v5833
        %7675 = vmatpush1.bf16.msra.mxu0 %v5832
        %7676 = vmatprep.subr.bf16.mxu0 %v5837
        %7677 = vmatpush1.bf16.msra.mxu0 %v5836
        %7678 = vmatprep.subr.bf16.mxu0 %v5841
        %7679 = vmatpush1.bf16.msra.mxu0 %v5840
        %7680 = vmatprep.subr.bf16.mxu0 %v5845
        %7681 = vmatpush1.bf16.msra.mxu0 %v5844
        %7682 = vmatprep.subr.bf16.mxu0 %v5849
        %7683 = vmatpush1.bf16.msra.mxu0 %v5848
        %7684 = vmatprep.subr.bf16.mxu0 %v5853
        %7685 = vmatpush1.bf16.msra.mxu0 %v5852
        %7686 = vmatprep.subr.bf16.mxu0 %v5857
        %7687 = vmatpush1.bf16.msra.mxu0 %v5856
        %7688 = vmatprep.subr.bf16.mxu0 %v5861
        %7689 = vmatpush1.bf16.msra.mxu0 %v5860
        %7690 = vmatprep.subr.bf16.mxu0 %v5865
        %7691 = vmatpush1.bf16.msra.mxu0 %v5864
        %7692 = vmatprep.subr.bf16.mxu0 %v5869
        %7693 = vmatpush1.bf16.msra.mxu0 %v5868
        %7694 = vmatprep.subr.bf16.mxu0 %v5873
        %7695 = vmatpush1.bf16.msra.mxu0 %v5872
        %7696 = vmatprep.subr.bf16.mxu0 %v5877
        %7697 = vmatpush1.bf16.msra.mxu0 %v5876
        %7698 = vmatprep.mubr.bf16.mxu0 %v1950
        %7699 = vmatmul.mubr.bf16.gmra.mrb[0].mxu0 %v1949
        %v7700 = vpop.f32.mrb[0].mxu0
        %v7701 = vadd.f32 %v7660, %v7700
        %v7702 = vpop.f32.mrb[0].mxu0
        %v7703 = vadd.f32 %v7662, %v7702
        %v7704 = vpop.f32.mrb[0].mxu0
        %v7705 = vpop.f32.mrb[0].mxu0
        %7706 = vdwg.mxu0
        %7707 = vmatprep.subr.bf16.mxu0 %v5881
        %7708 = vmatpush1.bf16.msra.mxu0 %v5880
        %7709 = vmatprep.subr.bf16.mxu0 %v5885
        %7710 = vmatpush1.bf16.msra.mxu0 %v5884
        %7711 = vmatprep.subr.bf16.mxu0 %v5889
        %7712 = vmatpush1.bf16.msra.mxu0 %v5888
        %7713 = vmatprep.subr.bf16.mxu0 %v5893
        %7714 = vmatpush1.bf16.msra.mxu0 %v5892
        %7715 = vmatprep.subr.bf16.mxu0 0
        %7716 = vmatpush1.bf16.msra.mxu0 0
        %7717 = vmatprep.subr.bf16.mxu0 0
        %7718 = vmatpush1.bf16.msra.mxu0 0
        %7719 = vmatprep.subr.bf16.mxu0 0
        %7720 = vmatpush1.bf16.msra.mxu0 0
        %7721 = vmatprep.subr.bf16.mxu0 0
        %7722 = vmatpush1.bf16.msra.mxu0 0
        %7723 = vmatprep.subr.bf16.mxu0 0
        %7724 = vmatpush1.bf16.msra.mxu0 0
        %7725 = vmatprep.subr.bf16.mxu0 0
        %7726 = vmatpush1.bf16.msra.mxu0 0
        %7727 = vmatprep.subr.bf16.mxu0 0
        %7728 = vmatpush1.bf16.msra.mxu0 0
        %7729 = vmatprep.subr.bf16.mxu0 0
        %7730 = vmatpush1.bf16.msra.mxu0 0
        %7731 = vmatprep.subr.bf16.mxu0 0
        %7732 = vmatpush1.bf16.msra.mxu0 0
        %7733 = vmatprep.subr.bf16.mxu0 0
        %7734 = vmatpush1.bf16.msra.mxu0 0
        %7735 = vmatprep.subr.bf16.mxu0 0
        %7736 = vmatpush1.bf16.msra.mxu0 0
        %7737 = vmatprep.subr.bf16.mxu0 0
        %7738 = vmatpush1.bf16.msra.mxu0 0
        %7739 = vmatprep.mubr.bf16.mxu0 0
        %7740 = vmatmul.mubr.bf16.gmra.mrb[0].mxu0 %v6680
        %v7741 = vpop.f32.mrb[0].mxu0
        %v7742 = vadd.f32 %v7701, %v7741
        %v7743 = vpop.f32.mrb[0].mxu0
        %v7744 = vadd.f32 %v7703, %v7743
        %v7745 = vpop.f32.mrb[0].mxu0
        %v7746 = vpop.f32.mrb[0].mxu0
        %7747 = vdwg.mxu0
        %v7752 = vcombine.low %v7209, %v7211
        %v7753 = vcombine.low %v7742, %v7744
        %v7755 = vunpack.c.l.s4 1983009808
        %v7756 = vunpack.c.0.s8 %v7755
        %v7757 = vlaneseq
        %v7758 = vshrl.u32 %v7757, 7
        %v7759 = vsub.s32 %v7756, %v7758
        %v7760 = vrot.slane %v7752, %v7759
        %v7762 = vunpack.c.l.s4 1983009808
        %v7763 = vunpack.c.0.s8 %v7762
        %v7764 = vlaneseq
        %v7765 = vshrl.u32 %v7764, 7
        %v7766 = vsub.s32 %v7763, %v7765
        %v7767 = vrot.slane %v7753, %v7766
        %v7768 = vcombine.low %v7760, %v7767
        %7770 = vst [vmem:[%s1776] sm:$0xff] %v7768
        %s7771 = smul.u32 4, %s14
        %p7772 = scmp.lt.s32.totalorder %s7771, 31
        %s7773 = scalar_select %p7772, %s7771, 31
        %s7774 = smul.addr %s7773, 2
        %s7775 = scalar_lea.vmem %s3, %s7774
        // Predicated region
        $region56: #{encoder_forward.7} parent=50 // pred_check
          %p7776 = pneg %p105
        $region57: #{encoder_forward.7} parent=50 // pred_check_branch
          %7778 = sbr.rel (%p7776) target = $region59
        $region58: #{encoder_forward.7} parent=50 // pred_region
          %s7779 = smul.u32 4, %s14
        $region59: #{encoder_forward.7} parent=50 // pred_fallthru
          _
      $region51: #{encoder_forward.7} parent=5 // pred_fallthru
        _
      %p7780 = scmp.le.s32.totalorder 2, %s9
      // Predicated region
      $region60: #{encoder_forward.7} parent=5 // pred_check
        %p7781 = pneg %p7780
      $region61: #{encoder_forward.7} parent=5 // pred_check_branch
        %7783 = sbr.rel (%p7781) target = $region63
      $region62: #{encoder_forward.7} parent=5 // pred_region
        %s7784 = ssub.s32 %s9, 2
        // Predicated region
        $region64: #{encoder_forward.7} parent=62 // pred_check
          %p7785 = pneg %p111
        $region65: #{encoder_forward.7} parent=62 // pred_check_branch
          %7787 = sbr.rel (%p7785) target = $region67
        $region66: #{encoder_forward.7} parent=62 // pred_region
          %s7788 = smul.u32 4, %s15
          %p7789 = scmp.lt.s32.totalorder %s7788, 31
          %s7790 = scalar_select %p7789, %s7788, 31
          %s7791 = smul.addr %s7790, 2
          %s7792 = scalar_lea.vmem %s3, %s7791
        $region67: #{encoder_forward.7} parent=62 // pred_fallthru
          _
      $region63: #{encoder_forward.7} parent=5 // pred_fallthru
        _
    $region6: #{encoder_forward.7} parent=1 // loop_footer
      %s13 = sadd.s32 1, %s9
    $region7: #{encoder_forward.7} parent=1 // loop_footer_branch
      %8 = sbr.rel target = $region3
    $region8: #{encoder_forward.7} parent=1 // loop_exit
      _

</llo_original>
